<compile_context>
chip_gen: v7x
topology: tpu7x:2x2x1
jax: 0.10.0
libtpu: 0.0.40
codegen_flags: <defaults>
</compile_context>

<pallas_src>
import numpy as np
import jax
import jax.numpy as jnp
from jax import lax
from jax.experimental import pallas as pl
from jax.experimental.pallas import tpu as pltpu

# ----- model hyper-parameters (small, consistent with the module) -----
FREQ_DIM = 16        # LSTM input_size
FEATURE_DIM = 32     # LSTM hidden_size == attention embed_dim
NUM_LAYERS = 2
NUM_HEADS = 4
HEAD_DIM = FEATURE_DIM // NUM_HEADS
BATCH = 2
SEQ = 8


# ---------------------------------------------------------------------
# Fused kernel: LSTM(2 layers, unrolled) -> MHA -> mean over seq.
# Single program; everything stays on-chip.
# ---------------------------------------------------------------------
def _wavelet_fused_kernel(x_ref, wih1_ref, whh1_ref, b1_ref,
                          wih2_ref, whh2_ref, b2_ref,
                          wqh_ref, wkh_ref, wvh_ref,
                          bqh_ref, bkh_ref, bvh_ref,
                          woh_ref, bo_ref, out_ref):
    B, T, D = x_ref.shape
    H = whh1_ref.shape[0]
    E = H
    NH, _, HD = wqh_ref.shape
    f32 = jnp.float32

    # ---- LSTM layer 1: hoisted input projection (one matmul for all timesteps) ----
    x2d = x_ref[...].reshape(B * T, D)                               # (B*T, D)
    xp1 = jnp.dot(x2d, wih1_ref[...], preferred_element_type=f32) + b1_ref[...]
    xp1 = xp1.reshape(B, T, 4 * H)                                   # (B, T, 4H)

    whh1 = whh1_ref[...]
    wih2 = wih2_ref[...]
    whh2 = whh2_ref[...]
    b2 = jnp.broadcast_to(b2_ref[...], (B, 4 * H))                   # hoisted broadcast

    def lstm_step(gates, c_prev):
        # whole-(B,4H) activations, then gate slices (i, f, g, o -- PyTorch order)
        sg = jax.nn.sigmoid(gates)
        th = jnp.tanh(gates)
        i = sg[:, 0 * H:1 * H]
        f = sg[:, 1 * H:2 * H]
        g = th[:, 2 * H:3 * H]
        o = sg[:, 3 * H:4 * H]
        c = f * c_prev + i * g
        h = o * jnp.tanh(c)
        return h, c

    h1 = jnp.zeros((B, H), f32)
    c1 = jnp.zeros((B, H), f32)
    h2 = jnp.zeros((B, H), f32)
    c2 = jnp.zeros((B, H), f32)
    h2_steps = []
    # Fully unrolled wavefront: layer-2 step t directly follows layer-1 step t, so the
    # scheduler can overlap layer-1[t+1] with layer-2[t].
    for t in range(T):
        g1 = xp1[:, t, :] + jnp.dot(h1, whh1, preferred_element_type=f32)
        h1, c1 = lstm_step(g1, c1)
        g2 = (jnp.dot(h1, wih2, preferred_element_type=f32)
              + jnp.dot(h2, whh2, preferred_element_type=f32) + b2)
        h2, c2 = lstm_step(g2, c2)
        h2_steps.append(h2)

    h_seq = jnp.stack(h2_steps, axis=1)                              # (B, T, E)
    h2d = h_seq.reshape(B * T, E)                                    # (B*T, E)

    # ---- Multi-head self-attention + mean over seq ----
    scale = 1.0 / (HD ** 0.5)
    acc = jnp.zeros((B, E), f32)
    for hd in range(NH):                                             # static, weights pre-split
        q = jnp.dot(h2d, wqh_ref[hd], preferred_element_type=f32) + bqh_ref[hd]
        k = jnp.dot(h2d, wkh_ref[hd], preferred_element_type=f32) + bkh_ref[hd]
        v = jnp.dot(h2d, wvh_ref[hd], preferred_element_type=f32) + bvh_ref[hd]
        q3 = q.reshape(B, T, HD)
        k3 = k.reshape(B, T, HD)
        v3 = v.reshape(B, T, HD)
        s = jnp.einsum("btd,bsd->bts", q3, k3, preferred_element_type=f32) * scale
        p = jax.nn.softmax(s, axis=-1)
        ctx = jnp.einsum("bts,bsd->btd", p, v3, preferred_element_type=f32)
        ctx_mean = jnp.mean(ctx, axis=1)                             # mean over seq (pre-proj)
        acc = acc + jnp.dot(ctx_mean, woh_ref[hd], preferred_element_type=f32)

    out_ref[...] = acc + bo_ref[...]                                 # single lane-dense store


def _full_spec(shape):
    n = len(shape)
    return pl.BlockSpec(tuple(shape), lambda i, _n=n: (0,) * _n)


def wavelet_feature_forward(x, params):
    """x: (B, T, FREQ_DIM) float32 -> (B, FEATURE_DIM) float32."""
    assert NUM_LAYERS == 2
    (w_ih1, w_hh1, b1), (w_ih2, w_hh2, b2) = params["lstm"]
    wq_t, wk_t, wv_t, wo_t, bq, bk, bv, bo = params["mha"]

    # Head-split the attention weights outside the kernel (free; removes all in-kernel
    # activation lane-slicing / concatenation).
    def split_cols(w):     # (E, E) -> (NH, E, HD)
        return jnp.stack([w[:, h * HEAD_DIM:(h + 1) * HEAD_DIM] for h in range(NUM_HEADS)], axis=0)

    def split_bias(b):     # (1, E) -> (NH, 1, HD)
        return jnp.stack([b[:, h * HEAD_DIM:(h + 1) * HEAD_DIM] for h in range(NUM_HEADS)], axis=0)

    wqh, wkh, wvh = split_cols(wq_t), split_cols(wk_t), split_cols(wv_t)
    bqh, bkh, bvh = split_bias(bq), split_bias(bk), split_bias(bv)
    woh = jnp.stack([wo_t[h * HEAD_DIM:(h + 1) * HEAD_DIM, :] for h in range(NUM_HEADS)], axis=0)

    B = x.shape[0]
    E = FEATURE_DIM
    args = (x, w_ih1, w_hh1, b1, w_ih2, w_hh2, b2,
            wqh, wkh, wvh, bqh, bkh, bvh, woh, bo)

    return pl.pallas_call(
        _wavelet_fused_kernel,
        out_shape=jax.ShapeDtypeStruct((B, E), jnp.float32),
        grid=(1,),
        in_specs=[_full_spec(a.shape) for a in args],
        out_specs=_full_spec((B, E)),
        compiler_params=pltpu.CompilerParams(dimension_semantics=("arbitrary",)),
    )(*args)


# ---------------------------------------------------------------------
# Deterministic parameter construction (PyTorch shapes, uniform(-1/sqrt(H), 1/sqrt(H))).
# ---------------------------------------------------------------------
def make_params(key):
    H, E = FEATURE_DIM, FEATURE_DIM
    k_lstm = 1.0 / np.sqrt(H)
    lstm_params = []
    d_in = FREQ_DIM
    for _ in range(NUM_LAYERS):
        key, k1, k2, k3, k4 = jax.random.split(key, 5)
        w_ih = jax.random.uniform(k1, (4 * H, d_in), jnp.float32, -k_lstm, k_lstm)
        w_hh = jax.random.uniform(k2, (4 * H, H), jnp.float32, -k_lstm, k_lstm)
        b_ih = jax.random.uniform(k3, (4 * H,), jnp.float32, -k_lstm, k_lstm)
        b_hh = jax.random.uniform(k4, (4 * H,), jnp.float32, -k_lstm, k_lstm)
        lstm_params.append((w_ih.T, w_hh.T, (b_ih + b_hh).reshape(1, 4 * H)))
        d_in = H

    key, k1, k2, k3, k4 = jax.random.split(key, 5)
    k_mha = 1.0 / np.sqrt(E)
    in_proj_w = jax.random.uniform(k1, (3 * E, E), jnp.float32, -k_mha, k_mha)
    in_proj_b = jax.random.uniform(k2, (3 * E,), jnp.float32, -k_mha, k_mha)
    out_w = jax.random.uniform(k3, (E, E), jnp.float32, -k_mha, k_mha)
    out_b = jax.random.uniform(k4, (E,), jnp.float32, -k_mha, k_mha)
    wq_t = in_proj_w[0 * E:1 * E].T
    wk_t = in_proj_w[1 * E:2 * E].T
    wv_t = in_proj_w[2 * E:3 * E].T
    mha = (wq_t, wk_t, wv_t, out_w.T,
           in_proj_b[0 * E:1 * E].reshape(1, E),
           in_proj_b[1 * E:2 * E].reshape(1, E),
           in_proj_b[2 * E:3 * E].reshape(1, E),
           out_b.reshape(1, E))
    return {"lstm": lstm_params, "mha": mha}


# ---------------------------------------------------------------------
# Pure-JAX reference (same math as the PyTorch module) for a sanity check.
# ---------------------------------------------------------------------
def reference_forward(x, params):
    h = x
    B = x.shape[0]
    for (w_ih_t, w_hh_t, b) in params["lstm"]:
        H = w_hh_t.shape[0]

        def step(carry, x_t):
            h_prev, c_prev = carry
            gates = x_t @ w_ih_t + h_prev @ w_hh_t + b[0]
            i = jax.nn.sigmoid(gates[:, 0 * H:1 * H])
            f = jax.nn.sigmoid(gates[:, 1 * H:2 * H])
            g = jnp.tanh(gates[:, 2 * H:3 * H])
            o = jax.nn.sigmoid(gates[:, 3 * H:4 * H])
            c = f * c_prev + i * g
            hh = o * jnp.tanh(c)
            return (hh, c), hh

        x_tm = jnp.transpose(h, (1, 0, 2))
        (_, _), hs = lax.scan(step, (jnp.zeros((B, H)), jnp.zeros((B, H))), x_tm)
        h = jnp.transpose(hs, (1, 0, 2))

    wq_t, wk_t, wv_t, wo_t, bq, bk, bv, bo = params["mha"]
    Bm, T, E = h.shape
    q = h @ wq_t + bq[0]
    k = h @ wk_t + bk[0]
    v = h @ wv_t + bv[0]
    qh = q.reshape(Bm, T, NUM_HEADS, HEAD_DIM).transpose(0, 2, 1, 3)
    kh = k.reshape(Bm, T, NUM_HEADS, HEAD_DIM).transpose(0, 2, 1, 3)
    vh = v.reshape(Bm, T, NUM_HEADS, HEAD_DIM).transpose(0, 2, 1, 3)
    s = jnp.einsum("bhqd,bhkd->bhqk", qh, kh) / (HEAD_DIM ** 0.5)
    p = jax.nn.softmax(s, axis=-1)
    ctx = jnp.einsum("bhqk,bhkd->bhqd", p, vh).transpose(0, 2, 1, 3).reshape(Bm, T, E)
    out = ctx @ wo_t + bo[0]
    return out.mean(axis=1)


if __name__ == "__main__":
    root = jax.random.PRNGKey(0)
    k_x, k_p = jax.random.split(root)
    x = jax.random.normal(k_x, (BATCH, SEQ, FREQ_DIM), dtype=jnp.float32)
    params = make_params(k_p)

    out = wavelet_feature_forward(x, params)
    out = jax.block_until_ready(out)

    ref = jax.block_until_ready(reference_forward(x, params))
    assert out.shape == (BATCH, FEATURE_DIM), out.shape
    np.testing.assert_allclose(np.asarray(out), np.asarray(ref), rtol=1e-2, atol=1e-2)

    # TODO(synk): nn.LSTM inter-layer dropout (default p=0) is not modeled; fine for eval.
    print("KERNEL_OK")
</pallas_src>

<mosaic_0001>
module attributes {stable_mosaic.version = 11 : i64} {
  func.func @_wavelet_fused_kernel(%arg0: i32, %arg1: memref<2x8x16xf32, #tpu.memory_space<vmem>>, %arg2: memref<16x128xf32, #tpu.memory_space<vmem>>, %arg3: memref<32x128xf32, #tpu.memory_space<vmem>>, %arg4: memref<1x128xf32, #tpu.memory_space<vmem>>, %arg5: memref<32x128xf32, #tpu.memory_space<vmem>>, %arg6: memref<32x128xf32, #tpu.memory_space<vmem>>, %arg7: memref<1x128xf32, #tpu.memory_space<vmem>>, %arg8: memref<4x32x8xf32, #tpu.memory_space<vmem>>, %arg9: memref<4x32x8xf32, #tpu.memory_space<vmem>>, %arg10: memref<4x32x8xf32, #tpu.memory_space<vmem>>, %arg11: memref<4x1x8xf32, #tpu.memory_space<vmem>>, %arg12: memref<4x1x8xf32, #tpu.memory_space<vmem>>, %arg13: memref<4x1x8xf32, #tpu.memory_space<vmem>>, %arg14: memref<4x8x32xf32, #tpu.memory_space<vmem>>, %arg15: memref<1x32xf32, #tpu.memory_space<vmem>>, %arg16: memref<2x32xf32, #tpu.memory_space<vmem>>) attributes {dimension_semantics = [#tpu.dimension_semantics<arbitrary>], iteration_bounds = array<i64: 1>, scalar_prefetch = 0 : i64, scratch_operands = 0 : i64, tpu.core_type = #tpu.core_type<tc>, window_params = [{pipeline_mode = #tpu.pipeline_mode<synchronous>, transform_indices = @transform_0, window_bounds = array<i64: 2, 8, 16>}, {pipeline_mode = #tpu.pipeline_mode<synchronous>, transform_indices = @transform_1, window_bounds = array<i64: 16, 128>}, {pipeline_mode = #tpu.pipeline_mode<synchronous>, transform_indices = @transform_2, window_bounds = array<i64: 32, 128>}, {pipeline_mode = #tpu.pipeline_mode<synchronous>, transform_indices = @transform_3, window_bounds = array<i64: 1, 128>}, {pipeline_mode = #tpu.pipeline_mode<synchronous>, transform_indices = @transform_4, window_bounds = array<i64: 32, 128>}, {pipeline_mode = #tpu.pipeline_mode<synchronous>, transform_indices = @transform_5, window_bounds = array<i64: 32, 128>}, {pipeline_mode = #tpu.pipeline_mode<synchronous>, transform_indices = @transform_6, window_bounds = array<i64: 1, 128>}, {pipeline_mode = #tpu.pipeline_mode<synchronous>, transform_indices = @transform_7, window_bounds = array<i64: 4, 32, 8>}, {pipeline_mode = #tpu.pipeline_mode<synchronous>, transform_indices = @transform_8, window_bounds = array<i64: 4, 32, 8>}, {pipeline_mode = #tpu.pipeline_mode<synchronous>, transform_indices = @transform_9, window_bounds = array<i64: 4, 32, 8>}, {pipeline_mode = #tpu.pipeline_mode<synchronous>, transform_indices = @transform_10, window_bounds = array<i64: 4, 1, 8>}, {pipeline_mode = #tpu.pipeline_mode<synchronous>, transform_indices = @transform_11, window_bounds = array<i64: 4, 1, 8>}, {pipeline_mode = #tpu.pipeline_mode<synchronous>, transform_indices = @transform_12, window_bounds = array<i64: 4, 1, 8>}, {pipeline_mode = #tpu.pipeline_mode<synchronous>, transform_indices = @transform_13, window_bounds = array<i64: 4, 8, 32>}, {pipeline_mode = #tpu.pipeline_mode<synchronous>, transform_indices = @transform_14, window_bounds = array<i64: 1, 32>}, {pipeline_mode = #tpu.pipeline_mode<synchronous>, transform_indices = @transform_15, window_bounds = array<i64: 2, 32>}]} {
    %c0 = arith.constant 0 : index
    %c0_0 = arith.constant 0 : index
    %c0_1 = arith.constant 0 : index
    %0 = vector.load %arg1[%c0, %c0_0, %c0_1] : memref<2x8x16xf32, #tpu.memory_space<vmem>>, vector<2x8x16xf32>
    %1 = vector.shape_cast %0 : vector<2x8x16xf32> to vector<16x16xf32>
    %c0_2 = arith.constant 0 : index
    %c0_3 = arith.constant 0 : index
    %2 = vector.load %arg2[%c0_2, %c0_3] : memref<16x128xf32, #tpu.memory_space<vmem>>, vector<16x128xf32>
    %cst = arith.constant dense<0.000000e+00> : vector<16x128xf32>
    %3 = tpu.matmul %1, %2, %cst {dimension_numbers = #tpu.dot_dimension_numbers<[1], [0], [0], [1], [0, 0, 1, 1], [], []>} : vector<16x16xf32>, vector<16x128xf32>, vector<16x128xf32> -> vector<16x128xf32>
    %c0_4 = arith.constant 0 : index
    %c0_5 = arith.constant 0 : index
    %4 = vector.load %arg4[%c0_4, %c0_5] : memref<1x128xf32, #tpu.memory_space<vmem>>, vector<1x128xf32>
    %5 = vector.broadcast %4 : vector<1x128xf32> to vector<16x128xf32>
    %6 = arith.addf %3, %5 : vector<16x128xf32>
    %7 = vector.shape_cast %6 : vector<16x128xf32> to vector<2x8x128xf32>
    %c0_6 = arith.constant 0 : index
    %c0_7 = arith.constant 0 : index
    %8 = vector.load %arg3[%c0_6, %c0_7] : memref<32x128xf32, #tpu.memory_space<vmem>>, vector<32x128xf32>
    %c0_8 = arith.constant 0 : index
    %c0_9 = arith.constant 0 : index
    %9 = vector.load %arg5[%c0_8, %c0_9] : memref<32x128xf32, #tpu.memory_space<vmem>>, vector<32x128xf32>
    %c0_10 = arith.constant 0 : index
    %c0_11 = arith.constant 0 : index
    %10 = vector.load %arg6[%c0_10, %c0_11] : memref<32x128xf32, #tpu.memory_space<vmem>>, vector<32x128xf32>
    %c0_12 = arith.constant 0 : index
    %c0_13 = arith.constant 0 : index
    %11 = vector.load %arg7[%c0_12, %c0_13] : memref<1x128xf32, #tpu.memory_space<vmem>>, vector<1x128xf32>
    %12 = vector.shape_cast %11 : vector<1x128xf32> to vector<1x128xf32>
    %13 = vector.broadcast %12 : vector<1x128xf32> to vector<2x128xf32>
    %cst_14 = arith.constant 0.000000e+00 : f32
    %14 = vector.broadcast %cst_14 : f32 to vector<2x32xf32>
    %cst_15 = arith.constant 0.000000e+00 : f32
    %15 = vector.broadcast %cst_15 : f32 to vector<2x32xf32>
    %cst_16 = arith.constant 0.000000e+00 : f32
    %16 = vector.broadcast %cst_16 : f32 to vector<2x32xf32>
    %cst_17 = arith.constant 0.000000e+00 : f32
    %17 = vector.broadcast %cst_17 : f32 to vector<2x32xf32>
    %18 = vector.extract_strided_slice %7 {offsets = [0, 0, 0], sizes = [2, 1, 128], strides = [1, 1, 1]} : vector<2x8x128xf32> to vector<2x1x128xf32>
    %19 = vector.shape_cast %18 : vector<2x1x128xf32> to vector<2x128xf32>
    %cst_18 = arith.constant dense<0.000000e+00> : vector<2x128xf32>
    %20 = tpu.matmul %14, %8, %cst_18 {dimension_numbers = #tpu.dot_dimension_numbers<[1], [0], [0], [1], [0, 0, 1, 1], [], []>} : vector<2x32xf32>, vector<32x128xf32>, vector<2x128xf32> -> vector<2x128xf32>
    %21 = arith.addf %19, %20 : vector<2x128xf32>
    %22 = arith.negf %21 : vector<2x128xf32>
    %23 = math.exp %22 : vector<2x128xf32>
    %cst_19 = arith.constant 1.000000e+00 : f32
    %24 = vector.broadcast %cst_19 : f32 to vector<2x128xf32>
    %25 = arith.addf %24, %23 : vector<2x128xf32>
    %26 = arith.divf %24, %25 : vector<2x128xf32>
    %27 = math.tanh %21 : vector<2x128xf32>
    %28 = vector.extract_strided_slice %26 {offsets = [0, 0], sizes = [2, 32], strides = [1, 1]} : vector<2x128xf32> to vector<2x32xf32>
    %29 = vector.extract_strided_slice %26 {offsets = [0, 32], sizes = [2, 32], strides = [1, 1]} : vector<2x128xf32> to vector<2x32xf32>
    %30 = vector.extract_strided_slice %27 {offsets = [0, 64], sizes = [2, 32], strides = [1, 1]} : vector<2x128xf32> to vector<2x32xf32>
    %31 = vector.extract_strided_slice %26 {offsets = [0, 96], sizes = [2, 32], strides = [1, 1]} : vector<2x128xf32> to vector<2x32xf32>
    %32 = arith.mulf %29, %15 : vector<2x32xf32>
    %33 = arith.mulf %28, %30 : vector<2x32xf32>
    %34 = arith.addf %32, %33 : vector<2x32xf32>
    %35 = math.tanh %34 : vector<2x32xf32>
    %36 = arith.mulf %31, %35 : vector<2x32xf32>
    %cst_20 = arith.constant dense<0.000000e+00> : vector<2x128xf32>
    %37 = tpu.matmul %36, %9, %cst_20 {dimension_numbers = #tpu.dot_dimension_numbers<[1], [0], [0], [1], [0, 0, 1, 1], [], []>} : vector<2x32xf32>, vector<32x128xf32>, vector<2x128xf32> -> vector<2x128xf32>
    %cst_21 = arith.constant dense<0.000000e+00> : vector<2x128xf32>
    %38 = tpu.matmul %16, %10, %cst_21 {dimension_numbers = #tpu.dot_dimension_numbers<[1], [0], [0], [1], [0, 0, 1, 1], [], []>} : vector<2x32xf32>, vector<32x128xf32>, vector<2x128xf32> -> vector<2x128xf32>
    %39 = arith.addf %37, %38 : vector<2x128xf32>
    %40 = arith.addf %39, %13 : vector<2x128xf32>
    %41 = arith.negf %40 : vector<2x128xf32>
    %42 = math.exp %41 : vector<2x128xf32>
    %cst_22 = arith.constant 1.000000e+00 : f32
    %43 = vector.broadcast %cst_22 : f32 to vector<2x128xf32>
    %44 = arith.addf %43, %42 : vector<2x128xf32>
    %45 = arith.divf %43, %44 : vector<2x128xf32>
    %46 = math.tanh %40 : vector<2x128xf32>
    %47 = vector.extract_strided_slice %45 {offsets = [0, 0], sizes = [2, 32], strides = [1, 1]} : vector<2x128xf32> to vector<2x32xf32>
    %48 = vector.extract_strided_slice %45 {offsets = [0, 32], sizes = [2, 32], strides = [1, 1]} : vector<2x128xf32> to vector<2x32xf32>
    %49 = vector.extract_strided_slice %46 {offsets = [0, 64], sizes = [2, 32], strides = [1, 1]} : vector<2x128xf32> to vector<2x32xf32>
    %50 = vector.extract_strided_slice %45 {offsets = [0, 96], sizes = [2, 32], strides = [1, 1]} : vector<2x128xf32> to vector<2x32xf32>
    %51 = arith.mulf %48, %17 : vector<2x32xf32>
    %52 = arith.mulf %47, %49 : vector<2x32xf32>
    %53 = arith.addf %51, %52 : vector<2x32xf32>
    %54 = math.tanh %53 : vector<2x32xf32>
    %55 = arith.mulf %50, %54 : vector<2x32xf32>
    %56 = vector.extract_strided_slice %7 {offsets = [0, 1, 0], sizes = [2, 1, 128], strides = [1, 1, 1]} : vector<2x8x128xf32> to vector<2x1x128xf32>
    %57 = vector.shape_cast %56 : vector<2x1x128xf32> to vector<2x128xf32>
    %cst_23 = arith.constant dense<0.000000e+00> : vector<2x128xf32>
    %58 = tpu.matmul %36, %8, %cst_23 {dimension_numbers = #tpu.dot_dimension_numbers<[1], [0], [0], [1], [0, 0, 1, 1], [], []>} : vector<2x32xf32>, vector<32x128xf32>, vector<2x128xf32> -> vector<2x128xf32>
    %59 = arith.addf %57, %58 : vector<2x128xf32>
    %60 = arith.negf %59 : vector<2x128xf32>
    %61 = math.exp %60 : vector<2x128xf32>
    %cst_24 = arith.constant 1.000000e+00 : f32
    %62 = vector.broadcast %cst_24 : f32 to vector<2x128xf32>
    %63 = arith.addf %62, %61 : vector<2x128xf32>
    %64 = arith.divf %62, %63 : vector<2x128xf32>
    %65 = math.tanh %59 : vector<2x128xf32>
    %66 = vector.extract_strided_slice %64 {offsets = [0, 0], sizes = [2, 32], strides = [1, 1]} : vector<2x128xf32> to vector<2x32xf32>
    %67 = vector.extract_strided_slice %64 {offsets = [0, 32], sizes = [2, 32], strides = [1, 1]} : vector<2x128xf32> to vector<2x32xf32>
    %68 = vector.extract_strided_slice %65 {offsets = [0, 64], sizes = [2, 32], strides = [1, 1]} : vector<2x128xf32> to vector<2x32xf32>
    %69 = vector.extract_strided_slice %64 {offsets = [0, 96], sizes = [2, 32], strides = [1, 1]} : vector<2x128xf32> to vector<2x32xf32>
    %70 = arith.mulf %67, %34 : vector<2x32xf32>
    %71 = arith.mulf %66, %68 : vector<2x32xf32>
    %72 = arith.addf %70, %71 : vector<2x32xf32>
    %73 = math.tanh %72 : vector<2x32xf32>
    %74 = arith.mulf %69, %73 : vector<2x32xf32>
    %cst_25 = arith.constant dense<0.000000e+00> : vector<2x128xf32>
    %75 = tpu.matmul %74, %9, %cst_25 {dimension_numbers = #tpu.dot_dimension_numbers<[1], [0], [0], [1], [0, 0, 1, 1], [], []>} : vector<2x32xf32>, vector<32x128xf32>, vector<2x128xf32> -> vector<2x128xf32>
    %cst_26 = arith.constant dense<0.000000e+00> : vector<2x128xf32>
    %76 = tpu.matmul %55, %10, %cst_26 {dimension_numbers = #tpu.dot_dimension_numbers<[1], [0], [0], [1], [0, 0, 1, 1], [], []>} : vector<2x32xf32>, vector<32x128xf32>, vector<2x128xf32> -> vector<2x128xf32>
    %77 = arith.addf %75, %76 : vector<2x128xf32>
    %78 = arith.addf %77, %13 : vector<2x128xf32>
    %79 = arith.negf %78 : vector<2x128xf32>
    %80 = math.exp %79 : vector<2x128xf32>
    %cst_27 = arith.constant 1.000000e+00 : f32
    %81 = vector.broadcast %cst_27 : f32 to vector<2x128xf32>
    %82 = arith.addf %81, %80 : vector<2x128xf32>
    %83 = arith.divf %81, %82 : vector<2x128xf32>
    %84 = math.tanh %78 : vector<2x128xf32>
    %85 = vector.extract_strided_slice %83 {offsets = [0, 0], sizes = [2, 32], strides = [1, 1]} : vector<2x128xf32> to vector<2x32xf32>
    %86 = vector.extract_strided_slice %83 {offsets = [0, 32], sizes = [2, 32], strides = [1, 1]} : vector<2x128xf32> to vector<2x32xf32>
    %87 = vector.extract_strided_slice %84 {offsets = [0, 64], sizes = [2, 32], strides = [1, 1]} : vector<2x128xf32> to vector<2x32xf32>
    %88 = vector.extract_strided_slice %83 {offsets = [0, 96], sizes = [2, 32], strides = [1, 1]} : vector<2x128xf32> to vector<2x32xf32>
    %89 = arith.mulf %86, %53 : vector<2x32xf32>
    %90 = arith.mulf %85, %87 : vector<2x32xf32>
    %91 = arith.addf %89, %90 : vector<2x32xf32>
    %92 = math.tanh %91 : vector<2x32xf32>
    %93 = arith.mulf %88, %92 : vector<2x32xf32>
    %94 = vector.extract_strided_slice %7 {offsets = [0, 2, 0], sizes = [2, 1, 128], strides = [1, 1, 1]} : vector<2x8x128xf32> to vector<2x1x128xf32>
    %95 = vector.shape_cast %94 : vector<2x1x128xf32> to vector<2x128xf32>
    %cst_28 = arith.constant dense<0.000000e+00> : vector<2x128xf32>
    %96 = tpu.matmul %74, %8, %cst_28 {dimension_numbers = #tpu.dot_dimension_numbers<[1], [0], [0], [1], [0, 0, 1, 1], [], []>} : vector<2x32xf32>, vector<32x128xf32>, vector<2x128xf32> -> vector<2x128xf32>
    %97 = arith.addf %95, %96 : vector<2x128xf32>
    %98 = arith.negf %97 : vector<2x128xf32>
    %99 = math.exp %98 : vector<2x128xf32>
    %cst_29 = arith.constant 1.000000e+00 : f32
    %100 = vector.broadcast %cst_29 : f32 to vector<2x128xf32>
    %101 = arith.addf %100, %99 : vector<2x128xf32>
    %102 = arith.divf %100, %101 : vector<2x128xf32>
    %103 = math.tanh %97 : vector<2x128xf32>
    %104 = vector.extract_strided_slice %102 {offsets = [0, 0], sizes = [2, 32], strides = [1, 1]} : vector<2x128xf32> to vector<2x32xf32>
    %105 = vector.extract_strided_slice %102 {offsets = [0, 32], sizes = [2, 32], strides = [1, 1]} : vector<2x128xf32> to vector<2x32xf32>
    %106 = vector.extract_strided_slice %103 {offsets = [0, 64], sizes = [2, 32], strides = [1, 1]} : vector<2x128xf32> to vector<2x32xf32>
    %107 = vector.extract_strided_slice %102 {offsets = [0, 96], sizes = [2, 32], strides = [1, 1]} : vector<2x128xf32> to vector<2x32xf32>
    %108 = arith.mulf %105, %72 : vector<2x32xf32>
    %109 = arith.mulf %104, %106 : vector<2x32xf32>
    %110 = arith.addf %108, %109 : vector<2x32xf32>
    %111 = math.tanh %110 : vector<2x32xf32>
    %112 = arith.mulf %107, %111 : vector<2x32xf32>
    %cst_30 = arith.constant dense<0.000000e+00> : vector<2x128xf32>
    %113 = tpu.matmul %112, %9, %cst_30 {dimension_numbers = #tpu.dot_dimension_numbers<[1], [0], [0], [1], [0, 0, 1, 1], [], []>} : vector<2x32xf32>, vector<32x128xf32>, vector<2x128xf32> -> vector<2x128xf32>
    %cst_31 = arith.constant dense<0.000000e+00> : vector<2x128xf32>
    %114 = tpu.matmul %93, %10, %cst_31 {dimension_numbers = #tpu.dot_dimension_numbers<[1], [0], [0], [1], [0, 0, 1, 1], [], []>} : vector<2x32xf32>, vector<32x128xf32>, vector<2x128xf32> -> vector<2x128xf32>
    %115 = arith.addf %113, %114 : vector<2x128xf32>
    %116 = arith.addf %115, %13 : vector<2x128xf32>
    %117 = arith.negf %116 : vector<2x128xf32>
    %118 = math.exp %117 : vector<2x128xf32>
    %cst_32 = arith.constant 1.000000e+00 : f32
    %119 = vector.broadcast %cst_32 : f32 to vector<2x128xf32>
    %120 = arith.addf %119, %118 : vector<2x128xf32>
    %121 = arith.divf %119, %120 : vector<2x128xf32>
    %122 = math.tanh %116 : vector<2x128xf32>
    %123 = vector.extract_strided_slice %121 {offsets = [0, 0], sizes = [2, 32], strides = [1, 1]} : vector<2x128xf32> to vector<2x32xf32>
    %124 = vector.extract_strided_slice %121 {offsets = [0, 32], sizes = [2, 32], strides = [1, 1]} : vector<2x128xf32> to vector<2x32xf32>
    %125 = vector.extract_strided_slice %122 {offsets = [0, 64], sizes = [2, 32], strides = [1, 1]} : vector<2x128xf32> to vector<2x32xf32>
    %126 = vector.extract_strided_slice %121 {offsets = [0, 96], sizes = [2, 32], strides = [1, 1]} : vector<2x128xf32> to vector<2x32xf32>
    %127 = arith.mulf %124, %91 : vector<2x32xf32>
    %128 = arith.mulf %123, %125 : vector<2x32xf32>
    %129 = arith.addf %127, %128 : vector<2x32xf32>
    %130 = math.tanh %129 : vector<2x32xf32>
    %131 = arith.mulf %126, %130 : vector<2x32xf32>
    %132 = vector.extract_strided_slice %7 {offsets = [0, 3, 0], sizes = [2, 1, 128], strides = [1, 1, 1]} : vector<2x8x128xf32> to vector<2x1x128xf32>
    %133 = vector.shape_cast %132 : vector<2x1x128xf32> to vector<2x128xf32>
    %cst_33 = arith.constant dense<0.000000e+00> : vector<2x128xf32>
    %134 = tpu.matmul %112, %8, %cst_33 {dimension_numbers = #tpu.dot_dimension_numbers<[1], [0], [0], [1], [0, 0, 1, 1], [], []>} : vector<2x32xf32>, vector<32x128xf32>, vector<2x128xf32> -> vector<2x128xf32>
    %135 = arith.addf %133, %134 : vector<2x128xf32>
    %136 = arith.negf %135 : vector<2x128xf32>
    %137 = math.exp %136 : vector<2x128xf32>
    %cst_34 = arith.constant 1.000000e+00 : f32
    %138 = vector.broadcast %cst_34 : f32 to vector<2x128xf32>
    %139 = arith.addf %138, %137 : vector<2x128xf32>
    %140 = arith.divf %138, %139 : vector<2x128xf32>
    %141 = math.tanh %135 : vector<2x128xf32>
    %142 = vector.extract_strided_slice %140 {offsets = [0, 0], sizes = [2, 32], strides = [1, 1]} : vector<2x128xf32> to vector<2x32xf32>
    %143 = vector.extract_strided_slice %140 {offsets = [0, 32], sizes = [2, 32], strides = [1, 1]} : vector<2x128xf32> to vector<2x32xf32>
    %144 = vector.extract_strided_slice %141 {offsets = [0, 64], sizes = [2, 32], strides = [1, 1]} : vector<2x128xf32> to vector<2x32xf32>
    %145 = vector.extract_strided_slice %140 {offsets = [0, 96], sizes = [2, 32], strides = [1, 1]} : vector<2x128xf32> to vector<2x32xf32>
    %146 = arith.mulf %143, %110 : vector<2x32xf32>
    %147 = arith.mulf %142, %144 : vector<2x32xf32>
    %148 = arith.addf %146, %147 : vector<2x32xf32>
    %149 = math.tanh %148 : vector<2x32xf32>
    %150 = arith.mulf %145, %149 : vector<2x32xf32>
    %cst_35 = arith.constant dense<0.000000e+00> : vector<2x128xf32>
    %151 = tpu.matmul %150, %9, %cst_35 {dimension_numbers = #tpu.dot_dimension_numbers<[1], [0], [0], [1], [0, 0, 1, 1], [], []>} : vector<2x32xf32>, vector<32x128xf32>, vector<2x128xf32> -> vector<2x128xf32>
    %cst_36 = arith.constant dense<0.000000e+00> : vector<2x128xf32>
    %152 = tpu.matmul %131, %10, %cst_36 {dimension_numbers = #tpu.dot_dimension_numbers<[1], [0], [0], [1], [0, 0, 1, 1], [], []>} : vector<2x32xf32>, vector<32x128xf32>, vector<2x128xf32> -> vector<2x128xf32>
    %153 = arith.addf %151, %152 : vector<2x128xf32>
    %154 = arith.addf %153, %13 : vector<2x128xf32>
    %155 = arith.negf %154 : vector<2x128xf32>
    %156 = math.exp %155 : vector<2x128xf32>
    %cst_37 = arith.constant 1.000000e+00 : f32
    %157 = vector.broadcast %cst_37 : f32 to vector<2x128xf32>
    %158 = arith.addf %157, %156 : vector<2x128xf32>
    %159 = arith.divf %157, %158 : vector<2x128xf32>
    %160 = math.tanh %154 : vector<2x128xf32>
    %161 = vector.extract_strided_slice %159 {offsets = [0, 0], sizes = [2, 32], strides = [1, 1]} : vector<2x128xf32> to vector<2x32xf32>
    %162 = vector.extract_strided_slice %159 {offsets = [0, 32], sizes = [2, 32], strides = [1, 1]} : vector<2x128xf32> to vector<2x32xf32>
    %163 = vector.extract_strided_slice %160 {offsets = [0, 64], sizes = [2, 32], strides = [1, 1]} : vector<2x128xf32> to vector<2x32xf32>
    %164 = vector.extract_strided_slice %159 {offsets = [0, 96], sizes = [2, 32], strides = [1, 1]} : vector<2x128xf32> to vector<2x32xf32>
    %165 = arith.mulf %162, %129 : vector<2x32xf32>
    %166 = arith.mulf %161, %163 : vector<2x32xf32>
    %167 = arith.addf %165, %166 : vector<2x32xf32>
    %168 = math.tanh %167 : vector<2x32xf32>
    %169 = arith.mulf %164, %168 : vector<2x32xf32>
    %170 = vector.extract_strided_slice %7 {offsets = [0, 4, 0], sizes = [2, 1, 128], strides = [1, 1, 1]} : vector<2x8x128xf32> to vector<2x1x128xf32>
    %171 = vector.shape_cast %170 : vector<2x1x128xf32> to vector<2x128xf32>
    %cst_38 = arith.constant dense<0.000000e+00> : vector<2x128xf32>
    %172 = tpu.matmul %150, %8, %cst_38 {dimension_numbers = #tpu.dot_dimension_numbers<[1], [0], [0], [1], [0, 0, 1, 1], [], []>} : vector<2x32xf32>, vector<32x128xf32>, vector<2x128xf32> -> vector<2x128xf32>
    %173 = arith.addf %171, %172 : vector<2x128xf32>
    %174 = arith.negf %173 : vector<2x128xf32>
    %175 = math.exp %174 : vector<2x128xf32>
    %cst_39 = arith.constant 1.000000e+00 : f32
    %176 = vector.broadcast %cst_39 : f32 to vector<2x128xf32>
    %177 = arith.addf %176, %175 : vector<2x128xf32>
    %178 = arith.divf %176, %177 : vector<2x128xf32>
    %179 = math.tanh %173 : vector<2x128xf32>
    %180 = vector.extract_strided_slice %178 {offsets = [0, 0], sizes = [2, 32], strides = [1, 1]} : vector<2x128xf32> to vector<2x32xf32>
    %181 = vector.extract_strided_slice %178 {offsets = [0, 32], sizes = [2, 32], strides = [1, 1]} : vector<2x128xf32> to vector<2x32xf32>
    %182 = vector.extract_strided_slice %179 {offsets = [0, 64], sizes = [2, 32], strides = [1, 1]} : vector<2x128xf32> to vector<2x32xf32>
    %183 = vector.extract_strided_slice %178 {offsets = [0, 96], sizes = [2, 32], strides = [1, 1]} : vector<2x128xf32> to vector<2x32xf32>
    %184 = arith.mulf %181, %148 : vector<2x32xf32>
    %185 = arith.mulf %180, %182 : vector<2x32xf32>
    %186 = arith.addf %184, %185 : vector<2x32xf32>
    %187 = math.tanh %186 : vector<2x32xf32>
    %188 = arith.mulf %183, %187 : vector<2x32xf32>
    %cst_40 = arith.constant dense<0.000000e+00> : vector<2x128xf32>
    %189 = tpu.matmul %188, %9, %cst_40 {dimension_numbers = #tpu.dot_dimension_numbers<[1], [0], [0], [1], [0, 0, 1, 1], [], []>} : vector<2x32xf32>, vector<32x128xf32>, vector<2x128xf32> -> vector<2x128xf32>
    %cst_41 = arith.constant dense<0.000000e+00> : vector<2x128xf32>
    %190 = tpu.matmul %169, %10, %cst_41 {dimension_numbers = #tpu.dot_dimension_numbers<[1], [0], [0], [1], [0, 0, 1, 1], [], []>} : vector<2x32xf32>, vector<32x128xf32>, vector<2x128xf32> -> vector<2x128xf32>
    %191 = arith.addf %189, %190 : vector<2x128xf32>
    %192 = arith.addf %191, %13 : vector<2x128xf32>
    %193 = arith.negf %192 : vector<2x128xf32>
    %194 = math.exp %193 : vector<2x128xf32>
    %cst_42 = arith.constant 1.000000e+00 : f32
    %195 = vector.broadcast %cst_42 : f32 to vector<2x128xf32>
    %196 = arith.addf %195, %194 : vector<2x128xf32>
    %197 = arith.divf %195, %196 : vector<2x128xf32>
    %198 = math.tanh %192 : vector<2x128xf32>
    %199 = vector.extract_strided_slice %197 {offsets = [0, 0], sizes = [2, 32], strides = [1, 1]} : vector<2x128xf32> to vector<2x32xf32>
    %200 = vector.extract_strided_slice %197 {offsets = [0, 32], sizes = [2, 32], strides = [1, 1]} : vector<2x128xf32> to vector<2x32xf32>
    %201 = vector.extract_strided_slice %198 {offsets = [0, 64], sizes = [2, 32], strides = [1, 1]} : vector<2x128xf32> to vector<2x32xf32>
    %202 = vector.extract_strided_slice %197 {offsets = [0, 96], sizes = [2, 32], strides = [1, 1]} : vector<2x128xf32> to vector<2x32xf32>
    %203 = arith.mulf %200, %167 : vector<2x32xf32>
    %204 = arith.mulf %199, %201 : vector<2x32xf32>
    %205 = arith.addf %203, %204 : vector<2x32xf32>
    %206 = math.tanh %205 : vector<2x32xf32>
    %207 = arith.mulf %202, %206 : vector<2x32xf32>
    %208 = vector.extract_strided_slice %7 {offsets = [0, 5, 0], sizes = [2, 1, 128], strides = [1, 1, 1]} : vector<2x8x128xf32> to vector<2x1x128xf32>
    %209 = vector.shape_cast %208 : vector<2x1x128xf32> to vector<2x128xf32>
    %cst_43 = arith.constant dense<0.000000e+00> : vector<2x128xf32>
    %210 = tpu.matmul %188, %8, %cst_43 {dimension_numbers = #tpu.dot_dimension_numbers<[1], [0], [0], [1], [0, 0, 1, 1], [], []>} : vector<2x32xf32>, vector<32x128xf32>, vector<2x128xf32> -> vector<2x128xf32>
    %211 = arith.addf %209, %210 : vector<2x128xf32>
    %212 = arith.negf %211 : vector<2x128xf32>
    %213 = math.exp %212 : vector<2x128xf32>
    %cst_44 = arith.constant 1.000000e+00 : f32
    %214 = vector.broadcast %cst_44 : f32 to vector<2x128xf32>
    %215 = arith.addf %214, %213 : vector<2x128xf32>
    %216 = arith.divf %214, %215 : vector<2x128xf32>
    %217 = math.tanh %211 : vector<2x128xf32>
    %218 = vector.extract_strided_slice %216 {offsets = [0, 0], sizes = [2, 32], strides = [1, 1]} : vector<2x128xf32> to vector<2x32xf32>
    %219 = vector.extract_strided_slice %216 {offsets = [0, 32], sizes = [2, 32], strides = [1, 1]} : vector<2x128xf32> to vector<2x32xf32>
    %220 = vector.extract_strided_slice %217 {offsets = [0, 64], sizes = [2, 32], strides = [1, 1]} : vector<2x128xf32> to vector<2x32xf32>
    %221 = vector.extract_strided_slice %216 {offsets = [0, 96], sizes = [2, 32], strides = [1, 1]} : vector<2x128xf32> to vector<2x32xf32>
    %222 = arith.mulf %219, %186 : vector<2x32xf32>
    %223 = arith.mulf %218, %220 : vector<2x32xf32>
    %224 = arith.addf %222, %223 : vector<2x32xf32>
    %225 = math.tanh %224 : vector<2x32xf32>
    %226 = arith.mulf %221, %225 : vector<2x32xf32>
    %cst_45 = arith.constant dense<0.000000e+00> : vector<2x128xf32>
    %227 = tpu.matmul %226, %9, %cst_45 {dimension_numbers = #tpu.dot_dimension_numbers<[1], [0], [0], [1], [0, 0, 1, 1], [], []>} : vector<2x32xf32>, vector<32x128xf32>, vector<2x128xf32> -> vector<2x128xf32>
    %cst_46 = arith.constant dense<0.000000e+00> : vector<2x128xf32>
    %228 = tpu.matmul %207, %10, %cst_46 {dimension_numbers = #tpu.dot_dimension_numbers<[1], [0], [0], [1], [0, 0, 1, 1], [], []>} : vector<2x32xf32>, vector<32x128xf32>, vector<2x128xf32> -> vector<2x128xf32>
    %229 = arith.addf %227, %228 : vector<2x128xf32>
    %230 = arith.addf %229, %13 : vector<2x128xf32>
    %231 = arith.negf %230 : vector<2x128xf32>
    %232 = math.exp %231 : vector<2x128xf32>
    %cst_47 = arith.constant 1.000000e+00 : f32
    %233 = vector.broadcast %cst_47 : f32 to vector<2x128xf32>
    %234 = arith.addf %233, %232 : vector<2x128xf32>
    %235 = arith.divf %233, %234 : vector<2x128xf32>
    %236 = math.tanh %230 : vector<2x128xf32>
    %237 = vector.extract_strided_slice %235 {offsets = [0, 0], sizes = [2, 32], strides = [1, 1]} : vector<2x128xf32> to vector<2x32xf32>
    %238 = vector.extract_strided_slice %235 {offsets = [0, 32], sizes = [2, 32], strides = [1, 1]} : vector<2x128xf32> to vector<2x32xf32>
    %239 = vector.extract_strided_slice %236 {offsets = [0, 64], sizes = [2, 32], strides = [1, 1]} : vector<2x128xf32> to vector<2x32xf32>
    %240 = vector.extract_strided_slice %235 {offsets = [0, 96], sizes = [2, 32], strides = [1, 1]} : vector<2x128xf32> to vector<2x32xf32>
    %241 = arith.mulf %238, %205 : vector<2x32xf32>
    %242 = arith.mulf %237, %239 : vector<2x32xf32>
    %243 = arith.addf %241, %242 : vector<2x32xf32>
    %244 = math.tanh %243 : vector<2x32xf32>
    %245 = arith.mulf %240, %244 : vector<2x32xf32>
    %246 = vector.extract_strided_slice %7 {offsets = [0, 6, 0], sizes = [2, 1, 128], strides = [1, 1, 1]} : vector<2x8x128xf32> to vector<2x1x128xf32>
    %247 = vector.shape_cast %246 : vector<2x1x128xf32> to vector<2x128xf32>
    %cst_48 = arith.constant dense<0.000000e+00> : vector<2x128xf32>
    %248 = tpu.matmul %226, %8, %cst_48 {dimension_numbers = #tpu.dot_dimension_numbers<[1], [0], [0], [1], [0, 0, 1, 1], [], []>} : vector<2x32xf32>, vector<32x128xf32>, vector<2x128xf32> -> vector<2x128xf32>
    %249 = arith.addf %247, %248 : vector<2x128xf32>
    %250 = arith.negf %249 : vector<2x128xf32>
    %251 = math.exp %250 : vector<2x128xf32>
    %cst_49 = arith.constant 1.000000e+00 : f32
    %252 = vector.broadcast %cst_49 : f32 to vector<2x128xf32>
    %253 = arith.addf %252, %251 : vector<2x128xf32>
    %254 = arith.divf %252, %253 : vector<2x128xf32>
    %255 = math.tanh %249 : vector<2x128xf32>
    %256 = vector.extract_strided_slice %254 {offsets = [0, 0], sizes = [2, 32], strides = [1, 1]} : vector<2x128xf32> to vector<2x32xf32>
    %257 = vector.extract_strided_slice %254 {offsets = [0, 32], sizes = [2, 32], strides = [1, 1]} : vector<2x128xf32> to vector<2x32xf32>
    %258 = vector.extract_strided_slice %255 {offsets = [0, 64], sizes = [2, 32], strides = [1, 1]} : vector<2x128xf32> to vector<2x32xf32>
    %259 = vector.extract_strided_slice %254 {offsets = [0, 96], sizes = [2, 32], strides = [1, 1]} : vector<2x128xf32> to vector<2x32xf32>
    %260 = arith.mulf %257, %224 : vector<2x32xf32>
    %261 = arith.mulf %256, %258 : vector<2x32xf32>
    %262 = arith.addf %260, %261 : vector<2x32xf32>
    %263 = math.tanh %262 : vector<2x32xf32>
    %264 = arith.mulf %259, %263 : vector<2x32xf32>
    %cst_50 = arith.constant dense<0.000000e+00> : vector<2x128xf32>
    %265 = tpu.matmul %264, %9, %cst_50 {dimension_numbers = #tpu.dot_dimension_numbers<[1], [0], [0], [1], [0, 0, 1, 1], [], []>} : vector<2x32xf32>, vector<32x128xf32>, vector<2x128xf32> -> vector<2x128xf32>
    %cst_51 = arith.constant dense<0.000000e+00> : vector<2x128xf32>
    %266 = tpu.matmul %245, %10, %cst_51 {dimension_numbers = #tpu.dot_dimension_numbers<[1], [0], [0], [1], [0, 0, 1, 1], [], []>} : vector<2x32xf32>, vector<32x128xf32>, vector<2x128xf32> -> vector<2x128xf32>
    %267 = arith.addf %265, %266 : vector<2x128xf32>
    %268 = arith.addf %267, %13 : vector<2x128xf32>
    %269 = arith.negf %268 : vector<2x128xf32>
    %270 = math.exp %269 : vector<2x128xf32>
    %cst_52 = arith.constant 1.000000e+00 : f32
    %271 = vector.broadcast %cst_52 : f32 to vector<2x128xf32>
    %272 = arith.addf %271, %270 : vector<2x128xf32>
    %273 = arith.divf %271, %272 : vector<2x128xf32>
    %274 = math.tanh %268 : vector<2x128xf32>
    %275 = vector.extract_strided_slice %273 {offsets = [0, 0], sizes = [2, 32], strides = [1, 1]} : vector<2x128xf32> to vector<2x32xf32>
    %276 = vector.extract_strided_slice %273 {offsets = [0, 32], sizes = [2, 32], strides = [1, 1]} : vector<2x128xf32> to vector<2x32xf32>
    %277 = vector.extract_strided_slice %274 {offsets = [0, 64], sizes = [2, 32], strides = [1, 1]} : vector<2x128xf32> to vector<2x32xf32>
    %278 = vector.extract_strided_slice %273 {offsets = [0, 96], sizes = [2, 32], strides = [1, 1]} : vector<2x128xf32> to vector<2x32xf32>
    %279 = arith.mulf %276, %243 : vector<2x32xf32>
    %280 = arith.mulf %275, %277 : vector<2x32xf32>
    %281 = arith.addf %279, %280 : vector<2x32xf32>
    %282 = math.tanh %281 : vector<2x32xf32>
    %283 = arith.mulf %278, %282 : vector<2x32xf32>
    %284 = vector.extract_strided_slice %7 {offsets = [0, 7, 0], sizes = [2, 1, 128], strides = [1, 1, 1]} : vector<2x8x128xf32> to vector<2x1x128xf32>
    %285 = vector.shape_cast %284 : vector<2x1x128xf32> to vector<2x128xf32>
    %cst_53 = arith.constant dense<0.000000e+00> : vector<2x128xf32>
    %286 = tpu.matmul %264, %8, %cst_53 {dimension_numbers = #tpu.dot_dimension_numbers<[1], [0], [0], [1], [0, 0, 1, 1], [], []>} : vector<2x32xf32>, vector<32x128xf32>, vector<2x128xf32> -> vector<2x128xf32>
    %287 = arith.addf %285, %286 : vector<2x128xf32>
    %288 = arith.negf %287 : vector<2x128xf32>
    %289 = math.exp %288 : vector<2x128xf32>
    %cst_54 = arith.constant 1.000000e+00 : f32
    %290 = vector.broadcast %cst_54 : f32 to vector<2x128xf32>
    %291 = arith.addf %290, %289 : vector<2x128xf32>
    %292 = arith.divf %290, %291 : vector<2x128xf32>
    %293 = math.tanh %287 : vector<2x128xf32>
    %294 = vector.extract_strided_slice %292 {offsets = [0, 0], sizes = [2, 32], strides = [1, 1]} : vector<2x128xf32> to vector<2x32xf32>
    %295 = vector.extract_strided_slice %292 {offsets = [0, 32], sizes = [2, 32], strides = [1, 1]} : vector<2x128xf32> to vector<2x32xf32>
    %296 = vector.extract_strided_slice %293 {offsets = [0, 64], sizes = [2, 32], strides = [1, 1]} : vector<2x128xf32> to vector<2x32xf32>
    %297 = vector.extract_strided_slice %292 {offsets = [0, 96], sizes = [2, 32], strides = [1, 1]} : vector<2x128xf32> to vector<2x32xf32>
    %298 = arith.mulf %295, %262 : vector<2x32xf32>
    %299 = arith.mulf %294, %296 : vector<2x32xf32>
    %300 = arith.addf %298, %299 : vector<2x32xf32>
    %301 = math.tanh %300 : vector<2x32xf32>
    %302 = arith.mulf %297, %301 : vector<2x32xf32>
    %cst_55 = arith.constant dense<0.000000e+00> : vector<2x128xf32>
    %303 = tpu.matmul %302, %9, %cst_55 {dimension_numbers = #tpu.dot_dimension_numbers<[1], [0], [0], [1], [0, 0, 1, 1], [], []>} : vector<2x32xf32>, vector<32x128xf32>, vector<2x128xf32> -> vector<2x128xf32>
    %cst_56 = arith.constant dense<0.000000e+00> : vector<2x128xf32>
    %304 = tpu.matmul %283, %10, %cst_56 {dimension_numbers = #tpu.dot_dimension_numbers<[1], [0], [0], [1], [0, 0, 1, 1], [], []>} : vector<2x32xf32>, vector<32x128xf32>, vector<2x128xf32> -> vector<2x128xf32>
    %305 = arith.addf %303, %304 : vector<2x128xf32>
    %306 = arith.addf %305, %13 : vector<2x128xf32>
    %307 = arith.negf %306 : vector<2x128xf32>
    %308 = math.exp %307 : vector<2x128xf32>
    %cst_57 = arith.constant 1.000000e+00 : f32
    %309 = vector.broadcast %cst_57 : f32 to vector<2x128xf32>
    %310 = arith.addf %309, %308 : vector<2x128xf32>
    %311 = arith.divf %309, %310 : vector<2x128xf32>
    %312 = math.tanh %306 : vector<2x128xf32>
    %313 = vector.extract_strided_slice %311 {offsets = [0, 0], sizes = [2, 32], strides = [1, 1]} : vector<2x128xf32> to vector<2x32xf32>
    %314 = vector.extract_strided_slice %311 {offsets = [0, 32], sizes = [2, 32], strides = [1, 1]} : vector<2x128xf32> to vector<2x32xf32>
    %315 = vector.extract_strided_slice %312 {offsets = [0, 64], sizes = [2, 32], strides = [1, 1]} : vector<2x128xf32> to vector<2x32xf32>
    %316 = vector.extract_strided_slice %311 {offsets = [0, 96], sizes = [2, 32], strides = [1, 1]} : vector<2x128xf32> to vector<2x32xf32>
    %317 = arith.mulf %314, %281 : vector<2x32xf32>
    %318 = arith.mulf %313, %315 : vector<2x32xf32>
    %319 = arith.addf %317, %318 : vector<2x32xf32>
    %320 = math.tanh %319 : vector<2x32xf32>
    %321 = arith.mulf %316, %320 : vector<2x32xf32>
    %322 = vector.shape_cast %55 : vector<2x32xf32> to vector<2x1x32xf32>
    %323 = vector.shape_cast %93 : vector<2x32xf32> to vector<2x1x32xf32>
    %324 = vector.shape_cast %131 : vector<2x32xf32> to vector<2x1x32xf32>
    %325 = vector.shape_cast %169 : vector<2x32xf32> to vector<2x1x32xf32>
    %326 = vector.shape_cast %207 : vector<2x32xf32> to vector<2x1x32xf32>
    %327 = vector.shape_cast %245 : vector<2x32xf32> to vector<2x1x32xf32>
    %328 = vector.shape_cast %283 : vector<2x32xf32> to vector<2x1x32xf32>
    %329 = vector.shape_cast %321 : vector<2x32xf32> to vector<2x1x32xf32>
    %330 = tpu.concatenate %322, %323, %324, %325, %326, %327, %328, %329 in 1 : vector<2x1x32xf32>, vector<2x1x32xf32>, vector<2x1x32xf32>, vector<2x1x32xf32>, vector<2x1x32xf32>, vector<2x1x32xf32>, vector<2x1x32xf32>, vector<2x1x32xf32> -> vector<2x8x32xf32>
    %331 = vector.shape_cast %330 : vector<2x8x32xf32> to vector<16x32xf32>
    %cst_58 = arith.constant 0.000000e+00 : f32
    %332 = vector.broadcast %cst_58 : f32 to vector<2x32xf32>
    %c0_59 = arith.constant 0 : index
    %c0_60 = arith.constant 0 : index
    %c0_61 = arith.constant 0 : index
    %333 = vector.load %arg8[%c0_59, %c0_60, %c0_61] : memref<4x32x8xf32, #tpu.memory_space<vmem>>, vector<1x32x8xf32>
    %334 = vector.shape_cast %333 : vector<1x32x8xf32> to vector<32x8xf32>
    %cst_62 = arith.constant dense<0.000000e+00> : vector<16x8xf32>
    %335 = tpu.matmul %331, %334, %cst_62 {dimension_numbers = #tpu.dot_dimension_numbers<[1], [0], [0], [1], [0, 0, 1, 1], [], []>} : vector<16x32xf32>, vector<32x8xf32>, vector<16x8xf32> -> vector<16x8xf32>
    %c0_63 = arith.constant 0 : index
    %c0_64 = arith.constant 0 : index
    %c0_65 = arith.constant 0 : index
    %336 = vector.load %arg11[%c0_63, %c0_64, %c0_65] : memref<4x1x8xf32, #tpu.memory_space<vmem>>, vector<1x1x8xf32>
    %337 = vector.shape_cast %336 : vector<1x1x8xf32> to vector<1x8xf32>
    %338 = vector.broadcast %337 : vector<1x8xf32> to vector<16x8xf32>
    %339 = arith.addf %335, %338 : vector<16x8xf32>
    %c0_66 = arith.constant 0 : index
    %c0_67 = arith.constant 0 : index
    %c0_68 = arith.constant 0 : index
    %340 = vector.load %arg9[%c0_66, %c0_67, %c0_68] : memref<4x32x8xf32, #tpu.memory_space<vmem>>, vector<1x32x8xf32>
    %341 = vector.shape_cast %340 : vector<1x32x8xf32> to vector<32x8xf32>
    %cst_69 = arith.constant dense<0.000000e+00> : vector<16x8xf32>
    %342 = tpu.matmul %331, %341, %cst_69 {dimension_numbers = #tpu.dot_dimension_numbers<[1], [0], [0], [1], [0, 0, 1, 1], [], []>} : vector<16x32xf32>, vector<32x8xf32>, vector<16x8xf32> -> vector<16x8xf32>
    %c0_70 = arith.constant 0 : index
    %c0_71 = arith.constant 0 : index
    %c0_72 = arith.constant 0 : index
    %343 = vector.load %arg12[%c0_70, %c0_71, %c0_72] : memref<4x1x8xf32, #tpu.memory_space<vmem>>, vector<1x1x8xf32>
    %344 = vector.shape_cast %343 : vector<1x1x8xf32> to vector<1x8xf32>
    %345 = vector.broadcast %344 : vector<1x8xf32> to vector<16x8xf32>
    %346 = arith.addf %342, %345 : vector<16x8xf32>
    %c0_73 = arith.constant 0 : index
    %c0_74 = arith.constant 0 : index
    %c0_75 = arith.constant 0 : index
    %347 = vector.load %arg10[%c0_73, %c0_74, %c0_75] : memref<4x32x8xf32, #tpu.memory_space<vmem>>, vector<1x32x8xf32>
    %348 = vector.shape_cast %347 : vector<1x32x8xf32> to vector<32x8xf32>
    %cst_76 = arith.constant dense<0.000000e+00> : vector<16x8xf32>
    %349 = tpu.matmul %331, %348, %cst_76 {dimension_numbers = #tpu.dot_dimension_numbers<[1], [0], [0], [1], [0, 0, 1, 1], [], []>} : vector<16x32xf32>, vector<32x8xf32>, vector<16x8xf32> -> vector<16x8xf32>
    %c0_77 = arith.constant 0 : index
    %c0_78 = arith.constant 0 : index
    %c0_79 = arith.constant 0 : index
    %350 = vector.load %arg13[%c0_77, %c0_78, %c0_79] : memref<4x1x8xf32, #tpu.memory_space<vmem>>, vector<1x1x8xf32>
    %351 = vector.shape_cast %350 : vector<1x1x8xf32> to vector<1x8xf32>
    %352 = vector.broadcast %351 : vector<1x8xf32> to vector<16x8xf32>
    %353 = arith.addf %349, %352 : vector<16x8xf32>
    %354 = vector.shape_cast %339 : vector<16x8xf32> to vector<2x8x8xf32>
    %355 = vector.shape_cast %346 : vector<16x8xf32> to vector<2x8x8xf32>
    %356 = vector.shape_cast %353 : vector<16x8xf32> to vector<2x8x8xf32>
    "tpu.trace_start"() <{level = 10 : i32, message = "btd,bsd->bts"}> : () -> ()
    %cst_80 = arith.constant dense<0.000000e+00> : vector<2x8x8xf32>
    %357 = tpu.matmul %354, %355, %cst_80 {dimension_numbers = #tpu.dot_dimension_numbers<[2], [2], [1], [1], [0, 0, 0, 1, 1, 1], [0], [0]>} : vector<2x8x8xf32>, vector<2x8x8xf32>, vector<2x8x8xf32> -> vector<2x8x8xf32>
    "tpu.trace_stop"() : () -> ()
    %cst_81 = arith.constant 0.353553385 : f32
    %358 = vector.broadcast %cst_81 : f32 to vector<2x8x8xf32>
    %359 = arith.mulf %357, %358 : vector<2x8x8xf32>
    %cst_82 = arith.constant dense<0xFF800000> : vector<2x8xf32>
    %360 = vector.multi_reduction <maximumf>, %359, %cst_82 [2] : vector<2x8x8xf32> to vector<2x8xf32>
    %cst_83 = arith.constant 0xFF800000 : f32
    %361 = vector.broadcast %cst_83 : f32 to vector<2x8xf32>
    %362 = arith.maximumf %361, %360 : vector<2x8xf32>
    %363 = vector.shape_cast %362 : vector<2x8xf32> to vector<2x8x1xf32>
    %364 = vector.broadcast %363 : vector<2x8x1xf32> to vector<2x8x8xf32>
    %365 = arith.subf %359, %364 : vector<2x8x8xf32>
    %366 = math.exp %365 : vector<2x8x8xf32>
    %cst_84 = arith.constant dense<0.000000e+00> : vector<2x8xf32>
    %367 = vector.multi_reduction <add>, %366, %cst_84 [2] : vector<2x8x8xf32> to vector<2x8xf32>
    %368 = vector.shape_cast %367 : vector<2x8xf32> to vector<2x8x1xf32>
    %369 = vector.broadcast %368 : vector<2x8x1xf32> to vector<2x8x8xf32>
    %370 = arith.divf %366, %369 : vector<2x8x8xf32>
    "tpu.trace_start"() <{level = 10 : i32, message = "bts,bsd->btd"}> : () -> ()
    %cst_85 = arith.constant dense<0.000000e+00> : vector<2x8x8xf32>
    %371 = tpu.matmul %370, %356, %cst_85 {dimension_numbers = #tpu.dot_dimension_numbers<[2], [1], [1], [2], [0, 0, 0, 1, 1, 2], [0], [0]>} : vector<2x8x8xf32>, vector<2x8x8xf32>, vector<2x8x8xf32> -> vector<2x8x8xf32>
    "tpu.trace_stop"() : () -> ()
    %cst_86 = arith.constant dense<0.000000e+00> : vector<2x8xf32>
    %372 = vector.multi_reduction <add>, %371, %cst_86 [1] : vector<2x8x8xf32> to vector<2x8xf32>
    %cst_87 = arith.constant 8.000000e+00 : f32
    %373 = vector.broadcast %cst_87 : f32 to vector<2x8xf32>
    %374 = arith.divf %372, %373 : vector<2x8xf32>
    %c0_88 = arith.constant 0 : index
    %c0_89 = arith.constant 0 : index
    %c0_90 = arith.constant 0 : index
    %375 = vector.load %arg14[%c0_88, %c0_89, %c0_90] : memref<4x8x32xf32, #tpu.memory_space<vmem>>, vector<1x8x32xf32>
    %376 = vector.shape_cast %375 : vector<1x8x32xf32> to vector<8x32xf32>
    %cst_91 = arith.constant dense<0.000000e+00> : vector<2x32xf32>
    %377 = tpu.matmul %374, %376, %cst_91 {dimension_numbers = #tpu.dot_dimension_numbers<[1], [0], [0], [1], [0, 0, 1, 1], [], []>} : vector<2x8xf32>, vector<8x32xf32>, vector<2x32xf32> -> vector<2x32xf32>
    %378 = arith.addf %332, %377 : vector<2x32xf32>
    %c1 = arith.constant 1 : index
    %c0_92 = arith.constant 0 : index
    %c0_93 = arith.constant 0 : index
    %379 = vector.load %arg8[%c1, %c0_92, %c0_93] : memref<4x32x8xf32, #tpu.memory_space<vmem>>, vector<1x32x8xf32>
    %380 = vector.shape_cast %379 : vector<1x32x8xf32> to vector<32x8xf32>
    %cst_94 = arith.constant dense<0.000000e+00> : vector<16x8xf32>
    %381 = tpu.matmul %331, %380, %cst_94 {dimension_numbers = #tpu.dot_dimension_numbers<[1], [0], [0], [1], [0, 0, 1, 1], [], []>} : vector<16x32xf32>, vector<32x8xf32>, vector<16x8xf32> -> vector<16x8xf32>
    %c1_95 = arith.constant 1 : index
    %c0_96 = arith.constant 0 : index
    %c0_97 = arith.constant 0 : index
    %382 = vector.load %arg11[%c1_95, %c0_96, %c0_97] : memref<4x1x8xf32, #tpu.memory_space<vmem>>, vector<1x1x8xf32>
    %383 = vector.shape_cast %382 : vector<1x1x8xf32> to vector<1x8xf32>
    %384 = vector.broadcast %383 : vector<1x8xf32> to vector<16x8xf32>
    %385 = arith.addf %381, %384 : vector<16x8xf32>
    %c1_98 = arith.constant 1 : index
    %c0_99 = arith.constant 0 : index
    %c0_100 = arith.constant 0 : index
    %386 = vector.load %arg9[%c1_98, %c0_99, %c0_100] : memref<4x32x8xf32, #tpu.memory_space<vmem>>, vector<1x32x8xf32>
    %387 = vector.shape_cast %386 : vector<1x32x8xf32> to vector<32x8xf32>
    %cst_101 = arith.constant dense<0.000000e+00> : vector<16x8xf32>
    %388 = tpu.matmul %331, %387, %cst_101 {dimension_numbers = #tpu.dot_dimension_numbers<[1], [0], [0], [1], [0, 0, 1, 1], [], []>} : vector<16x32xf32>, vector<32x8xf32>, vector<16x8xf32> -> vector<16x8xf32>
    %c1_102 = arith.constant 1 : index
    %c0_103 = arith.constant 0 : index
    %c0_104 = arith.constant 0 : index
    %389 = vector.load %arg12[%c1_102, %c0_103, %c0_104] : memref<4x1x8xf32, #tpu.memory_space<vmem>>, vector<1x1x8xf32>
    %390 = vector.shape_cast %389 : vector<1x1x8xf32> to vector<1x8xf32>
    %391 = vector.broadcast %390 : vector<1x8xf32> to vector<16x8xf32>
    %392 = arith.addf %388, %391 : vector<16x8xf32>
    %c1_105 = arith.constant 1 : index
    %c0_106 = arith.constant 0 : index
    %c0_107 = arith.constant 0 : index
    %393 = vector.load %arg10[%c1_105, %c0_106, %c0_107] : memref<4x32x8xf32, #tpu.memory_space<vmem>>, vector<1x32x8xf32>
    %394 = vector.shape_cast %393 : vector<1x32x8xf32> to vector<32x8xf32>
    %cst_108 = arith.constant dense<0.000000e+00> : vector<16x8xf32>
    %395 = tpu.matmul %331, %394, %cst_108 {dimension_numbers = #tpu.dot_dimension_numbers<[1], [0], [0], [1], [0, 0, 1, 1], [], []>} : vector<16x32xf32>, vector<32x8xf32>, vector<16x8xf32> -> vector<16x8xf32>
    %c1_109 = arith.constant 1 : index
    %c0_110 = arith.constant 0 : index
    %c0_111 = arith.constant 0 : index
    %396 = vector.load %arg13[%c1_109, %c0_110, %c0_111] : memref<4x1x8xf32, #tpu.memory_space<vmem>>, vector<1x1x8xf32>
    %397 = vector.shape_cast %396 : vector<1x1x8xf32> to vector<1x8xf32>
    %398 = vector.broadcast %397 : vector<1x8xf32> to vector<16x8xf32>
    %399 = arith.addf %395, %398 : vector<16x8xf32>
    %400 = vector.shape_cast %385 : vector<16x8xf32> to vector<2x8x8xf32>
    %401 = vector.shape_cast %392 : vector<16x8xf32> to vector<2x8x8xf32>
    %402 = vector.shape_cast %399 : vector<16x8xf32> to vector<2x8x8xf32>
    "tpu.trace_start"() <{level = 10 : i32, message = "btd,bsd->bts"}> : () -> ()
    %cst_112 = arith.constant dense<0.000000e+00> : vector<2x8x8xf32>
    %403 = tpu.matmul %400, %401, %cst_112 {dimension_numbers = #tpu.dot_dimension_numbers<[2], [2], [1], [1], [0, 0, 0, 1, 1, 1], [0], [0]>} : vector<2x8x8xf32>, vector<2x8x8xf32>, vector<2x8x8xf32> -> vector<2x8x8xf32>
    "tpu.trace_stop"() : () -> ()
    %cst_113 = arith.constant 0.353553385 : f32
    %404 = vector.broadcast %cst_113 : f32 to vector<2x8x8xf32>
    %405 = arith.mulf %403, %404 : vector<2x8x8xf32>
    %cst_114 = arith.constant dense<0xFF800000> : vector<2x8xf32>
    %406 = vector.multi_reduction <maximumf>, %405, %cst_114 [2] : vector<2x8x8xf32> to vector<2x8xf32>
    %cst_115 = arith.constant 0xFF800000 : f32
    %407 = vector.broadcast %cst_115 : f32 to vector<2x8xf32>
    %408 = arith.maximumf %407, %406 : vector<2x8xf32>
    %409 = vector.shape_cast %408 : vector<2x8xf32> to vector<2x8x1xf32>
    %410 = vector.broadcast %409 : vector<2x8x1xf32> to vector<2x8x8xf32>
    %411 = arith.subf %405, %410 : vector<2x8x8xf32>
    %412 = math.exp %411 : vector<2x8x8xf32>
    %cst_116 = arith.constant dense<0.000000e+00> : vector<2x8xf32>
    %413 = vector.multi_reduction <add>, %412, %cst_116 [2] : vector<2x8x8xf32> to vector<2x8xf32>
    %414 = vector.shape_cast %413 : vector<2x8xf32> to vector<2x8x1xf32>
    %415 = vector.broadcast %414 : vector<2x8x1xf32> to vector<2x8x8xf32>
    %416 = arith.divf %412, %415 : vector<2x8x8xf32>
    "tpu.trace_start"() <{level = 10 : i32, message = "bts,bsd->btd"}> : () -> ()
    %cst_117 = arith.constant dense<0.000000e+00> : vector<2x8x8xf32>
    %417 = tpu.matmul %416, %402, %cst_117 {dimension_numbers = #tpu.dot_dimension_numbers<[2], [1], [1], [2], [0, 0, 0, 1, 1, 2], [0], [0]>} : vector<2x8x8xf32>, vector<2x8x8xf32>, vector<2x8x8xf32> -> vector<2x8x8xf32>
    "tpu.trace_stop"() : () -> ()
    %cst_118 = arith.constant dense<0.000000e+00> : vector<2x8xf32>
    %418 = vector.multi_reduction <add>, %417, %cst_118 [1] : vector<2x8x8xf32> to vector<2x8xf32>
    %cst_119 = arith.constant 8.000000e+00 : f32
    %419 = vector.broadcast %cst_119 : f32 to vector<2x8xf32>
    %420 = arith.divf %418, %419 : vector<2x8xf32>
    %c1_120 = arith.constant 1 : index
    %c0_121 = arith.constant 0 : index
    %c0_122 = arith.constant 0 : index
    %421 = vector.load %arg14[%c1_120, %c0_121, %c0_122] : memref<4x8x32xf32, #tpu.memory_space<vmem>>, vector<1x8x32xf32>
    %422 = vector.shape_cast %421 : vector<1x8x32xf32> to vector<8x32xf32>
    %cst_123 = arith.constant dense<0.000000e+00> : vector<2x32xf32>
    %423 = tpu.matmul %420, %422, %cst_123 {dimension_numbers = #tpu.dot_dimension_numbers<[1], [0], [0], [1], [0, 0, 1, 1], [], []>} : vector<2x8xf32>, vector<8x32xf32>, vector<2x32xf32> -> vector<2x32xf32>
    %424 = arith.addf %378, %423 : vector<2x32xf32>
    %c2 = arith.constant 2 : index
    %c0_124 = arith.constant 0 : index
    %c0_125 = arith.constant 0 : index
    %425 = vector.load %arg8[%c2, %c0_124, %c0_125] : memref<4x32x8xf32, #tpu.memory_space<vmem>>, vector<1x32x8xf32>
    %426 = vector.shape_cast %425 : vector<1x32x8xf32> to vector<32x8xf32>
    %cst_126 = arith.constant dense<0.000000e+00> : vector<16x8xf32>
    %427 = tpu.matmul %331, %426, %cst_126 {dimension_numbers = #tpu.dot_dimension_numbers<[1], [0], [0], [1], [0, 0, 1, 1], [], []>} : vector<16x32xf32>, vector<32x8xf32>, vector<16x8xf32> -> vector<16x8xf32>
    %c2_127 = arith.constant 2 : index
    %c0_128 = arith.constant 0 : index
    %c0_129 = arith.constant 0 : index
    %428 = vector.load %arg11[%c2_127, %c0_128, %c0_129] : memref<4x1x8xf32, #tpu.memory_space<vmem>>, vector<1x1x8xf32>
    %429 = vector.shape_cast %428 : vector<1x1x8xf32> to vector<1x8xf32>
    %430 = vector.broadcast %429 : vector<1x8xf32> to vector<16x8xf32>
    %431 = arith.addf %427, %430 : vector<16x8xf32>
    %c2_130 = arith.constant 2 : index
    %c0_131 = arith.constant 0 : index
    %c0_132 = arith.constant 0 : index
    %432 = vector.load %arg9[%c2_130, %c0_131, %c0_132] : memref<4x32x8xf32, #tpu.memory_space<vmem>>, vector<1x32x8xf32>
    %433 = vector.shape_cast %432 : vector<1x32x8xf32> to vector<32x8xf32>
    %cst_133 = arith.constant dense<0.000000e+00> : vector<16x8xf32>
    %434 = tpu.matmul %331, %433, %cst_133 {dimension_numbers = #tpu.dot_dimension_numbers<[1], [0], [0], [1], [0, 0, 1, 1], [], []>} : vector<16x32xf32>, vector<32x8xf32>, vector<16x8xf32> -> vector<16x8xf32>
    %c2_134 = arith.constant 2 : index
    %c0_135 = arith.constant 0 : index
    %c0_136 = arith.constant 0 : index
    %435 = vector.load %arg12[%c2_134, %c0_135, %c0_136] : memref<4x1x8xf32, #tpu.memory_space<vmem>>, vector<1x1x8xf32>
    %436 = vector.shape_cast %435 : vector<1x1x8xf32> to vector<1x8xf32>
    %437 = vector.broadcast %436 : vector<1x8xf32> to vector<16x8xf32>
    %438 = arith.addf %434, %437 : vector<16x8xf32>
    %c2_137 = arith.constant 2 : index
    %c0_138 = arith.constant 0 : index
    %c0_139 = arith.constant 0 : index
    %439 = vector.load %arg10[%c2_137, %c0_138, %c0_139] : memref<4x32x8xf32, #tpu.memory_space<vmem>>, vector<1x32x8xf32>
    %440 = vector.shape_cast %439 : vector<1x32x8xf32> to vector<32x8xf32>
    %cst_140 = arith.constant dense<0.000000e+00> : vector<16x8xf32>
    %441 = tpu.matmul %331, %440, %cst_140 {dimension_numbers = #tpu.dot_dimension_numbers<[1], [0], [0], [1], [0, 0, 1, 1], [], []>} : vector<16x32xf32>, vector<32x8xf32>, vector<16x8xf32> -> vector<16x8xf32>
    %c2_141 = arith.constant 2 : index
    %c0_142 = arith.constant 0 : index
    %c0_143 = arith.constant 0 : index
    %442 = vector.load %arg13[%c2_141, %c0_142, %c0_143] : memref<4x1x8xf32, #tpu.memory_space<vmem>>, vector<1x1x8xf32>
    %443 = vector.shape_cast %442 : vector<1x1x8xf32> to vector<1x8xf32>
    %444 = vector.broadcast %443 : vector<1x8xf32> to vector<16x8xf32>
    %445 = arith.addf %441, %444 : vector<16x8xf32>
    %446 = vector.shape_cast %431 : vector<16x8xf32> to vector<2x8x8xf32>
    %447 = vector.shape_cast %438 : vector<16x8xf32> to vector<2x8x8xf32>
    %448 = vector.shape_cast %445 : vector<16x8xf32> to vector<2x8x8xf32>
    "tpu.trace_start"() <{level = 10 : i32, message = "btd,bsd->bts"}> : () -> ()
    %cst_144 = arith.constant dense<0.000000e+00> : vector<2x8x8xf32>
    %449 = tpu.matmul %446, %447, %cst_144 {dimension_numbers = #tpu.dot_dimension_numbers<[2], [2], [1], [1], [0, 0, 0, 1, 1, 1], [0], [0]>} : vector<2x8x8xf32>, vector<2x8x8xf32>, vector<2x8x8xf32> -> vector<2x8x8xf32>
    "tpu.trace_stop"() : () -> ()
    %cst_145 = arith.constant 0.353553385 : f32
    %450 = vector.broadcast %cst_145 : f32 to vector<2x8x8xf32>
    %451 = arith.mulf %449, %450 : vector<2x8x8xf32>
    %cst_146 = arith.constant dense<0xFF800000> : vector<2x8xf32>
    %452 = vector.multi_reduction <maximumf>, %451, %cst_146 [2] : vector<2x8x8xf32> to vector<2x8xf32>
    %cst_147 = arith.constant 0xFF800000 : f32
    %453 = vector.broadcast %cst_147 : f32 to vector<2x8xf32>
    %454 = arith.maximumf %453, %452 : vector<2x8xf32>
    %455 = vector.shape_cast %454 : vector<2x8xf32> to vector<2x8x1xf32>
    %456 = vector.broadcast %455 : vector<2x8x1xf32> to vector<2x8x8xf32>
    %457 = arith.subf %451, %456 : vector<2x8x8xf32>
    %458 = math.exp %457 : vector<2x8x8xf32>
    %cst_148 = arith.constant dense<0.000000e+00> : vector<2x8xf32>
    %459 = vector.multi_reduction <add>, %458, %cst_148 [2] : vector<2x8x8xf32> to vector<2x8xf32>
    %460 = vector.shape_cast %459 : vector<2x8xf32> to vector<2x8x1xf32>
    %461 = vector.broadcast %460 : vector<2x8x1xf32> to vector<2x8x8xf32>
    %462 = arith.divf %458, %461 : vector<2x8x8xf32>
    "tpu.trace_start"() <{level = 10 : i32, message = "bts,bsd->btd"}> : () -> ()
    %cst_149 = arith.constant dense<0.000000e+00> : vector<2x8x8xf32>
    %463 = tpu.matmul %462, %448, %cst_149 {dimension_numbers = #tpu.dot_dimension_numbers<[2], [1], [1], [2], [0, 0, 0, 1, 1, 2], [0], [0]>} : vector<2x8x8xf32>, vector<2x8x8xf32>, vector<2x8x8xf32> -> vector<2x8x8xf32>
    "tpu.trace_stop"() : () -> ()
    %cst_150 = arith.constant dense<0.000000e+00> : vector<2x8xf32>
    %464 = vector.multi_reduction <add>, %463, %cst_150 [1] : vector<2x8x8xf32> to vector<2x8xf32>
    %cst_151 = arith.constant 8.000000e+00 : f32
    %465 = vector.broadcast %cst_151 : f32 to vector<2x8xf32>
    %466 = arith.divf %464, %465 : vector<2x8xf32>
    %c2_152 = arith.constant 2 : index
    %c0_153 = arith.constant 0 : index
    %c0_154 = arith.constant 0 : index
    %467 = vector.load %arg14[%c2_152, %c0_153, %c0_154] : memref<4x8x32xf32, #tpu.memory_space<vmem>>, vector<1x8x32xf32>
    %468 = vector.shape_cast %467 : vector<1x8x32xf32> to vector<8x32xf32>
    %cst_155 = arith.constant dense<0.000000e+00> : vector<2x32xf32>
    %469 = tpu.matmul %466, %468, %cst_155 {dimension_numbers = #tpu.dot_dimension_numbers<[1], [0], [0], [1], [0, 0, 1, 1], [], []>} : vector<2x8xf32>, vector<8x32xf32>, vector<2x32xf32> -> vector<2x32xf32>
    %470 = arith.addf %424, %469 : vector<2x32xf32>
    %c3 = arith.constant 3 : index
    %c0_156 = arith.constant 0 : index
    %c0_157 = arith.constant 0 : index
    %471 = vector.load %arg8[%c3, %c0_156, %c0_157] : memref<4x32x8xf32, #tpu.memory_space<vmem>>, vector<1x32x8xf32>
    %472 = vector.shape_cast %471 : vector<1x32x8xf32> to vector<32x8xf32>
    %cst_158 = arith.constant dense<0.000000e+00> : vector<16x8xf32>
    %473 = tpu.matmul %331, %472, %cst_158 {dimension_numbers = #tpu.dot_dimension_numbers<[1], [0], [0], [1], [0, 0, 1, 1], [], []>} : vector<16x32xf32>, vector<32x8xf32>, vector<16x8xf32> -> vector<16x8xf32>
    %c3_159 = arith.constant 3 : index
    %c0_160 = arith.constant 0 : index
    %c0_161 = arith.constant 0 : index
    %474 = vector.load %arg11[%c3_159, %c0_160, %c0_161] : memref<4x1x8xf32, #tpu.memory_space<vmem>>, vector<1x1x8xf32>
    %475 = vector.shape_cast %474 : vector<1x1x8xf32> to vector<1x8xf32>
    %476 = vector.broadcast %475 : vector<1x8xf32> to vector<16x8xf32>
    %477 = arith.addf %473, %476 : vector<16x8xf32>
    %c3_162 = arith.constant 3 : index
    %c0_163 = arith.constant 0 : index
    %c0_164 = arith.constant 0 : index
    %478 = vector.load %arg9[%c3_162, %c0_163, %c0_164] : memref<4x32x8xf32, #tpu.memory_space<vmem>>, vector<1x32x8xf32>
    %479 = vector.shape_cast %478 : vector<1x32x8xf32> to vector<32x8xf32>
    %cst_165 = arith.constant dense<0.000000e+00> : vector<16x8xf32>
    %480 = tpu.matmul %331, %479, %cst_165 {dimension_numbers = #tpu.dot_dimension_numbers<[1], [0], [0], [1], [0, 0, 1, 1], [], []>} : vector<16x32xf32>, vector<32x8xf32>, vector<16x8xf32> -> vector<16x8xf32>
    %c3_166 = arith.constant 3 : index
    %c0_167 = arith.constant 0 : index
    %c0_168 = arith.constant 0 : index
    %481 = vector.load %arg12[%c3_166, %c0_167, %c0_168] : memref<4x1x8xf32, #tpu.memory_space<vmem>>, vector<1x1x8xf32>
    %482 = vector.shape_cast %481 : vector<1x1x8xf32> to vector<1x8xf32>
    %483 = vector.broadcast %482 : vector<1x8xf32> to vector<16x8xf32>
    %484 = arith.addf %480, %483 : vector<16x8xf32>
    %c3_169 = arith.constant 3 : index
    %c0_170 = arith.constant 0 : index
    %c0_171 = arith.constant 0 : index
    %485 = vector.load %arg10[%c3_169, %c0_170, %c0_171] : memref<4x32x8xf32, #tpu.memory_space<vmem>>, vector<1x32x8xf32>
    %486 = vector.shape_cast %485 : vector<1x32x8xf32> to vector<32x8xf32>
    %cst_172 = arith.constant dense<0.000000e+00> : vector<16x8xf32>
    %487 = tpu.matmul %331, %486, %cst_172 {dimension_numbers = #tpu.dot_dimension_numbers<[1], [0], [0], [1], [0, 0, 1, 1], [], []>} : vector<16x32xf32>, vector<32x8xf32>, vector<16x8xf32> -> vector<16x8xf32>
    %c3_173 = arith.constant 3 : index
    %c0_174 = arith.constant 0 : index
    %c0_175 = arith.constant 0 : index
    %488 = vector.load %arg13[%c3_173, %c0_174, %c0_175] : memref<4x1x8xf32, #tpu.memory_space<vmem>>, vector<1x1x8xf32>
    %489 = vector.shape_cast %488 : vector<1x1x8xf32> to vector<1x8xf32>
    %490 = vector.broadcast %489 : vector<1x8xf32> to vector<16x8xf32>
    %491 = arith.addf %487, %490 : vector<16x8xf32>
    %492 = vector.shape_cast %477 : vector<16x8xf32> to vector<2x8x8xf32>
    %493 = vector.shape_cast %484 : vector<16x8xf32> to vector<2x8x8xf32>
    %494 = vector.shape_cast %491 : vector<16x8xf32> to vector<2x8x8xf32>
    "tpu.trace_start"() <{level = 10 : i32, message = "btd,bsd->bts"}> : () -> ()
    %cst_176 = arith.constant dense<0.000000e+00> : vector<2x8x8xf32>
    %495 = tpu.matmul %492, %493, %cst_176 {dimension_numbers = #tpu.dot_dimension_numbers<[2], [2], [1], [1], [0, 0, 0, 1, 1, 1], [0], [0]>} : vector<2x8x8xf32>, vector<2x8x8xf32>, vector<2x8x8xf32> -> vector<2x8x8xf32>
    "tpu.trace_stop"() : () -> ()
    %cst_177 = arith.constant 0.353553385 : f32
    %496 = vector.broadcast %cst_177 : f32 to vector<2x8x8xf32>
    %497 = arith.mulf %495, %496 : vector<2x8x8xf32>
    %cst_178 = arith.constant dense<0xFF800000> : vector<2x8xf32>
    %498 = vector.multi_reduction <maximumf>, %497, %cst_178 [2] : vector<2x8x8xf32> to vector<2x8xf32>
    %cst_179 = arith.constant 0xFF800000 : f32
    %499 = vector.broadcast %cst_179 : f32 to vector<2x8xf32>
    %500 = arith.maximumf %499, %498 : vector<2x8xf32>
    %501 = vector.shape_cast %500 : vector<2x8xf32> to vector<2x8x1xf32>
    %502 = vector.broadcast %501 : vector<2x8x1xf32> to vector<2x8x8xf32>
    %503 = arith.subf %497, %502 : vector<2x8x8xf32>
    %504 = math.exp %503 : vector<2x8x8xf32>
    %cst_180 = arith.constant dense<0.000000e+00> : vector<2x8xf32>
    %505 = vector.multi_reduction <add>, %504, %cst_180 [2] : vector<2x8x8xf32> to vector<2x8xf32>
    %506 = vector.shape_cast %505 : vector<2x8xf32> to vector<2x8x1xf32>
    %507 = vector.broadcast %506 : vector<2x8x1xf32> to vector<2x8x8xf32>
    %508 = arith.divf %504, %507 : vector<2x8x8xf32>
    "tpu.trace_start"() <{level = 10 : i32, message = "bts,bsd->btd"}> : () -> ()
    %cst_181 = arith.constant dense<0.000000e+00> : vector<2x8x8xf32>
    %509 = tpu.matmul %508, %494, %cst_181 {dimension_numbers = #tpu.dot_dimension_numbers<[2], [1], [1], [2], [0, 0, 0, 1, 1, 2], [0], [0]>} : vector<2x8x8xf32>, vector<2x8x8xf32>, vector<2x8x8xf32> -> vector<2x8x8xf32>
    "tpu.trace_stop"() : () -> ()
    %cst_182 = arith.constant dense<0.000000e+00> : vector<2x8xf32>
    %510 = vector.multi_reduction <add>, %509, %cst_182 [1] : vector<2x8x8xf32> to vector<2x8xf32>
    %cst_183 = arith.constant 8.000000e+00 : f32
    %511 = vector.broadcast %cst_183 : f32 to vector<2x8xf32>
    %512 = arith.divf %510, %511 : vector<2x8xf32>
    %c3_184 = arith.constant 3 : index
    %c0_185 = arith.constant 0 : index
    %c0_186 = arith.constant 0 : index
    %513 = vector.load %arg14[%c3_184, %c0_185, %c0_186] : memref<4x8x32xf32, #tpu.memory_space<vmem>>, vector<1x8x32xf32>
    %514 = vector.shape_cast %513 : vector<1x8x32xf32> to vector<8x32xf32>
    %cst_187 = arith.constant dense<0.000000e+00> : vector<2x32xf32>
    %515 = tpu.matmul %512, %514, %cst_187 {dimension_numbers = #tpu.dot_dimension_numbers<[1], [0], [0], [1], [0, 0, 1, 1], [], []>} : vector<2x8xf32>, vector<8x32xf32>, vector<2x32xf32> -> vector<2x32xf32>
    %516 = arith.addf %470, %515 : vector<2x32xf32>
    %c0_188 = arith.constant 0 : index
    %c0_189 = arith.constant 0 : index
    %517 = vector.load %arg15[%c0_188, %c0_189] : memref<1x32xf32, #tpu.memory_space<vmem>>, vector<1x32xf32>
    %518 = vector.broadcast %517 : vector<1x32xf32> to vector<2x32xf32>
    %519 = arith.addf %516, %518 : vector<2x32xf32>
    %c0_190 = arith.constant 0 : index
    %c0_191 = arith.constant 0 : index
    %520 = vector.load %arg16[%c0_190, %c0_191] : memref<2x32xf32, #tpu.memory_space<vmem>>, vector<2x32xf32>
    tpu.vector_store %arg16[%c0_190, %c0_191], %519 {strides = array<i32>} : memref<2x32xf32, #tpu.memory_space<vmem>>, vector<2x32xf32>,
    return
  }
  func.func @transform_0(%arg0: i32) -> (i32, i32, i32) {
    %c0_i32 = arith.constant 0 : i32
    %c0_i32_0 = arith.constant 0 : i32
    %c0_i32_1 = arith.constant 0 : i32
    %c0_i32_2 = arith.constant 0 : i32
    return %c0_i32, %c0_i32_0, %c0_i32_1 : i32, i32, i32
  }
  func.func @transform_1(%arg0: i32) -> (i32, i32) {
    %c0_i32 = arith.constant 0 : i32
    %c0_i32_0 = arith.constant 0 : i32
    %c0_i32_1 = arith.constant 0 : i32
    return %c0_i32, %c0_i32_0 : i32, i32
  }
  func.func @transform_2(%arg0: i32) -> (i32, i32) {
    %c0_i32 = arith.constant 0 : i32
    %c0_i32_0 = arith.constant 0 : i32
    %c0_i32_1 = arith.constant 0 : i32
    return %c0_i32, %c0_i32_0 : i32, i32
  }
  func.func @transform_3(%arg0: i32) -> (i32, i32) {
    %c0_i32 = arith.constant 0 : i32
    %c0_i32_0 = arith.constant 0 : i32
    %c0_i32_1 = arith.constant 0 : i32
    return %c0_i32, %c0_i32_0 : i32, i32
  }
  func.func @transform_4(%arg0: i32) -> (i32, i32) {
    %c0_i32 = arith.constant 0 : i32
    %c0_i32_0 = arith.constant 0 : i32
    %c0_i32_1 = arith.constant 0 : i32
    return %c0_i32, %c0_i32_0 : i32, i32
  }
  func.func @transform_5(%arg0: i32) -> (i32, i32) {
    %c0_i32 = arith.constant 0 : i32
    %c0_i32_0 = arith.constant 0 : i32
    %c0_i32_1 = arith.constant 0 : i32
    return %c0_i32, %c0_i32_0 : i32, i32
  }
  func.func @transform_6(%arg0: i32) -> (i32, i32) {
    %c0_i32 = arith.constant 0 : i32
    %c0_i32_0 = arith.constant 0 : i32
    %c0_i32_1 = arith.constant 0 : i32
    return %c0_i32, %c0_i32_0 : i32, i32
  }
  func.func @transform_7(%arg0: i32) -> (i32, i32, i32) {
    %c0_i32 = arith.constant 0 : i32
    %c0_i32_0 = arith.constant 0 : i32
    %c0_i32_1 = arith.constant 0 : i32
    %c0_i32_2 = arith.constant 0 : i32
    return %c0_i32, %c0_i32_0, %c0_i32_1 : i32, i32, i32
  }
  func.func @transform_8(%arg0: i32) -> (i32, i32, i32) {
    %c0_i32 = arith.constant 0 : i32
    %c0_i32_0 = arith.constant 0 : i32
    %c0_i32_1 = arith.constant 0 : i32
    %c0_i32_2 = arith.constant 0 : i32
    return %c0_i32, %c0_i32_0, %c0_i32_1 : i32, i32, i32
  }
  func.func @transform_9(%arg0: i32) -> (i32, i32, i32) {
    %c0_i32 = arith.constant 0 : i32
    %c0_i32_0 = arith.constant 0 : i32
    %c0_i32_1 = arith.constant 0 : i32
    %c0_i32_2 = arith.constant 0 : i32
    return %c0_i32, %c0_i32_0, %c0_i32_1 : i32, i32, i32
  }
  func.func @transform_10(%arg0: i32) -> (i32, i32, i32) {
    %c0_i32 = arith.constant 0 : i32
    %c0_i32_0 = arith.constant 0 : i32
    %c0_i32_1 = arith.constant 0 : i32
    %c0_i32_2 = arith.constant 0 : i32
    return %c0_i32, %c0_i32_0, %c0_i32_1 : i32, i32, i32
  }
  func.func @transform_11(%arg0: i32) -> (i32, i32, i32) {
    %c0_i32 = arith.constant 0 : i32
    %c0_i32_0 = arith.constant 0 : i32
    %c0_i32_1 = arith.constant 0 : i32
    %c0_i32_2 = arith.constant 0 : i32
    return %c0_i32, %c0_i32_0, %c0_i32_1 : i32, i32, i32
  }
  func.func @transform_12(%arg0: i32) -> (i32, i32, i32) {
    %c0_i32 = arith.constant 0 : i32
    %c0_i32_0 = arith.constant 0 : i32
    %c0_i32_1 = arith.constant 0 : i32
    %c0_i32_2 = arith.constant 0 : i32
    return %c0_i32, %c0_i32_0, %c0_i32_1 : i32, i32, i32
  }
  func.func @transform_13(%arg0: i32) -> (i32, i32, i32) {
    %c0_i32 = arith.constant 0 : i32
    %c0_i32_0 = arith.constant 0 : i32
    %c0_i32_1 = arith.constant 0 : i32
    %c0_i32_2 = arith.constant 0 : i32
    return %c0_i32, %c0_i32_0, %c0_i32_1 : i32, i32, i32
  }
  func.func @transform_14(%arg0: i32) -> (i32, i32) {
    %c0_i32 = arith.constant 0 : i32
    %c0_i32_0 = arith.constant 0 : i32
    %c0_i32_1 = arith.constant 0 : i32
    return %c0_i32, %c0_i32_0 : i32, i32
  }
  func.func @transform_15(%arg0: i32) -> (i32, i32) {
    %c0_i32 = arith.constant 0 : i32
    %c0_i32_0 = arith.constant 0 : i32
    %c0_i32_1 = arith.constant 0 : i32
    return %c0_i32, %c0_i32_0 : i32, i32
  }
}

</mosaic_0001>

<llo_original>
// kernel: tpu_custom_call.1
$region0: #{tpu_custom_call.1}
  #allocation0 [shape = 'u32[]', space=smem, size = 0x4, offset = 0x4, fixed_abs, tag = 'smem constant byte address 0x4 - core index']
  #allocation1 [shape = 'u32[144,128]{1,0:T(1,128)}', space=vmem, size = 0x12000, scoped, tag = 'internal scratch']
  %s0 = inlined_call_operand.vmem [shape: f32[2,8,16], index: 0, kind: input, shape index: {}]
  %s1 = inlined_call_operand.vmem [shape: f32[16,128], index: 1, kind: input, shape index: {}]
  %s2 = inlined_call_operand.vmem [shape: f32[32,128], index: 2, kind: input, shape index: {}]
  %s3 = inlined_call_operand.vmem [shape: f32[1,128], index: 3, kind: input, shape index: {}]
  %s4 = inlined_call_operand.vmem [shape: f32[32,128], index: 4, kind: input, shape index: {}]
  %s5 = inlined_call_operand.vmem [shape: f32[32,128], index: 5, kind: input, shape index: {}]
  %s6 = inlined_call_operand.vmem [shape: f32[1,128], index: 6, kind: input, shape index: {}]
  %s7 = inlined_call_operand.vmem [shape: f32[4,32,8], index: 7, kind: input, shape index: {}]
  %s8 = inlined_call_operand.vmem [shape: f32[4,32,8], index: 8, kind: input, shape index: {}]
  %s9 = inlined_call_operand.vmem [shape: f32[4,32,8], index: 9, kind: input, shape index: {}]
  %s10 = inlined_call_operand.vmem [shape: f32[4,1,8], index: 10, kind: input, shape index: {}]
  %s11 = inlined_call_operand.vmem [shape: f32[4,1,8], index: 11, kind: input, shape index: {}]
  %s12 = inlined_call_operand.vmem [shape: f32[4,1,8], index: 12, kind: input, shape index: {}]
  %s13 = inlined_call_operand.vmem [shape: f32[4,8,32], index: 13, kind: input, shape index: {}]
  %s14 = inlined_call_operand.vmem [shape: f32[1,32], index: 14, kind: input, shape index: {}]
  %s15 = inlined_call_operand.hbm [shape: f32[2,32], index: 15, kind: output, shape index: {}]
  %s16 = sld [smem:[#allocation0]]
  $region70: #{tpu_custom_call.1} parent=0
    _
  %s18 = ssub.s32 1, %s16
  %s19 = scalar_select 0, %s18, %s16
  $region1: #{tpu_custom_call.1} parent=0
    #allocation2 [shape = 'u8[1024]{0}', space=vmem, size = 0x400, scoped, tag = 'output window, operand 0, single buffered']
    #allocation3 [shape = 's32[1]{0}', space=sflag, size = 0x4, scoped, tag = 'scoped memory for tpu_custom_call.1']
    %20 = vsyncpa [#allocation3], 0
    // Predicated region
    $region2: #{tpu_custom_call.1} parent=1 // pred_check
      _
    $region3: #{tpu_custom_call.1} parent=1 // pred_check_branch
      %22 = sbr.rel (0) target = $region5
    $region4: #{tpu_custom_call.1} parent=1 // pred_region
      _
    $region5: #{tpu_custom_call.1} parent=1 // pred_fallthru
      _
    // Predicated region
    $region6: #{tpu_custom_call.1} parent=1 // pred_check
      _
    $region7: #{tpu_custom_call.1} parent=1 // pred_check_branch
      %24 = sbr.rel (0) target = $region9
    $region8: #{tpu_custom_call.1} parent=1 // pred_region
      _
    $region9: #{tpu_custom_call.1} parent=1 // pred_fallthru
      _
    // Predicated region
    $region10: #{tpu_custom_call.1} parent=1 // pred_check
      _
    $region11: #{tpu_custom_call.1} parent=1 // pred_check_branch
      %26 = sbr.rel (0) target = $region13
    $region12: #{tpu_custom_call.1} parent=1 // pred_region
      _
    $region13: #{tpu_custom_call.1} parent=1 // pred_fallthru
      _
    // Predicated region
    $region14: #{tpu_custom_call.1} parent=1 // pred_check
      _
    $region15: #{tpu_custom_call.1} parent=1 // pred_check_branch
      %28 = sbr.rel (0) target = $region17
    $region16: #{tpu_custom_call.1} parent=1 // pred_region
      _
    $region17: #{tpu_custom_call.1} parent=1 // pred_fallthru
      _
    // Predicated region
    $region18: #{tpu_custom_call.1} parent=1 // pred_check
      _
    $region19: #{tpu_custom_call.1} parent=1 // pred_check_branch
      %30 = sbr.rel (0) target = $region21
    $region20: #{tpu_custom_call.1} parent=1 // pred_region
      _
    $region21: #{tpu_custom_call.1} parent=1 // pred_fallthru
      _
    // Predicated region
    $region22: #{tpu_custom_call.1} parent=1 // pred_check
      _
    $region23: #{tpu_custom_call.1} parent=1 // pred_check_branch
      %32 = sbr.rel (0) target = $region25
    $region24: #{tpu_custom_call.1} parent=1 // pred_region
      _
    $region25: #{tpu_custom_call.1} parent=1 // pred_fallthru
      _
    // Predicated region
    $region26: #{tpu_custom_call.1} parent=1 // pred_check
      _
    $region27: #{tpu_custom_call.1} parent=1 // pred_check_branch
      %34 = sbr.rel (0) target = $region29
    $region28: #{tpu_custom_call.1} parent=1 // pred_region
      _
    $region29: #{tpu_custom_call.1} parent=1 // pred_fallthru
      _
    // Predicated region
    $region30: #{tpu_custom_call.1} parent=1 // pred_check
      _
    $region31: #{tpu_custom_call.1} parent=1 // pred_check_branch
      %36 = sbr.rel (0) target = $region33
    $region32: #{tpu_custom_call.1} parent=1 // pred_region
      _
    $region33: #{tpu_custom_call.1} parent=1 // pred_fallthru
      _
    // Predicated region
    $region34: #{tpu_custom_call.1} parent=1 // pred_check
      _
    $region35: #{tpu_custom_call.1} parent=1 // pred_check_branch
      %38 = sbr.rel (0) target = $region37
    $region36: #{tpu_custom_call.1} parent=1 // pred_region
      _
    $region37: #{tpu_custom_call.1} parent=1 // pred_fallthru
      _
    // Predicated region
    $region38: #{tpu_custom_call.1} parent=1 // pred_check
      _
    $region39: #{tpu_custom_call.1} parent=1 // pred_check_branch
      %40 = sbr.rel (0) target = $region41
    $region40: #{tpu_custom_call.1} parent=1 // pred_region
      _
    $region41: #{tpu_custom_call.1} parent=1 // pred_fallthru
      _
    // Predicated region
    $region42: #{tpu_custom_call.1} parent=1 // pred_check
      _
    $region43: #{tpu_custom_call.1} parent=1 // pred_check_branch
      %42 = sbr.rel (0) target = $region45
    $region44: #{tpu_custom_call.1} parent=1 // pred_region
      _
    $region45: #{tpu_custom_call.1} parent=1 // pred_fallthru
      _
    // Predicated region
    $region46: #{tpu_custom_call.1} parent=1 // pred_check
      _
    $region47: #{tpu_custom_call.1} parent=1 // pred_check_branch
      %44 = sbr.rel (0) target = $region49
    $region48: #{tpu_custom_call.1} parent=1 // pred_region
      _
    $region49: #{tpu_custom_call.1} parent=1 // pred_fallthru
      _
    // Predicated region
    $region50: #{tpu_custom_call.1} parent=1 // pred_check
      _
    $region51: #{tpu_custom_call.1} parent=1 // pred_check_branch
      %46 = sbr.rel (0) target = $region53
    $region52: #{tpu_custom_call.1} parent=1 // pred_region
      _
    $region53: #{tpu_custom_call.1} parent=1 // pred_fallthru
      _
    // Predicated region
    $region54: #{tpu_custom_call.1} parent=1 // pred_check
      _
    $region55: #{tpu_custom_call.1} parent=1 // pred_check_branch
      %48 = sbr.rel (0) target = $region57
    $region56: #{tpu_custom_call.1} parent=1 // pred_region
      _
    $region57: #{tpu_custom_call.1} parent=1 // pred_fallthru
      _
    // Predicated region
    $region58: #{tpu_custom_call.1} parent=1 // pred_check
      _
    $region59: #{tpu_custom_call.1} parent=1 // pred_check_branch
      %50 = sbr.rel (0) target = $region61
    $region60: #{tpu_custom_call.1} parent=1 // pred_region
      _
    $region61: #{tpu_custom_call.1} parent=1 // pred_fallthru
      _
    %v51 = vld [vmem:[%s0] sm:$0xff]
    %v52 = vld [vmem:[%s0 + $0x8] sm:$0xff]
    %v53 = vld [vmem:[%s1] sm:$0xff]
    %v54 = vld [vmem:[%s1 + $0x8] sm:$0xff]
    %v55 = vld [vmem:[%s3] sm:$0x1]
    %v57 = vlaneseq
    %v58 = vshrl.u32 %v57, 7
    %v59 = vsub.s32 0, %v58
    %v60 = vrot.slane %v55, %v59
    %vm62 = vcmask 130048
    %v64 = vsel %vm62, %v51, 0
    %v67 = vsel %vm62, %v52, 0
    %69 = vmatprep.subr.mxu0 0.0
    %70 = vmatpush1.msra.mxu0 %v53
    %71 = vmatprep.subr.mxu0 0.0
    %72 = vmatpush1.msra.mxu0 %v54
    %73 = vmatprep.subr.mxu0 0.0
    %74 = vmatpush1.msra.mxu0 0.0
    %75 = vmatprep.subr.mxu0 0.0
    %76 = vmatpush1.msra.mxu0 0.0
    %77 = vmatprep.subr.mxu0 0.0
    %78 = vmatpush1.msra.mxu0 0.0
    %79 = vmatprep.subr.mxu0 0.0
    %80 = vmatpush1.msra.mxu0 0.0
    %81 = vmatprep.subr.mxu0 0.0
    %82 = vmatpush1.msra.mxu0 0.0
    %83 = vmatprep.subr.mxu0 0.0
    %84 = vmatpush1.msra.mxu0 0.0
    %85 = vmatprep.subr.mxu0 0.0
    %86 = vmatpush1.msra.mxu0 0.0
    %87 = vmatprep.subr.mxu0 0.0
    %88 = vmatpush1.msra.mxu0 0.0
    %89 = vmatprep.subr.mxu0 0.0
    %90 = vmatpush1.msra.mxu0 0.0
    %91 = vmatprep.subr.mxu0 0.0
    %92 = vmatpush1.msra.mxu0 0.0
    %93 = vmatprep.subr.mxu0 0.0
    %94 = vmatpush1.msra.mxu0 0.0
    %95 = vmatprep.subr.mxu0 0.0
    %96 = vmatpush1.msra.mxu0 0.0
    %97 = vmatprep.subr.mxu0 0.0
    %98 = vmatpush1.msra.mxu0 0.0
    %99 = vmatprep.subr.mxu0 0.0
    %100 = vmatpush1.msra.mxu0 0.0
    %101 = vmatprep.subr.mxu0 0.0
    %102 = vmatpush1.msra.mxu0 0.0
    %103 = vmatprep.subr.mxu0 0.0
    %104 = vmatpush1.msra.mxu0 0.0
    %105 = vmatprep.subr.mxu0 0.0
    %106 = vmatpush1.msra.mxu0 0.0
    %107 = vmatprep.subr.mxu0 0.0
    %108 = vmatpush1.msra.mxu0 0.0
    %109 = vmatprep.subr.mxu0 0.0
    %110 = vmatpush1.msra.mxu0 0.0
    %111 = vmatprep.subr.mxu0 0.0
    %112 = vmatpush1.msra.mxu0 0.0
    %113 = vmatprep.subr.mxu0 0.0
    %114 = vmatpush1.msra.mxu0 0.0
    %115 = vmatprep.subr.mxu0 0.0
    %116 = vmatpush1.msra.mxu0 0.0
    %117 = vmatprep.subr.mxu0 0.0
    %118 = vmatpush1.msra.mxu0 0.0
    %119 = vmatprep.subr.mxu0 0.0
    %120 = vmatpush1.msra.mxu0 0.0
    %121 = vmatprep.subr.mxu0 0.0
    %122 = vmatpush1.msra.mxu0 0.0
    %123 = vmatprep.subr.mxu0 0.0
    %124 = vmatpush1.msra.mxu0 0.0
    %125 = vmatprep.subr.mxu0 0.0
    %126 = vmatpush1.msra.mxu0 0.0
    %127 = vmatprep.subr.mxu0 0.0
    %128 = vmatpush1.msra.mxu0 0.0
    %129 = vmatprep.subr.mxu0 0.0
    %130 = vmatpush1.msra.mxu0 0.0
    %131 = vmatprep.subr.mxu0 0.0
    %132 = vmatpush1.msra.mxu0 0.0
    %133 = vmatprep.mubr.f32.mxu0 0.0
    %134 = vmatmul.mubr.f32.gmra.mrb[0].mxu0 %v64
    %v135 = vpop.f32.mrb[0].mxu0
    %v136 = vadd.f32 %v60, %v135
    %v137 = vpop.f32.mrb[0].mxu0
    %138 = vmatprep.mubr.f32.mxu0 0.0
    %139 = vmatmul.mubr.f32.gmra.mrb[0].mxu0 %v67
    %v140 = vpop.f32.mrb[0].mxu0
    %v141 = vadd.f32 %v60, %v140
    %v142 = vpop.f32.mrb[0].mxu0
    %143 = vdwg.mxu0
    %v144 = vld [vmem:[%s2] sm:$0xff]
    %v145 = vld [vmem:[%s2 + $0x8] sm:$0xff]
    %v146 = vld [vmem:[%s2 + $0x10] sm:$0xff]
    %v147 = vld [vmem:[%s2 + $0x18] sm:$0xff]
    %v148 = vld [vmem:[%s4] sm:$0xff]
    %v149 = vld [vmem:[%s4 + $0x8] sm:$0xff]
    %v150 = vld [vmem:[%s4 + $0x10] sm:$0xff]
    %v151 = vld [vmem:[%s4 + $0x18] sm:$0xff]
    %v152 = vld [vmem:[%s5] sm:$0xff]
    %v153 = vld [vmem:[%s5 + $0x8] sm:$0xff]
    %v154 = vld [vmem:[%s5 + $0x10] sm:$0xff]
    %v155 = vld [vmem:[%s5 + $0x18] sm:$0xff]
    %v156 = vld [vmem:[%s6] sm:$0x1]
    %v158 = vlaneseq
    %v159 = vshrl.u32 %v158, 7
    %v160 = vsub.s32 0, %v159
    %v161 = vrot.slane %v156, %v160
    %vm163 = vcmask 261120
    %v165 = vsel %vm163, 0.0, 0
    %167 = vmatprep.subr.mxu0 0.0
    %168 = vmatpush1.msra.mxu0 %v144
    %169 = vmatprep.subr.mxu0 0.0
    %170 = vmatpush1.msra.mxu0 %v145
    %171 = vmatprep.subr.mxu0 0.0
    %172 = vmatpush1.msra.mxu0 %v146
    %173 = vmatprep.subr.mxu0 0.0
    %174 = vmatpush1.msra.mxu0 %v147
    %175 = vmatprep.subr.mxu0 0.0
    %176 = vmatpush1.msra.mxu0 0.0
    %177 = vmatprep.subr.mxu0 0.0
    %178 = vmatpush1.msra.mxu0 0.0
    %179 = vmatprep.subr.mxu0 0.0
    %180 = vmatpush1.msra.mxu0 0.0
    %181 = vmatprep.subr.mxu0 0.0
    %182 = vmatpush1.msra.mxu0 0.0
    %183 = vmatprep.subr.mxu0 0.0
    %184 = vmatpush1.msra.mxu0 0.0
    %185 = vmatprep.subr.mxu0 0.0
    %186 = vmatpush1.msra.mxu0 0.0
    %187 = vmatprep.subr.mxu0 0.0
    %188 = vmatpush1.msra.mxu0 0.0
    %189 = vmatprep.subr.mxu0 0.0
    %190 = vmatpush1.msra.mxu0 0.0
    %191 = vmatprep.subr.mxu0 0.0
    %192 = vmatpush1.msra.mxu0 0.0
    %193 = vmatprep.subr.mxu0 0.0
    %194 = vmatpush1.msra.mxu0 0.0
    %195 = vmatprep.subr.mxu0 0.0
    %196 = vmatpush1.msra.mxu0 0.0
    %197 = vmatprep.subr.mxu0 0.0
    %198 = vmatpush1.msra.mxu0 0.0
    %199 = vmatprep.subr.mxu0 0.0
    %200 = vmatpush1.msra.mxu0 0.0
    %201 = vmatprep.subr.mxu0 0.0
    %202 = vmatpush1.msra.mxu0 0.0
    %203 = vmatprep.subr.mxu0 0.0
    %204 = vmatpush1.msra.mxu0 0.0
    %205 = vmatprep.subr.mxu0 0.0
    %206 = vmatpush1.msra.mxu0 0.0
    %207 = vmatprep.subr.mxu0 0.0
    %208 = vmatpush1.msra.mxu0 0.0
    %209 = vmatprep.subr.mxu0 0.0
    %210 = vmatpush1.msra.mxu0 0.0
    %211 = vmatprep.subr.mxu0 0.0
    %212 = vmatpush1.msra.mxu0 0.0
    %213 = vmatprep.subr.mxu0 0.0
    %214 = vmatpush1.msra.mxu0 0.0
    %215 = vmatprep.subr.mxu0 0.0
    %216 = vmatpush1.msra.mxu0 0.0
    %217 = vmatprep.subr.mxu0 0.0
    %218 = vmatpush1.msra.mxu0 0.0
    %219 = vmatprep.subr.mxu0 0.0
    %220 = vmatpush1.msra.mxu0 0.0
    %221 = vmatprep.subr.mxu0 0.0
    %222 = vmatpush1.msra.mxu0 0.0
    %223 = vmatprep.subr.mxu0 0.0
    %224 = vmatpush1.msra.mxu0 0.0
    %225 = vmatprep.subr.mxu0 0.0
    %226 = vmatpush1.msra.mxu0 0.0
    %227 = vmatprep.subr.mxu0 0.0
    %228 = vmatpush1.msra.mxu0 0.0
    %229 = vmatprep.subr.mxu0 0.0
    %230 = vmatpush1.msra.mxu0 0.0
    %231 = vmatprep.mubr.f32.mxu0 0.0
    %232 = vmatmul.mubr.f32.gmra.mrb[0].mxu0 %v165
    %v233 = vpop.f32.mrb[0].mxu0
    %v234 = vadd.f32 0.0, %v233
    %v235 = vpop.f32.mrb[0].mxu0
    %236 = vdwg.mxu0
    %v238 = vrot.slane %v234, 1
    %v241 = vadd.f32 %v136, %v234
    %v242 = vadd.f32 %v141, %v238
    %v243 = vxor.u32 %v241, 2147483648
    %v244 = vxor.u32 %v242, 2147483648
    %v245 = vmul.f32 %v243, 1.442695
    %v246 = vpow.pop %v245
    %v247 = vmul.f32 %v244, 1.442695
    %v248 = vpow.pop %v247
    %v249 = vadd.f32 %v246, 1.0
    %v250 = vadd.f32 %v248, 1.0
    %v251 = vrcp.pop %v249
    %v252 = vmul.f32 1.0, %v251
    %v253 = vrcp.pop %v250
    %v254 = vmul.f32 1.0, %v253
    %v255 = vtanh.pop %v241
    %v256 = vtanh.pop %v242
    %v257 = vmul.f32 %v252, 0.0
    %v258 = vmul.f32 %v254, 0.0
    %261 = vrot.lane.b32.xlu0 %v255, 64
    %v262 = vpop.permute.xlu0 %261
    %263 = vrot.lane.b32.xlu0 %v256, 64
    %v264 = vpop.permute.xlu0 %263
    %v267 = vmul.f32 %v252, %v262
    %v268 = vmul.f32 %v254, %v264
    %271 = vrot.lane.b32.xlu0 %v267, 32
    %v272 = vpop.permute.xlu0 %271
    %273 = vrot.lane.b32.xlu0 %v268, 32
    %v274 = vpop.permute.xlu0 %273
    %v277 = vadd.f32 %v257, %v272
    %v278 = vadd.f32 %v258, %v274
    %v279 = vtanh.pop %v277
    %v280 = vtanh.pop %v278
    %283 = vrot.lane.b32.xlu0 %v279, 64
    %v284 = vpop.permute.xlu0 %283
    %285 = vrot.lane.b32.xlu0 %v280, 64
    %v286 = vpop.permute.xlu0 %285
    %v289 = vmul.f32 %v252, %v284
    %v290 = vmul.f32 %v254, %v286
    %291 = vmatprep.subr.mxu0 0.0
    %292 = vmatpush1.msra.mxu0 %v152
    %293 = vmatprep.subr.mxu0 0.0
    %294 = vmatpush1.msra.mxu0 %v153
    %295 = vmatprep.subr.mxu0 0.0
    %296 = vmatpush1.msra.mxu0 %v154
    %297 = vmatprep.subr.mxu0 0.0
    %298 = vmatpush1.msra.mxu0 %v155
    %299 = vmatprep.subr.mxu0 0.0
    %300 = vmatpush1.msra.mxu0 0.0
    %301 = vmatprep.subr.mxu0 0.0
    %302 = vmatpush1.msra.mxu0 0.0
    %303 = vmatprep.subr.mxu0 0.0
    %304 = vmatpush1.msra.mxu0 0.0
    %305 = vmatprep.subr.mxu0 0.0
    %306 = vmatpush1.msra.mxu0 0.0
    %307 = vmatprep.subr.mxu0 0.0
    %308 = vmatpush1.msra.mxu0 0.0
    %309 = vmatprep.subr.mxu0 0.0
    %310 = vmatpush1.msra.mxu0 0.0
    %311 = vmatprep.subr.mxu0 0.0
    %312 = vmatpush1.msra.mxu0 0.0
    %313 = vmatprep.subr.mxu0 0.0
    %314 = vmatpush1.msra.mxu0 0.0
    %315 = vmatprep.subr.mxu0 0.0
    %316 = vmatpush1.msra.mxu0 0.0
    %317 = vmatprep.subr.mxu0 0.0
    %318 = vmatpush1.msra.mxu0 0.0
    %319 = vmatprep.subr.mxu0 0.0
    %320 = vmatpush1.msra.mxu0 0.0
    %321 = vmatprep.subr.mxu0 0.0
    %322 = vmatpush1.msra.mxu0 0.0
    %323 = vmatprep.subr.mxu0 0.0
    %324 = vmatpush1.msra.mxu0 0.0
    %325 = vmatprep.subr.mxu0 0.0
    %326 = vmatpush1.msra.mxu0 0.0
    %327 = vmatprep.subr.mxu0 0.0
    %328 = vmatpush1.msra.mxu0 0.0
    %329 = vmatprep.subr.mxu0 0.0
    %330 = vmatpush1.msra.mxu0 0.0
    %331 = vmatprep.subr.mxu0 0.0
    %332 = vmatpush1.msra.mxu0 0.0
    %333 = vmatprep.subr.mxu0 0.0
    %334 = vmatpush1.msra.mxu0 0.0
    %335 = vmatprep.subr.mxu0 0.0
    %336 = vmatpush1.msra.mxu0 0.0
    %337 = vmatprep.subr.mxu0 0.0
    %338 = vmatpush1.msra.mxu0 0.0
    %339 = vmatprep.subr.mxu0 0.0
    %340 = vmatpush1.msra.mxu0 0.0
    %341 = vmatprep.subr.mxu0 0.0
    %342 = vmatpush1.msra.mxu0 0.0
    %343 = vmatprep.subr.mxu0 0.0
    %344 = vmatpush1.msra.mxu0 0.0
    %345 = vmatprep.subr.mxu0 0.0
    %346 = vmatpush1.msra.mxu0 0.0
    %347 = vmatprep.subr.mxu0 0.0
    %348 = vmatpush1.msra.mxu0 0.0
    %349 = vmatprep.subr.mxu0 0.0
    %350 = vmatpush1.msra.mxu0 0.0
    %351 = vmatprep.subr.mxu0 0.0
    %352 = vmatpush1.msra.mxu0 0.0
    %353 = vmatprep.subr.mxu0 0.0
    %354 = vmatpush1.msra.mxu0 0.0
    %355 = vmatprep.mubr.f32.mxu0 0.0
    %356 = vmatmul.mubr.f32.gmra.mrb[0].mxu0 %v165
    %v357 = vpop.f32.mrb[0].mxu0
    %v358 = vadd.f32 0.0, %v357
    %v359 = vpop.f32.mrb[0].mxu0
    %360 = vdwg.mxu0
    %v363 = vrot.slane %v290, 7
    %vm364 = vcmask 1041409
    %v365 = vsel %vm364, %v363, %v289
    %366 = vrot.lane.b32.xlu0 %v365, 32
    %v367 = vpop.permute.xlu0 %366
    %v368 = vsel %vm163, %v367, 0
    %370 = vmatprep.subr.mxu0 0.0
    %371 = vmatpush1.msra.mxu0 %v148
    %372 = vmatprep.subr.mxu0 0.0
    %373 = vmatpush1.msra.mxu0 %v149
    %374 = vmatprep.subr.mxu0 0.0
    %375 = vmatpush1.msra.mxu0 %v150
    %376 = vmatprep.subr.mxu0 0.0
    %377 = vmatpush1.msra.mxu0 %v151
    %378 = vmatprep.subr.mxu0 0.0
    %379 = vmatpush1.msra.mxu0 0.0
    %380 = vmatprep.subr.mxu0 0.0
    %381 = vmatpush1.msra.mxu0 0.0
    %382 = vmatprep.subr.mxu0 0.0
    %383 = vmatpush1.msra.mxu0 0.0
    %384 = vmatprep.subr.mxu0 0.0
    %385 = vmatpush1.msra.mxu0 0.0
    %386 = vmatprep.subr.mxu0 0.0
    %387 = vmatpush1.msra.mxu0 0.0
    %388 = vmatprep.subr.mxu0 0.0
    %389 = vmatpush1.msra.mxu0 0.0
    %390 = vmatprep.subr.mxu0 0.0
    %391 = vmatpush1.msra.mxu0 0.0
    %392 = vmatprep.subr.mxu0 0.0
    %393 = vmatpush1.msra.mxu0 0.0
    %394 = vmatprep.subr.mxu0 0.0
    %395 = vmatpush1.msra.mxu0 0.0
    %396 = vmatprep.subr.mxu0 0.0
    %397 = vmatpush1.msra.mxu0 0.0
    %398 = vmatprep.subr.mxu0 0.0
    %399 = vmatpush1.msra.mxu0 0.0
    %400 = vmatprep.subr.mxu0 0.0
    %401 = vmatpush1.msra.mxu0 0.0
    %402 = vmatprep.subr.mxu0 0.0
    %403 = vmatpush1.msra.mxu0 0.0
    %404 = vmatprep.subr.mxu0 0.0
    %405 = vmatpush1.msra.mxu0 0.0
    %406 = vmatprep.subr.mxu0 0.0
    %407 = vmatpush1.msra.mxu0 0.0
    %408 = vmatprep.subr.mxu0 0.0
    %409 = vmatpush1.msra.mxu0 0.0
    %410 = vmatprep.subr.mxu0 0.0
    %411 = vmatpush1.msra.mxu0 0.0
    %412 = vmatprep.subr.mxu0 0.0
    %413 = vmatpush1.msra.mxu0 0.0
    %414 = vmatprep.subr.mxu0 0.0
    %415 = vmatpush1.msra.mxu0 0.0
    %416 = vmatprep.subr.mxu0 0.0
    %417 = vmatpush1.msra.mxu0 0.0
    %418 = vmatprep.subr.mxu0 0.0
    %419 = vmatpush1.msra.mxu0 0.0
    %420 = vmatprep.subr.mxu0 0.0
    %421 = vmatpush1.msra.mxu0 0.0
    %422 = vmatprep.subr.mxu0 0.0
    %423 = vmatpush1.msra.mxu0 0.0
    %424 = vmatprep.subr.mxu0 0.0
    %425 = vmatpush1.msra.mxu0 0.0
    %426 = vmatprep.subr.mxu0 0.0
    %427 = vmatpush1.msra.mxu0 0.0
    %428 = vmatprep.subr.mxu0 0.0
    %429 = vmatpush1.msra.mxu0 0.0
    %430 = vmatprep.subr.mxu0 0.0
    %431 = vmatpush1.msra.mxu0 0.0
    %432 = vmatprep.subr.mxu0 0.0
    %433 = vmatpush1.msra.mxu0 0.0
    %434 = vmatprep.mubr.f32.mxu0 0.0
    %435 = vmatmul.mubr.f32.gmra.mrb[0].mxu0 %v368
    %v436 = vpop.f32.mrb[0].mxu0
    %v437 = vadd.f32 %v358, %v436
    %v438 = vpop.f32.mrb[0].mxu0
    %439 = vdwg.mxu0
    %v440 = vadd.f32 %v437, %v161
    %v441 = vxor.u32 %v440, 2147483648
    %v442 = vmul.f32 %v441, 1.442695
    %v443 = vpow.pop %v442
    %v444 = vadd.f32 %v443, 1.0
    %v445 = vrcp.pop %v444
    %v446 = vmul.f32 1.0, %v445
    %v447 = vtanh.pop %v440
    %v448 = vmul.f32 %v446, 0.0
    %450 = vrot.lane.b32.xlu0 %v447, 64
    %v451 = vpop.permute.xlu0 %450
    %v453 = vmul.f32 %v446, %v451
    %455 = vrot.lane.b32.xlu0 %v453, 32
    %v456 = vpop.permute.xlu0 %455
    %v458 = vadd.f32 %v448, %v456
    %v459 = vtanh.pop %v458
    %461 = vrot.lane.b32.xlu0 %v459, 64
    %v462 = vpop.permute.xlu0 %461
    %v464 = vmul.f32 %v446, %v462
    %465 = vmatprep.subr.mxu0 0.0
    %466 = vmatpush1.msra.mxu0 %v144
    %467 = vmatprep.subr.mxu0 0.0
    %468 = vmatpush1.msra.mxu0 %v145
    %469 = vmatprep.subr.mxu0 0.0
    %470 = vmatpush1.msra.mxu0 %v146
    %471 = vmatprep.subr.mxu0 0.0
    %472 = vmatpush1.msra.mxu0 %v147
    %473 = vmatprep.subr.mxu0 0.0
    %474 = vmatpush1.msra.mxu0 0.0
    %475 = vmatprep.subr.mxu0 0.0
    %476 = vmatpush1.msra.mxu0 0.0
    %477 = vmatprep.subr.mxu0 0.0
    %478 = vmatpush1.msra.mxu0 0.0
    %479 = vmatprep.subr.mxu0 0.0
    %480 = vmatpush1.msra.mxu0 0.0
    %481 = vmatprep.subr.mxu0 0.0
    %482 = vmatpush1.msra.mxu0 0.0
    %483 = vmatprep.subr.mxu0 0.0
    %484 = vmatpush1.msra.mxu0 0.0
    %485 = vmatprep.subr.mxu0 0.0
    %486 = vmatpush1.msra.mxu0 0.0
    %487 = vmatprep.subr.mxu0 0.0
    %488 = vmatpush1.msra.mxu0 0.0
    %489 = vmatprep.subr.mxu0 0.0
    %490 = vmatpush1.msra.mxu0 0.0
    %491 = vmatprep.subr.mxu0 0.0
    %492 = vmatpush1.msra.mxu0 0.0
    %493 = vmatprep.subr.mxu0 0.0
    %494 = vmatpush1.msra.mxu0 0.0
    %495 = vmatprep.subr.mxu0 0.0
    %496 = vmatpush1.msra.mxu0 0.0
    %497 = vmatprep.subr.mxu0 0.0
    %498 = vmatpush1.msra.mxu0 0.0
    %499 = vmatprep.subr.mxu0 0.0
    %500 = vmatpush1.msra.mxu0 0.0
    %501 = vmatprep.subr.mxu0 0.0
    %502 = vmatpush1.msra.mxu0 0.0
    %503 = vmatprep.subr.mxu0 0.0
    %504 = vmatpush1.msra.mxu0 0.0
    %505 = vmatprep.subr.mxu0 0.0
    %506 = vmatpush1.msra.mxu0 0.0
    %507 = vmatprep.subr.mxu0 0.0
    %508 = vmatpush1.msra.mxu0 0.0
    %509 = vmatprep.subr.mxu0 0.0
    %510 = vmatpush1.msra.mxu0 0.0
    %511 = vmatprep.subr.mxu0 0.0
    %512 = vmatpush1.msra.mxu0 0.0
    %513 = vmatprep.subr.mxu0 0.0
    %514 = vmatpush1.msra.mxu0 0.0
    %515 = vmatprep.subr.mxu0 0.0
    %516 = vmatpush1.msra.mxu0 0.0
    %517 = vmatprep.subr.mxu0 0.0
    %518 = vmatpush1.msra.mxu0 0.0
    %519 = vmatprep.subr.mxu0 0.0
    %520 = vmatpush1.msra.mxu0 0.0
    %521 = vmatprep.subr.mxu0 0.0
    %522 = vmatpush1.msra.mxu0 0.0
    %523 = vmatprep.subr.mxu0 0.0
    %524 = vmatpush1.msra.mxu0 0.0
    %525 = vmatprep.subr.mxu0 0.0
    %526 = vmatpush1.msra.mxu0 0.0
    %527 = vmatprep.subr.mxu0 0.0
    %528 = vmatpush1.msra.mxu0 0.0
    %529 = vmatprep.mubr.f32.mxu0 0.0
    %530 = vmatmul.mubr.f32.gmra.mrb[0].mxu0 %v368
    %v531 = vpop.f32.mrb[0].mxu0
    %v532 = vadd.f32 0.0, %v531
    %v533 = vpop.f32.mrb[0].mxu0
    %534 = vdwg.mxu0
    %v536 = vrot.slane %v532, 7
    %v539 = vadd.f32 %v136, %v536
    %v540 = vadd.f32 %v141, %v532
    %v541 = vxor.u32 %v539, 2147483648
    %v542 = vxor.u32 %v540, 2147483648
    %v543 = vmul.f32 %v541, 1.442695
    %v544 = vpow.pop %v543
    %v545 = vmul.f32 %v542, 1.442695
    %v546 = vpow.pop %v545
    %v547 = vadd.f32 %v544, 1.0
    %v548 = vadd.f32 %v546, 1.0
    %v549 = vrcp.pop %v547
    %v550 = vmul.f32 1.0, %v549
    %v551 = vrcp.pop %v548
    %v552 = vmul.f32 1.0, %v551
    %v553 = vtanh.pop %v539
    %v554 = vtanh.pop %v540
    %v557 = vrot.slane %v277, 7
    %v558 = vrot.slane %v278, 7
    %v561 = vmul.f32 %v550, %v557
    %v562 = vmul.f32 %v552, %v558
    %565 = vrot.lane.b32.xlu0 %v553, 64
    %v566 = vpop.permute.xlu0 %565
    %567 = vrot.lane.b32.xlu0 %v554, 64
    %v568 = vpop.permute.xlu0 %567
    %v571 = vmul.f32 %v550, %v566
    %v572 = vmul.f32 %v552, %v568
    %575 = vrot.lane.b32.xlu0 %v571, 32
    %v576 = vpop.permute.xlu0 %575
    %577 = vrot.lane.b32.xlu0 %v572, 32
    %v578 = vpop.permute.xlu0 %577
    %v581 = vadd.f32 %v561, %v576
    %v582 = vadd.f32 %v562, %v578
    %v583 = vtanh.pop %v581
    %v584 = vtanh.pop %v582
    %587 = vrot.lane.b32.xlu0 %v583, 64
    %v588 = vpop.permute.xlu0 %587
    %589 = vrot.lane.b32.xlu0 %v584, 64
    %v590 = vpop.permute.xlu0 %589
    %v593 = vmul.f32 %v550, %v588
    %v594 = vmul.f32 %v552, %v590
    %596 = vrot.lane.b32.xlu0 %v464, 32
    %v597 = vpop.permute.xlu0 %596
    %v598 = vsel %vm163, %v597, 0
    %600 = vmatprep.subr.mxu0 0.0
    %601 = vmatpush1.msra.mxu0 %v152
    %602 = vmatprep.subr.mxu0 0.0
    %603 = vmatpush1.msra.mxu0 %v153
    %604 = vmatprep.subr.mxu0 0.0
    %605 = vmatpush1.msra.mxu0 %v154
    %606 = vmatprep.subr.mxu0 0.0
    %607 = vmatpush1.msra.mxu0 %v155
    %608 = vmatprep.subr.mxu0 0.0
    %609 = vmatpush1.msra.mxu0 0.0
    %610 = vmatprep.subr.mxu0 0.0
    %611 = vmatpush1.msra.mxu0 0.0
    %612 = vmatprep.subr.mxu0 0.0
    %613 = vmatpush1.msra.mxu0 0.0
    %614 = vmatprep.subr.mxu0 0.0
    %615 = vmatpush1.msra.mxu0 0.0
    %616 = vmatprep.subr.mxu0 0.0
    %617 = vmatpush1.msra.mxu0 0.0
    %618 = vmatprep.subr.mxu0 0.0
    %619 = vmatpush1.msra.mxu0 0.0
    %620 = vmatprep.subr.mxu0 0.0
    %621 = vmatpush1.msra.mxu0 0.0
    %622 = vmatprep.subr.mxu0 0.0
    %623 = vmatpush1.msra.mxu0 0.0
    %624 = vmatprep.subr.mxu0 0.0
    %625 = vmatpush1.msra.mxu0 0.0
    %626 = vmatprep.subr.mxu0 0.0
    %627 = vmatpush1.msra.mxu0 0.0
    %628 = vmatprep.subr.mxu0 0.0
    %629 = vmatpush1.msra.mxu0 0.0
    %630 = vmatprep.subr.mxu0 0.0
    %631 = vmatpush1.msra.mxu0 0.0
    %632 = vmatprep.subr.mxu0 0.0
    %633 = vmatpush1.msra.mxu0 0.0
    %634 = vmatprep.subr.mxu0 0.0
    %635 = vmatpush1.msra.mxu0 0.0
    %636 = vmatprep.subr.mxu0 0.0
    %637 = vmatpush1.msra.mxu0 0.0
    %638 = vmatprep.subr.mxu0 0.0
    %639 = vmatpush1.msra.mxu0 0.0
    %640 = vmatprep.subr.mxu0 0.0
    %641 = vmatpush1.msra.mxu0 0.0
    %642 = vmatprep.subr.mxu0 0.0
    %643 = vmatpush1.msra.mxu0 0.0
    %644 = vmatprep.subr.mxu0 0.0
    %645 = vmatpush1.msra.mxu0 0.0
    %646 = vmatprep.subr.mxu0 0.0
    %647 = vmatpush1.msra.mxu0 0.0
    %648 = vmatprep.subr.mxu0 0.0
    %649 = vmatpush1.msra.mxu0 0.0
    %650 = vmatprep.subr.mxu0 0.0
    %651 = vmatpush1.msra.mxu0 0.0
    %652 = vmatprep.subr.mxu0 0.0
    %653 = vmatpush1.msra.mxu0 0.0
    %654 = vmatprep.subr.mxu0 0.0
    %655 = vmatpush1.msra.mxu0 0.0
    %656 = vmatprep.subr.mxu0 0.0
    %657 = vmatpush1.msra.mxu0 0.0
    %658 = vmatprep.subr.mxu0 0.0
    %659 = vmatpush1.msra.mxu0 0.0
    %660 = vmatprep.subr.mxu0 0.0
    %661 = vmatpush1.msra.mxu0 0.0
    %662 = vmatprep.subr.mxu0 0.0
    %663 = vmatpush1.msra.mxu0 0.0
    %664 = vmatprep.mubr.f32.mxu0 0.0
    %665 = vmatmul.mubr.f32.gmra.mrb[0].mxu0 %v598
    %v666 = vpop.f32.mrb[0].mxu0
    %v667 = vadd.f32 0.0, %v666
    %v668 = vpop.f32.mrb[0].mxu0
    %669 = vdwg.mxu0
    %v672 = vrot.slane %v593, 1
    %v673 = vsel %vm364, %v594, %v672
    %674 = vrot.lane.b32.xlu0 %v673, 32
    %v675 = vpop.permute.xlu0 %674
    %v676 = vsel %vm163, %v675, 0
    %678 = vmatprep.subr.mxu0 0.0
    %679 = vmatpush1.msra.mxu0 %v148
    %680 = vmatprep.subr.mxu0 0.0
    %681 = vmatpush1.msra.mxu0 %v149
    %682 = vmatprep.subr.mxu0 0.0
    %683 = vmatpush1.msra.mxu0 %v150
    %684 = vmatprep.subr.mxu0 0.0
    %685 = vmatpush1.msra.mxu0 %v151
    %686 = vmatprep.subr.mxu0 0.0
    %687 = vmatpush1.msra.mxu0 0.0
    %688 = vmatprep.subr.mxu0 0.0
    %689 = vmatpush1.msra.mxu0 0.0
    %690 = vmatprep.subr.mxu0 0.0
    %691 = vmatpush1.msra.mxu0 0.0
    %692 = vmatprep.subr.mxu0 0.0
    %693 = vmatpush1.msra.mxu0 0.0
    %694 = vmatprep.subr.mxu0 0.0
    %695 = vmatpush1.msra.mxu0 0.0
    %696 = vmatprep.subr.mxu0 0.0
    %697 = vmatpush1.msra.mxu0 0.0
    %698 = vmatprep.subr.mxu0 0.0
    %699 = vmatpush1.msra.mxu0 0.0
    %700 = vmatprep.subr.mxu0 0.0
    %701 = vmatpush1.msra.mxu0 0.0
    %702 = vmatprep.subr.mxu0 0.0
    %703 = vmatpush1.msra.mxu0 0.0
    %704 = vmatprep.subr.mxu0 0.0
    %705 = vmatpush1.msra.mxu0 0.0
    %706 = vmatprep.subr.mxu0 0.0
    %707 = vmatpush1.msra.mxu0 0.0
    %708 = vmatprep.subr.mxu0 0.0
    %709 = vmatpush1.msra.mxu0 0.0
    %710 = vmatprep.subr.mxu0 0.0
    %711 = vmatpush1.msra.mxu0 0.0
    %712 = vmatprep.subr.mxu0 0.0
    %713 = vmatpush1.msra.mxu0 0.0
    %714 = vmatprep.subr.mxu0 0.0
    %715 = vmatpush1.msra.mxu0 0.0
    %716 = vmatprep.subr.mxu0 0.0
    %717 = vmatpush1.msra.mxu0 0.0
    %718 = vmatprep.subr.mxu0 0.0
    %719 = vmatpush1.msra.mxu0 0.0
    %720 = vmatprep.subr.mxu0 0.0
    %721 = vmatpush1.msra.mxu0 0.0
    %722 = vmatprep.subr.mxu0 0.0
    %723 = vmatpush1.msra.mxu0 0.0
    %724 = vmatprep.subr.mxu0 0.0
    %725 = vmatpush1.msra.mxu0 0.0
    %726 = vmatprep.subr.mxu0 0.0
    %727 = vmatpush1.msra.mxu0 0.0
    %728 = vmatprep.subr.mxu0 0.0
    %729 = vmatpush1.msra.mxu0 0.0
    %730 = vmatprep.subr.mxu0 0.0
    %731 = vmatpush1.msra.mxu0 0.0
    %732 = vmatprep.subr.mxu0 0.0
    %733 = vmatpush1.msra.mxu0 0.0
    %734 = vmatprep.subr.mxu0 0.0
    %735 = vmatpush1.msra.mxu0 0.0
    %736 = vmatprep.subr.mxu0 0.0
    %737 = vmatpush1.msra.mxu0 0.0
    %738 = vmatprep.subr.mxu0 0.0
    %739 = vmatpush1.msra.mxu0 0.0
    %740 = vmatprep.subr.mxu0 0.0
    %741 = vmatpush1.msra.mxu0 0.0
    %742 = vmatprep.mubr.f32.mxu0 0.0
    %743 = vmatmul.mubr.f32.gmra.mrb[0].mxu0 %v676
    %v744 = vpop.f32.mrb[0].mxu0
    %v745 = vadd.f32 %v667, %v744
    %v746 = vpop.f32.mrb[0].mxu0
    %747 = vdwg.mxu0
    %v748 = vadd.f32 %v745, %v161
    %v749 = vxor.u32 %v748, 2147483648
    %v750 = vmul.f32 %v749, 1.442695
    %v751 = vpow.pop %v750
    %v752 = vadd.f32 %v751, 1.0
    %v753 = vrcp.pop %v752
    %v754 = vmul.f32 1.0, %v753
    %v755 = vtanh.pop %v748
    %v756 = vmul.f32 %v754, %v458
    %758 = vrot.lane.b32.xlu0 %v755, 64
    %v759 = vpop.permute.xlu0 %758
    %v761 = vmul.f32 %v754, %v759
    %763 = vrot.lane.b32.xlu0 %v761, 32
    %v764 = vpop.permute.xlu0 %763
    %v766 = vadd.f32 %v756, %v764
    %v767 = vtanh.pop %v766
    %769 = vrot.lane.b32.xlu0 %v767, 64
    %v770 = vpop.permute.xlu0 %769
    %v772 = vmul.f32 %v754, %v770
    %773 = vmatprep.subr.mxu0 0.0
    %774 = vmatpush1.msra.mxu0 %v144
    %775 = vmatprep.subr.mxu0 0.0
    %776 = vmatpush1.msra.mxu0 %v145
    %777 = vmatprep.subr.mxu0 0.0
    %778 = vmatpush1.msra.mxu0 %v146
    %779 = vmatprep.subr.mxu0 0.0
    %780 = vmatpush1.msra.mxu0 %v147
    %781 = vmatprep.subr.mxu0 0.0
    %782 = vmatpush1.msra.mxu0 0.0
    %783 = vmatprep.subr.mxu0 0.0
    %784 = vmatpush1.msra.mxu0 0.0
    %785 = vmatprep.subr.mxu0 0.0
    %786 = vmatpush1.msra.mxu0 0.0
    %787 = vmatprep.subr.mxu0 0.0
    %788 = vmatpush1.msra.mxu0 0.0
    %789 = vmatprep.subr.mxu0 0.0
    %790 = vmatpush1.msra.mxu0 0.0
    %791 = vmatprep.subr.mxu0 0.0
    %792 = vmatpush1.msra.mxu0 0.0
    %793 = vmatprep.subr.mxu0 0.0
    %794 = vmatpush1.msra.mxu0 0.0
    %795 = vmatprep.subr.mxu0 0.0
    %796 = vmatpush1.msra.mxu0 0.0
    %797 = vmatprep.subr.mxu0 0.0
    %798 = vmatpush1.msra.mxu0 0.0
    %799 = vmatprep.subr.mxu0 0.0
    %800 = vmatpush1.msra.mxu0 0.0
    %801 = vmatprep.subr.mxu0 0.0
    %802 = vmatpush1.msra.mxu0 0.0
    %803 = vmatprep.subr.mxu0 0.0
    %804 = vmatpush1.msra.mxu0 0.0
    %805 = vmatprep.subr.mxu0 0.0
    %806 = vmatpush1.msra.mxu0 0.0
    %807 = vmatprep.subr.mxu0 0.0
    %808 = vmatpush1.msra.mxu0 0.0
    %809 = vmatprep.subr.mxu0 0.0
    %810 = vmatpush1.msra.mxu0 0.0
    %811 = vmatprep.subr.mxu0 0.0
    %812 = vmatpush1.msra.mxu0 0.0
    %813 = vmatprep.subr.mxu0 0.0
    %814 = vmatpush1.msra.mxu0 0.0
    %815 = vmatprep.subr.mxu0 0.0
    %816 = vmatpush1.msra.mxu0 0.0
    %817 = vmatprep.subr.mxu0 0.0
    %818 = vmatpush1.msra.mxu0 0.0
    %819 = vmatprep.subr.mxu0 0.0
    %820 = vmatpush1.msra.mxu0 0.0
    %821 = vmatprep.subr.mxu0 0.0
    %822 = vmatpush1.msra.mxu0 0.0
    %823 = vmatprep.subr.mxu0 0.0
    %824 = vmatpush1.msra.mxu0 0.0
    %825 = vmatprep.subr.mxu0 0.0
    %826 = vmatpush1.msra.mxu0 0.0
    %827 = vmatprep.subr.mxu0 0.0
    %828 = vmatpush1.msra.mxu0 0.0
    %829 = vmatprep.subr.mxu0 0.0
    %830 = vmatpush1.msra.mxu0 0.0
    %831 = vmatprep.subr.mxu0 0.0
    %832 = vmatpush1.msra.mxu0 0.0
    %833 = vmatprep.subr.mxu0 0.0
    %834 = vmatpush1.msra.mxu0 0.0
    %835 = vmatprep.subr.mxu0 0.0
    %836 = vmatpush1.msra.mxu0 0.0
    %837 = vmatprep.mubr.f32.mxu0 0.0
    %838 = vmatmul.mubr.f32.gmra.mrb[0].mxu0 %v676
    %v839 = vpop.f32.mrb[0].mxu0
    %v840 = vadd.f32 0.0, %v839
    %v841 = vpop.f32.mrb[0].mxu0
    %842 = vdwg.mxu0
    %v844 = vrot.slane %v840, 6
    %v845 = vrot.slane %v840, 7
    %v848 = vadd.f32 %v136, %v844
    %v849 = vadd.f32 %v141, %v845
    %v850 = vxor.u32 %v848, 2147483648
    %v851 = vxor.u32 %v849, 2147483648
    %v852 = vmul.f32 %v850, 1.442695
    %v853 = vpow.pop %v852
    %v854 = vmul.f32 %v851, 1.442695
    %v855 = vpow.pop %v854
    %v856 = vadd.f32 %v853, 1.0
    %v857 = vadd.f32 %v855, 1.0
    %v858 = vrcp.pop %v856
    %v859 = vmul.f32 1.0, %v858
    %v860 = vrcp.pop %v857
    %v861 = vmul.f32 1.0, %v860
    %v862 = vtanh.pop %v848
    %v863 = vtanh.pop %v849
    %v866 = vrot.slane %v581, 7
    %v867 = vrot.slane %v582, 7
    %v870 = vmul.f32 %v859, %v866
    %v871 = vmul.f32 %v861, %v867
    %874 = vrot.lane.b32.xlu0 %v862, 64
    %v875 = vpop.permute.xlu0 %874
    %876 = vrot.lane.b32.xlu0 %v863, 64
    %v877 = vpop.permute.xlu0 %876
    %v880 = vmul.f32 %v859, %v875
    %v881 = vmul.f32 %v861, %v877
    %884 = vrot.lane.b32.xlu0 %v880, 32
    %v885 = vpop.permute.xlu0 %884
    %886 = vrot.lane.b32.xlu0 %v881, 32
    %v887 = vpop.permute.xlu0 %886
    %v890 = vadd.f32 %v870, %v885
    %v891 = vadd.f32 %v871, %v887
    %v892 = vtanh.pop %v890
    %v893 = vtanh.pop %v891
    %896 = vrot.lane.b32.xlu0 %v892, 64
    %v897 = vpop.permute.xlu0 %896
    %898 = vrot.lane.b32.xlu0 %v893, 64
    %v899 = vpop.permute.xlu0 %898
    %v902 = vmul.f32 %v859, %v897
    %v903 = vmul.f32 %v861, %v899
    %905 = vrot.lane.b32.xlu0 %v772, 32
    %v906 = vpop.permute.xlu0 %905
    %v907 = vsel %vm163, %v906, 0
    %909 = vmatprep.subr.mxu0 0.0
    %910 = vmatpush1.msra.mxu0 %v152
    %911 = vmatprep.subr.mxu0 0.0
    %912 = vmatpush1.msra.mxu0 %v153
    %913 = vmatprep.subr.mxu0 0.0
    %914 = vmatpush1.msra.mxu0 %v154
    %915 = vmatprep.subr.mxu0 0.0
    %916 = vmatpush1.msra.mxu0 %v155
    %917 = vmatprep.subr.mxu0 0.0
    %918 = vmatpush1.msra.mxu0 0.0
    %919 = vmatprep.subr.mxu0 0.0
    %920 = vmatpush1.msra.mxu0 0.0
    %921 = vmatprep.subr.mxu0 0.0
    %922 = vmatpush1.msra.mxu0 0.0
    %923 = vmatprep.subr.mxu0 0.0
    %924 = vmatpush1.msra.mxu0 0.0
    %925 = vmatprep.subr.mxu0 0.0
    %926 = vmatpush1.msra.mxu0 0.0
    %927 = vmatprep.subr.mxu0 0.0
    %928 = vmatpush1.msra.mxu0 0.0
    %929 = vmatprep.subr.mxu0 0.0
    %930 = vmatpush1.msra.mxu0 0.0
    %931 = vmatprep.subr.mxu0 0.0
    %932 = vmatpush1.msra.mxu0 0.0
    %933 = vmatprep.subr.mxu0 0.0
    %934 = vmatpush1.msra.mxu0 0.0
    %935 = vmatprep.subr.mxu0 0.0
    %936 = vmatpush1.msra.mxu0 0.0
    %937 = vmatprep.subr.mxu0 0.0
    %938 = vmatpush1.msra.mxu0 0.0
    %939 = vmatprep.subr.mxu0 0.0
    %940 = vmatpush1.msra.mxu0 0.0
    %941 = vmatprep.subr.mxu0 0.0
    %942 = vmatpush1.msra.mxu0 0.0
    %943 = vmatprep.subr.mxu0 0.0
    %944 = vmatpush1.msra.mxu0 0.0
    %945 = vmatprep.subr.mxu0 0.0
    %946 = vmatpush1.msra.mxu0 0.0
    %947 = vmatprep.subr.mxu0 0.0
    %948 = vmatpush1.msra.mxu0 0.0
    %949 = vmatprep.subr.mxu0 0.0
    %950 = vmatpush1.msra.mxu0 0.0
    %951 = vmatprep.subr.mxu0 0.0
    %952 = vmatpush1.msra.mxu0 0.0
    %953 = vmatprep.subr.mxu0 0.0
    %954 = vmatpush1.msra.mxu0 0.0
    %955 = vmatprep.subr.mxu0 0.0
    %956 = vmatpush1.msra.mxu0 0.0
    %957 = vmatprep.subr.mxu0 0.0
    %958 = vmatpush1.msra.mxu0 0.0
    %959 = vmatprep.subr.mxu0 0.0
    %960 = vmatpush1.msra.mxu0 0.0
    %961 = vmatprep.subr.mxu0 0.0
    %962 = vmatpush1.msra.mxu0 0.0
    %963 = vmatprep.subr.mxu0 0.0
    %964 = vmatpush1.msra.mxu0 0.0
    %965 = vmatprep.subr.mxu0 0.0
    %966 = vmatpush1.msra.mxu0 0.0
    %967 = vmatprep.subr.mxu0 0.0
    %968 = vmatpush1.msra.mxu0 0.0
    %969 = vmatprep.subr.mxu0 0.0
    %970 = vmatpush1.msra.mxu0 0.0
    %971 = vmatprep.subr.mxu0 0.0
    %972 = vmatpush1.msra.mxu0 0.0
    %973 = vmatprep.mubr.f32.mxu0 0.0
    %974 = vmatmul.mubr.f32.gmra.mrb[0].mxu0 %v907
    %v975 = vpop.f32.mrb[0].mxu0
    %v976 = vadd.f32 0.0, %v975
    %v977 = vpop.f32.mrb[0].mxu0
    %978 = vdwg.mxu0
    %v981 = vrot.slane %v902, 2
    %v982 = vrot.slane %v903, 1
    %v983 = vsel %vm364, %v982, %v981
    %984 = vrot.lane.b32.xlu0 %v983, 32
    %v985 = vpop.permute.xlu0 %984
    %v986 = vsel %vm163, %v985, 0
    %988 = vmatprep.subr.mxu0 0.0
    %989 = vmatpush1.msra.mxu0 %v148
    %990 = vmatprep.subr.mxu0 0.0
    %991 = vmatpush1.msra.mxu0 %v149
    %992 = vmatprep.subr.mxu0 0.0
    %993 = vmatpush1.msra.mxu0 %v150
    %994 = vmatprep.subr.mxu0 0.0
    %995 = vmatpush1.msra.mxu0 %v151
    %996 = vmatprep.subr.mxu0 0.0
    %997 = vmatpush1.msra.mxu0 0.0
    %998 = vmatprep.subr.mxu0 0.0
    %999 = vmatpush1.msra.mxu0 0.0
    %1000 = vmatprep.subr.mxu0 0.0
    %1001 = vmatpush1.msra.mxu0 0.0
    %1002 = vmatprep.subr.mxu0 0.0
    %1003 = vmatpush1.msra.mxu0 0.0
    %1004 = vmatprep.subr.mxu0 0.0
    %1005 = vmatpush1.msra.mxu0 0.0
    %1006 = vmatprep.subr.mxu0 0.0
    %1007 = vmatpush1.msra.mxu0 0.0
    %1008 = vmatprep.subr.mxu0 0.0
    %1009 = vmatpush1.msra.mxu0 0.0
    %1010 = vmatprep.subr.mxu0 0.0
    %1011 = vmatpush1.msra.mxu0 0.0
    %1012 = vmatprep.subr.mxu0 0.0
    %1013 = vmatpush1.msra.mxu0 0.0
    %1014 = vmatprep.subr.mxu0 0.0
    %1015 = vmatpush1.msra.mxu0 0.0
    %1016 = vmatprep.subr.mxu0 0.0
    %1017 = vmatpush1.msra.mxu0 0.0
    %1018 = vmatprep.subr.mxu0 0.0
    %1019 = vmatpush1.msra.mxu0 0.0
    %1020 = vmatprep.subr.mxu0 0.0
    %1021 = vmatpush1.msra.mxu0 0.0
    %1022 = vmatprep.subr.mxu0 0.0
    %1023 = vmatpush1.msra.mxu0 0.0
    %1024 = vmatprep.subr.mxu0 0.0
    %1025 = vmatpush1.msra.mxu0 0.0
    %1026 = vmatprep.subr.mxu0 0.0
    %1027 = vmatpush1.msra.mxu0 0.0
    %1028 = vmatprep.subr.mxu0 0.0
    %1029 = vmatpush1.msra.mxu0 0.0
    %1030 = vmatprep.subr.mxu0 0.0
    %1031 = vmatpush1.msra.mxu0 0.0
    %1032 = vmatprep.subr.mxu0 0.0
    %1033 = vmatpush1.msra.mxu0 0.0
    %1034 = vmatprep.subr.mxu0 0.0
    %1035 = vmatpush1.msra.mxu0 0.0
    %1036 = vmatprep.subr.mxu0 0.0
    %1037 = vmatpush1.msra.mxu0 0.0
    %1038 = vmatprep.subr.mxu0 0.0
    %1039 = vmatpush1.msra.mxu0 0.0
    %1040 = vmatprep.subr.mxu0 0.0
    %1041 = vmatpush1.msra.mxu0 0.0
    %1042 = vmatprep.subr.mxu0 0.0
    %1043 = vmatpush1.msra.mxu0 0.0
    %1044 = vmatprep.subr.mxu0 0.0
    %1045 = vmatpush1.msra.mxu0 0.0
    %1046 = vmatprep.subr.mxu0 0.0
    %1047 = vmatpush1.msra.mxu0 0.0
    %1048 = vmatprep.subr.mxu0 0.0
    %1049 = vmatpush1.msra.mxu0 0.0
    %1050 = vmatprep.subr.mxu0 0.0
    %1051 = vmatpush1.msra.mxu0 0.0
    %1052 = vmatprep.mubr.f32.mxu0 0.0
    %1053 = vmatmul.mubr.f32.gmra.mrb[0].mxu0 %v986
    %v1054 = vpop.f32.mrb[0].mxu0
    %v1055 = vadd.f32 %v976, %v1054
    %v1056 = vpop.f32.mrb[0].mxu0
    %1057 = vdwg.mxu0
    %v1058 = vadd.f32 %v1055, %v161
    %v1059 = vxor.u32 %v1058, 2147483648
    %v1060 = vmul.f32 %v1059, 1.442695
    %v1061 = vpow.pop %v1060
    %v1062 = vadd.f32 %v1061, 1.0
    %v1063 = vrcp.pop %v1062
    %v1064 = vmul.f32 1.0, %v1063
    %v1065 = vtanh.pop %v1058
    %v1066 = vmul.f32 %v1064, %v766
    %1068 = vrot.lane.b32.xlu0 %v1065, 64
    %v1069 = vpop.permute.xlu0 %1068
    %v1071 = vmul.f32 %v1064, %v1069
    %1073 = vrot.lane.b32.xlu0 %v1071, 32
    %v1074 = vpop.permute.xlu0 %1073
    %v1076 = vadd.f32 %v1066, %v1074
    %v1077 = vtanh.pop %v1076
    %1079 = vrot.lane.b32.xlu0 %v1077, 64
    %v1080 = vpop.permute.xlu0 %1079
    %v1082 = vmul.f32 %v1064, %v1080
    %1083 = vmatprep.subr.mxu0 0.0
    %1084 = vmatpush1.msra.mxu0 %v144
    %1085 = vmatprep.subr.mxu0 0.0
    %1086 = vmatpush1.msra.mxu0 %v145
    %1087 = vmatprep.subr.mxu0 0.0
    %1088 = vmatpush1.msra.mxu0 %v146
    %1089 = vmatprep.subr.mxu0 0.0
    %1090 = vmatpush1.msra.mxu0 %v147
    %1091 = vmatprep.subr.mxu0 0.0
    %1092 = vmatpush1.msra.mxu0 0.0
    %1093 = vmatprep.subr.mxu0 0.0
    %1094 = vmatpush1.msra.mxu0 0.0
    %1095 = vmatprep.subr.mxu0 0.0
    %1096 = vmatpush1.msra.mxu0 0.0
    %1097 = vmatprep.subr.mxu0 0.0
    %1098 = vmatpush1.msra.mxu0 0.0
    %1099 = vmatprep.subr.mxu0 0.0
    %1100 = vmatpush1.msra.mxu0 0.0
    %1101 = vmatprep.subr.mxu0 0.0
    %1102 = vmatpush1.msra.mxu0 0.0
    %1103 = vmatprep.subr.mxu0 0.0
    %1104 = vmatpush1.msra.mxu0 0.0
    %1105 = vmatprep.subr.mxu0 0.0
    %1106 = vmatpush1.msra.mxu0 0.0
    %1107 = vmatprep.subr.mxu0 0.0
    %1108 = vmatpush1.msra.mxu0 0.0
    %1109 = vmatprep.subr.mxu0 0.0
    %1110 = vmatpush1.msra.mxu0 0.0
    %1111 = vmatprep.subr.mxu0 0.0
    %1112 = vmatpush1.msra.mxu0 0.0
    %1113 = vmatprep.subr.mxu0 0.0
    %1114 = vmatpush1.msra.mxu0 0.0
    %1115 = vmatprep.subr.mxu0 0.0
    %1116 = vmatpush1.msra.mxu0 0.0
    %1117 = vmatprep.subr.mxu0 0.0
    %1118 = vmatpush1.msra.mxu0 0.0
    %1119 = vmatprep.subr.mxu0 0.0
    %1120 = vmatpush1.msra.mxu0 0.0
    %1121 = vmatprep.subr.mxu0 0.0
    %1122 = vmatpush1.msra.mxu0 0.0
    %1123 = vmatprep.subr.mxu0 0.0
    %1124 = vmatpush1.msra.mxu0 0.0
    %1125 = vmatprep.subr.mxu0 0.0
    %1126 = vmatpush1.msra.mxu0 0.0
    %1127 = vmatprep.subr.mxu0 0.0
    %1128 = vmatpush1.msra.mxu0 0.0
    %1129 = vmatprep.subr.mxu0 0.0
    %1130 = vmatpush1.msra.mxu0 0.0
    %1131 = vmatprep.subr.mxu0 0.0
    %1132 = vmatpush1.msra.mxu0 0.0
    %1133 = vmatprep.subr.mxu0 0.0
    %1134 = vmatpush1.msra.mxu0 0.0
    %1135 = vmatprep.subr.mxu0 0.0
    %1136 = vmatpush1.msra.mxu0 0.0
    %1137 = vmatprep.subr.mxu0 0.0
    %1138 = vmatpush1.msra.mxu0 0.0
    %1139 = vmatprep.subr.mxu0 0.0
    %1140 = vmatpush1.msra.mxu0 0.0
    %1141 = vmatprep.subr.mxu0 0.0
    %1142 = vmatpush1.msra.mxu0 0.0
    %1143 = vmatprep.subr.mxu0 0.0
    %1144 = vmatpush1.msra.mxu0 0.0
    %1145 = vmatprep.subr.mxu0 0.0
    %1146 = vmatpush1.msra.mxu0 0.0
    %1147 = vmatprep.mubr.f32.mxu0 0.0
    %1148 = vmatmul.mubr.f32.gmra.mrb[0].mxu0 %v986
    %v1149 = vpop.f32.mrb[0].mxu0
    %v1150 = vadd.f32 0.0, %v1149
    %v1151 = vpop.f32.mrb[0].mxu0
    %1152 = vdwg.mxu0
    %v1154 = vrot.slane %v1150, 5
    %v1155 = vrot.slane %v1150, 6
    %v1158 = vadd.f32 %v136, %v1154
    %v1159 = vadd.f32 %v141, %v1155
    %v1160 = vxor.u32 %v1158, 2147483648
    %v1161 = vxor.u32 %v1159, 2147483648
    %v1162 = vmul.f32 %v1160, 1.442695
    %v1163 = vpow.pop %v1162
    %v1164 = vmul.f32 %v1161, 1.442695
    %v1165 = vpow.pop %v1164
    %v1166 = vadd.f32 %v1163, 1.0
    %v1167 = vadd.f32 %v1165, 1.0
    %v1168 = vrcp.pop %v1166
    %v1169 = vmul.f32 1.0, %v1168
    %v1170 = vrcp.pop %v1167
    %v1171 = vmul.f32 1.0, %v1170
    %v1172 = vtanh.pop %v1158
    %v1173 = vtanh.pop %v1159
    %v1176 = vrot.slane %v890, 7
    %v1177 = vrot.slane %v891, 7
    %v1180 = vmul.f32 %v1169, %v1176
    %v1181 = vmul.f32 %v1171, %v1177
    %1184 = vrot.lane.b32.xlu0 %v1172, 64
    %v1185 = vpop.permute.xlu0 %1184
    %1186 = vrot.lane.b32.xlu0 %v1173, 64
    %v1187 = vpop.permute.xlu0 %1186
    %v1190 = vmul.f32 %v1169, %v1185
    %v1191 = vmul.f32 %v1171, %v1187
    %1194 = vrot.lane.b32.xlu0 %v1190, 32
    %v1195 = vpop.permute.xlu0 %1194
    %1196 = vrot.lane.b32.xlu0 %v1191, 32
    %v1197 = vpop.permute.xlu0 %1196
    %v1200 = vadd.f32 %v1180, %v1195
    %v1201 = vadd.f32 %v1181, %v1197
    %v1202 = vtanh.pop %v1200
    %v1203 = vtanh.pop %v1201
    %1206 = vrot.lane.b32.xlu0 %v1202, 64
    %v1207 = vpop.permute.xlu0 %1206
    %1208 = vrot.lane.b32.xlu0 %v1203, 64
    %v1209 = vpop.permute.xlu0 %1208
    %v1212 = vmul.f32 %v1169, %v1207
    %v1213 = vmul.f32 %v1171, %v1209
    %1215 = vrot.lane.b32.xlu0 %v1082, 32
    %v1216 = vpop.permute.xlu0 %1215
    %v1217 = vsel %vm163, %v1216, 0
    %1219 = vmatprep.subr.mxu0 0.0
    %1220 = vmatpush1.msra.mxu0 %v152
    %1221 = vmatprep.subr.mxu0 0.0
    %1222 = vmatpush1.msra.mxu0 %v153
    %1223 = vmatprep.subr.mxu0 0.0
    %1224 = vmatpush1.msra.mxu0 %v154
    %1225 = vmatprep.subr.mxu0 0.0
    %1226 = vmatpush1.msra.mxu0 %v155
    %1227 = vmatprep.subr.mxu0 0.0
    %1228 = vmatpush1.msra.mxu0 0.0
    %1229 = vmatprep.subr.mxu0 0.0
    %1230 = vmatpush1.msra.mxu0 0.0
    %1231 = vmatprep.subr.mxu0 0.0
    %1232 = vmatpush1.msra.mxu0 0.0
    %1233 = vmatprep.subr.mxu0 0.0
    %1234 = vmatpush1.msra.mxu0 0.0
    %1235 = vmatprep.subr.mxu0 0.0
    %1236 = vmatpush1.msra.mxu0 0.0
    %1237 = vmatprep.subr.mxu0 0.0
    %1238 = vmatpush1.msra.mxu0 0.0
    %1239 = vmatprep.subr.mxu0 0.0
    %1240 = vmatpush1.msra.mxu0 0.0
    %1241 = vmatprep.subr.mxu0 0.0
    %1242 = vmatpush1.msra.mxu0 0.0
    %1243 = vmatprep.subr.mxu0 0.0
    %1244 = vmatpush1.msra.mxu0 0.0
    %1245 = vmatprep.subr.mxu0 0.0
    %1246 = vmatpush1.msra.mxu0 0.0
    %1247 = vmatprep.subr.mxu0 0.0
    %1248 = vmatpush1.msra.mxu0 0.0
    %1249 = vmatprep.subr.mxu0 0.0
    %1250 = vmatpush1.msra.mxu0 0.0
    %1251 = vmatprep.subr.mxu0 0.0
    %1252 = vmatpush1.msra.mxu0 0.0
    %1253 = vmatprep.subr.mxu0 0.0
    %1254 = vmatpush1.msra.mxu0 0.0
    %1255 = vmatprep.subr.mxu0 0.0
    %1256 = vmatpush1.msra.mxu0 0.0
    %1257 = vmatprep.subr.mxu0 0.0
    %1258 = vmatpush1.msra.mxu0 0.0
    %1259 = vmatprep.subr.mxu0 0.0
    %1260 = vmatpush1.msra.mxu0 0.0
    %1261 = vmatprep.subr.mxu0 0.0
    %1262 = vmatpush1.msra.mxu0 0.0
    %1263 = vmatprep.subr.mxu0 0.0
    %1264 = vmatpush1.msra.mxu0 0.0
    %1265 = vmatprep.subr.mxu0 0.0
    %1266 = vmatpush1.msra.mxu0 0.0
    %1267 = vmatprep.subr.mxu0 0.0
    %1268 = vmatpush1.msra.mxu0 0.0
    %1269 = vmatprep.subr.mxu0 0.0
    %1270 = vmatpush1.msra.mxu0 0.0
    %1271 = vmatprep.subr.mxu0 0.0
    %1272 = vmatpush1.msra.mxu0 0.0
    %1273 = vmatprep.subr.mxu0 0.0
    %1274 = vmatpush1.msra.mxu0 0.0
    %1275 = vmatprep.subr.mxu0 0.0
    %1276 = vmatpush1.msra.mxu0 0.0
    %1277 = vmatprep.subr.mxu0 0.0
    %1278 = vmatpush1.msra.mxu0 0.0
    %1279 = vmatprep.subr.mxu0 0.0
    %1280 = vmatpush1.msra.mxu0 0.0
    %1281 = vmatprep.subr.mxu0 0.0
    %1282 = vmatpush1.msra.mxu0 0.0
    %1283 = vmatprep.mubr.f32.mxu0 0.0
    %1284 = vmatmul.mubr.f32.gmra.mrb[0].mxu0 %v1217
    %v1285 = vpop.f32.mrb[0].mxu0
    %v1286 = vadd.f32 0.0, %v1285
    %v1287 = vpop.f32.mrb[0].mxu0
    %1288 = vdwg.mxu0
    %v1291 = vrot.slane %v1212, 3
    %v1292 = vrot.slane %v1213, 2
    %v1293 = vsel %vm364, %v1292, %v1291
    %1294 = vrot.lane.b32.xlu0 %v1293, 32
    %v1295 = vpop.permute.xlu0 %1294
    %v1296 = vsel %vm163, %v1295, 0
    %1298 = vmatprep.subr.mxu0 0.0
    %1299 = vmatpush1.msra.mxu0 %v148
    %1300 = vmatprep.subr.mxu0 0.0
    %1301 = vmatpush1.msra.mxu0 %v149
    %1302 = vmatprep.subr.mxu0 0.0
    %1303 = vmatpush1.msra.mxu0 %v150
    %1304 = vmatprep.subr.mxu0 0.0
    %1305 = vmatpush1.msra.mxu0 %v151
    %1306 = vmatprep.subr.mxu0 0.0
    %1307 = vmatpush1.msra.mxu0 0.0
    %1308 = vmatprep.subr.mxu0 0.0
    %1309 = vmatpush1.msra.mxu0 0.0
    %1310 = vmatprep.subr.mxu0 0.0
    %1311 = vmatpush1.msra.mxu0 0.0
    %1312 = vmatprep.subr.mxu0 0.0
    %1313 = vmatpush1.msra.mxu0 0.0
    %1314 = vmatprep.subr.mxu0 0.0
    %1315 = vmatpush1.msra.mxu0 0.0
    %1316 = vmatprep.subr.mxu0 0.0
    %1317 = vmatpush1.msra.mxu0 0.0
    %1318 = vmatprep.subr.mxu0 0.0
    %1319 = vmatpush1.msra.mxu0 0.0
    %1320 = vmatprep.subr.mxu0 0.0
    %1321 = vmatpush1.msra.mxu0 0.0
    %1322 = vmatprep.subr.mxu0 0.0
    %1323 = vmatpush1.msra.mxu0 0.0
    %1324 = vmatprep.subr.mxu0 0.0
    %1325 = vmatpush1.msra.mxu0 0.0
    %1326 = vmatprep.subr.mxu0 0.0
    %1327 = vmatpush1.msra.mxu0 0.0
    %1328 = vmatprep.subr.mxu0 0.0
    %1329 = vmatpush1.msra.mxu0 0.0
    %1330 = vmatprep.subr.mxu0 0.0
    %1331 = vmatpush1.msra.mxu0 0.0
    %1332 = vmatprep.subr.mxu0 0.0
    %1333 = vmatpush1.msra.mxu0 0.0
    %1334 = vmatprep.subr.mxu0 0.0
    %1335 = vmatpush1.msra.mxu0 0.0
    %1336 = vmatprep.subr.mxu0 0.0
    %1337 = vmatpush1.msra.mxu0 0.0
    %1338 = vmatprep.subr.mxu0 0.0
    %1339 = vmatpush1.msra.mxu0 0.0
    %1340 = vmatprep.subr.mxu0 0.0
    %1341 = vmatpush1.msra.mxu0 0.0
    %1342 = vmatprep.subr.mxu0 0.0
    %1343 = vmatpush1.msra.mxu0 0.0
    %1344 = vmatprep.subr.mxu0 0.0
    %1345 = vmatpush1.msra.mxu0 0.0
    %1346 = vmatprep.subr.mxu0 0.0
    %1347 = vmatpush1.msra.mxu0 0.0
    %1348 = vmatprep.subr.mxu0 0.0
    %1349 = vmatpush1.msra.mxu0 0.0
    %1350 = vmatprep.subr.mxu0 0.0
    %1351 = vmatpush1.msra.mxu0 0.0
    %1352 = vmatprep.subr.mxu0 0.0
    %1353 = vmatpush1.msra.mxu0 0.0
    %1354 = vmatprep.subr.mxu0 0.0
    %1355 = vmatpush1.msra.mxu0 0.0
    %1356 = vmatprep.subr.mxu0 0.0
    %1357 = vmatpush1.msra.mxu0 0.0
    %1358 = vmatprep.subr.mxu0 0.0
    %1359 = vmatpush1.msra.mxu0 0.0
    %1360 = vmatprep.subr.mxu0 0.0
    %1361 = vmatpush1.msra.mxu0 0.0
    %1362 = vmatprep.mubr.f32.mxu0 0.0
    %1363 = vmatmul.mubr.f32.gmra.mrb[0].mxu0 %v1296
    %v1364 = vpop.f32.mrb[0].mxu0
    %v1365 = vadd.f32 %v1286, %v1364
    %v1366 = vpop.f32.mrb[0].mxu0
    %1367 = vdwg.mxu0
    %v1368 = vadd.f32 %v1365, %v161
    %v1369 = vxor.u32 %v1368, 2147483648
    %v1370 = vmul.f32 %v1369, 1.442695
    %v1371 = vpow.pop %v1370
    %v1372 = vadd.f32 %v1371, 1.0
    %v1373 = vrcp.pop %v1372
    %v1374 = vmul.f32 1.0, %v1373
    %v1375 = vtanh.pop %v1368
    %v1376 = vmul.f32 %v1374, %v1076
    %1378 = vrot.lane.b32.xlu0 %v1375, 64
    %v1379 = vpop.permute.xlu0 %1378
    %v1381 = vmul.f32 %v1374, %v1379
    %1383 = vrot.lane.b32.xlu0 %v1381, 32
    %v1384 = vpop.permute.xlu0 %1383
    %v1386 = vadd.f32 %v1376, %v1384
    %v1387 = vtanh.pop %v1386
    %1389 = vrot.lane.b32.xlu0 %v1387, 64
    %v1390 = vpop.permute.xlu0 %1389
    %v1392 = vmul.f32 %v1374, %v1390
    %1393 = vmatprep.subr.mxu0 0.0
    %1394 = vmatpush1.msra.mxu0 %v144
    %1395 = vmatprep.subr.mxu0 0.0
    %1396 = vmatpush1.msra.mxu0 %v145
    %1397 = vmatprep.subr.mxu0 0.0
    %1398 = vmatpush1.msra.mxu0 %v146
    %1399 = vmatprep.subr.mxu0 0.0
    %1400 = vmatpush1.msra.mxu0 %v147
    %1401 = vmatprep.subr.mxu0 0.0
    %1402 = vmatpush1.msra.mxu0 0.0
    %1403 = vmatprep.subr.mxu0 0.0
    %1404 = vmatpush1.msra.mxu0 0.0
    %1405 = vmatprep.subr.mxu0 0.0
    %1406 = vmatpush1.msra.mxu0 0.0
    %1407 = vmatprep.subr.mxu0 0.0
    %1408 = vmatpush1.msra.mxu0 0.0
    %1409 = vmatprep.subr.mxu0 0.0
    %1410 = vmatpush1.msra.mxu0 0.0
    %1411 = vmatprep.subr.mxu0 0.0
    %1412 = vmatpush1.msra.mxu0 0.0
    %1413 = vmatprep.subr.mxu0 0.0
    %1414 = vmatpush1.msra.mxu0 0.0
    %1415 = vmatprep.subr.mxu0 0.0
    %1416 = vmatpush1.msra.mxu0 0.0
    %1417 = vmatprep.subr.mxu0 0.0
    %1418 = vmatpush1.msra.mxu0 0.0
    %1419 = vmatprep.subr.mxu0 0.0
    %1420 = vmatpush1.msra.mxu0 0.0
    %1421 = vmatprep.subr.mxu0 0.0
    %1422 = vmatpush1.msra.mxu0 0.0
    %1423 = vmatprep.subr.mxu0 0.0
    %1424 = vmatpush1.msra.mxu0 0.0
    %1425 = vmatprep.subr.mxu0 0.0
    %1426 = vmatpush1.msra.mxu0 0.0
    %1427 = vmatprep.subr.mxu0 0.0
    %1428 = vmatpush1.msra.mxu0 0.0
    %1429 = vmatprep.subr.mxu0 0.0
    %1430 = vmatpush1.msra.mxu0 0.0
    %1431 = vmatprep.subr.mxu0 0.0
    %1432 = vmatpush1.msra.mxu0 0.0
    %1433 = vmatprep.subr.mxu0 0.0
    %1434 = vmatpush1.msra.mxu0 0.0
    %1435 = vmatprep.subr.mxu0 0.0
    %1436 = vmatpush1.msra.mxu0 0.0
    %1437 = vmatprep.subr.mxu0 0.0
    %1438 = vmatpush1.msra.mxu0 0.0
    %1439 = vmatprep.subr.mxu0 0.0
    %1440 = vmatpush1.msra.mxu0 0.0
    %1441 = vmatprep.subr.mxu0 0.0
    %1442 = vmatpush1.msra.mxu0 0.0
    %1443 = vmatprep.subr.mxu0 0.0
    %1444 = vmatpush1.msra.mxu0 0.0
    %1445 = vmatprep.subr.mxu0 0.0
    %1446 = vmatpush1.msra.mxu0 0.0
    %1447 = vmatprep.subr.mxu0 0.0
    %1448 = vmatpush1.msra.mxu0 0.0
    %1449 = vmatprep.subr.mxu0 0.0
    %1450 = vmatpush1.msra.mxu0 0.0
    %1451 = vmatprep.subr.mxu0 0.0
    %1452 = vmatpush1.msra.mxu0 0.0
    %1453 = vmatprep.subr.mxu0 0.0
    %1454 = vmatpush1.msra.mxu0 0.0
    %1455 = vmatprep.subr.mxu0 0.0
    %1456 = vmatpush1.msra.mxu0 0.0
    %1457 = vmatprep.mubr.f32.mxu0 0.0
    %1458 = vmatmul.mubr.f32.gmra.mrb[0].mxu0 %v1296
    %v1459 = vpop.f32.mrb[0].mxu0
    %v1460 = vadd.f32 0.0, %v1459
    %v1461 = vpop.f32.mrb[0].mxu0
    %1462 = vdwg.mxu0
    %v1464 = vrot.slane %v1460, 4
    %v1465 = vrot.slane %v1460, 5
    %v1468 = vadd.f32 %v136, %v1464
    %v1469 = vadd.f32 %v141, %v1465
    %v1470 = vxor.u32 %v1468, 2147483648
    %v1471 = vxor.u32 %v1469, 2147483648
    %v1472 = vmul.f32 %v1470, 1.442695
    %v1473 = vpow.pop %v1472
    %v1474 = vmul.f32 %v1471, 1.442695
    %v1475 = vpow.pop %v1474
    %v1476 = vadd.f32 %v1473, 1.0
    %v1477 = vadd.f32 %v1475, 1.0
    %v1478 = vrcp.pop %v1476
    %v1479 = vmul.f32 1.0, %v1478
    %v1480 = vrcp.pop %v1477
    %v1481 = vmul.f32 1.0, %v1480
    %v1482 = vtanh.pop %v1468
    %v1483 = vtanh.pop %v1469
    %v1486 = vrot.slane %v1200, 7
    %v1487 = vrot.slane %v1201, 7
    %v1490 = vmul.f32 %v1479, %v1486
    %v1491 = vmul.f32 %v1481, %v1487
    %1494 = vrot.lane.b32.xlu0 %v1482, 64
    %v1495 = vpop.permute.xlu0 %1494
    %1496 = vrot.lane.b32.xlu0 %v1483, 64
    %v1497 = vpop.permute.xlu0 %1496
    %v1500 = vmul.f32 %v1479, %v1495
    %v1501 = vmul.f32 %v1481, %v1497
    %1504 = vrot.lane.b32.xlu0 %v1500, 32
    %v1505 = vpop.permute.xlu0 %1504
    %1506 = vrot.lane.b32.xlu0 %v1501, 32
    %v1507 = vpop.permute.xlu0 %1506
    %v1510 = vadd.f32 %v1490, %v1505
    %v1511 = vadd.f32 %v1491, %v1507
    %v1512 = vtanh.pop %v1510
    %v1513 = vtanh.pop %v1511
    %1516 = vrot.lane.b32.xlu0 %v1512, 64
    %v1517 = vpop.permute.xlu0 %1516
    %1518 = vrot.lane.b32.xlu0 %v1513, 64
    %v1519 = vpop.permute.xlu0 %1518
    %v1522 = vmul.f32 %v1479, %v1517
    %v1523 = vmul.f32 %v1481, %v1519
    %1525 = vrot.lane.b32.xlu0 %v1392, 32
    %v1526 = vpop.permute.xlu0 %1525
    %v1527 = vsel %vm163, %v1526, 0
    %1529 = vmatprep.subr.mxu0 0.0
    %1530 = vmatpush1.msra.mxu0 %v152
    %1531 = vmatprep.subr.mxu0 0.0
    %1532 = vmatpush1.msra.mxu0 %v153
    %1533 = vmatprep.subr.mxu0 0.0
    %1534 = vmatpush1.msra.mxu0 %v154
    %1535 = vmatprep.subr.mxu0 0.0
    %1536 = vmatpush1.msra.mxu0 %v155
    %1537 = vmatprep.subr.mxu0 0.0
    %1538 = vmatpush1.msra.mxu0 0.0
    %1539 = vmatprep.subr.mxu0 0.0
    %1540 = vmatpush1.msra.mxu0 0.0
    %1541 = vmatprep.subr.mxu0 0.0
    %1542 = vmatpush1.msra.mxu0 0.0
    %1543 = vmatprep.subr.mxu0 0.0
    %1544 = vmatpush1.msra.mxu0 0.0
    %1545 = vmatprep.subr.mxu0 0.0
    %1546 = vmatpush1.msra.mxu0 0.0
    %1547 = vmatprep.subr.mxu0 0.0
    %1548 = vmatpush1.msra.mxu0 0.0
    %1549 = vmatprep.subr.mxu0 0.0
    %1550 = vmatpush1.msra.mxu0 0.0
    %1551 = vmatprep.subr.mxu0 0.0
    %1552 = vmatpush1.msra.mxu0 0.0
    %1553 = vmatprep.subr.mxu0 0.0
    %1554 = vmatpush1.msra.mxu0 0.0
    %1555 = vmatprep.subr.mxu0 0.0
    %1556 = vmatpush1.msra.mxu0 0.0
    %1557 = vmatprep.subr.mxu0 0.0
    %1558 = vmatpush1.msra.mxu0 0.0
    %1559 = vmatprep.subr.mxu0 0.0
    %1560 = vmatpush1.msra.mxu0 0.0
    %1561 = vmatprep.subr.mxu0 0.0
    %1562 = vmatpush1.msra.mxu0 0.0
    %1563 = vmatprep.subr.mxu0 0.0
    %1564 = vmatpush1.msra.mxu0 0.0
    %1565 = vmatprep.subr.mxu0 0.0
    %1566 = vmatpush1.msra.mxu0 0.0
    %1567 = vmatprep.subr.mxu0 0.0
    %1568 = vmatpush1.msra.mxu0 0.0
    %1569 = vmatprep.subr.mxu0 0.0
    %1570 = vmatpush1.msra.mxu0 0.0
    %1571 = vmatprep.subr.mxu0 0.0
    %1572 = vmatpush1.msra.mxu0 0.0
    %1573 = vmatprep.subr.mxu0 0.0
    %1574 = vmatpush1.msra.mxu0 0.0
    %1575 = vmatprep.subr.mxu0 0.0
    %1576 = vmatpush1.msra.mxu0 0.0
    %1577 = vmatprep.subr.mxu0 0.0
    %1578 = vmatpush1.msra.mxu0 0.0
    %1579 = vmatprep.subr.mxu0 0.0
    %1580 = vmatpush1.msra.mxu0 0.0
    %1581 = vmatprep.subr.mxu0 0.0
    %1582 = vmatpush1.msra.mxu0 0.0
    %1583 = vmatprep.subr.mxu0 0.0
    %1584 = vmatpush1.msra.mxu0 0.0
    %1585 = vmatprep.subr.mxu0 0.0
    %1586 = vmatpush1.msra.mxu0 0.0
    %1587 = vmatprep.subr.mxu0 0.0
    %1588 = vmatpush1.msra.mxu0 0.0
    %1589 = vmatprep.subr.mxu0 0.0
    %1590 = vmatpush1.msra.mxu0 0.0
    %1591 = vmatprep.subr.mxu0 0.0
    %1592 = vmatpush1.msra.mxu0 0.0
    %1593 = vmatprep.mubr.f32.mxu0 0.0
    %1594 = vmatmul.mubr.f32.gmra.mrb[0].mxu0 %v1527
    %v1595 = vpop.f32.mrb[0].mxu0
    %v1596 = vadd.f32 0.0, %v1595
    %v1597 = vpop.f32.mrb[0].mxu0
    %1598 = vdwg.mxu0
    %v1601 = vrot.slane %v1522, 4
    %v1602 = vrot.slane %v1523, 3
    %v1603 = vsel %vm364, %v1602, %v1601
    %1604 = vrot.lane.b32.xlu0 %v1603, 32
    %v1605 = vpop.permute.xlu0 %1604
    %v1606 = vsel %vm163, %v1605, 0
    %1608 = vmatprep.subr.mxu0 0.0
    %1609 = vmatpush1.msra.mxu0 %v148
    %1610 = vmatprep.subr.mxu0 0.0
    %1611 = vmatpush1.msra.mxu0 %v149
    %1612 = vmatprep.subr.mxu0 0.0
    %1613 = vmatpush1.msra.mxu0 %v150
    %1614 = vmatprep.subr.mxu0 0.0
    %1615 = vmatpush1.msra.mxu0 %v151
    %1616 = vmatprep.subr.mxu0 0.0
    %1617 = vmatpush1.msra.mxu0 0.0
    %1618 = vmatprep.subr.mxu0 0.0
    %1619 = vmatpush1.msra.mxu0 0.0
    %1620 = vmatprep.subr.mxu0 0.0
    %1621 = vmatpush1.msra.mxu0 0.0
    %1622 = vmatprep.subr.mxu0 0.0
    %1623 = vmatpush1.msra.mxu0 0.0
    %1624 = vmatprep.subr.mxu0 0.0
    %1625 = vmatpush1.msra.mxu0 0.0
    %1626 = vmatprep.subr.mxu0 0.0
    %1627 = vmatpush1.msra.mxu0 0.0
    %1628 = vmatprep.subr.mxu0 0.0
    %1629 = vmatpush1.msra.mxu0 0.0
    %1630 = vmatprep.subr.mxu0 0.0
    %1631 = vmatpush1.msra.mxu0 0.0
    %1632 = vmatprep.subr.mxu0 0.0
    %1633 = vmatpush1.msra.mxu0 0.0
    %1634 = vmatprep.subr.mxu0 0.0
    %1635 = vmatpush1.msra.mxu0 0.0
    %1636 = vmatprep.subr.mxu0 0.0
    %1637 = vmatpush1.msra.mxu0 0.0
    %1638 = vmatprep.subr.mxu0 0.0
    %1639 = vmatpush1.msra.mxu0 0.0
    %1640 = vmatprep.subr.mxu0 0.0
    %1641 = vmatpush1.msra.mxu0 0.0
    %1642 = vmatprep.subr.mxu0 0.0
    %1643 = vmatpush1.msra.mxu0 0.0
    %1644 = vmatprep.subr.mxu0 0.0
    %1645 = vmatpush1.msra.mxu0 0.0
    %1646 = vmatprep.subr.mxu0 0.0
    %1647 = vmatpush1.msra.mxu0 0.0
    %1648 = vmatprep.subr.mxu0 0.0
    %1649 = vmatpush1.msra.mxu0 0.0
    %1650 = vmatprep.subr.mxu0 0.0
    %1651 = vmatpush1.msra.mxu0 0.0
    %1652 = vmatprep.subr.mxu0 0.0
    %1653 = vmatpush1.msra.mxu0 0.0
    %1654 = vmatprep.subr.mxu0 0.0
    %1655 = vmatpush1.msra.mxu0 0.0
    %1656 = vmatprep.subr.mxu0 0.0
    %1657 = vmatpush1.msra.mxu0 0.0
    %1658 = vmatprep.subr.mxu0 0.0
    %1659 = vmatpush1.msra.mxu0 0.0
    %1660 = vmatprep.subr.mxu0 0.0
    %1661 = vmatpush1.msra.mxu0 0.0
    %1662 = vmatprep.subr.mxu0 0.0
    %1663 = vmatpush1.msra.mxu0 0.0
    %1664 = vmatprep.subr.mxu0 0.0
    %1665 = vmatpush1.msra.mxu0 0.0
    %1666 = vmatprep.subr.mxu0 0.0
    %1667 = vmatpush1.msra.mxu0 0.0
    %1668 = vmatprep.subr.mxu0 0.0
    %1669 = vmatpush1.msra.mxu0 0.0
    %1670 = vmatprep.subr.mxu0 0.0
    %1671 = vmatpush1.msra.mxu0 0.0
    %1672 = vmatprep.mubr.f32.mxu0 0.0
    %1673 = vmatmul.mubr.f32.gmra.mrb[0].mxu0 %v1606
    %v1674 = vpop.f32.mrb[0].mxu0
    %v1675 = vadd.f32 %v1596, %v1674
    %v1676 = vpop.f32.mrb[0].mxu0
    %1677 = vdwg.mxu0
    %v1678 = vadd.f32 %v1675, %v161
    %v1679 = vxor.u32 %v1678, 2147483648
    %v1680 = vmul.f32 %v1679, 1.442695
    %v1681 = vpow.pop %v1680
    %v1682 = vadd.f32 %v1681, 1.0
    %v1683 = vrcp.pop %v1682
    %v1684 = vmul.f32 1.0, %v1683
    %v1685 = vtanh.pop %v1678
    %v1686 = vmul.f32 %v1684, %v1386
    %1688 = vrot.lane.b32.xlu0 %v1685, 64
    %v1689 = vpop.permute.xlu0 %1688
    %v1691 = vmul.f32 %v1684, %v1689
    %1693 = vrot.lane.b32.xlu0 %v1691, 32
    %v1694 = vpop.permute.xlu0 %1693
    %v1696 = vadd.f32 %v1686, %v1694
    %v1697 = vtanh.pop %v1696
    %1699 = vrot.lane.b32.xlu0 %v1697, 64
    %v1700 = vpop.permute.xlu0 %1699
    %v1702 = vmul.f32 %v1684, %v1700
    %1703 = vmatprep.subr.mxu0 0.0
    %1704 = vmatpush1.msra.mxu0 %v144
    %1705 = vmatprep.subr.mxu0 0.0
    %1706 = vmatpush1.msra.mxu0 %v145
    %1707 = vmatprep.subr.mxu0 0.0
    %1708 = vmatpush1.msra.mxu0 %v146
    %1709 = vmatprep.subr.mxu0 0.0
    %1710 = vmatpush1.msra.mxu0 %v147
    %1711 = vmatprep.subr.mxu0 0.0
    %1712 = vmatpush1.msra.mxu0 0.0
    %1713 = vmatprep.subr.mxu0 0.0
    %1714 = vmatpush1.msra.mxu0 0.0
    %1715 = vmatprep.subr.mxu0 0.0
    %1716 = vmatpush1.msra.mxu0 0.0
    %1717 = vmatprep.subr.mxu0 0.0
    %1718 = vmatpush1.msra.mxu0 0.0
    %1719 = vmatprep.subr.mxu0 0.0
    %1720 = vmatpush1.msra.mxu0 0.0
    %1721 = vmatprep.subr.mxu0 0.0
    %1722 = vmatpush1.msra.mxu0 0.0
    %1723 = vmatprep.subr.mxu0 0.0
    %1724 = vmatpush1.msra.mxu0 0.0
    %1725 = vmatprep.subr.mxu0 0.0
    %1726 = vmatpush1.msra.mxu0 0.0
    %1727 = vmatprep.subr.mxu0 0.0
    %1728 = vmatpush1.msra.mxu0 0.0
    %1729 = vmatprep.subr.mxu0 0.0
    %1730 = vmatpush1.msra.mxu0 0.0
    %1731 = vmatprep.subr.mxu0 0.0
    %1732 = vmatpush1.msra.mxu0 0.0
    %1733 = vmatprep.subr.mxu0 0.0
    %1734 = vmatpush1.msra.mxu0 0.0
    %1735 = vmatprep.subr.mxu0 0.0
    %1736 = vmatpush1.msra.mxu0 0.0
    %1737 = vmatprep.subr.mxu0 0.0
    %1738 = vmatpush1.msra.mxu0 0.0
    %1739 = vmatprep.subr.mxu0 0.0
    %1740 = vmatpush1.msra.mxu0 0.0
    %1741 = vmatprep.subr.mxu0 0.0
    %1742 = vmatpush1.msra.mxu0 0.0
    %1743 = vmatprep.subr.mxu0 0.0
    %1744 = vmatpush1.msra.mxu0 0.0
    %1745 = vmatprep.subr.mxu0 0.0
    %1746 = vmatpush1.msra.mxu0 0.0
    %1747 = vmatprep.subr.mxu0 0.0
    %1748 = vmatpush1.msra.mxu0 0.0
    %1749 = vmatprep.subr.mxu0 0.0
    %1750 = vmatpush1.msra.mxu0 0.0
    %1751 = vmatprep.subr.mxu0 0.0
    %1752 = vmatpush1.msra.mxu0 0.0
    %1753 = vmatprep.subr.mxu0 0.0
    %1754 = vmatpush1.msra.mxu0 0.0
    %1755 = vmatprep.subr.mxu0 0.0
    %1756 = vmatpush1.msra.mxu0 0.0
    %1757 = vmatprep.subr.mxu0 0.0
    %1758 = vmatpush1.msra.mxu0 0.0
    %1759 = vmatprep.subr.mxu0 0.0
    %1760 = vmatpush1.msra.mxu0 0.0
    %1761 = vmatprep.subr.mxu0 0.0
    %1762 = vmatpush1.msra.mxu0 0.0
    %1763 = vmatprep.subr.mxu0 0.0
    %1764 = vmatpush1.msra.mxu0 0.0
    %1765 = vmatprep.subr.mxu0 0.0
    %1766 = vmatpush1.msra.mxu0 0.0
    %1767 = vmatprep.mubr.f32.mxu0 0.0
    %1768 = vmatmul.mubr.f32.gmra.mrb[0].mxu0 %v1606
    %v1769 = vpop.f32.mrb[0].mxu0
    %v1770 = vadd.f32 0.0, %v1769
    %v1771 = vpop.f32.mrb[0].mxu0
    %1772 = vdwg.mxu0
    %v1774 = vrot.slane %v1770, 3
    %v1775 = vrot.slane %v1770, 4
    %v1778 = vadd.f32 %v136, %v1774
    %v1779 = vadd.f32 %v141, %v1775
    %v1780 = vxor.u32 %v1778, 2147483648
    %v1781 = vxor.u32 %v1779, 2147483648
    %v1782 = vmul.f32 %v1780, 1.442695
    %v1783 = vpow.pop %v1782
    %v1784 = vmul.f32 %v1781, 1.442695
    %v1785 = vpow.pop %v1784
    %v1786 = vadd.f32 %v1783, 1.0
    %v1787 = vadd.f32 %v1785, 1.0
    %v1788 = vrcp.pop %v1786
    %v1789 = vmul.f32 1.0, %v1788
    %v1790 = vrcp.pop %v1787
    %v1791 = vmul.f32 1.0, %v1790
    %v1792 = vtanh.pop %v1778
    %v1793 = vtanh.pop %v1779
    %v1796 = vrot.slane %v1510, 7
    %v1797 = vrot.slane %v1511, 7
    %v1800 = vmul.f32 %v1789, %v1796
    %v1801 = vmul.f32 %v1791, %v1797
    %1804 = vrot.lane.b32.xlu0 %v1792, 64
    %v1805 = vpop.permute.xlu0 %1804
    %1806 = vrot.lane.b32.xlu0 %v1793, 64
    %v1807 = vpop.permute.xlu0 %1806
    %v1810 = vmul.f32 %v1789, %v1805
    %v1811 = vmul.f32 %v1791, %v1807
    %1814 = vrot.lane.b32.xlu0 %v1810, 32
    %v1815 = vpop.permute.xlu0 %1814
    %1816 = vrot.lane.b32.xlu0 %v1811, 32
    %v1817 = vpop.permute.xlu0 %1816
    %v1820 = vadd.f32 %v1800, %v1815
    %v1821 = vadd.f32 %v1801, %v1817
    %v1822 = vtanh.pop %v1820
    %v1823 = vtanh.pop %v1821
    %1826 = vrot.lane.b32.xlu0 %v1822, 64
    %v1827 = vpop.permute.xlu0 %1826
    %1828 = vrot.lane.b32.xlu0 %v1823, 64
    %v1829 = vpop.permute.xlu0 %1828
    %v1832 = vmul.f32 %v1789, %v1827
    %v1833 = vmul.f32 %v1791, %v1829
    %1835 = vrot.lane.b32.xlu0 %v1702, 32
    %v1836 = vpop.permute.xlu0 %1835
    %v1837 = vsel %vm163, %v1836, 0
    %1839 = vmatprep.subr.mxu0 0.0
    %1840 = vmatpush1.msra.mxu0 %v152
    %1841 = vmatprep.subr.mxu0 0.0
    %1842 = vmatpush1.msra.mxu0 %v153
    %1843 = vmatprep.subr.mxu0 0.0
    %1844 = vmatpush1.msra.mxu0 %v154
    %1845 = vmatprep.subr.mxu0 0.0
    %1846 = vmatpush1.msra.mxu0 %v155
    %1847 = vmatprep.subr.mxu0 0.0
    %1848 = vmatpush1.msra.mxu0 0.0
    %1849 = vmatprep.subr.mxu0 0.0
    %1850 = vmatpush1.msra.mxu0 0.0
    %1851 = vmatprep.subr.mxu0 0.0
    %1852 = vmatpush1.msra.mxu0 0.0
    %1853 = vmatprep.subr.mxu0 0.0
    %1854 = vmatpush1.msra.mxu0 0.0
    %1855 = vmatprep.subr.mxu0 0.0
    %1856 = vmatpush1.msra.mxu0 0.0
    %1857 = vmatprep.subr.mxu0 0.0
    %1858 = vmatpush1.msra.mxu0 0.0
    %1859 = vmatprep.subr.mxu0 0.0
    %1860 = vmatpush1.msra.mxu0 0.0
    %1861 = vmatprep.subr.mxu0 0.0
    %1862 = vmatpush1.msra.mxu0 0.0
    %1863 = vmatprep.subr.mxu0 0.0
    %1864 = vmatpush1.msra.mxu0 0.0
    %1865 = vmatprep.subr.mxu0 0.0
    %1866 = vmatpush1.msra.mxu0 0.0
    %1867 = vmatprep.subr.mxu0 0.0
    %1868 = vmatpush1.msra.mxu0 0.0
    %1869 = vmatprep.subr.mxu0 0.0
    %1870 = vmatpush1.msra.mxu0 0.0
    %1871 = vmatprep.subr.mxu0 0.0
    %1872 = vmatpush1.msra.mxu0 0.0
    %1873 = vmatprep.subr.mxu0 0.0
    %1874 = vmatpush1.msra.mxu0 0.0
    %1875 = vmatprep.subr.mxu0 0.0
    %1876 = vmatpush1.msra.mxu0 0.0
    %1877 = vmatprep.subr.mxu0 0.0
    %1878 = vmatpush1.msra.mxu0 0.0
    %1879 = vmatprep.subr.mxu0 0.0
    %1880 = vmatpush1.msra.mxu0 0.0
    %1881 = vmatprep.subr.mxu0 0.0
    %1882 = vmatpush1.msra.mxu0 0.0
    %1883 = vmatprep.subr.mxu0 0.0
    %1884 = vmatpush1.msra.mxu0 0.0
    %1885 = vmatprep.subr.mxu0 0.0
    %1886 = vmatpush1.msra.mxu0 0.0
    %1887 = vmatprep.subr.mxu0 0.0
    %1888 = vmatpush1.msra.mxu0 0.0
    %1889 = vmatprep.subr.mxu0 0.0
    %1890 = vmatpush1.msra.mxu0 0.0
    %1891 = vmatprep.subr.mxu0 0.0
    %1892 = vmatpush1.msra.mxu0 0.0
    %1893 = vmatprep.subr.mxu0 0.0
    %1894 = vmatpush1.msra.mxu0 0.0
    %1895 = vmatprep.subr.mxu0 0.0
    %1896 = vmatpush1.msra.mxu0 0.0
    %1897 = vmatprep.subr.mxu0 0.0
    %1898 = vmatpush1.msra.mxu0 0.0
    %1899 = vmatprep.subr.mxu0 0.0
    %1900 = vmatpush1.msra.mxu0 0.0
    %1901 = vmatprep.subr.mxu0 0.0
    %1902 = vmatpush1.msra.mxu0 0.0
    %1903 = vmatprep.mubr.f32.mxu0 0.0
    %1904 = vmatmul.mubr.f32.gmra.mrb[0].mxu0 %v1837
    %v1905 = vpop.f32.mrb[0].mxu0
    %v1906 = vadd.f32 0.0, %v1905
    %v1907 = vpop.f32.mrb[0].mxu0
    %1908 = vdwg.mxu0
    %v1911 = vrot.slane %v1832, 5
    %v1912 = vrot.slane %v1833, 4
    %v1913 = vsel %vm364, %v1912, %v1911
    %1914 = vrot.lane.b32.xlu0 %v1913, 32
    %v1915 = vpop.permute.xlu0 %1914
    %v1916 = vsel %vm163, %v1915, 0
    %1918 = vmatprep.subr.mxu0 0.0
    %1919 = vmatpush1.msra.mxu0 %v148
    %1920 = vmatprep.subr.mxu0 0.0
    %1921 = vmatpush1.msra.mxu0 %v149
    %1922 = vmatprep.subr.mxu0 0.0
    %1923 = vmatpush1.msra.mxu0 %v150
    %1924 = vmatprep.subr.mxu0 0.0
    %1925 = vmatpush1.msra.mxu0 %v151
    %1926 = vmatprep.subr.mxu0 0.0
    %1927 = vmatpush1.msra.mxu0 0.0
    %1928 = vmatprep.subr.mxu0 0.0
    %1929 = vmatpush1.msra.mxu0 0.0
    %1930 = vmatprep.subr.mxu0 0.0
    %1931 = vmatpush1.msra.mxu0 0.0
    %1932 = vmatprep.subr.mxu0 0.0
    %1933 = vmatpush1.msra.mxu0 0.0
    %1934 = vmatprep.subr.mxu0 0.0
    %1935 = vmatpush1.msra.mxu0 0.0
    %1936 = vmatprep.subr.mxu0 0.0
    %1937 = vmatpush1.msra.mxu0 0.0
    %1938 = vmatprep.subr.mxu0 0.0
    %1939 = vmatpush1.msra.mxu0 0.0
    %1940 = vmatprep.subr.mxu0 0.0
    %1941 = vmatpush1.msra.mxu0 0.0
    %1942 = vmatprep.subr.mxu0 0.0
    %1943 = vmatpush1.msra.mxu0 0.0
    %1944 = vmatprep.subr.mxu0 0.0
    %1945 = vmatpush1.msra.mxu0 0.0
    %1946 = vmatprep.subr.mxu0 0.0
    %1947 = vmatpush1.msra.mxu0 0.0
    %1948 = vmatprep.subr.mxu0 0.0
    %1949 = vmatpush1.msra.mxu0 0.0
    %1950 = vmatprep.subr.mxu0 0.0
    %1951 = vmatpush1.msra.mxu0 0.0
    %1952 = vmatprep.subr.mxu0 0.0
    %1953 = vmatpush1.msra.mxu0 0.0
    %1954 = vmatprep.subr.mxu0 0.0
    %1955 = vmatpush1.msra.mxu0 0.0
    %1956 = vmatprep.subr.mxu0 0.0
    %1957 = vmatpush1.msra.mxu0 0.0
    %1958 = vmatprep.subr.mxu0 0.0
    %1959 = vmatpush1.msra.mxu0 0.0
    %1960 = vmatprep.subr.mxu0 0.0
    %1961 = vmatpush1.msra.mxu0 0.0
    %1962 = vmatprep.subr.mxu0 0.0
    %1963 = vmatpush1.msra.mxu0 0.0
    %1964 = vmatprep.subr.mxu0 0.0
    %1965 = vmatpush1.msra.mxu0 0.0
    %1966 = vmatprep.subr.mxu0 0.0
    %1967 = vmatpush1.msra.mxu0 0.0
    %1968 = vmatprep.subr.mxu0 0.0
    %1969 = vmatpush1.msra.mxu0 0.0
    %1970 = vmatprep.subr.mxu0 0.0
    %1971 = vmatpush1.msra.mxu0 0.0
    %1972 = vmatprep.subr.mxu0 0.0
    %1973 = vmatpush1.msra.mxu0 0.0
    %1974 = vmatprep.subr.mxu0 0.0
    %1975 = vmatpush1.msra.mxu0 0.0
    %1976 = vmatprep.subr.mxu0 0.0
    %1977 = vmatpush1.msra.mxu0 0.0
    %1978 = vmatprep.subr.mxu0 0.0
    %1979 = vmatpush1.msra.mxu0 0.0
    %1980 = vmatprep.subr.mxu0 0.0
    %1981 = vmatpush1.msra.mxu0 0.0
    %1982 = vmatprep.mubr.f32.mxu0 0.0
    %1983 = vmatmul.mubr.f32.gmra.mrb[0].mxu0 %v1916
    %v1984 = vpop.f32.mrb[0].mxu0
    %v1985 = vadd.f32 %v1906, %v1984
    %v1986 = vpop.f32.mrb[0].mxu0
    %1987 = vdwg.mxu0
    %v1988 = vadd.f32 %v1985, %v161
    %v1989 = vxor.u32 %v1988, 2147483648
    %v1990 = vmul.f32 %v1989, 1.442695
    %v1991 = vpow.pop %v1990
    %v1992 = vadd.f32 %v1991, 1.0
    %v1993 = vrcp.pop %v1992
    %v1994 = vmul.f32 1.0, %v1993
    %v1995 = vtanh.pop %v1988
    %v1996 = vmul.f32 %v1994, %v1696
    %1998 = vrot.lane.b32.xlu0 %v1995, 64
    %v1999 = vpop.permute.xlu0 %1998
    %v2001 = vmul.f32 %v1994, %v1999
    %2003 = vrot.lane.b32.xlu0 %v2001, 32
    %v2004 = vpop.permute.xlu0 %2003
    %v2006 = vadd.f32 %v1996, %v2004
    %v2007 = vtanh.pop %v2006
    %2009 = vrot.lane.b32.xlu0 %v2007, 64
    %v2010 = vpop.permute.xlu0 %2009
    %v2012 = vmul.f32 %v1994, %v2010
    %2013 = vmatprep.subr.mxu0 0.0
    %2014 = vmatpush1.msra.mxu0 %v144
    %2015 = vmatprep.subr.mxu0 0.0
    %2016 = vmatpush1.msra.mxu0 %v145
    %2017 = vmatprep.subr.mxu0 0.0
    %2018 = vmatpush1.msra.mxu0 %v146
    %2019 = vmatprep.subr.mxu0 0.0
    %2020 = vmatpush1.msra.mxu0 %v147
    %2021 = vmatprep.subr.mxu0 0.0
    %2022 = vmatpush1.msra.mxu0 0.0
    %2023 = vmatprep.subr.mxu0 0.0
    %2024 = vmatpush1.msra.mxu0 0.0
    %2025 = vmatprep.subr.mxu0 0.0
    %2026 = vmatpush1.msra.mxu0 0.0
    %2027 = vmatprep.subr.mxu0 0.0
    %2028 = vmatpush1.msra.mxu0 0.0
    %2029 = vmatprep.subr.mxu0 0.0
    %2030 = vmatpush1.msra.mxu0 0.0
    %2031 = vmatprep.subr.mxu0 0.0
    %2032 = vmatpush1.msra.mxu0 0.0
    %2033 = vmatprep.subr.mxu0 0.0
    %2034 = vmatpush1.msra.mxu0 0.0
    %2035 = vmatprep.subr.mxu0 0.0
    %2036 = vmatpush1.msra.mxu0 0.0
    %2037 = vmatprep.subr.mxu0 0.0
    %2038 = vmatpush1.msra.mxu0 0.0
    %2039 = vmatprep.subr.mxu0 0.0
    %2040 = vmatpush1.msra.mxu0 0.0
    %2041 = vmatprep.subr.mxu0 0.0
    %2042 = vmatpush1.msra.mxu0 0.0
    %2043 = vmatprep.subr.mxu0 0.0
    %2044 = vmatpush1.msra.mxu0 0.0
    %2045 = vmatprep.subr.mxu0 0.0
    %2046 = vmatpush1.msra.mxu0 0.0
    %2047 = vmatprep.subr.mxu0 0.0
    %2048 = vmatpush1.msra.mxu0 0.0
    %2049 = vmatprep.subr.mxu0 0.0
    %2050 = vmatpush1.msra.mxu0 0.0
    %2051 = vmatprep.subr.mxu0 0.0
    %2052 = vmatpush1.msra.mxu0 0.0
    %2053 = vmatprep.subr.mxu0 0.0
    %2054 = vmatpush1.msra.mxu0 0.0
    %2055 = vmatprep.subr.mxu0 0.0
    %2056 = vmatpush1.msra.mxu0 0.0
    %2057 = vmatprep.subr.mxu0 0.0
    %2058 = vmatpush1.msra.mxu0 0.0
    %2059 = vmatprep.subr.mxu0 0.0
    %2060 = vmatpush1.msra.mxu0 0.0
    %2061 = vmatprep.subr.mxu0 0.0
    %2062 = vmatpush1.msra.mxu0 0.0
    %2063 = vmatprep.subr.mxu0 0.0
    %2064 = vmatpush1.msra.mxu0 0.0
    %2065 = vmatprep.subr.mxu0 0.0
    %2066 = vmatpush1.msra.mxu0 0.0
    %2067 = vmatprep.subr.mxu0 0.0
    %2068 = vmatpush1.msra.mxu0 0.0
    %2069 = vmatprep.subr.mxu0 0.0
    %2070 = vmatpush1.msra.mxu0 0.0
    %2071 = vmatprep.subr.mxu0 0.0
    %2072 = vmatpush1.msra.mxu0 0.0
    %2073 = vmatprep.subr.mxu0 0.0
    %2074 = vmatpush1.msra.mxu0 0.0
    %2075 = vmatprep.subr.mxu0 0.0
    %2076 = vmatpush1.msra.mxu0 0.0
    %2077 = vmatprep.mubr.f32.mxu0 0.0
    %2078 = vmatmul.mubr.f32.gmra.mrb[0].mxu0 %v1916
    %v2079 = vpop.f32.mrb[0].mxu0
    %v2080 = vadd.f32 0.0, %v2079
    %v2081 = vpop.f32.mrb[0].mxu0
    %2082 = vdwg.mxu0
    %v2084 = vrot.slane %v2080, 2
    %v2085 = vrot.slane %v2080, 3
    %v2088 = vadd.f32 %v136, %v2084
    %v2089 = vadd.f32 %v141, %v2085
    %v2090 = vxor.u32 %v2088, 2147483648
    %v2091 = vxor.u32 %v2089, 2147483648
    %v2092 = vmul.f32 %v2090, 1.442695
    %v2093 = vpow.pop %v2092
    %v2094 = vmul.f32 %v2091, 1.442695
    %v2095 = vpow.pop %v2094
    %v2096 = vadd.f32 %v2093, 1.0
    %v2097 = vadd.f32 %v2095, 1.0
    %v2098 = vrcp.pop %v2096
    %v2099 = vmul.f32 1.0, %v2098
    %v2100 = vrcp.pop %v2097
    %v2101 = vmul.f32 1.0, %v2100
    %v2102 = vtanh.pop %v2088
    %v2103 = vtanh.pop %v2089
    %v2106 = vrot.slane %v1820, 7
    %v2107 = vrot.slane %v1821, 7
    %v2110 = vmul.f32 %v2099, %v2106
    %v2111 = vmul.f32 %v2101, %v2107
    %2114 = vrot.lane.b32.xlu0 %v2102, 64
    %v2115 = vpop.permute.xlu0 %2114
    %2116 = vrot.lane.b32.xlu0 %v2103, 64
    %v2117 = vpop.permute.xlu0 %2116
    %v2120 = vmul.f32 %v2099, %v2115
    %v2121 = vmul.f32 %v2101, %v2117
    %2124 = vrot.lane.b32.xlu0 %v2120, 32
    %v2125 = vpop.permute.xlu0 %2124
    %2126 = vrot.lane.b32.xlu0 %v2121, 32
    %v2127 = vpop.permute.xlu0 %2126
    %v2130 = vadd.f32 %v2110, %v2125
    %v2131 = vadd.f32 %v2111, %v2127
    %v2132 = vtanh.pop %v2130
    %v2133 = vtanh.pop %v2131
    %2136 = vrot.lane.b32.xlu0 %v2132, 64
    %v2137 = vpop.permute.xlu0 %2136
    %2138 = vrot.lane.b32.xlu0 %v2133, 64
    %v2139 = vpop.permute.xlu0 %2138
    %v2142 = vmul.f32 %v2099, %v2137
    %v2143 = vmul.f32 %v2101, %v2139
    %2145 = vrot.lane.b32.xlu0 %v2012, 32
    %v2146 = vpop.permute.xlu0 %2145
    %v2147 = vsel %vm163, %v2146, 0
    %2149 = vmatprep.subr.mxu0 0.0
    %2150 = vmatpush1.msra.mxu0 %v152
    %2151 = vmatprep.subr.mxu0 0.0
    %2152 = vmatpush1.msra.mxu0 %v153
    %2153 = vmatprep.subr.mxu0 0.0
    %2154 = vmatpush1.msra.mxu0 %v154
    %2155 = vmatprep.subr.mxu0 0.0
    %2156 = vmatpush1.msra.mxu0 %v155
    %2157 = vmatprep.subr.mxu0 0.0
    %2158 = vmatpush1.msra.mxu0 0.0
    %2159 = vmatprep.subr.mxu0 0.0
    %2160 = vmatpush1.msra.mxu0 0.0
    %2161 = vmatprep.subr.mxu0 0.0
    %2162 = vmatpush1.msra.mxu0 0.0
    %2163 = vmatprep.subr.mxu0 0.0
    %2164 = vmatpush1.msra.mxu0 0.0
    %2165 = vmatprep.subr.mxu0 0.0
    %2166 = vmatpush1.msra.mxu0 0.0
    %2167 = vmatprep.subr.mxu0 0.0
    %2168 = vmatpush1.msra.mxu0 0.0
    %2169 = vmatprep.subr.mxu0 0.0
    %2170 = vmatpush1.msra.mxu0 0.0
    %2171 = vmatprep.subr.mxu0 0.0
    %2172 = vmatpush1.msra.mxu0 0.0
    %2173 = vmatprep.subr.mxu0 0.0
    %2174 = vmatpush1.msra.mxu0 0.0
    %2175 = vmatprep.subr.mxu0 0.0
    %2176 = vmatpush1.msra.mxu0 0.0
    %2177 = vmatprep.subr.mxu0 0.0
    %2178 = vmatpush1.msra.mxu0 0.0
    %2179 = vmatprep.subr.mxu0 0.0
    %2180 = vmatpush1.msra.mxu0 0.0
    %2181 = vmatprep.subr.mxu0 0.0
    %2182 = vmatpush1.msra.mxu0 0.0
    %2183 = vmatprep.subr.mxu0 0.0
    %2184 = vmatpush1.msra.mxu0 0.0
    %2185 = vmatprep.subr.mxu0 0.0
    %2186 = vmatpush1.msra.mxu0 0.0
    %2187 = vmatprep.subr.mxu0 0.0
    %2188 = vmatpush1.msra.mxu0 0.0
    %2189 = vmatprep.subr.mxu0 0.0
    %2190 = vmatpush1.msra.mxu0 0.0
    %2191 = vmatprep.subr.mxu0 0.0
    %2192 = vmatpush1.msra.mxu0 0.0
    %2193 = vmatprep.subr.mxu0 0.0
    %2194 = vmatpush1.msra.mxu0 0.0
    %2195 = vmatprep.subr.mxu0 0.0
    %2196 = vmatpush1.msra.mxu0 0.0
    %2197 = vmatprep.subr.mxu0 0.0
    %2198 = vmatpush1.msra.mxu0 0.0
    %2199 = vmatprep.subr.mxu0 0.0
    %2200 = vmatpush1.msra.mxu0 0.0
    %2201 = vmatprep.subr.mxu0 0.0
    %2202 = vmatpush1.msra.mxu0 0.0
    %2203 = vmatprep.subr.mxu0 0.0
    %2204 = vmatpush1.msra.mxu0 0.0
    %2205 = vmatprep.subr.mxu0 0.0
    %2206 = vmatpush1.msra.mxu0 0.0
    %2207 = vmatprep.subr.mxu0 0.0
    %2208 = vmatpush1.msra.mxu0 0.0
    %2209 = vmatprep.subr.mxu0 0.0
    %2210 = vmatpush1.msra.mxu0 0.0
    %2211 = vmatprep.subr.mxu0 0.0
    %2212 = vmatpush1.msra.mxu0 0.0
    %2213 = vmatprep.mubr.f32.mxu0 0.0
    %2214 = vmatmul.mubr.f32.gmra.mrb[0].mxu0 %v2147
    %v2215 = vpop.f32.mrb[0].mxu0
    %v2216 = vadd.f32 0.0, %v2215
    %v2217 = vpop.f32.mrb[0].mxu0
    %2218 = vdwg.mxu0
    %v2221 = vrot.slane %v2142, 6
    %v2222 = vrot.slane %v2143, 5
    %v2223 = vsel %vm364, %v2222, %v2221
    %2224 = vrot.lane.b32.xlu0 %v2223, 32
    %v2225 = vpop.permute.xlu0 %2224
    %v2226 = vsel %vm163, %v2225, 0
    %2228 = vmatprep.subr.mxu0 0.0
    %2229 = vmatpush1.msra.mxu0 %v148
    %2230 = vmatprep.subr.mxu0 0.0
    %2231 = vmatpush1.msra.mxu0 %v149
    %2232 = vmatprep.subr.mxu0 0.0
    %2233 = vmatpush1.msra.mxu0 %v150
    %2234 = vmatprep.subr.mxu0 0.0
    %2235 = vmatpush1.msra.mxu0 %v151
    %2236 = vmatprep.subr.mxu0 0.0
    %2237 = vmatpush1.msra.mxu0 0.0
    %2238 = vmatprep.subr.mxu0 0.0
    %2239 = vmatpush1.msra.mxu0 0.0
    %2240 = vmatprep.subr.mxu0 0.0
    %2241 = vmatpush1.msra.mxu0 0.0
    %2242 = vmatprep.subr.mxu0 0.0
    %2243 = vmatpush1.msra.mxu0 0.0
    %2244 = vmatprep.subr.mxu0 0.0
    %2245 = vmatpush1.msra.mxu0 0.0
    %2246 = vmatprep.subr.mxu0 0.0
    %2247 = vmatpush1.msra.mxu0 0.0
    %2248 = vmatprep.subr.mxu0 0.0
    %2249 = vmatpush1.msra.mxu0 0.0
    %2250 = vmatprep.subr.mxu0 0.0
    %2251 = vmatpush1.msra.mxu0 0.0
    %2252 = vmatprep.subr.mxu0 0.0
    %2253 = vmatpush1.msra.mxu0 0.0
    %2254 = vmatprep.subr.mxu0 0.0
    %2255 = vmatpush1.msra.mxu0 0.0
    %2256 = vmatprep.subr.mxu0 0.0
    %2257 = vmatpush1.msra.mxu0 0.0
    %2258 = vmatprep.subr.mxu0 0.0
    %2259 = vmatpush1.msra.mxu0 0.0
    %2260 = vmatprep.subr.mxu0 0.0
    %2261 = vmatpush1.msra.mxu0 0.0
    %2262 = vmatprep.subr.mxu0 0.0
    %2263 = vmatpush1.msra.mxu0 0.0
    %2264 = vmatprep.subr.mxu0 0.0
    %2265 = vmatpush1.msra.mxu0 0.0
    %2266 = vmatprep.subr.mxu0 0.0
    %2267 = vmatpush1.msra.mxu0 0.0
    %2268 = vmatprep.subr.mxu0 0.0
    %2269 = vmatpush1.msra.mxu0 0.0
    %2270 = vmatprep.subr.mxu0 0.0
    %2271 = vmatpush1.msra.mxu0 0.0
    %2272 = vmatprep.subr.mxu0 0.0
    %2273 = vmatpush1.msra.mxu0 0.0
    %2274 = vmatprep.subr.mxu0 0.0
    %2275 = vmatpush1.msra.mxu0 0.0
    %2276 = vmatprep.subr.mxu0 0.0
    %2277 = vmatpush1.msra.mxu0 0.0
    %2278 = vmatprep.subr.mxu0 0.0
    %2279 = vmatpush1.msra.mxu0 0.0
    %2280 = vmatprep.subr.mxu0 0.0
    %2281 = vmatpush1.msra.mxu0 0.0
    %2282 = vmatprep.subr.mxu0 0.0
    %2283 = vmatpush1.msra.mxu0 0.0
    %2284 = vmatprep.subr.mxu0 0.0
    %2285 = vmatpush1.msra.mxu0 0.0
    %2286 = vmatprep.subr.mxu0 0.0
    %2287 = vmatpush1.msra.mxu0 0.0
    %2288 = vmatprep.subr.mxu0 0.0
    %2289 = vmatpush1.msra.mxu0 0.0
    %2290 = vmatprep.subr.mxu0 0.0
    %2291 = vmatpush1.msra.mxu0 0.0
    %2292 = vmatprep.mubr.f32.mxu0 0.0
    %2293 = vmatmul.mubr.f32.gmra.mrb[0].mxu0 %v2226
    %v2294 = vpop.f32.mrb[0].mxu0
    %v2295 = vadd.f32 %v2216, %v2294
    %v2296 = vpop.f32.mrb[0].mxu0
    %2297 = vdwg.mxu0
    %v2298 = vadd.f32 %v2295, %v161
    %v2299 = vxor.u32 %v2298, 2147483648
    %v2300 = vmul.f32 %v2299, 1.442695
    %v2301 = vpow.pop %v2300
    %v2302 = vadd.f32 %v2301, 1.0
    %v2303 = vrcp.pop %v2302
    %v2304 = vmul.f32 1.0, %v2303
    %v2305 = vtanh.pop %v2298
    %v2306 = vmul.f32 %v2304, %v2006
    %2308 = vrot.lane.b32.xlu0 %v2305, 64
    %v2309 = vpop.permute.xlu0 %2308
    %v2311 = vmul.f32 %v2304, %v2309
    %2313 = vrot.lane.b32.xlu0 %v2311, 32
    %v2314 = vpop.permute.xlu0 %2313
    %v2316 = vadd.f32 %v2306, %v2314
    %v2317 = vtanh.pop %v2316
    %2319 = vrot.lane.b32.xlu0 %v2317, 64
    %v2320 = vpop.permute.xlu0 %2319
    %v2322 = vmul.f32 %v2304, %v2320
    %2323 = vmatprep.subr.mxu0 0.0
    %2324 = vmatpush1.msra.mxu0 %v144
    %2325 = vmatprep.subr.mxu0 0.0
    %2326 = vmatpush1.msra.mxu0 %v145
    %2327 = vmatprep.subr.mxu0 0.0
    %2328 = vmatpush1.msra.mxu0 %v146
    %2329 = vmatprep.subr.mxu0 0.0
    %2330 = vmatpush1.msra.mxu0 %v147
    %2331 = vmatprep.subr.mxu0 0.0
    %2332 = vmatpush1.msra.mxu0 0.0
    %2333 = vmatprep.subr.mxu0 0.0
    %2334 = vmatpush1.msra.mxu0 0.0
    %2335 = vmatprep.subr.mxu0 0.0
    %2336 = vmatpush1.msra.mxu0 0.0
    %2337 = vmatprep.subr.mxu0 0.0
    %2338 = vmatpush1.msra.mxu0 0.0
    %2339 = vmatprep.subr.mxu0 0.0
    %2340 = vmatpush1.msra.mxu0 0.0
    %2341 = vmatprep.subr.mxu0 0.0
    %2342 = vmatpush1.msra.mxu0 0.0
    %2343 = vmatprep.subr.mxu0 0.0
    %2344 = vmatpush1.msra.mxu0 0.0
    %2345 = vmatprep.subr.mxu0 0.0
    %2346 = vmatpush1.msra.mxu0 0.0
    %2347 = vmatprep.subr.mxu0 0.0
    %2348 = vmatpush1.msra.mxu0 0.0
    %2349 = vmatprep.subr.mxu0 0.0
    %2350 = vmatpush1.msra.mxu0 0.0
    %2351 = vmatprep.subr.mxu0 0.0
    %2352 = vmatpush1.msra.mxu0 0.0
    %2353 = vmatprep.subr.mxu0 0.0
    %2354 = vmatpush1.msra.mxu0 0.0
    %2355 = vmatprep.subr.mxu0 0.0
    %2356 = vmatpush1.msra.mxu0 0.0
    %2357 = vmatprep.subr.mxu0 0.0
    %2358 = vmatpush1.msra.mxu0 0.0
    %2359 = vmatprep.subr.mxu0 0.0
    %2360 = vmatpush1.msra.mxu0 0.0
    %2361 = vmatprep.subr.mxu0 0.0
    %2362 = vmatpush1.msra.mxu0 0.0
    %2363 = vmatprep.subr.mxu0 0.0
    %2364 = vmatpush1.msra.mxu0 0.0
    %2365 = vmatprep.subr.mxu0 0.0
    %2366 = vmatpush1.msra.mxu0 0.0
    %2367 = vmatprep.subr.mxu0 0.0
    %2368 = vmatpush1.msra.mxu0 0.0
    %2369 = vmatprep.subr.mxu0 0.0
    %2370 = vmatpush1.msra.mxu0 0.0
    %2371 = vmatprep.subr.mxu0 0.0
    %2372 = vmatpush1.msra.mxu0 0.0
    %2373 = vmatprep.subr.mxu0 0.0
    %2374 = vmatpush1.msra.mxu0 0.0
    %2375 = vmatprep.subr.mxu0 0.0
    %2376 = vmatpush1.msra.mxu0 0.0
    %2377 = vmatprep.subr.mxu0 0.0
    %2378 = vmatpush1.msra.mxu0 0.0
    %2379 = vmatprep.subr.mxu0 0.0
    %2380 = vmatpush1.msra.mxu0 0.0
    %2381 = vmatprep.subr.mxu0 0.0
    %2382 = vmatpush1.msra.mxu0 0.0
    %2383 = vmatprep.subr.mxu0 0.0
    %2384 = vmatpush1.msra.mxu0 0.0
    %2385 = vmatprep.subr.mxu0 0.0
    %2386 = vmatpush1.msra.mxu0 0.0
    %2387 = vmatprep.mubr.f32.mxu0 0.0
    %2388 = vmatmul.mubr.f32.gmra.mrb[0].mxu0 %v2226
    %v2389 = vpop.f32.mrb[0].mxu0
    %v2390 = vadd.f32 0.0, %v2389
    %v2391 = vpop.f32.mrb[0].mxu0
    %2392 = vdwg.mxu0
    %v2394 = vrot.slane %v2390, 1
    %v2395 = vrot.slane %v2390, 2
    %v2398 = vadd.f32 %v136, %v2394
    %v2399 = vadd.f32 %v141, %v2395
    %v2400 = vxor.u32 %v2398, 2147483648
    %v2401 = vxor.u32 %v2399, 2147483648
    %v2402 = vmul.f32 %v2400, 1.442695
    %v2403 = vpow.pop %v2402
    %v2404 = vmul.f32 %v2401, 1.442695
    %v2405 = vpow.pop %v2404
    %v2406 = vadd.f32 %v2403, 1.0
    %v2407 = vadd.f32 %v2405, 1.0
    %v2408 = vrcp.pop %v2406
    %v2409 = vmul.f32 1.0, %v2408
    %v2410 = vrcp.pop %v2407
    %v2411 = vmul.f32 1.0, %v2410
    %v2412 = vtanh.pop %v2398
    %v2413 = vtanh.pop %v2399
    %v2416 = vrot.slane %v2130, 7
    %v2417 = vrot.slane %v2131, 7
    %v2420 = vmul.f32 %v2409, %v2416
    %v2421 = vmul.f32 %v2411, %v2417
    %2424 = vrot.lane.b32.xlu0 %v2412, 64
    %v2425 = vpop.permute.xlu0 %2424
    %2426 = vrot.lane.b32.xlu0 %v2413, 64
    %v2427 = vpop.permute.xlu0 %2426
    %v2430 = vmul.f32 %v2409, %v2425
    %v2431 = vmul.f32 %v2411, %v2427
    %2434 = vrot.lane.b32.xlu0 %v2430, 32
    %v2435 = vpop.permute.xlu0 %2434
    %2436 = vrot.lane.b32.xlu0 %v2431, 32
    %v2437 = vpop.permute.xlu0 %2436
    %v2440 = vadd.f32 %v2420, %v2435
    %v2441 = vadd.f32 %v2421, %v2437
    %v2442 = vtanh.pop %v2440
    %v2443 = vtanh.pop %v2441
    %2446 = vrot.lane.b32.xlu0 %v2442, 64
    %v2447 = vpop.permute.xlu0 %2446
    %2448 = vrot.lane.b32.xlu0 %v2443, 64
    %v2449 = vpop.permute.xlu0 %2448
    %v2452 = vmul.f32 %v2409, %v2447
    %v2453 = vmul.f32 %v2411, %v2449
    %2455 = vrot.lane.b32.xlu0 %v2322, 32
    %v2456 = vpop.permute.xlu0 %2455
    %v2457 = vsel %vm163, %v2456, 0
    %2459 = vmatprep.subr.mxu0 0.0
    %2460 = vmatpush1.msra.mxu0 %v152
    %2461 = vmatprep.subr.mxu0 0.0
    %2462 = vmatpush1.msra.mxu0 %v153
    %2463 = vmatprep.subr.mxu0 0.0
    %2464 = vmatpush1.msra.mxu0 %v154
    %2465 = vmatprep.subr.mxu0 0.0
    %2466 = vmatpush1.msra.mxu0 %v155
    %2467 = vmatprep.subr.mxu0 0.0
    %2468 = vmatpush1.msra.mxu0 0.0
    %2469 = vmatprep.subr.mxu0 0.0
    %2470 = vmatpush1.msra.mxu0 0.0
    %2471 = vmatprep.subr.mxu0 0.0
    %2472 = vmatpush1.msra.mxu0 0.0
    %2473 = vmatprep.subr.mxu0 0.0
    %2474 = vmatpush1.msra.mxu0 0.0
    %2475 = vmatprep.subr.mxu0 0.0
    %2476 = vmatpush1.msra.mxu0 0.0
    %2477 = vmatprep.subr.mxu0 0.0
    %2478 = vmatpush1.msra.mxu0 0.0
    %2479 = vmatprep.subr.mxu0 0.0
    %2480 = vmatpush1.msra.mxu0 0.0
    %2481 = vmatprep.subr.mxu0 0.0
    %2482 = vmatpush1.msra.mxu0 0.0
    %2483 = vmatprep.subr.mxu0 0.0
    %2484 = vmatpush1.msra.mxu0 0.0
    %2485 = vmatprep.subr.mxu0 0.0
    %2486 = vmatpush1.msra.mxu0 0.0
    %2487 = vmatprep.subr.mxu0 0.0
    %2488 = vmatpush1.msra.mxu0 0.0
    %2489 = vmatprep.subr.mxu0 0.0
    %2490 = vmatpush1.msra.mxu0 0.0
    %2491 = vmatprep.subr.mxu0 0.0
    %2492 = vmatpush1.msra.mxu0 0.0
    %2493 = vmatprep.subr.mxu0 0.0
    %2494 = vmatpush1.msra.mxu0 0.0
    %2495 = vmatprep.subr.mxu0 0.0
    %2496 = vmatpush1.msra.mxu0 0.0
    %2497 = vmatprep.subr.mxu0 0.0
    %2498 = vmatpush1.msra.mxu0 0.0
    %2499 = vmatprep.subr.mxu0 0.0
    %2500 = vmatpush1.msra.mxu0 0.0
    %2501 = vmatprep.subr.mxu0 0.0
    %2502 = vmatpush1.msra.mxu0 0.0
    %2503 = vmatprep.subr.mxu0 0.0
    %2504 = vmatpush1.msra.mxu0 0.0
    %2505 = vmatprep.subr.mxu0 0.0
    %2506 = vmatpush1.msra.mxu0 0.0
    %2507 = vmatprep.subr.mxu0 0.0
    %2508 = vmatpush1.msra.mxu0 0.0
    %2509 = vmatprep.subr.mxu0 0.0
    %2510 = vmatpush1.msra.mxu0 0.0
    %2511 = vmatprep.subr.mxu0 0.0
    %2512 = vmatpush1.msra.mxu0 0.0
    %2513 = vmatprep.subr.mxu0 0.0
    %2514 = vmatpush1.msra.mxu0 0.0
    %2515 = vmatprep.subr.mxu0 0.0
    %2516 = vmatpush1.msra.mxu0 0.0
    %2517 = vmatprep.subr.mxu0 0.0
    %2518 = vmatpush1.msra.mxu0 0.0
    %2519 = vmatprep.subr.mxu0 0.0
    %2520 = vmatpush1.msra.mxu0 0.0
    %2521 = vmatprep.subr.mxu0 0.0
    %2522 = vmatpush1.msra.mxu0 0.0
    %2523 = vmatprep.mubr.f32.mxu0 0.0
    %2524 = vmatmul.mubr.f32.gmra.mrb[0].mxu0 %v2457
    %v2525 = vpop.f32.mrb[0].mxu0
    %v2526 = vadd.f32 0.0, %v2525
    %v2527 = vpop.f32.mrb[0].mxu0
    %2528 = vdwg.mxu0
    %v2531 = vrot.slane %v2452, 7
    %v2532 = vrot.slane %v2453, 6
    %v2533 = vsel %vm364, %v2532, %v2531
    %2534 = vrot.lane.b32.xlu0 %v2533, 32
    %v2535 = vpop.permute.xlu0 %2534
    %v2536 = vsel %vm163, %v2535, 0
    %2538 = vmatprep.subr.mxu0 0.0
    %2539 = vmatpush1.msra.mxu0 %v148
    %2540 = vmatprep.subr.mxu0 0.0
    %2541 = vmatpush1.msra.mxu0 %v149
    %2542 = vmatprep.subr.mxu0 0.0
    %2543 = vmatpush1.msra.mxu0 %v150
    %2544 = vmatprep.subr.mxu0 0.0
    %2545 = vmatpush1.msra.mxu0 %v151
    %2546 = vmatprep.subr.mxu0 0.0
    %2547 = vmatpush1.msra.mxu0 0.0
    %2548 = vmatprep.subr.mxu0 0.0
    %2549 = vmatpush1.msra.mxu0 0.0
    %2550 = vmatprep.subr.mxu0 0.0
    %2551 = vmatpush1.msra.mxu0 0.0
    %2552 = vmatprep.subr.mxu0 0.0
    %2553 = vmatpush1.msra.mxu0 0.0
    %2554 = vmatprep.subr.mxu0 0.0
    %2555 = vmatpush1.msra.mxu0 0.0
    %2556 = vmatprep.subr.mxu0 0.0
    %2557 = vmatpush1.msra.mxu0 0.0
    %2558 = vmatprep.subr.mxu0 0.0
    %2559 = vmatpush1.msra.mxu0 0.0
    %2560 = vmatprep.subr.mxu0 0.0
    %2561 = vmatpush1.msra.mxu0 0.0
    %2562 = vmatprep.subr.mxu0 0.0
    %2563 = vmatpush1.msra.mxu0 0.0
    %2564 = vmatprep.subr.mxu0 0.0
    %2565 = vmatpush1.msra.mxu0 0.0
    %2566 = vmatprep.subr.mxu0 0.0
    %2567 = vmatpush1.msra.mxu0 0.0
    %2568 = vmatprep.subr.mxu0 0.0
    %2569 = vmatpush1.msra.mxu0 0.0
    %2570 = vmatprep.subr.mxu0 0.0
    %2571 = vmatpush1.msra.mxu0 0.0
    %2572 = vmatprep.subr.mxu0 0.0
    %2573 = vmatpush1.msra.mxu0 0.0
    %2574 = vmatprep.subr.mxu0 0.0
    %2575 = vmatpush1.msra.mxu0 0.0
    %2576 = vmatprep.subr.mxu0 0.0
    %2577 = vmatpush1.msra.mxu0 0.0
    %2578 = vmatprep.subr.mxu0 0.0
    %2579 = vmatpush1.msra.mxu0 0.0
    %2580 = vmatprep.subr.mxu0 0.0
    %2581 = vmatpush1.msra.mxu0 0.0
    %2582 = vmatprep.subr.mxu0 0.0
    %2583 = vmatpush1.msra.mxu0 0.0
    %2584 = vmatprep.subr.mxu0 0.0
    %2585 = vmatpush1.msra.mxu0 0.0
    %2586 = vmatprep.subr.mxu0 0.0
    %2587 = vmatpush1.msra.mxu0 0.0
    %2588 = vmatprep.subr.mxu0 0.0
    %2589 = vmatpush1.msra.mxu0 0.0
    %2590 = vmatprep.subr.mxu0 0.0
    %2591 = vmatpush1.msra.mxu0 0.0
    %2592 = vmatprep.subr.mxu0 0.0
    %2593 = vmatpush1.msra.mxu0 0.0
    %2594 = vmatprep.subr.mxu0 0.0
    %2595 = vmatpush1.msra.mxu0 0.0
    %2596 = vmatprep.subr.mxu0 0.0
    %2597 = vmatpush1.msra.mxu0 0.0
    %2598 = vmatprep.subr.mxu0 0.0
    %2599 = vmatpush1.msra.mxu0 0.0
    %2600 = vmatprep.subr.mxu0 0.0
    %2601 = vmatpush1.msra.mxu0 0.0
    %2602 = vmatprep.mubr.f32.mxu0 0.0
    %2603 = vmatmul.mubr.f32.gmra.mrb[0].mxu0 %v2536
    %v2604 = vpop.f32.mrb[0].mxu0
    %v2605 = vadd.f32 %v2526, %v2604
    %v2606 = vpop.f32.mrb[0].mxu0
    %2607 = vdwg.mxu0
    %v2608 = vadd.f32 %v2605, %v161
    %v2609 = vxor.u32 %v2608, 2147483648
    %v2610 = vmul.f32 %v2609, 1.442695
    %v2611 = vpow.pop %v2610
    %v2612 = vadd.f32 %v2611, 1.0
    %v2613 = vrcp.pop %v2612
    %v2614 = vmul.f32 1.0, %v2613
    %v2615 = vtanh.pop %v2608
    %v2616 = vmul.f32 %v2614, %v2316
    %2618 = vrot.lane.b32.xlu0 %v2615, 64
    %v2619 = vpop.permute.xlu0 %2618
    %v2621 = vmul.f32 %v2614, %v2619
    %2623 = vrot.lane.b32.xlu0 %v2621, 32
    %v2624 = vpop.permute.xlu0 %2623
    %v2626 = vadd.f32 %v2616, %v2624
    %v2627 = vtanh.pop %v2626
    %2629 = vrot.lane.b32.xlu0 %v2627, 64
    %v2630 = vpop.permute.xlu0 %2629
    %v2632 = vmul.f32 %v2614, %v2630
    %v2634 = vunpack.c.l.s4 1966171168
    %v2635 = vunpack.c.0.s8 %v2634
    %v2636 = vlaneseq
    %v2637 = vshrl.u32 %v2636, 7
    %v2638 = vsub.s32 %v2635, %v2637
    %v2639 = vrot.slane %v464, %v2638
    %v2640 = vcombine.high %v2639, %v2639
    %v2642 = vunpack.c.l.s4 1966171168
    %v2643 = vunpack.c.0.s8 %v2642
    %v2644 = vlaneseq
    %v2645 = vshrl.u32 %v2644, 7
    %v2646 = vsub.s32 %v2643, %v2645
    %v2647 = vrot.slane %v2639, %v2646
    %v2649 = vunpack.c.l.s4 1966171168
    %v2650 = vunpack.c.0.s8 %v2649
    %v2651 = vlaneseq
    %v2652 = vshrl.u32 %v2651, 7
    %v2653 = vsub.s32 %v2650, %v2652
    %v2654 = vrot.slane %v2640, %v2653
    %v2658 = vunpack.c.l.s4 1966171168
    %v2659 = vunpack.c.0.s8 %v2658
    %v2660 = vlaneseq
    %v2661 = vshrl.u32 %v2660, 7
    %v2662 = vsub.s32 %v2659, %v2661
    %v2663 = vrot.slane %v772, %v2662
    %v2664 = vcombine.high %v2663, %v2663
    %v2666 = vunpack.c.l.s4 1966171168
    %v2667 = vunpack.c.0.s8 %v2666
    %v2668 = vlaneseq
    %v2669 = vshrl.u32 %v2668, 7
    %v2670 = vsub.s32 %v2667, %v2669
    %v2671 = vrot.slane %v2663, %v2670
    %v2673 = vunpack.c.l.s4 1966171168
    %v2674 = vunpack.c.0.s8 %v2673
    %v2675 = vlaneseq
    %v2676 = vshrl.u32 %v2675, 7
    %v2677 = vsub.s32 %v2674, %v2676
    %v2678 = vrot.slane %v2664, %v2677
    %v2680 = vunpack.c.l.s4 1966171168
    %v2681 = vunpack.c.0.s8 %v2680
    %v2682 = vlaneseq
    %v2683 = vshrl.u32 %v2682, 7
    %v2684 = vsub.s32 %v2681, %v2683
    %v2685 = vrot.slane %v1082, %v2684
    %v2686 = vcombine.high %v2685, %v2685
    %v2688 = vunpack.c.l.s4 1966171168
    %v2689 = vunpack.c.0.s8 %v2688
    %v2690 = vlaneseq
    %v2691 = vshrl.u32 %v2690, 7
    %v2692 = vsub.s32 %v2689, %v2691
    %v2693 = vrot.slane %v2685, %v2692
    %v2695 = vunpack.c.l.s4 1966171168
    %v2696 = vunpack.c.0.s8 %v2695
    %v2697 = vlaneseq
    %v2698 = vshrl.u32 %v2697, 7
    %v2699 = vsub.s32 %v2696, %v2698
    %v2700 = vrot.slane %v2686, %v2699
    %v2702 = vunpack.c.l.s4 1966171168
    %v2703 = vunpack.c.0.s8 %v2702
    %v2704 = vlaneseq
    %v2705 = vshrl.u32 %v2704, 7
    %v2706 = vsub.s32 %v2703, %v2705
    %v2707 = vrot.slane %v1392, %v2706
    %v2708 = vcombine.high %v2707, %v2707
    %v2710 = vunpack.c.l.s4 1966171168
    %v2711 = vunpack.c.0.s8 %v2710
    %v2712 = vlaneseq
    %v2713 = vshrl.u32 %v2712, 7
    %v2714 = vsub.s32 %v2711, %v2713
    %v2715 = vrot.slane %v2707, %v2714
    %v2717 = vunpack.c.l.s4 1966171168
    %v2718 = vunpack.c.0.s8 %v2717
    %v2719 = vlaneseq
    %v2720 = vshrl.u32 %v2719, 7
    %v2721 = vsub.s32 %v2718, %v2720
    %v2722 = vrot.slane %v2708, %v2721
    %v2724 = vunpack.c.l.s4 1966171168
    %v2725 = vunpack.c.0.s8 %v2724
    %v2726 = vlaneseq
    %v2727 = vshrl.u32 %v2726, 7
    %v2728 = vsub.s32 %v2725, %v2727
    %v2729 = vrot.slane %v1702, %v2728
    %v2730 = vcombine.high %v2729, %v2729
    %v2732 = vunpack.c.l.s4 1966171168
    %v2733 = vunpack.c.0.s8 %v2732
    %v2734 = vlaneseq
    %v2735 = vshrl.u32 %v2734, 7
    %v2736 = vsub.s32 %v2733, %v2735
    %v2737 = vrot.slane %v2729, %v2736
    %v2739 = vunpack.c.l.s4 1966171168
    %v2740 = vunpack.c.0.s8 %v2739
    %v2741 = vlaneseq
    %v2742 = vshrl.u32 %v2741, 7
    %v2743 = vsub.s32 %v2740, %v2742
    %v2744 = vrot.slane %v2730, %v2743
    %v2746 = vunpack.c.l.s4 1966171168
    %v2747 = vunpack.c.0.s8 %v2746
    %v2748 = vlaneseq
    %v2749 = vshrl.u32 %v2748, 7
    %v2750 = vsub.s32 %v2747, %v2749
    %v2751 = vrot.slane %v2012, %v2750
    %v2752 = vcombine.high %v2751, %v2751
    %v2754 = vunpack.c.l.s4 1966171168
    %v2755 = vunpack.c.0.s8 %v2754
    %v2756 = vlaneseq
    %v2757 = vshrl.u32 %v2756, 7
    %v2758 = vsub.s32 %v2755, %v2757
    %v2759 = vrot.slane %v2751, %v2758
    %v2761 = vunpack.c.l.s4 1966171168
    %v2762 = vunpack.c.0.s8 %v2761
    %v2763 = vlaneseq
    %v2764 = vshrl.u32 %v2763, 7
    %v2765 = vsub.s32 %v2762, %v2764
    %v2766 = vrot.slane %v2752, %v2765
    %v2768 = vunpack.c.l.s4 1966171168
    %v2769 = vunpack.c.0.s8 %v2768
    %v2770 = vlaneseq
    %v2771 = vshrl.u32 %v2770, 7
    %v2772 = vsub.s32 %v2769, %v2771
    %v2773 = vrot.slane %v2322, %v2772
    %v2774 = vcombine.high %v2773, %v2773
    %v2776 = vunpack.c.l.s4 1966171168
    %v2777 = vunpack.c.0.s8 %v2776
    %v2778 = vlaneseq
    %v2779 = vshrl.u32 %v2778, 7
    %v2780 = vsub.s32 %v2777, %v2779
    %v2781 = vrot.slane %v2773, %v2780
    %v2783 = vunpack.c.l.s4 1966171168
    %v2784 = vunpack.c.0.s8 %v2783
    %v2785 = vlaneseq
    %v2786 = vshrl.u32 %v2785, 7
    %v2787 = vsub.s32 %v2784, %v2786
    %v2788 = vrot.slane %v2774, %v2787
    %v2791 = vunpack.c.l.s4 1966171168
    %v2792 = vunpack.c.0.s8 %v2791
    %v2793 = vlaneseq
    %v2794 = vshrl.u32 %v2793, 7
    %v2795 = vsub.s32 %v2792, %v2794
    %v2796 = vrot.slane %v2632, %v2795
    %v2797 = vcombine.high %v2796, %v2796
    %v2799 = vunpack.c.l.s4 1966171168
    %v2800 = vunpack.c.0.s8 %v2799
    %v2801 = vlaneseq
    %v2802 = vshrl.u32 %v2801, 7
    %v2803 = vsub.s32 %v2800, %v2802
    %v2804 = vrot.slane %v2796, %v2803
    %v2806 = vunpack.c.l.s4 1966171168
    %v2807 = vunpack.c.0.s8 %v2806
    %v2808 = vlaneseq
    %v2809 = vshrl.u32 %v2808, 7
    %v2810 = vsub.s32 %v2807, %v2809
    %v2811 = vrot.slane %v2797, %v2810
    %v2812 = vlaneseq
    %v2813 = vshrl.u32 %v2812, 7
    %v2814 = vsub.s32 0, %v2813
    %v2815 = vrot.slane %v2671, %v2814
    %v2816 = vlaneseq
    %v2817 = vshrl.u32 %v2816, 7
    %v2818 = vsub.s32 0, %v2817
    %v2819 = vrot.slane %v2678, %v2818
    %v2822 = vlaneseq
    %v2823 = vshrl.u32 %v2822, 7
    %v2824 = vsub.s32 0, %v2823
    %v2825 = vrot.slane %v2693, %v2824
    %v2826 = vlaneseq
    %v2827 = vshrl.u32 %v2826, 7
    %v2828 = vsub.s32 0, %v2827
    %v2829 = vrot.slane %v2700, %v2828
    %v2832 = vlaneseq
    %v2833 = vshrl.u32 %v2832, 7
    %v2834 = vsub.s32 0, %v2833
    %v2835 = vrot.slane %v2715, %v2834
    %v2836 = vlaneseq
    %v2837 = vshrl.u32 %v2836, 7
    %v2838 = vsub.s32 0, %v2837
    %v2839 = vrot.slane %v2722, %v2838
    %v2842 = vlaneseq
    %v2843 = vshrl.u32 %v2842, 7
    %v2844 = vsub.s32 0, %v2843
    %v2845 = vrot.slane %v2737, %v2844
    %v2846 = vlaneseq
    %v2847 = vshrl.u32 %v2846, 7
    %v2848 = vsub.s32 0, %v2847
    %v2849 = vrot.slane %v2744, %v2848
    %v2852 = vlaneseq
    %v2853 = vshrl.u32 %v2852, 7
    %v2854 = vsub.s32 0, %v2853
    %v2855 = vrot.slane %v2759, %v2854
    %v2856 = vlaneseq
    %v2857 = vshrl.u32 %v2856, 7
    %v2858 = vsub.s32 0, %v2857
    %v2859 = vrot.slane %v2766, %v2858
    %v2862 = vlaneseq
    %v2863 = vshrl.u32 %v2862, 7
    %v2864 = vsub.s32 0, %v2863
    %v2865 = vrot.slane %v2781, %v2864
    %v2866 = vlaneseq
    %v2867 = vshrl.u32 %v2866, 7
    %v2868 = vsub.s32 0, %v2867
    %v2869 = vrot.slane %v2788, %v2868
    %v2872 = vlaneseq
    %v2873 = vshrl.u32 %v2872, 7
    %v2874 = vsub.s32 0, %v2873
    %v2875 = vrot.slane %v2804, %v2874
    %v2876 = vlaneseq
    %v2877 = vshrl.u32 %v2876, 7
    %v2878 = vsub.s32 0, %v2877
    %v2879 = vrot.slane %v2811, %v2878
    %vm2882 = vcmask 1040384
    %v2883 = vsel %vm2882, %v2647, %v2815
    %v2884 = vsel %vm2882, %v2654, %v2819
    %vm2885 = vcmask 1041408
    %v2886 = vsel %vm2885, %v2883, %v2825
    %v2887 = vsel %vm2885, %v2884, %v2829
    %vm2888 = vcmask 1042432
    %v2889 = vsel %vm2888, %v2886, %v2835
    %v2890 = vsel %vm2888, %v2887, %v2839
    %vm2891 = vcmask 1043456
    %v2892 = vsel %vm2891, %v2889, %v2845
    %v2893 = vsel %vm2891, %v2890, %v2849
    %vm2894 = vcmask 1044480
    %v2895 = vsel %vm2894, %v2892, %v2855
    %v2896 = vsel %vm2894, %v2893, %v2859
    %vm2897 = vcmask 1045504
    %v2898 = vsel %vm2897, %v2895, %v2865
    %v2899 = vsel %vm2897, %v2896, %v2869
    %vm2900 = vcmask 1046528
    %v2901 = vsel %vm2900, %v2898, %v2875
    %v2902 = vsel %vm2900, %v2899, %v2879
    %v2903 = vld [vmem:[%s7] sm:$0xff]
    %v2904 = vld [vmem:[%s7 + $0x8] sm:$0xff]
    %v2905 = vld [vmem:[%s7 + $0x10] sm:$0xff]
    %v2906 = vld [vmem:[%s7 + $0x18] sm:$0xff]
    %v2907 = vld [vmem:[%s10] sm:$0x1]
    %v2909 = vlaneseq
    %v2910 = vshrl.u32 %v2909, 7
    %v2911 = vsub.s32 0, %v2910
    %v2912 = vrot.slane %v2907, %v2911
    %2916 = vrot.lane.b32.xlu0 %v2901, 32
    %v2917 = vpop.permute.xlu0 %2916
    %2918 = vrot.lane.b32.xlu0 %v2902, 32
    %v2919 = vpop.permute.xlu0 %2918
    %v2920 = vsel %vm163, %v2917, 0
    %v2922 = vsel %vm163, %v2919, 0
    %2924 = vmatprep.subr.mxu0 0.0
    %2925 = vmatpush1.msra.mxu0 %v2903
    %2926 = vmatprep.subr.mxu0 0.0
    %2927 = vmatpush1.msra.mxu0 %v2904
    %2928 = vmatprep.subr.mxu0 0.0
    %2929 = vmatpush1.msra.mxu0 %v2905
    %2930 = vmatprep.subr.mxu0 0.0
    %2931 = vmatpush1.msra.mxu0 %v2906
    %2932 = vmatprep.subr.mxu0 0.0
    %2933 = vmatpush1.msra.mxu0 0.0
    %2934 = vmatprep.subr.mxu0 0.0
    %2935 = vmatpush1.msra.mxu0 0.0
    %2936 = vmatprep.subr.mxu0 0.0
    %2937 = vmatpush1.msra.mxu0 0.0
    %2938 = vmatprep.subr.mxu0 0.0
    %2939 = vmatpush1.msra.mxu0 0.0
    %2940 = vmatprep.subr.mxu0 0.0
    %2941 = vmatpush1.msra.mxu0 0.0
    %2942 = vmatprep.subr.mxu0 0.0
    %2943 = vmatpush1.msra.mxu0 0.0
    %2944 = vmatprep.subr.mxu0 0.0
    %2945 = vmatpush1.msra.mxu0 0.0
    %2946 = vmatprep.subr.mxu0 0.0
    %2947 = vmatpush1.msra.mxu0 0.0
    %2948 = vmatprep.subr.mxu0 0.0
    %2949 = vmatpush1.msra.mxu0 0.0
    %2950 = vmatprep.subr.mxu0 0.0
    %2951 = vmatpush1.msra.mxu0 0.0
    %2952 = vmatprep.subr.mxu0 0.0
    %2953 = vmatpush1.msra.mxu0 0.0
    %2954 = vmatprep.subr.mxu0 0.0
    %2955 = vmatpush1.msra.mxu0 0.0
    %2956 = vmatprep.subr.mxu0 0.0
    %2957 = vmatpush1.msra.mxu0 0.0
    %2958 = vmatprep.subr.mxu0 0.0
    %2959 = vmatpush1.msra.mxu0 0.0
    %2960 = vmatprep.subr.mxu0 0.0
    %2961 = vmatpush1.msra.mxu0 0.0
    %2962 = vmatprep.subr.mxu0 0.0
    %2963 = vmatpush1.msra.mxu0 0.0
    %2964 = vmatprep.subr.mxu0 0.0
    %2965 = vmatpush1.msra.mxu0 0.0
    %2966 = vmatprep.subr.mxu0 0.0
    %2967 = vmatpush1.msra.mxu0 0.0
    %2968 = vmatprep.subr.mxu0 0.0
    %2969 = vmatpush1.msra.mxu0 0.0
    %2970 = vmatprep.subr.mxu0 0.0
    %2971 = vmatpush1.msra.mxu0 0.0
    %2972 = vmatprep.subr.mxu0 0.0
    %2973 = vmatpush1.msra.mxu0 0.0
    %2974 = vmatprep.subr.mxu0 0.0
    %2975 = vmatpush1.msra.mxu0 0.0
    %2976 = vmatprep.subr.mxu0 0.0
    %2977 = vmatpush1.msra.mxu0 0.0
    %2978 = vmatprep.subr.mxu0 0.0
    %2979 = vmatpush1.msra.mxu0 0.0
    %2980 = vmatprep.subr.mxu0 0.0
    %2981 = vmatpush1.msra.mxu0 0.0
    %2982 = vmatprep.subr.mxu0 0.0
    %2983 = vmatpush1.msra.mxu0 0.0
    %2984 = vmatprep.subr.mxu0 0.0
    %2985 = vmatpush1.msra.mxu0 0.0
    %2986 = vmatprep.subr.mxu0 0.0
    %2987 = vmatpush1.msra.mxu0 0.0
    %2988 = vmatprep.mubr.f32.mxu0 0.0
    %2989 = vmatmul.mubr.f32.gmra.mrb[0].mxu0 %v2920
    %v2990 = vpop.f32.mrb[0].mxu0
    %v2991 = vadd.f32 %v2912, %v2990
    %v2992 = vpop.f32.mrb[0].mxu0
    %2993 = vmatprep.mubr.f32.mxu0 0.0
    %2994 = vmatmul.mubr.f32.gmra.mrb[0].mxu0 %v2922
    %v2995 = vpop.f32.mrb[0].mxu0
    %v2996 = vadd.f32 %v2912, %v2995
    %v2997 = vpop.f32.mrb[0].mxu0
    %2998 = vdwg.mxu0
    %v2999 = vld [vmem:[%s8] sm:$0xff]
    %v3000 = vld [vmem:[%s8 + $0x8] sm:$0xff]
    %v3001 = vld [vmem:[%s8 + $0x10] sm:$0xff]
    %v3002 = vld [vmem:[%s8 + $0x18] sm:$0xff]
    %v3003 = vld [vmem:[%s11] sm:$0x1]
    %v3005 = vlaneseq
    %v3006 = vshrl.u32 %v3005, 7
    %v3007 = vsub.s32 0, %v3006
    %v3008 = vrot.slane %v3003, %v3007
    %3010 = vmatprep.subr.mxu0 0.0
    %3011 = vmatpush1.msra.mxu0 %v2999
    %3012 = vmatprep.subr.mxu0 0.0
    %3013 = vmatpush1.msra.mxu0 %v3000
    %3014 = vmatprep.subr.mxu0 0.0
    %3015 = vmatpush1.msra.mxu0 %v3001
    %3016 = vmatprep.subr.mxu0 0.0
    %3017 = vmatpush1.msra.mxu0 %v3002
    %3018 = vmatprep.subr.mxu0 0.0
    %3019 = vmatpush1.msra.mxu0 0.0
    %3020 = vmatprep.subr.mxu0 0.0
    %3021 = vmatpush1.msra.mxu0 0.0
    %3022 = vmatprep.subr.mxu0 0.0
    %3023 = vmatpush1.msra.mxu0 0.0
    %3024 = vmatprep.subr.mxu0 0.0
    %3025 = vmatpush1.msra.mxu0 0.0
    %3026 = vmatprep.subr.mxu0 0.0
    %3027 = vmatpush1.msra.mxu0 0.0
    %3028 = vmatprep.subr.mxu0 0.0
    %3029 = vmatpush1.msra.mxu0 0.0
    %3030 = vmatprep.subr.mxu0 0.0
    %3031 = vmatpush1.msra.mxu0 0.0
    %3032 = vmatprep.subr.mxu0 0.0
    %3033 = vmatpush1.msra.mxu0 0.0
    %3034 = vmatprep.subr.mxu0 0.0
    %3035 = vmatpush1.msra.mxu0 0.0
    %3036 = vmatprep.subr.mxu0 0.0
    %3037 = vmatpush1.msra.mxu0 0.0
    %3038 = vmatprep.subr.mxu0 0.0
    %3039 = vmatpush1.msra.mxu0 0.0
    %3040 = vmatprep.subr.mxu0 0.0
    %3041 = vmatpush1.msra.mxu0 0.0
    %3042 = vmatprep.subr.mxu0 0.0
    %3043 = vmatpush1.msra.mxu0 0.0
    %3044 = vmatprep.subr.mxu0 0.0
    %3045 = vmatpush1.msra.mxu0 0.0
    %3046 = vmatprep.subr.mxu0 0.0
    %3047 = vmatpush1.msra.mxu0 0.0
    %3048 = vmatprep.subr.mxu0 0.0
    %3049 = vmatpush1.msra.mxu0 0.0
    %3050 = vmatprep.subr.mxu0 0.0
    %3051 = vmatpush1.msra.mxu0 0.0
    %3052 = vmatprep.subr.mxu0 0.0
    %3053 = vmatpush1.msra.mxu0 0.0
    %3054 = vmatprep.subr.mxu0 0.0
    %3055 = vmatpush1.msra.mxu0 0.0
    %3056 = vmatprep.subr.mxu0 0.0
    %3057 = vmatpush1.msra.mxu0 0.0
    %3058 = vmatprep.subr.mxu0 0.0
    %3059 = vmatpush1.msra.mxu0 0.0
    %3060 = vmatprep.subr.mxu0 0.0
    %3061 = vmatpush1.msra.mxu0 0.0
    %3062 = vmatprep.subr.mxu0 0.0
    %3063 = vmatpush1.msra.mxu0 0.0
    %3064 = vmatprep.subr.mxu0 0.0
    %3065 = vmatpush1.msra.mxu0 0.0
    %3066 = vmatprep.subr.mxu0 0.0
    %3067 = vmatpush1.msra.mxu0 0.0
    %3068 = vmatprep.subr.mxu0 0.0
    %3069 = vmatpush1.msra.mxu0 0.0
    %3070 = vmatprep.subr.mxu0 0.0
    %3071 = vmatpush1.msra.mxu0 0.0
    %3072 = vmatprep.subr.mxu0 0.0
    %3073 = vmatpush1.msra.mxu0 0.0
    %3074 = vmatprep.mubr.f32.mxu0 0.0
    %3075 = vmatmul.mubr.f32.gmra.mrb[0].mxu0 %v2920
    %v3076 = vpop.f32.mrb[0].mxu0
    %v3077 = vadd.f32 %v3008, %v3076
    %v3078 = vpop.f32.mrb[0].mxu0
    %3079 = vmatprep.mubr.f32.mxu0 0.0
    %3080 = vmatmul.mubr.f32.gmra.mrb[0].mxu0 %v2922
    %v3081 = vpop.f32.mrb[0].mxu0
    %v3082 = vadd.f32 %v3008, %v3081
    %v3083 = vpop.f32.mrb[0].mxu0
    %3084 = vdwg.mxu0
    %v3085 = vld [vmem:[%s9] sm:$0xff]
    %v3086 = vld [vmem:[%s9 + $0x8] sm:$0xff]
    %v3087 = vld [vmem:[%s9 + $0x10] sm:$0xff]
    %v3088 = vld [vmem:[%s9 + $0x18] sm:$0xff]
    %v3089 = vld [vmem:[%s12] sm:$0x1]
    %v3091 = vlaneseq
    %v3092 = vshrl.u32 %v3091, 7
    %v3093 = vsub.s32 0, %v3092
    %v3094 = vrot.slane %v3089, %v3093
    %3096 = vmatprep.subr.mxu0 0.0
    %3097 = vmatpush1.msra.mxu0 %v3085
    %3098 = vmatprep.subr.mxu0 0.0
    %3099 = vmatpush1.msra.mxu0 %v3086
    %3100 = vmatprep.subr.mxu0 0.0
    %3101 = vmatpush1.msra.mxu0 %v3087
    %3102 = vmatprep.subr.mxu0 0.0
    %3103 = vmatpush1.msra.mxu0 %v3088
    %3104 = vmatprep.subr.mxu0 0.0
    %3105 = vmatpush1.msra.mxu0 0.0
    %3106 = vmatprep.subr.mxu0 0.0
    %3107 = vmatpush1.msra.mxu0 0.0
    %3108 = vmatprep.subr.mxu0 0.0
    %3109 = vmatpush1.msra.mxu0 0.0
    %3110 = vmatprep.subr.mxu0 0.0
    %3111 = vmatpush1.msra.mxu0 0.0
    %3112 = vmatprep.subr.mxu0 0.0
    %3113 = vmatpush1.msra.mxu0 0.0
    %3114 = vmatprep.subr.mxu0 0.0
    %3115 = vmatpush1.msra.mxu0 0.0
    %3116 = vmatprep.subr.mxu0 0.0
    %3117 = vmatpush1.msra.mxu0 0.0
    %3118 = vmatprep.subr.mxu0 0.0
    %3119 = vmatpush1.msra.mxu0 0.0
    %3120 = vmatprep.subr.mxu0 0.0
    %3121 = vmatpush1.msra.mxu0 0.0
    %3122 = vmatprep.subr.mxu0 0.0
    %3123 = vmatpush1.msra.mxu0 0.0
    %3124 = vmatprep.subr.mxu0 0.0
    %3125 = vmatpush1.msra.mxu0 0.0
    %3126 = vmatprep.subr.mxu0 0.0
    %3127 = vmatpush1.msra.mxu0 0.0
    %3128 = vmatprep.subr.mxu0 0.0
    %3129 = vmatpush1.msra.mxu0 0.0
    %3130 = vmatprep.subr.mxu0 0.0
    %3131 = vmatpush1.msra.mxu0 0.0
    %3132 = vmatprep.subr.mxu0 0.0
    %3133 = vmatpush1.msra.mxu0 0.0
    %3134 = vmatprep.subr.mxu0 0.0
    %3135 = vmatpush1.msra.mxu0 0.0
    %3136 = vmatprep.subr.mxu0 0.0
    %3137 = vmatpush1.msra.mxu0 0.0
    %3138 = vmatprep.subr.mxu0 0.0
    %3139 = vmatpush1.msra.mxu0 0.0
    %3140 = vmatprep.subr.mxu0 0.0
    %3141 = vmatpush1.msra.mxu0 0.0
    %3142 = vmatprep.subr.mxu0 0.0
    %3143 = vmatpush1.msra.mxu0 0.0
    %3144 = vmatprep.subr.mxu0 0.0
    %3145 = vmatpush1.msra.mxu0 0.0
    %3146 = vmatprep.subr.mxu0 0.0
    %3147 = vmatpush1.msra.mxu0 0.0
    %3148 = vmatprep.subr.mxu0 0.0
    %3149 = vmatpush1.msra.mxu0 0.0
    %3150 = vmatprep.subr.mxu0 0.0
    %3151 = vmatpush1.msra.mxu0 0.0
    %3152 = vmatprep.subr.mxu0 0.0
    %3153 = vmatpush1.msra.mxu0 0.0
    %3154 = vmatprep.subr.mxu0 0.0
    %3155 = vmatpush1.msra.mxu0 0.0
    %3156 = vmatprep.subr.mxu0 0.0
    %3157 = vmatpush1.msra.mxu0 0.0
    %3158 = vmatprep.subr.mxu0 0.0
    %3159 = vmatpush1.msra.mxu0 0.0
    %3160 = vmatprep.mubr.f32.mxu0 0.0
    %3161 = vmatmul.mubr.f32.gmra.mrb[0].mxu0 %v2920
    %v3162 = vpop.f32.mrb[0].mxu0
    %v3163 = vadd.f32 %v3094, %v3162
    %v3164 = vpop.f32.mrb[0].mxu0
    %3165 = vmatprep.mubr.f32.mxu0 0.0
    %3166 = vmatmul.mubr.f32.gmra.mrb[0].mxu0 %v2922
    %v3167 = vpop.f32.mrb[0].mxu0
    %v3168 = vadd.f32 %v3094, %v3167
    %v3169 = vpop.f32.mrb[0].mxu0
    %3170 = vdwg.mxu0
    %vm3171 = vcmask 64512
    %v3173 = vsel %vm3171, %v2991, 0
    %v3176 = vsel %vm3171, %v3077, 0
    %3178 = vmatprep.subr.mxu0 0.0
    %3179 = vmatpush1.xpose.msra.mxu0 %v3176
    %3180 = vmatprep.subr.mxu0 0.0
    %3181 = vmatpush1.xpose.msra.mxu0 0.0
    %3182 = vmatprep.subr.mxu0 0.0
    %3183 = vmatpush1.xpose.msra.mxu0 0.0
    %3184 = vmatprep.subr.mxu0 0.0
    %3185 = vmatpush1.xpose.msra.mxu0 0.0
    %3186 = vmatprep.subr.mxu0 0.0
    %3187 = vmatpush1.xpose.msra.mxu0 0.0
    %3188 = vmatprep.subr.mxu0 0.0
    %3189 = vmatpush1.xpose.msra.mxu0 0.0
    %3190 = vmatprep.subr.mxu0 0.0
    %3191 = vmatpush1.xpose.msra.mxu0 0.0
    %3192 = vmatprep.subr.mxu0 0.0
    %3193 = vmatpush1.xpose.msra.mxu0 0.0
    %3194 = vmatprep.subr.mxu0 0.0
    %3195 = vmatpush1.xpose.msra.mxu0 0.0
    %3196 = vmatprep.subr.mxu0 0.0
    %3197 = vmatpush1.xpose.msra.mxu0 0.0
    %3198 = vmatprep.subr.mxu0 0.0
    %3199 = vmatpush1.xpose.msra.mxu0 0.0
    %3200 = vmatprep.subr.mxu0 0.0
    %3201 = vmatpush1.xpose.msra.mxu0 0.0
    %3202 = vmatprep.subr.mxu0 0.0
    %3203 = vmatpush1.xpose.msra.mxu0 0.0
    %3204 = vmatprep.subr.mxu0 0.0
    %3205 = vmatpush1.xpose.msra.mxu0 0.0
    %3206 = vmatprep.subr.mxu0 0.0
    %3207 = vmatpush1.xpose.msra.mxu0 0.0
    %3208 = vmatprep.subr.mxu0 0.0
    %3209 = vmatpush1.xpose.msra.mxu0 0.0
    %3210 = vmatprep.subr.mxu0 0.0
    %3211 = vmatpush1.xpose.msra.mxu0 0.0
    %3212 = vmatprep.subr.mxu0 0.0
    %3213 = vmatpush1.xpose.msra.mxu0 0.0
    %3214 = vmatprep.subr.mxu0 0.0
    %3215 = vmatpush1.xpose.msra.mxu0 0.0
    %3216 = vmatprep.subr.mxu0 0.0
    %3217 = vmatpush1.xpose.msra.mxu0 0.0
    %3218 = vmatprep.subr.mxu0 0.0
    %3219 = vmatpush1.xpose.msra.mxu0 0.0
    %3220 = vmatprep.subr.mxu0 0.0
    %3221 = vmatpush1.xpose.msra.mxu0 0.0
    %3222 = vmatprep.subr.mxu0 0.0
    %3223 = vmatpush1.xpose.msra.mxu0 0.0
    %3224 = vmatprep.subr.mxu0 0.0
    %3225 = vmatpush1.xpose.msra.mxu0 0.0
    %3226 = vmatprep.subr.mxu0 0.0
    %3227 = vmatpush1.xpose.msra.mxu0 0.0
    %3228 = vmatprep.subr.mxu0 0.0
    %3229 = vmatpush1.xpose.msra.mxu0 0.0
    %3230 = vmatprep.subr.mxu0 0.0
    %3231 = vmatpush1.xpose.msra.mxu0 0.0
    %3232 = vmatprep.subr.mxu0 0.0
    %3233 = vmatpush1.xpose.msra.mxu0 0.0
    %3234 = vmatprep.subr.mxu0 0.0
    %3235 = vmatpush1.xpose.msra.mxu0 0.0
    %3236 = vmatprep.subr.mxu0 0.0
    %3237 = vmatpush1.xpose.msra.mxu0 0.0
    %3238 = vmatprep.subr.mxu0 0.0
    %3239 = vmatpush1.xpose.msra.mxu0 0.0
    %3240 = vmatprep.subr.mxu0 0.0
    %3241 = vmatpush1.xpose.msra.mxu0 0.0
    %3242 = vmatprep.mubr.f32.mxu0 0.0
    %3243 = vmatmul.mubr.f32.gmra.mrb[0].mxu0 %v3173
    %v3244 = vpop.f32.mrb[0].mxu0
    %v3245 = vadd.f32 0.0, %v3244
    %v3246 = vpop.f32.mrb[0].mxu0
    %3247 = vdwg.mxu0
    %v3249 = vsel %vm3171, %v2996, 0
    %v3252 = vsel %vm3171, %v3082, 0
    %3254 = vmatprep.subr.mxu0 0.0
    %3255 = vmatpush1.xpose.msra.mxu0 %v3252
    %3256 = vmatprep.subr.mxu0 0.0
    %3257 = vmatpush1.xpose.msra.mxu0 0.0
    %3258 = vmatprep.subr.mxu0 0.0
    %3259 = vmatpush1.xpose.msra.mxu0 0.0
    %3260 = vmatprep.subr.mxu0 0.0
    %3261 = vmatpush1.xpose.msra.mxu0 0.0
    %3262 = vmatprep.subr.mxu0 0.0
    %3263 = vmatpush1.xpose.msra.mxu0 0.0
    %3264 = vmatprep.subr.mxu0 0.0
    %3265 = vmatpush1.xpose.msra.mxu0 0.0
    %3266 = vmatprep.subr.mxu0 0.0
    %3267 = vmatpush1.xpose.msra.mxu0 0.0
    %3268 = vmatprep.subr.mxu0 0.0
    %3269 = vmatpush1.xpose.msra.mxu0 0.0
    %3270 = vmatprep.subr.mxu0 0.0
    %3271 = vmatpush1.xpose.msra.mxu0 0.0
    %3272 = vmatprep.subr.mxu0 0.0
    %3273 = vmatpush1.xpose.msra.mxu0 0.0
    %3274 = vmatprep.subr.mxu0 0.0
    %3275 = vmatpush1.xpose.msra.mxu0 0.0
    %3276 = vmatprep.subr.mxu0 0.0
    %3277 = vmatpush1.xpose.msra.mxu0 0.0
    %3278 = vmatprep.subr.mxu0 0.0
    %3279 = vmatpush1.xpose.msra.mxu0 0.0
    %3280 = vmatprep.subr.mxu0 0.0
    %3281 = vmatpush1.xpose.msra.mxu0 0.0
    %3282 = vmatprep.subr.mxu0 0.0
    %3283 = vmatpush1.xpose.msra.mxu0 0.0
    %3284 = vmatprep.subr.mxu0 0.0
    %3285 = vmatpush1.xpose.msra.mxu0 0.0
    %3286 = vmatprep.subr.mxu0 0.0
    %3287 = vmatpush1.xpose.msra.mxu0 0.0
    %3288 = vmatprep.subr.mxu0 0.0
    %3289 = vmatpush1.xpose.msra.mxu0 0.0
    %3290 = vmatprep.subr.mxu0 0.0
    %3291 = vmatpush1.xpose.msra.mxu0 0.0
    %3292 = vmatprep.subr.mxu0 0.0
    %3293 = vmatpush1.xpose.msra.mxu0 0.0
    %3294 = vmatprep.subr.mxu0 0.0
    %3295 = vmatpush1.xpose.msra.mxu0 0.0
    %3296 = vmatprep.subr.mxu0 0.0
    %3297 = vmatpush1.xpose.msra.mxu0 0.0
    %3298 = vmatprep.subr.mxu0 0.0
    %3299 = vmatpush1.xpose.msra.mxu0 0.0
    %3300 = vmatprep.subr.mxu0 0.0
    %3301 = vmatpush1.xpose.msra.mxu0 0.0
    %3302 = vmatprep.subr.mxu0 0.0
    %3303 = vmatpush1.xpose.msra.mxu0 0.0
    %3304 = vmatprep.subr.mxu0 0.0
    %3305 = vmatpush1.xpose.msra.mxu0 0.0
    %3306 = vmatprep.subr.mxu0 0.0
    %3307 = vmatpush1.xpose.msra.mxu0 0.0
    %3308 = vmatprep.subr.mxu0 0.0
    %3309 = vmatpush1.xpose.msra.mxu0 0.0
    %3310 = vmatprep.subr.mxu0 0.0
    %3311 = vmatpush1.xpose.msra.mxu0 0.0
    %3312 = vmatprep.subr.mxu0 0.0
    %3313 = vmatpush1.xpose.msra.mxu0 0.0
    %3314 = vmatprep.subr.mxu0 0.0
    %3315 = vmatpush1.xpose.msra.mxu0 0.0
    %3316 = vmatprep.subr.mxu0 0.0
    %3317 = vmatpush1.xpose.msra.mxu0 0.0
    %3318 = vmatprep.mubr.f32.mxu0 0.0
    %3319 = vmatmul.mubr.f32.gmra.mrb[0].mxu0 %v3249
    %v3320 = vpop.f32.mrb[0].mxu0
    %v3321 = vadd.f32 0.0, %v3320
    %v3322 = vpop.f32.mrb[0].mxu0
    %3323 = vdwg.mxu0
    %v3324 = vmul.f32 %v3245, 0.35355338
    %v3325 = vmul.f32 %v3321, 0.35355338
    %v3326 = vsel %vm3171, %v3324, -inf
    %3327 = vmax.xlane.f32.xlu0 %v3326
    %v3328 = vpop.xlane.xlu0 %3327
    %v3329 = vsel %vm3171, %v3325, -inf
    %3330 = vmax.xlane.f32.xlu0 %v3329
    %v3331 = vpop.xlane.xlu0 %3330
    %v3332 = vsub.f32 %v3324, %v3328
    %v3333 = vsub.f32 %v3325, %v3331
    %v3334 = vmul.f32 %v3332, 1.442695
    %v3335 = vpow.pop %v3334
    %v3336 = vmul.f32 %v3333, 1.442695
    %v3337 = vpow.pop %v3336
    %v3338 = vsel %vm3171, %v3335, 0.0
    %3339 = vadd.xlane.f32.xlu0 %v3338
    %v3340 = vpop.xlane.xlu0 %3339
    %v3341 = vsel %vm3171, %v3337, 0.0
    %3342 = vadd.xlane.f32.xlu0 %v3341
    %v3343 = vpop.xlane.xlu0 %3342
    %v3344 = vrcp.pop %v3340
    %v3345 = vmul.f32 %v3335, %v3344
    %v3346 = vrcp.pop %v3343
    %v3347 = vmul.f32 %v3337, %v3346
    %v3349 = vsel %vm3171, %v3345, 0
    %3351 = vmatprep.subr.mxu0 0.0
    %3352 = vmatpush1.msra.mxu0 %v3163
    %3353 = vmatprep.subr.mxu0 0.0
    %3354 = vmatpush1.msra.mxu0 0.0
    %3355 = vmatprep.subr.mxu0 0.0
    %3356 = vmatpush1.msra.mxu0 0.0
    %3357 = vmatprep.subr.mxu0 0.0
    %3358 = vmatpush1.msra.mxu0 0.0
    %3359 = vmatprep.subr.mxu0 0.0
    %3360 = vmatpush1.msra.mxu0 0.0
    %3361 = vmatprep.subr.mxu0 0.0
    %3362 = vmatpush1.msra.mxu0 0.0
    %3363 = vmatprep.subr.mxu0 0.0
    %3364 = vmatpush1.msra.mxu0 0.0
    %3365 = vmatprep.subr.mxu0 0.0
    %3366 = vmatpush1.msra.mxu0 0.0
    %3367 = vmatprep.subr.mxu0 0.0
    %3368 = vmatpush1.msra.mxu0 0.0
    %3369 = vmatprep.subr.mxu0 0.0
    %3370 = vmatpush1.msra.mxu0 0.0
    %3371 = vmatprep.subr.mxu0 0.0
    %3372 = vmatpush1.msra.mxu0 0.0
    %3373 = vmatprep.subr.mxu0 0.0
    %3374 = vmatpush1.msra.mxu0 0.0
    %3375 = vmatprep.subr.mxu0 0.0
    %3376 = vmatpush1.msra.mxu0 0.0
    %3377 = vmatprep.subr.mxu0 0.0
    %3378 = vmatpush1.msra.mxu0 0.0
    %3379 = vmatprep.subr.mxu0 0.0
    %3380 = vmatpush1.msra.mxu0 0.0
    %3381 = vmatprep.subr.mxu0 0.0
    %3382 = vmatpush1.msra.mxu0 0.0
    %3383 = vmatprep.subr.mxu0 0.0
    %3384 = vmatpush1.msra.mxu0 0.0
    %3385 = vmatprep.subr.mxu0 0.0
    %3386 = vmatpush1.msra.mxu0 0.0
    %3387 = vmatprep.subr.mxu0 0.0
    %3388 = vmatpush1.msra.mxu0 0.0
    %3389 = vmatprep.subr.mxu0 0.0
    %3390 = vmatpush1.msra.mxu0 0.0
    %3391 = vmatprep.subr.mxu0 0.0
    %3392 = vmatpush1.msra.mxu0 0.0
    %3393 = vmatprep.subr.mxu0 0.0
    %3394 = vmatpush1.msra.mxu0 0.0
    %3395 = vmatprep.subr.mxu0 0.0
    %3396 = vmatpush1.msra.mxu0 0.0
    %3397 = vmatprep.subr.mxu0 0.0
    %3398 = vmatpush1.msra.mxu0 0.0
    %3399 = vmatprep.subr.mxu0 0.0
    %3400 = vmatpush1.msra.mxu0 0.0
    %3401 = vmatprep.subr.mxu0 0.0
    %3402 = vmatpush1.msra.mxu0 0.0
    %3403 = vmatprep.subr.mxu0 0.0
    %3404 = vmatpush1.msra.mxu0 0.0
    %3405 = vmatprep.subr.mxu0 0.0
    %3406 = vmatpush1.msra.mxu0 0.0
    %3407 = vmatprep.subr.mxu0 0.0
    %3408 = vmatpush1.msra.mxu0 0.0
    %3409 = vmatprep.subr.mxu0 0.0
    %3410 = vmatpush1.msra.mxu0 0.0
    %3411 = vmatprep.subr.mxu0 0.0
    %3412 = vmatpush1.msra.mxu0 0.0
    %3413 = vmatprep.subr.mxu0 0.0
    %3414 = vmatpush1.msra.mxu0 0.0
    %3415 = vmatprep.mubr.f32.mxu0 0.0
    %3416 = vmatmul.mubr.f32.gmra.mrb[0].mxu0 %v3349
    %v3417 = vpop.f32.mrb[0].mxu0
    %v3418 = vadd.f32 0.0, %v3417
    %v3419 = vpop.f32.mrb[0].mxu0
    %3420 = vdwg.mxu0
    %v3422 = vsel %vm3171, %v3347, 0
    %3424 = vmatprep.subr.mxu0 0.0
    %3425 = vmatpush1.msra.mxu0 %v3168
    %3426 = vmatprep.subr.mxu0 0.0
    %3427 = vmatpush1.msra.mxu0 0.0
    %3428 = vmatprep.subr.mxu0 0.0
    %3429 = vmatpush1.msra.mxu0 0.0
    %3430 = vmatprep.subr.mxu0 0.0
    %3431 = vmatpush1.msra.mxu0 0.0
    %3432 = vmatprep.subr.mxu0 0.0
    %3433 = vmatpush1.msra.mxu0 0.0
    %3434 = vmatprep.subr.mxu0 0.0
    %3435 = vmatpush1.msra.mxu0 0.0
    %3436 = vmatprep.subr.mxu0 0.0
    %3437 = vmatpush1.msra.mxu0 0.0
    %3438 = vmatprep.subr.mxu0 0.0
    %3439 = vmatpush1.msra.mxu0 0.0
    %3440 = vmatprep.subr.mxu0 0.0
    %3441 = vmatpush1.msra.mxu0 0.0
    %3442 = vmatprep.subr.mxu0 0.0
    %3443 = vmatpush1.msra.mxu0 0.0
    %3444 = vmatprep.subr.mxu0 0.0
    %3445 = vmatpush1.msra.mxu0 0.0
    %3446 = vmatprep.subr.mxu0 0.0
    %3447 = vmatpush1.msra.mxu0 0.0
    %3448 = vmatprep.subr.mxu0 0.0
    %3449 = vmatpush1.msra.mxu0 0.0
    %3450 = vmatprep.subr.mxu0 0.0
    %3451 = vmatpush1.msra.mxu0 0.0
    %3452 = vmatprep.subr.mxu0 0.0
    %3453 = vmatpush1.msra.mxu0 0.0
    %3454 = vmatprep.subr.mxu0 0.0
    %3455 = vmatpush1.msra.mxu0 0.0
    %3456 = vmatprep.subr.mxu0 0.0
    %3457 = vmatpush1.msra.mxu0 0.0
    %3458 = vmatprep.subr.mxu0 0.0
    %3459 = vmatpush1.msra.mxu0 0.0
    %3460 = vmatprep.subr.mxu0 0.0
    %3461 = vmatpush1.msra.mxu0 0.0
    %3462 = vmatprep.subr.mxu0 0.0
    %3463 = vmatpush1.msra.mxu0 0.0
    %3464 = vmatprep.subr.mxu0 0.0
    %3465 = vmatpush1.msra.mxu0 0.0
    %3466 = vmatprep.subr.mxu0 0.0
    %3467 = vmatpush1.msra.mxu0 0.0
    %3468 = vmatprep.subr.mxu0 0.0
    %3469 = vmatpush1.msra.mxu0 0.0
    %3470 = vmatprep.subr.mxu0 0.0
    %3471 = vmatpush1.msra.mxu0 0.0
    %3472 = vmatprep.subr.mxu0 0.0
    %3473 = vmatpush1.msra.mxu0 0.0
    %3474 = vmatprep.subr.mxu0 0.0
    %3475 = vmatpush1.msra.mxu0 0.0
    %3476 = vmatprep.subr.mxu0 0.0
    %3477 = vmatpush1.msra.mxu0 0.0
    %3478 = vmatprep.subr.mxu0 0.0
    %3479 = vmatpush1.msra.mxu0 0.0
    %3480 = vmatprep.subr.mxu0 0.0
    %3481 = vmatpush1.msra.mxu0 0.0
    %3482 = vmatprep.subr.mxu0 0.0
    %3483 = vmatpush1.msra.mxu0 0.0
    %3484 = vmatprep.subr.mxu0 0.0
    %3485 = vmatpush1.msra.mxu0 0.0
    %3486 = vmatprep.subr.mxu0 0.0
    %3487 = vmatpush1.msra.mxu0 0.0
    %3488 = vmatprep.mubr.f32.mxu0 0.0
    %3489 = vmatmul.mubr.f32.gmra.mrb[0].mxu0 %v3422
    %v3490 = vpop.f32.mrb[0].mxu0
    %v3491 = vadd.f32 0.0, %v3490
    %v3492 = vpop.f32.mrb[0].mxu0
    %3493 = vdwg.mxu0
    %v3494 = vsel %vm3171, %v3418, 0.0
    %v3495 = vrot.slane %v3494, 4
    %v3496 = vadd.f32 %v3494, %v3495
    %v3497 = vrot.slane %v3496, 2
    %v3498 = vadd.f32 %v3496, %v3497
    %v3499 = vrot.slane %v3498, 1
    %v3500 = vadd.f32 %v3498, %v3499
    %v3501 = vsel %vm3171, %v3491, 0.0
    %v3502 = vrot.slane %v3501, 4
    %v3503 = vadd.f32 %v3501, %v3502
    %v3504 = vrot.slane %v3503, 2
    %v3505 = vadd.f32 %v3503, %v3504
    %v3506 = vrot.slane %v3505, 1
    %v3507 = vadd.f32 %v3505, %v3506
    %v3508 = vrcp.pop 8.0
    %v3509 = vmul.f32 %v3500, %v3508
    %v3510 = vmul.f32 %v3507, %v3508
    %v3511 = vld [vmem:[%s13] sm:$0xff]
    %s3512 = scalar_lea.vmem %s7, 32
    %v3513 = vld [vmem:[%s3512] sm:$0xff]
    %v3514 = vld [vmem:[%s3512 + $0x8] sm:$0xff]
    %v3515 = vld [vmem:[%s3512 + $0x10] sm:$0xff]
    %v3516 = vld [vmem:[%s3512 + $0x18] sm:$0xff]
    %s3517 = scalar_lea.vmem %s10, 1
    %v3518 = vld [vmem:[%s3517] sm:$0x1]
    %v3520 = vlaneseq
    %v3521 = vshrl.u32 %v3520, 7
    %v3522 = vsub.s32 0, %v3521
    %v3523 = vrot.slane %v3518, %v3522
    %3525 = vmatprep.subr.mxu0 0.0
    %3526 = vmatpush1.msra.mxu0 %v3513
    %3527 = vmatprep.subr.mxu0 0.0
    %3528 = vmatpush1.msra.mxu0 %v3514
    %3529 = vmatprep.subr.mxu0 0.0
    %3530 = vmatpush1.msra.mxu0 %v3515
    %3531 = vmatprep.subr.mxu0 0.0
    %3532 = vmatpush1.msra.mxu0 %v3516
    %3533 = vmatprep.subr.mxu0 0.0
    %3534 = vmatpush1.msra.mxu0 0.0
    %3535 = vmatprep.subr.mxu0 0.0
    %3536 = vmatpush1.msra.mxu0 0.0
    %3537 = vmatprep.subr.mxu0 0.0
    %3538 = vmatpush1.msra.mxu0 0.0
    %3539 = vmatprep.subr.mxu0 0.0
    %3540 = vmatpush1.msra.mxu0 0.0
    %3541 = vmatprep.subr.mxu0 0.0
    %3542 = vmatpush1.msra.mxu0 0.0
    %3543 = vmatprep.subr.mxu0 0.0
    %3544 = vmatpush1.msra.mxu0 0.0
    %3545 = vmatprep.subr.mxu0 0.0
    %3546 = vmatpush1.msra.mxu0 0.0
    %3547 = vmatprep.subr.mxu0 0.0
    %3548 = vmatpush1.msra.mxu0 0.0
    %3549 = vmatprep.subr.mxu0 0.0
    %3550 = vmatpush1.msra.mxu0 0.0
    %3551 = vmatprep.subr.mxu0 0.0
    %3552 = vmatpush1.msra.mxu0 0.0
    %3553 = vmatprep.subr.mxu0 0.0
    %3554 = vmatpush1.msra.mxu0 0.0
    %3555 = vmatprep.subr.mxu0 0.0
    %3556 = vmatpush1.msra.mxu0 0.0
    %3557 = vmatprep.subr.mxu0 0.0
    %3558 = vmatpush1.msra.mxu0 0.0
    %3559 = vmatprep.subr.mxu0 0.0
    %3560 = vmatpush1.msra.mxu0 0.0
    %3561 = vmatprep.subr.mxu0 0.0
    %3562 = vmatpush1.msra.mxu0 0.0
    %3563 = vmatprep.subr.mxu0 0.0
    %3564 = vmatpush1.msra.mxu0 0.0
    %3565 = vmatprep.subr.mxu0 0.0
    %3566 = vmatpush1.msra.mxu0 0.0
    %3567 = vmatprep.subr.mxu0 0.0
    %3568 = vmatpush1.msra.mxu0 0.0
    %3569 = vmatprep.subr.mxu0 0.0
    %3570 = vmatpush1.msra.mxu0 0.0
    %3571 = vmatprep.subr.mxu0 0.0
    %3572 = vmatpush1.msra.mxu0 0.0
    %3573 = vmatprep.subr.mxu0 0.0
    %3574 = vmatpush1.msra.mxu0 0.0
    %3575 = vmatprep.subr.mxu0 0.0
    %3576 = vmatpush1.msra.mxu0 0.0
    %3577 = vmatprep.subr.mxu0 0.0
    %3578 = vmatpush1.msra.mxu0 0.0
    %3579 = vmatprep.subr.mxu0 0.0
    %3580 = vmatpush1.msra.mxu0 0.0
    %3581 = vmatprep.subr.mxu0 0.0
    %3582 = vmatpush1.msra.mxu0 0.0
    %3583 = vmatprep.subr.mxu0 0.0
    %3584 = vmatpush1.msra.mxu0 0.0
    %3585 = vmatprep.subr.mxu0 0.0
    %3586 = vmatpush1.msra.mxu0 0.0
    %3587 = vmatprep.subr.mxu0 0.0
    %3588 = vmatpush1.msra.mxu0 0.0
    %3589 = vmatprep.mubr.f32.mxu0 0.0
    %3590 = vmatmul.mubr.f32.gmra.mrb[0].mxu0 %v2920
    %v3591 = vpop.f32.mrb[0].mxu0
    %v3592 = vadd.f32 %v3523, %v3591
    %v3593 = vpop.f32.mrb[0].mxu0
    %3594 = vmatprep.mubr.f32.mxu0 0.0
    %3595 = vmatmul.mubr.f32.gmra.mrb[0].mxu0 %v2922
    %v3596 = vpop.f32.mrb[0].mxu0
    %v3597 = vadd.f32 %v3523, %v3596
    %v3598 = vpop.f32.mrb[0].mxu0
    %3599 = vdwg.mxu0
    %s3600 = scalar_lea.vmem %s8, 32
    %v3601 = vld [vmem:[%s3600] sm:$0xff]
    %v3602 = vld [vmem:[%s3600 + $0x8] sm:$0xff]
    %v3603 = vld [vmem:[%s3600 + $0x10] sm:$0xff]
    %v3604 = vld [vmem:[%s3600 + $0x18] sm:$0xff]
    %s3605 = scalar_lea.vmem %s11, 1
    %v3606 = vld [vmem:[%s3605] sm:$0x1]
    %v3608 = vlaneseq
    %v3609 = vshrl.u32 %v3608, 7
    %v3610 = vsub.s32 0, %v3609
    %v3611 = vrot.slane %v3606, %v3610
    %3613 = vmatprep.subr.mxu0 0.0
    %3614 = vmatpush1.msra.mxu0 %v3601
    %3615 = vmatprep.subr.mxu0 0.0
    %3616 = vmatpush1.msra.mxu0 %v3602
    %3617 = vmatprep.subr.mxu0 0.0
    %3618 = vmatpush1.msra.mxu0 %v3603
    %3619 = vmatprep.subr.mxu0 0.0
    %3620 = vmatpush1.msra.mxu0 %v3604
    %3621 = vmatprep.subr.mxu0 0.0
    %3622 = vmatpush1.msra.mxu0 0.0
    %3623 = vmatprep.subr.mxu0 0.0
    %3624 = vmatpush1.msra.mxu0 0.0
    %3625 = vmatprep.subr.mxu0 0.0
    %3626 = vmatpush1.msra.mxu0 0.0
    %3627 = vmatprep.subr.mxu0 0.0
    %3628 = vmatpush1.msra.mxu0 0.0
    %3629 = vmatprep.subr.mxu0 0.0
    %3630 = vmatpush1.msra.mxu0 0.0
    %3631 = vmatprep.subr.mxu0 0.0
    %3632 = vmatpush1.msra.mxu0 0.0
    %3633 = vmatprep.subr.mxu0 0.0
    %3634 = vmatpush1.msra.mxu0 0.0
    %3635 = vmatprep.subr.mxu0 0.0
    %3636 = vmatpush1.msra.mxu0 0.0
    %3637 = vmatprep.subr.mxu0 0.0
    %3638 = vmatpush1.msra.mxu0 0.0
    %3639 = vmatprep.subr.mxu0 0.0
    %3640 = vmatpush1.msra.mxu0 0.0
    %3641 = vmatprep.subr.mxu0 0.0
    %3642 = vmatpush1.msra.mxu0 0.0
    %3643 = vmatprep.subr.mxu0 0.0
    %3644 = vmatpush1.msra.mxu0 0.0
    %3645 = vmatprep.subr.mxu0 0.0
    %3646 = vmatpush1.msra.mxu0 0.0
    %3647 = vmatprep.subr.mxu0 0.0
    %3648 = vmatpush1.msra.mxu0 0.0
    %3649 = vmatprep.subr.mxu0 0.0
    %3650 = vmatpush1.msra.mxu0 0.0
    %3651 = vmatprep.subr.mxu0 0.0
    %3652 = vmatpush1.msra.mxu0 0.0
    %3653 = vmatprep.subr.mxu0 0.0
    %3654 = vmatpush1.msra.mxu0 0.0
    %3655 = vmatprep.subr.mxu0 0.0
    %3656 = vmatpush1.msra.mxu0 0.0
    %3657 = vmatprep.subr.mxu0 0.0
    %3658 = vmatpush1.msra.mxu0 0.0
    %3659 = vmatprep.subr.mxu0 0.0
    %3660 = vmatpush1.msra.mxu0 0.0
    %3661 = vmatprep.subr.mxu0 0.0
    %3662 = vmatpush1.msra.mxu0 0.0
    %3663 = vmatprep.subr.mxu0 0.0
    %3664 = vmatpush1.msra.mxu0 0.0
    %3665 = vmatprep.subr.mxu0 0.0
    %3666 = vmatpush1.msra.mxu0 0.0
    %3667 = vmatprep.subr.mxu0 0.0
    %3668 = vmatpush1.msra.mxu0 0.0
    %3669 = vmatprep.subr.mxu0 0.0
    %3670 = vmatpush1.msra.mxu0 0.0
    %3671 = vmatprep.subr.mxu0 0.0
    %3672 = vmatpush1.msra.mxu0 0.0
    %3673 = vmatprep.subr.mxu0 0.0
    %3674 = vmatpush1.msra.mxu0 0.0
    %3675 = vmatprep.subr.mxu0 0.0
    %3676 = vmatpush1.msra.mxu0 0.0
    %3677 = vmatprep.mubr.f32.mxu0 0.0
    %3678 = vmatmul.mubr.f32.gmra.mrb[0].mxu0 %v2920
    %v3679 = vpop.f32.mrb[0].mxu0
    %v3680 = vadd.f32 %v3611, %v3679
    %v3681 = vpop.f32.mrb[0].mxu0
    %3682 = vmatprep.mubr.f32.mxu0 0.0
    %3683 = vmatmul.mubr.f32.gmra.mrb[0].mxu0 %v2922
    %v3684 = vpop.f32.mrb[0].mxu0
    %v3685 = vadd.f32 %v3611, %v3684
    %v3686 = vpop.f32.mrb[0].mxu0
    %3687 = vdwg.mxu0
    %s3688 = scalar_lea.vmem %s9, 32
    %v3689 = vld [vmem:[%s3688] sm:$0xff]
    %v3690 = vld [vmem:[%s3688 + $0x8] sm:$0xff]
    %v3691 = vld [vmem:[%s3688 + $0x10] sm:$0xff]
    %v3692 = vld [vmem:[%s3688 + $0x18] sm:$0xff]
    %s3693 = scalar_lea.vmem %s12, 1
    %v3694 = vld [vmem:[%s3693] sm:$0x1]
    %v3696 = vlaneseq
    %v3697 = vshrl.u32 %v3696, 7
    %v3698 = vsub.s32 0, %v3697
    %v3699 = vrot.slane %v3694, %v3698
    %3701 = vmatprep.subr.mxu0 0.0
    %3702 = vmatpush1.msra.mxu0 %v3689
    %3703 = vmatprep.subr.mxu0 0.0
    %3704 = vmatpush1.msra.mxu0 %v3690
    %3705 = vmatprep.subr.mxu0 0.0
    %3706 = vmatpush1.msra.mxu0 %v3691
    %3707 = vmatprep.subr.mxu0 0.0
    %3708 = vmatpush1.msra.mxu0 %v3692
    %3709 = vmatprep.subr.mxu0 0.0
    %3710 = vmatpush1.msra.mxu0 0.0
    %3711 = vmatprep.subr.mxu0 0.0
    %3712 = vmatpush1.msra.mxu0 0.0
    %3713 = vmatprep.subr.mxu0 0.0
    %3714 = vmatpush1.msra.mxu0 0.0
    %3715 = vmatprep.subr.mxu0 0.0
    %3716 = vmatpush1.msra.mxu0 0.0
    %3717 = vmatprep.subr.mxu0 0.0
    %3718 = vmatpush1.msra.mxu0 0.0
    %3719 = vmatprep.subr.mxu0 0.0
    %3720 = vmatpush1.msra.mxu0 0.0
    %3721 = vmatprep.subr.mxu0 0.0
    %3722 = vmatpush1.msra.mxu0 0.0
    %3723 = vmatprep.subr.mxu0 0.0
    %3724 = vmatpush1.msra.mxu0 0.0
    %3725 = vmatprep.subr.mxu0 0.0
    %3726 = vmatpush1.msra.mxu0 0.0
    %3727 = vmatprep.subr.mxu0 0.0
    %3728 = vmatpush1.msra.mxu0 0.0
    %3729 = vmatprep.subr.mxu0 0.0
    %3730 = vmatpush1.msra.mxu0 0.0
    %3731 = vmatprep.subr.mxu0 0.0
    %3732 = vmatpush1.msra.mxu0 0.0
    %3733 = vmatprep.subr.mxu0 0.0
    %3734 = vmatpush1.msra.mxu0 0.0
    %3735 = vmatprep.subr.mxu0 0.0
    %3736 = vmatpush1.msra.mxu0 0.0
    %3737 = vmatprep.subr.mxu0 0.0
    %3738 = vmatpush1.msra.mxu0 0.0
    %3739 = vmatprep.subr.mxu0 0.0
    %3740 = vmatpush1.msra.mxu0 0.0
    %3741 = vmatprep.subr.mxu0 0.0
    %3742 = vmatpush1.msra.mxu0 0.0
    %3743 = vmatprep.subr.mxu0 0.0
    %3744 = vmatpush1.msra.mxu0 0.0
    %3745 = vmatprep.subr.mxu0 0.0
    %3746 = vmatpush1.msra.mxu0 0.0
    %3747 = vmatprep.subr.mxu0 0.0
    %3748 = vmatpush1.msra.mxu0 0.0
    %3749 = vmatprep.subr.mxu0 0.0
    %3750 = vmatpush1.msra.mxu0 0.0
    %3751 = vmatprep.subr.mxu0 0.0
    %3752 = vmatpush1.msra.mxu0 0.0
    %3753 = vmatprep.subr.mxu0 0.0
    %3754 = vmatpush1.msra.mxu0 0.0
    %3755 = vmatprep.subr.mxu0 0.0
    %3756 = vmatpush1.msra.mxu0 0.0
    %3757 = vmatprep.subr.mxu0 0.0
    %3758 = vmatpush1.msra.mxu0 0.0
    %3759 = vmatprep.subr.mxu0 0.0
    %3760 = vmatpush1.msra.mxu0 0.0
    %3761 = vmatprep.subr.mxu0 0.0
    %3762 = vmatpush1.msra.mxu0 0.0
    %3763 = vmatprep.subr.mxu0 0.0
    %3764 = vmatpush1.msra.mxu0 0.0
    %3765 = vmatprep.mubr.f32.mxu0 0.0
    %3766 = vmatmul.mubr.f32.gmra.mrb[0].mxu0 %v2920
    %v3767 = vpop.f32.mrb[0].mxu0
    %v3768 = vadd.f32 %v3699, %v3767
    %v3769 = vpop.f32.mrb[0].mxu0
    %3770 = vmatprep.mubr.f32.mxu0 0.0
    %3771 = vmatmul.mubr.f32.gmra.mrb[0].mxu0 %v2922
    %v3772 = vpop.f32.mrb[0].mxu0
    %v3773 = vadd.f32 %v3699, %v3772
    %v3774 = vpop.f32.mrb[0].mxu0
    %3775 = vdwg.mxu0
    %v3777 = vsel %vm3171, %v3592, 0
    %v3780 = vsel %vm3171, %v3680, 0
    %3782 = vmatprep.subr.mxu0 0.0
    %3783 = vmatpush1.xpose.msra.mxu0 %v3780
    %3784 = vmatprep.subr.mxu0 0.0
    %3785 = vmatpush1.xpose.msra.mxu0 0.0
    %3786 = vmatprep.subr.mxu0 0.0
    %3787 = vmatpush1.xpose.msra.mxu0 0.0
    %3788 = vmatprep.subr.mxu0 0.0
    %3789 = vmatpush1.xpose.msra.mxu0 0.0
    %3790 = vmatprep.subr.mxu0 0.0
    %3791 = vmatpush1.xpose.msra.mxu0 0.0
    %3792 = vmatprep.subr.mxu0 0.0
    %3793 = vmatpush1.xpose.msra.mxu0 0.0
    %3794 = vmatprep.subr.mxu0 0.0
    %3795 = vmatpush1.xpose.msra.mxu0 0.0
    %3796 = vmatprep.subr.mxu0 0.0
    %3797 = vmatpush1.xpose.msra.mxu0 0.0
    %3798 = vmatprep.subr.mxu0 0.0
    %3799 = vmatpush1.xpose.msra.mxu0 0.0
    %3800 = vmatprep.subr.mxu0 0.0
    %3801 = vmatpush1.xpose.msra.mxu0 0.0
    %3802 = vmatprep.subr.mxu0 0.0
    %3803 = vmatpush1.xpose.msra.mxu0 0.0
    %3804 = vmatprep.subr.mxu0 0.0
    %3805 = vmatpush1.xpose.msra.mxu0 0.0
    %3806 = vmatprep.subr.mxu0 0.0
    %3807 = vmatpush1.xpose.msra.mxu0 0.0
    %3808 = vmatprep.subr.mxu0 0.0
    %3809 = vmatpush1.xpose.msra.mxu0 0.0
    %3810 = vmatprep.subr.mxu0 0.0
    %3811 = vmatpush1.xpose.msra.mxu0 0.0
    %3812 = vmatprep.subr.mxu0 0.0
    %3813 = vmatpush1.xpose.msra.mxu0 0.0
    %3814 = vmatprep.subr.mxu0 0.0
    %3815 = vmatpush1.xpose.msra.mxu0 0.0
    %3816 = vmatprep.subr.mxu0 0.0
    %3817 = vmatpush1.xpose.msra.mxu0 0.0
    %3818 = vmatprep.subr.mxu0 0.0
    %3819 = vmatpush1.xpose.msra.mxu0 0.0
    %3820 = vmatprep.subr.mxu0 0.0
    %3821 = vmatpush1.xpose.msra.mxu0 0.0
    %3822 = vmatprep.subr.mxu0 0.0
    %3823 = vmatpush1.xpose.msra.mxu0 0.0
    %3824 = vmatprep.subr.mxu0 0.0
    %3825 = vmatpush1.xpose.msra.mxu0 0.0
    %3826 = vmatprep.subr.mxu0 0.0
    %3827 = vmatpush1.xpose.msra.mxu0 0.0
    %3828 = vmatprep.subr.mxu0 0.0
    %3829 = vmatpush1.xpose.msra.mxu0 0.0
    %3830 = vmatprep.subr.mxu0 0.0
    %3831 = vmatpush1.xpose.msra.mxu0 0.0
    %3832 = vmatprep.subr.mxu0 0.0
    %3833 = vmatpush1.xpose.msra.mxu0 0.0
    %3834 = vmatprep.subr.mxu0 0.0
    %3835 = vmatpush1.xpose.msra.mxu0 0.0
    %3836 = vmatprep.subr.mxu0 0.0
    %3837 = vmatpush1.xpose.msra.mxu0 0.0
    %3838 = vmatprep.subr.mxu0 0.0
    %3839 = vmatpush1.xpose.msra.mxu0 0.0
    %3840 = vmatprep.subr.mxu0 0.0
    %3841 = vmatpush1.xpose.msra.mxu0 0.0
    %3842 = vmatprep.subr.mxu0 0.0
    %3843 = vmatpush1.xpose.msra.mxu0 0.0
    %3844 = vmatprep.subr.mxu0 0.0
    %3845 = vmatpush1.xpose.msra.mxu0 0.0
    %3846 = vmatprep.mubr.f32.mxu0 0.0
    %3847 = vmatmul.mubr.f32.gmra.mrb[0].mxu0 %v3777
    %v3848 = vpop.f32.mrb[0].mxu0
    %v3849 = vadd.f32 0.0, %v3848
    %v3850 = vpop.f32.mrb[0].mxu0
    %3851 = vdwg.mxu0
    %v3853 = vsel %vm3171, %v3597, 0
    %v3856 = vsel %vm3171, %v3685, 0
    %3858 = vmatprep.subr.mxu0 0.0
    %3859 = vmatpush1.xpose.msra.mxu0 %v3856
    %3860 = vmatprep.subr.mxu0 0.0
    %3861 = vmatpush1.xpose.msra.mxu0 0.0
    %3862 = vmatprep.subr.mxu0 0.0
    %3863 = vmatpush1.xpose.msra.mxu0 0.0
    %3864 = vmatprep.subr.mxu0 0.0
    %3865 = vmatpush1.xpose.msra.mxu0 0.0
    %3866 = vmatprep.subr.mxu0 0.0
    %3867 = vmatpush1.xpose.msra.mxu0 0.0
    %3868 = vmatprep.subr.mxu0 0.0
    %3869 = vmatpush1.xpose.msra.mxu0 0.0
    %3870 = vmatprep.subr.mxu0 0.0
    %3871 = vmatpush1.xpose.msra.mxu0 0.0
    %3872 = vmatprep.subr.mxu0 0.0
    %3873 = vmatpush1.xpose.msra.mxu0 0.0
    %3874 = vmatprep.subr.mxu0 0.0
    %3875 = vmatpush1.xpose.msra.mxu0 0.0
    %3876 = vmatprep.subr.mxu0 0.0
    %3877 = vmatpush1.xpose.msra.mxu0 0.0
    %3878 = vmatprep.subr.mxu0 0.0
    %3879 = vmatpush1.xpose.msra.mxu0 0.0
    %3880 = vmatprep.subr.mxu0 0.0
    %3881 = vmatpush1.xpose.msra.mxu0 0.0
    %3882 = vmatprep.subr.mxu0 0.0
    %3883 = vmatpush1.xpose.msra.mxu0 0.0
    %3884 = vmatprep.subr.mxu0 0.0
    %3885 = vmatpush1.xpose.msra.mxu0 0.0
    %3886 = vmatprep.subr.mxu0 0.0
    %3887 = vmatpush1.xpose.msra.mxu0 0.0
    %3888 = vmatprep.subr.mxu0 0.0
    %3889 = vmatpush1.xpose.msra.mxu0 0.0
    %3890 = vmatprep.subr.mxu0 0.0
    %3891 = vmatpush1.xpose.msra.mxu0 0.0
    %3892 = vmatprep.subr.mxu0 0.0
    %3893 = vmatpush1.xpose.msra.mxu0 0.0
    %3894 = vmatprep.subr.mxu0 0.0
    %3895 = vmatpush1.xpose.msra.mxu0 0.0
    %3896 = vmatprep.subr.mxu0 0.0
    %3897 = vmatpush1.xpose.msra.mxu0 0.0
    %3898 = vmatprep.subr.mxu0 0.0
    %3899 = vmatpush1.xpose.msra.mxu0 0.0
    %3900 = vmatprep.subr.mxu0 0.0
    %3901 = vmatpush1.xpose.msra.mxu0 0.0
    %3902 = vmatprep.subr.mxu0 0.0
    %3903 = vmatpush1.xpose.msra.mxu0 0.0
    %3904 = vmatprep.subr.mxu0 0.0
    %3905 = vmatpush1.xpose.msra.mxu0 0.0
    %3906 = vmatprep.subr.mxu0 0.0
    %3907 = vmatpush1.xpose.msra.mxu0 0.0
    %3908 = vmatprep.subr.mxu0 0.0
    %3909 = vmatpush1.xpose.msra.mxu0 0.0
    %3910 = vmatprep.subr.mxu0 0.0
    %3911 = vmatpush1.xpose.msra.mxu0 0.0
    %3912 = vmatprep.subr.mxu0 0.0
    %3913 = vmatpush1.xpose.msra.mxu0 0.0
    %3914 = vmatprep.subr.mxu0 0.0
    %3915 = vmatpush1.xpose.msra.mxu0 0.0
    %3916 = vmatprep.subr.mxu0 0.0
    %3917 = vmatpush1.xpose.msra.mxu0 0.0
    %3918 = vmatprep.subr.mxu0 0.0
    %3919 = vmatpush1.xpose.msra.mxu0 0.0
    %3920 = vmatprep.subr.mxu0 0.0
    %3921 = vmatpush1.xpose.msra.mxu0 0.0
    %3922 = vmatprep.mubr.f32.mxu0 0.0
    %3923 = vmatmul.mubr.f32.gmra.mrb[0].mxu0 %v3853
    %v3924 = vpop.f32.mrb[0].mxu0
    %v3925 = vadd.f32 0.0, %v3924
    %v3926 = vpop.f32.mrb[0].mxu0
    %3927 = vdwg.mxu0
    %v3928 = vmul.f32 %v3849, 0.35355338
    %v3929 = vmul.f32 %v3925, 0.35355338
    %v3930 = vsel %vm3171, %v3928, -inf
    %3931 = vmax.xlane.f32.xlu0 %v3930
    %v3932 = vpop.xlane.xlu0 %3931
    %v3933 = vsel %vm3171, %v3929, -inf
    %3934 = vmax.xlane.f32.xlu0 %v3933
    %v3935 = vpop.xlane.xlu0 %3934
    %v3936 = vsub.f32 %v3928, %v3932
    %v3937 = vsub.f32 %v3929, %v3935
    %v3938 = vmul.f32 %v3936, 1.442695
    %v3939 = vpow.pop %v3938
    %v3940 = vmul.f32 %v3937, 1.442695
    %v3941 = vpow.pop %v3940
    %v3942 = vsel %vm3171, %v3939, 0.0
    %3943 = vadd.xlane.f32.xlu0 %v3942
    %v3944 = vpop.xlane.xlu0 %3943
    %v3945 = vsel %vm3171, %v3941, 0.0
    %3946 = vadd.xlane.f32.xlu0 %v3945
    %v3947 = vpop.xlane.xlu0 %3946
    %v3948 = vrcp.pop %v3944
    %v3949 = vmul.f32 %v3939, %v3948
    %v3950 = vrcp.pop %v3947
    %v3951 = vmul.f32 %v3941, %v3950
    %v3953 = vsel %vm3171, %v3949, 0
    %3955 = vmatprep.subr.mxu0 0.0
    %3956 = vmatpush1.msra.mxu0 %v3768
    %3957 = vmatprep.subr.mxu0 0.0
    %3958 = vmatpush1.msra.mxu0 0.0
    %3959 = vmatprep.subr.mxu0 0.0
    %3960 = vmatpush1.msra.mxu0 0.0
    %3961 = vmatprep.subr.mxu0 0.0
    %3962 = vmatpush1.msra.mxu0 0.0
    %3963 = vmatprep.subr.mxu0 0.0
    %3964 = vmatpush1.msra.mxu0 0.0
    %3965 = vmatprep.subr.mxu0 0.0
    %3966 = vmatpush1.msra.mxu0 0.0
    %3967 = vmatprep.subr.mxu0 0.0
    %3968 = vmatpush1.msra.mxu0 0.0
    %3969 = vmatprep.subr.mxu0 0.0
    %3970 = vmatpush1.msra.mxu0 0.0
    %3971 = vmatprep.subr.mxu0 0.0
    %3972 = vmatpush1.msra.mxu0 0.0
    %3973 = vmatprep.subr.mxu0 0.0
    %3974 = vmatpush1.msra.mxu0 0.0
    %3975 = vmatprep.subr.mxu0 0.0
    %3976 = vmatpush1.msra.mxu0 0.0
    %3977 = vmatprep.subr.mxu0 0.0
    %3978 = vmatpush1.msra.mxu0 0.0
    %3979 = vmatprep.subr.mxu0 0.0
    %3980 = vmatpush1.msra.mxu0 0.0
    %3981 = vmatprep.subr.mxu0 0.0
    %3982 = vmatpush1.msra.mxu0 0.0
    %3983 = vmatprep.subr.mxu0 0.0
    %3984 = vmatpush1.msra.mxu0 0.0
    %3985 = vmatprep.subr.mxu0 0.0
    %3986 = vmatpush1.msra.mxu0 0.0
    %3987 = vmatprep.subr.mxu0 0.0
    %3988 = vmatpush1.msra.mxu0 0.0
    %3989 = vmatprep.subr.mxu0 0.0
    %3990 = vmatpush1.msra.mxu0 0.0
    %3991 = vmatprep.subr.mxu0 0.0
    %3992 = vmatpush1.msra.mxu0 0.0
    %3993 = vmatprep.subr.mxu0 0.0
    %3994 = vmatpush1.msra.mxu0 0.0
    %3995 = vmatprep.subr.mxu0 0.0
    %3996 = vmatpush1.msra.mxu0 0.0
    %3997 = vmatprep.subr.mxu0 0.0
    %3998 = vmatpush1.msra.mxu0 0.0
    %3999 = vmatprep.subr.mxu0 0.0
    %4000 = vmatpush1.msra.mxu0 0.0
    %4001 = vmatprep.subr.mxu0 0.0
    %4002 = vmatpush1.msra.mxu0 0.0
    %4003 = vmatprep.subr.mxu0 0.0
    %4004 = vmatpush1.msra.mxu0 0.0
    %4005 = vmatprep.subr.mxu0 0.0
    %4006 = vmatpush1.msra.mxu0 0.0
    %4007 = vmatprep.subr.mxu0 0.0
    %4008 = vmatpush1.msra.mxu0 0.0
    %4009 = vmatprep.subr.mxu0 0.0
    %4010 = vmatpush1.msra.mxu0 0.0
    %4011 = vmatprep.subr.mxu0 0.0
    %4012 = vmatpush1.msra.mxu0 0.0
    %4013 = vmatprep.subr.mxu0 0.0
    %4014 = vmatpush1.msra.mxu0 0.0
    %4015 = vmatprep.subr.mxu0 0.0
    %4016 = vmatpush1.msra.mxu0 0.0
    %4017 = vmatprep.subr.mxu0 0.0
    %4018 = vmatpush1.msra.mxu0 0.0
    %4019 = vmatprep.mubr.f32.mxu0 0.0
    %4020 = vmatmul.mubr.f32.gmra.mrb[0].mxu0 %v3953
    %v4021 = vpop.f32.mrb[0].mxu0
    %v4022 = vadd.f32 0.0, %v4021
    %v4023 = vpop.f32.mrb[0].mxu0
    %4024 = vdwg.mxu0
    %v4026 = vsel %vm3171, %v3951, 0
    %4028 = vmatprep.subr.mxu0 0.0
    %4029 = vmatpush1.msra.mxu0 %v3773
    %4030 = vmatprep.subr.mxu0 0.0
    %4031 = vmatpush1.msra.mxu0 0.0
    %4032 = vmatprep.subr.mxu0 0.0
    %4033 = vmatpush1.msra.mxu0 0.0
    %4034 = vmatprep.subr.mxu0 0.0
    %4035 = vmatpush1.msra.mxu0 0.0
    %4036 = vmatprep.subr.mxu0 0.0
    %4037 = vmatpush1.msra.mxu0 0.0
    %4038 = vmatprep.subr.mxu0 0.0
    %4039 = vmatpush1.msra.mxu0 0.0
    %4040 = vmatprep.subr.mxu0 0.0
    %4041 = vmatpush1.msra.mxu0 0.0
    %4042 = vmatprep.subr.mxu0 0.0
    %4043 = vmatpush1.msra.mxu0 0.0
    %4044 = vmatprep.subr.mxu0 0.0
    %4045 = vmatpush1.msra.mxu0 0.0
    %4046 = vmatprep.subr.mxu0 0.0
    %4047 = vmatpush1.msra.mxu0 0.0
    %4048 = vmatprep.subr.mxu0 0.0
    %4049 = vmatpush1.msra.mxu0 0.0
    %4050 = vmatprep.subr.mxu0 0.0
    %4051 = vmatpush1.msra.mxu0 0.0
    %4052 = vmatprep.subr.mxu0 0.0
    %4053 = vmatpush1.msra.mxu0 0.0
    %4054 = vmatprep.subr.mxu0 0.0
    %4055 = vmatpush1.msra.mxu0 0.0
    %4056 = vmatprep.subr.mxu0 0.0
    %4057 = vmatpush1.msra.mxu0 0.0
    %4058 = vmatprep.subr.mxu0 0.0
    %4059 = vmatpush1.msra.mxu0 0.0
    %4060 = vmatprep.subr.mxu0 0.0
    %4061 = vmatpush1.msra.mxu0 0.0
    %4062 = vmatprep.subr.mxu0 0.0
    %4063 = vmatpush1.msra.mxu0 0.0
    %4064 = vmatprep.subr.mxu0 0.0
    %4065 = vmatpush1.msra.mxu0 0.0
    %4066 = vmatprep.subr.mxu0 0.0
    %4067 = vmatpush1.msra.mxu0 0.0
    %4068 = vmatprep.subr.mxu0 0.0
    %4069 = vmatpush1.msra.mxu0 0.0
    %4070 = vmatprep.subr.mxu0 0.0
    %4071 = vmatpush1.msra.mxu0 0.0
    %4072 = vmatprep.subr.mxu0 0.0
    %4073 = vmatpush1.msra.mxu0 0.0
    %4074 = vmatprep.subr.mxu0 0.0
    %4075 = vmatpush1.msra.mxu0 0.0
    %4076 = vmatprep.subr.mxu0 0.0
    %4077 = vmatpush1.msra.mxu0 0.0
    %4078 = vmatprep.subr.mxu0 0.0
    %4079 = vmatpush1.msra.mxu0 0.0
    %4080 = vmatprep.subr.mxu0 0.0
    %4081 = vmatpush1.msra.mxu0 0.0
    %4082 = vmatprep.subr.mxu0 0.0
    %4083 = vmatpush1.msra.mxu0 0.0
    %4084 = vmatprep.subr.mxu0 0.0
    %4085 = vmatpush1.msra.mxu0 0.0
    %4086 = vmatprep.subr.mxu0 0.0
    %4087 = vmatpush1.msra.mxu0 0.0
    %4088 = vmatprep.subr.mxu0 0.0
    %4089 = vmatpush1.msra.mxu0 0.0
    %4090 = vmatprep.subr.mxu0 0.0
    %4091 = vmatpush1.msra.mxu0 0.0
    %4092 = vmatprep.mubr.f32.mxu0 0.0
    %4093 = vmatmul.mubr.f32.gmra.mrb[0].mxu0 %v4026
    %v4094 = vpop.f32.mrb[0].mxu0
    %v4095 = vadd.f32 0.0, %v4094
    %v4096 = vpop.f32.mrb[0].mxu0
    %4097 = vdwg.mxu0
    %v4098 = vsel %vm3171, %v4022, 0.0
    %v4099 = vrot.slane %v4098, 4
    %v4100 = vadd.f32 %v4098, %v4099
    %v4101 = vrot.slane %v4100, 2
    %v4102 = vadd.f32 %v4100, %v4101
    %v4103 = vrot.slane %v4102, 1
    %v4104 = vadd.f32 %v4102, %v4103
    %v4105 = vsel %vm3171, %v4095, 0.0
    %v4106 = vrot.slane %v4105, 4
    %v4107 = vadd.f32 %v4105, %v4106
    %v4108 = vrot.slane %v4107, 2
    %v4109 = vadd.f32 %v4107, %v4108
    %v4110 = vrot.slane %v4109, 1
    %v4111 = vadd.f32 %v4109, %v4110
    %v4112 = vmul.f32 %v4104, %v3508
    %v4113 = vmul.f32 %v4111, %v3508
    %s4114 = scalar_lea.vmem %s13, 8
    %v4115 = vld [vmem:[%s4114] sm:$0xff]
    %v4118 = vsel %vm364, %v4113, %v4112
    %v4119 = vsel %vm3171, %v4118, 0
    %4121 = vmatprep.subr.mxu0 0.0
    %4122 = vmatpush1.msra.mxu0 %v4115
    %4123 = vmatprep.subr.mxu0 0.0
    %4124 = vmatpush1.msra.mxu0 0.0
    %4125 = vmatprep.subr.mxu0 0.0
    %4126 = vmatpush1.msra.mxu0 0.0
    %4127 = vmatprep.subr.mxu0 0.0
    %4128 = vmatpush1.msra.mxu0 0.0
    %4129 = vmatprep.subr.mxu0 0.0
    %4130 = vmatpush1.msra.mxu0 0.0
    %4131 = vmatprep.subr.mxu0 0.0
    %4132 = vmatpush1.msra.mxu0 0.0
    %4133 = vmatprep.subr.mxu0 0.0
    %4134 = vmatpush1.msra.mxu0 0.0
    %4135 = vmatprep.subr.mxu0 0.0
    %4136 = vmatpush1.msra.mxu0 0.0
    %4137 = vmatprep.subr.mxu0 0.0
    %4138 = vmatpush1.msra.mxu0 0.0
    %4139 = vmatprep.subr.mxu0 0.0
    %4140 = vmatpush1.msra.mxu0 0.0
    %4141 = vmatprep.subr.mxu0 0.0
    %4142 = vmatpush1.msra.mxu0 0.0
    %4143 = vmatprep.subr.mxu0 0.0
    %4144 = vmatpush1.msra.mxu0 0.0
    %4145 = vmatprep.subr.mxu0 0.0
    %4146 = vmatpush1.msra.mxu0 0.0
    %4147 = vmatprep.subr.mxu0 0.0
    %4148 = vmatpush1.msra.mxu0 0.0
    %4149 = vmatprep.subr.mxu0 0.0
    %4150 = vmatpush1.msra.mxu0 0.0
    %4151 = vmatprep.subr.mxu0 0.0
    %4152 = vmatpush1.msra.mxu0 0.0
    %4153 = vmatprep.subr.mxu0 0.0
    %4154 = vmatpush1.msra.mxu0 0.0
    %4155 = vmatprep.subr.mxu0 0.0
    %4156 = vmatpush1.msra.mxu0 0.0
    %4157 = vmatprep.subr.mxu0 0.0
    %4158 = vmatpush1.msra.mxu0 0.0
    %4159 = vmatprep.subr.mxu0 0.0
    %4160 = vmatpush1.msra.mxu0 0.0
    %4161 = vmatprep.subr.mxu0 0.0
    %4162 = vmatpush1.msra.mxu0 0.0
    %4163 = vmatprep.subr.mxu0 0.0
    %4164 = vmatpush1.msra.mxu0 0.0
    %4165 = vmatprep.subr.mxu0 0.0
    %4166 = vmatpush1.msra.mxu0 0.0
    %4167 = vmatprep.subr.mxu0 0.0
    %4168 = vmatpush1.msra.mxu0 0.0
    %4169 = vmatprep.subr.mxu0 0.0
    %4170 = vmatpush1.msra.mxu0 0.0
    %4171 = vmatprep.subr.mxu0 0.0
    %4172 = vmatpush1.msra.mxu0 0.0
    %4173 = vmatprep.subr.mxu0 0.0
    %4174 = vmatpush1.msra.mxu0 0.0
    %4175 = vmatprep.subr.mxu0 0.0
    %4176 = vmatpush1.msra.mxu0 0.0
    %4177 = vmatprep.subr.mxu0 0.0
    %4178 = vmatpush1.msra.mxu0 0.0
    %4179 = vmatprep.subr.mxu0 0.0
    %4180 = vmatpush1.msra.mxu0 0.0
    %4181 = vmatprep.subr.mxu0 0.0
    %4182 = vmatpush1.msra.mxu0 0.0
    %4183 = vmatprep.subr.mxu0 0.0
    %4184 = vmatpush1.msra.mxu0 0.0
    %4185 = vmatprep.mubr.f32.mxu0 0.0
    %4186 = vmatmul.mubr.f32.gmra.mrb[0].mxu0 %v4119
    %v4187 = vpop.f32.mrb[0].mxu0
    %v4188 = vadd.f32 0.0, %v4187
    %v4189 = vpop.f32.mrb[0].mxu0
    %4190 = vdwg.mxu0
    %v4193 = vsel %vm364, %v3510, %v3509
    %v4194 = vsel %vm3171, %v4193, 0
    %4196 = vmatprep.subr.mxu0 0.0
    %4197 = vmatpush1.msra.mxu0 %v3511
    %4198 = vmatprep.subr.mxu0 0.0
    %4199 = vmatpush1.msra.mxu0 0.0
    %4200 = vmatprep.subr.mxu0 0.0
    %4201 = vmatpush1.msra.mxu0 0.0
    %4202 = vmatprep.subr.mxu0 0.0
    %4203 = vmatpush1.msra.mxu0 0.0
    %4204 = vmatprep.subr.mxu0 0.0
    %4205 = vmatpush1.msra.mxu0 0.0
    %4206 = vmatprep.subr.mxu0 0.0
    %4207 = vmatpush1.msra.mxu0 0.0
    %4208 = vmatprep.subr.mxu0 0.0
    %4209 = vmatpush1.msra.mxu0 0.0
    %4210 = vmatprep.subr.mxu0 0.0
    %4211 = vmatpush1.msra.mxu0 0.0
    %4212 = vmatprep.subr.mxu0 0.0
    %4213 = vmatpush1.msra.mxu0 0.0
    %4214 = vmatprep.subr.mxu0 0.0
    %4215 = vmatpush1.msra.mxu0 0.0
    %4216 = vmatprep.subr.mxu0 0.0
    %4217 = vmatpush1.msra.mxu0 0.0
    %4218 = vmatprep.subr.mxu0 0.0
    %4219 = vmatpush1.msra.mxu0 0.0
    %4220 = vmatprep.subr.mxu0 0.0
    %4221 = vmatpush1.msra.mxu0 0.0
    %4222 = vmatprep.subr.mxu0 0.0
    %4223 = vmatpush1.msra.mxu0 0.0
    %4224 = vmatprep.subr.mxu0 0.0
    %4225 = vmatpush1.msra.mxu0 0.0
    %4226 = vmatprep.subr.mxu0 0.0
    %4227 = vmatpush1.msra.mxu0 0.0
    %4228 = vmatprep.subr.mxu0 0.0
    %4229 = vmatpush1.msra.mxu0 0.0
    %4230 = vmatprep.subr.mxu0 0.0
    %4231 = vmatpush1.msra.mxu0 0.0
    %4232 = vmatprep.subr.mxu0 0.0
    %4233 = vmatpush1.msra.mxu0 0.0
    %4234 = vmatprep.subr.mxu0 0.0
    %4235 = vmatpush1.msra.mxu0 0.0
    %4236 = vmatprep.subr.mxu0 0.0
    %4237 = vmatpush1.msra.mxu0 0.0
    %4238 = vmatprep.subr.mxu0 0.0
    %4239 = vmatpush1.msra.mxu0 0.0
    %4240 = vmatprep.subr.mxu0 0.0
    %4241 = vmatpush1.msra.mxu0 0.0
    %4242 = vmatprep.subr.mxu0 0.0
    %4243 = vmatpush1.msra.mxu0 0.0
    %4244 = vmatprep.subr.mxu0 0.0
    %4245 = vmatpush1.msra.mxu0 0.0
    %4246 = vmatprep.subr.mxu0 0.0
    %4247 = vmatpush1.msra.mxu0 0.0
    %4248 = vmatprep.subr.mxu0 0.0
    %4249 = vmatpush1.msra.mxu0 0.0
    %4250 = vmatprep.subr.mxu0 0.0
    %4251 = vmatpush1.msra.mxu0 0.0
    %4252 = vmatprep.subr.mxu0 0.0
    %4253 = vmatpush1.msra.mxu0 0.0
    %4254 = vmatprep.subr.mxu0 0.0
    %4255 = vmatpush1.msra.mxu0 0.0
    %4256 = vmatprep.subr.mxu0 0.0
    %4257 = vmatpush1.msra.mxu0 0.0
    %4258 = vmatprep.subr.mxu0 0.0
    %4259 = vmatpush1.msra.mxu0 0.0
    %4260 = vmatprep.mubr.f32.mxu0 0.0
    %4261 = vmatmul.mubr.f32.gmra.mrb[0].mxu0 %v4194
    %v4262 = vpop.f32.mrb[0].mxu0
    %v4263 = vadd.f32 %v4188, %v4262
    %v4264 = vpop.f32.mrb[0].mxu0
    %4265 = vdwg.mxu0
    %s4266 = scalar_lea.vmem %s7, 64
    %v4267 = vld [vmem:[%s4266] sm:$0xff]
    %v4268 = vld [vmem:[%s4266 + $0x8] sm:$0xff]
    %v4269 = vld [vmem:[%s4266 + $0x10] sm:$0xff]
    %v4270 = vld [vmem:[%s4266 + $0x18] sm:$0xff]
    %s4271 = scalar_lea.vmem %s10, 2
    %v4272 = vld [vmem:[%s4271] sm:$0x1]
    %v4274 = vlaneseq
    %v4275 = vshrl.u32 %v4274, 7
    %v4276 = vsub.s32 0, %v4275
    %v4277 = vrot.slane %v4272, %v4276
    %4279 = vmatprep.subr.mxu0 0.0
    %4280 = vmatpush1.msra.mxu0 %v4267
    %4281 = vmatprep.subr.mxu0 0.0
    %4282 = vmatpush1.msra.mxu0 %v4268
    %4283 = vmatprep.subr.mxu0 0.0
    %4284 = vmatpush1.msra.mxu0 %v4269
    %4285 = vmatprep.subr.mxu0 0.0
    %4286 = vmatpush1.msra.mxu0 %v4270
    %4287 = vmatprep.subr.mxu0 0.0
    %4288 = vmatpush1.msra.mxu0 0.0
    %4289 = vmatprep.subr.mxu0 0.0
    %4290 = vmatpush1.msra.mxu0 0.0
    %4291 = vmatprep.subr.mxu0 0.0
    %4292 = vmatpush1.msra.mxu0 0.0
    %4293 = vmatprep.subr.mxu0 0.0
    %4294 = vmatpush1.msra.mxu0 0.0
    %4295 = vmatprep.subr.mxu0 0.0
    %4296 = vmatpush1.msra.mxu0 0.0
    %4297 = vmatprep.subr.mxu0 0.0
    %4298 = vmatpush1.msra.mxu0 0.0
    %4299 = vmatprep.subr.mxu0 0.0
    %4300 = vmatpush1.msra.mxu0 0.0
    %4301 = vmatprep.subr.mxu0 0.0
    %4302 = vmatpush1.msra.mxu0 0.0
    %4303 = vmatprep.subr.mxu0 0.0
    %4304 = vmatpush1.msra.mxu0 0.0
    %4305 = vmatprep.subr.mxu0 0.0
    %4306 = vmatpush1.msra.mxu0 0.0
    %4307 = vmatprep.subr.mxu0 0.0
    %4308 = vmatpush1.msra.mxu0 0.0
    %4309 = vmatprep.subr.mxu0 0.0
    %4310 = vmatpush1.msra.mxu0 0.0
    %4311 = vmatprep.subr.mxu0 0.0
    %4312 = vmatpush1.msra.mxu0 0.0
    %4313 = vmatprep.subr.mxu0 0.0
    %4314 = vmatpush1.msra.mxu0 0.0
    %4315 = vmatprep.subr.mxu0 0.0
    %4316 = vmatpush1.msra.mxu0 0.0
    %4317 = vmatprep.subr.mxu0 0.0
    %4318 = vmatpush1.msra.mxu0 0.0
    %4319 = vmatprep.subr.mxu0 0.0
    %4320 = vmatpush1.msra.mxu0 0.0
    %4321 = vmatprep.subr.mxu0 0.0
    %4322 = vmatpush1.msra.mxu0 0.0
    %4323 = vmatprep.subr.mxu0 0.0
    %4324 = vmatpush1.msra.mxu0 0.0
    %4325 = vmatprep.subr.mxu0 0.0
    %4326 = vmatpush1.msra.mxu0 0.0
    %4327 = vmatprep.subr.mxu0 0.0
    %4328 = vmatpush1.msra.mxu0 0.0
    %4329 = vmatprep.subr.mxu0 0.0
    %4330 = vmatpush1.msra.mxu0 0.0
    %4331 = vmatprep.subr.mxu0 0.0
    %4332 = vmatpush1.msra.mxu0 0.0
    %4333 = vmatprep.subr.mxu0 0.0
    %4334 = vmatpush1.msra.mxu0 0.0
    %4335 = vmatprep.subr.mxu0 0.0
    %4336 = vmatpush1.msra.mxu0 0.0
    %4337 = vmatprep.subr.mxu0 0.0
    %4338 = vmatpush1.msra.mxu0 0.0
    %4339 = vmatprep.subr.mxu0 0.0
    %4340 = vmatpush1.msra.mxu0 0.0
    %4341 = vmatprep.subr.mxu0 0.0
    %4342 = vmatpush1.msra.mxu0 0.0
    %4343 = vmatprep.mubr.f32.mxu0 0.0
    %4344 = vmatmul.mubr.f32.gmra.mrb[0].mxu0 %v2920
    %v4345 = vpop.f32.mrb[0].mxu0
    %v4346 = vadd.f32 %v4277, %v4345
    %v4347 = vpop.f32.mrb[0].mxu0
    %4348 = vmatprep.mubr.f32.mxu0 0.0
    %4349 = vmatmul.mubr.f32.gmra.mrb[0].mxu0 %v2922
    %v4350 = vpop.f32.mrb[0].mxu0
    %v4351 = vadd.f32 %v4277, %v4350
    %v4352 = vpop.f32.mrb[0].mxu0
    %4353 = vdwg.mxu0
    %s4354 = scalar_lea.vmem %s8, 64
    %v4355 = vld [vmem:[%s4354] sm:$0xff]
    %v4356 = vld [vmem:[%s4354 + $0x8] sm:$0xff]
    %v4357 = vld [vmem:[%s4354 + $0x10] sm:$0xff]
    %v4358 = vld [vmem:[%s4354 + $0x18] sm:$0xff]
    %s4359 = scalar_lea.vmem %s11, 2
    %v4360 = vld [vmem:[%s4359] sm:$0x1]
    %v4362 = vlaneseq
    %v4363 = vshrl.u32 %v4362, 7
    %v4364 = vsub.s32 0, %v4363
    %v4365 = vrot.slane %v4360, %v4364
    %4367 = vmatprep.subr.mxu0 0.0
    %4368 = vmatpush1.msra.mxu0 %v4355
    %4369 = vmatprep.subr.mxu0 0.0
    %4370 = vmatpush1.msra.mxu0 %v4356
    %4371 = vmatprep.subr.mxu0 0.0
    %4372 = vmatpush1.msra.mxu0 %v4357
    %4373 = vmatprep.subr.mxu0 0.0
    %4374 = vmatpush1.msra.mxu0 %v4358
    %4375 = vmatprep.subr.mxu0 0.0
    %4376 = vmatpush1.msra.mxu0 0.0
    %4377 = vmatprep.subr.mxu0 0.0
    %4378 = vmatpush1.msra.mxu0 0.0
    %4379 = vmatprep.subr.mxu0 0.0
    %4380 = vmatpush1.msra.mxu0 0.0
    %4381 = vmatprep.subr.mxu0 0.0
    %4382 = vmatpush1.msra.mxu0 0.0
    %4383 = vmatprep.subr.mxu0 0.0
    %4384 = vmatpush1.msra.mxu0 0.0
    %4385 = vmatprep.subr.mxu0 0.0
    %4386 = vmatpush1.msra.mxu0 0.0
    %4387 = vmatprep.subr.mxu0 0.0
    %4388 = vmatpush1.msra.mxu0 0.0
    %4389 = vmatprep.subr.mxu0 0.0
    %4390 = vmatpush1.msra.mxu0 0.0
    %4391 = vmatprep.subr.mxu0 0.0
    %4392 = vmatpush1.msra.mxu0 0.0
    %4393 = vmatprep.subr.mxu0 0.0
    %4394 = vmatpush1.msra.mxu0 0.0
    %4395 = vmatprep.subr.mxu0 0.0
    %4396 = vmatpush1.msra.mxu0 0.0
    %4397 = vmatprep.subr.mxu0 0.0
    %4398 = vmatpush1.msra.mxu0 0.0
    %4399 = vmatprep.subr.mxu0 0.0
    %4400 = vmatpush1.msra.mxu0 0.0
    %4401 = vmatprep.subr.mxu0 0.0
    %4402 = vmatpush1.msra.mxu0 0.0
    %4403 = vmatprep.subr.mxu0 0.0
    %4404 = vmatpush1.msra.mxu0 0.0
    %4405 = vmatprep.subr.mxu0 0.0
    %4406 = vmatpush1.msra.mxu0 0.0
    %4407 = vmatprep.subr.mxu0 0.0
    %4408 = vmatpush1.msra.mxu0 0.0
    %4409 = vmatprep.subr.mxu0 0.0
    %4410 = vmatpush1.msra.mxu0 0.0
    %4411 = vmatprep.subr.mxu0 0.0
    %4412 = vmatpush1.msra.mxu0 0.0
    %4413 = vmatprep.subr.mxu0 0.0
    %4414 = vmatpush1.msra.mxu0 0.0
    %4415 = vmatprep.subr.mxu0 0.0
    %4416 = vmatpush1.msra.mxu0 0.0
    %4417 = vmatprep.subr.mxu0 0.0
    %4418 = vmatpush1.msra.mxu0 0.0
    %4419 = vmatprep.subr.mxu0 0.0
    %4420 = vmatpush1.msra.mxu0 0.0
    %4421 = vmatprep.subr.mxu0 0.0
    %4422 = vmatpush1.msra.mxu0 0.0
    %4423 = vmatprep.subr.mxu0 0.0
    %4424 = vmatpush1.msra.mxu0 0.0
    %4425 = vmatprep.subr.mxu0 0.0
    %4426 = vmatpush1.msra.mxu0 0.0
    %4427 = vmatprep.subr.mxu0 0.0
    %4428 = vmatpush1.msra.mxu0 0.0
    %4429 = vmatprep.subr.mxu0 0.0
    %4430 = vmatpush1.msra.mxu0 0.0
    %4431 = vmatprep.mubr.f32.mxu0 0.0
    %4432 = vmatmul.mubr.f32.gmra.mrb[0].mxu0 %v2920
    %v4433 = vpop.f32.mrb[0].mxu0
    %v4434 = vadd.f32 %v4365, %v4433
    %v4435 = vpop.f32.mrb[0].mxu0
    %4436 = vmatprep.mubr.f32.mxu0 0.0
    %4437 = vmatmul.mubr.f32.gmra.mrb[0].mxu0 %v2922
    %v4438 = vpop.f32.mrb[0].mxu0
    %v4439 = vadd.f32 %v4365, %v4438
    %v4440 = vpop.f32.mrb[0].mxu0
    %4441 = vdwg.mxu0
    %s4442 = scalar_lea.vmem %s9, 64
    %v4443 = vld [vmem:[%s4442] sm:$0xff]
    %v4444 = vld [vmem:[%s4442 + $0x8] sm:$0xff]
    %v4445 = vld [vmem:[%s4442 + $0x10] sm:$0xff]
    %v4446 = vld [vmem:[%s4442 + $0x18] sm:$0xff]
    %s4447 = scalar_lea.vmem %s12, 2
    %v4448 = vld [vmem:[%s4447] sm:$0x1]
    %v4450 = vlaneseq
    %v4451 = vshrl.u32 %v4450, 7
    %v4452 = vsub.s32 0, %v4451
    %v4453 = vrot.slane %v4448, %v4452
    %4455 = vmatprep.subr.mxu0 0.0
    %4456 = vmatpush1.msra.mxu0 %v4443
    %4457 = vmatprep.subr.mxu0 0.0
    %4458 = vmatpush1.msra.mxu0 %v4444
    %4459 = vmatprep.subr.mxu0 0.0
    %4460 = vmatpush1.msra.mxu0 %v4445
    %4461 = vmatprep.subr.mxu0 0.0
    %4462 = vmatpush1.msra.mxu0 %v4446
    %4463 = vmatprep.subr.mxu0 0.0
    %4464 = vmatpush1.msra.mxu0 0.0
    %4465 = vmatprep.subr.mxu0 0.0
    %4466 = vmatpush1.msra.mxu0 0.0
    %4467 = vmatprep.subr.mxu0 0.0
    %4468 = vmatpush1.msra.mxu0 0.0
    %4469 = vmatprep.subr.mxu0 0.0
    %4470 = vmatpush1.msra.mxu0 0.0
    %4471 = vmatprep.subr.mxu0 0.0
    %4472 = vmatpush1.msra.mxu0 0.0
    %4473 = vmatprep.subr.mxu0 0.0
    %4474 = vmatpush1.msra.mxu0 0.0
    %4475 = vmatprep.subr.mxu0 0.0
    %4476 = vmatpush1.msra.mxu0 0.0
    %4477 = vmatprep.subr.mxu0 0.0
    %4478 = vmatpush1.msra.mxu0 0.0
    %4479 = vmatprep.subr.mxu0 0.0
    %4480 = vmatpush1.msra.mxu0 0.0
    %4481 = vmatprep.subr.mxu0 0.0
    %4482 = vmatpush1.msra.mxu0 0.0
    %4483 = vmatprep.subr.mxu0 0.0
    %4484 = vmatpush1.msra.mxu0 0.0
    %4485 = vmatprep.subr.mxu0 0.0
    %4486 = vmatpush1.msra.mxu0 0.0
    %4487 = vmatprep.subr.mxu0 0.0
    %4488 = vmatpush1.msra.mxu0 0.0
    %4489 = vmatprep.subr.mxu0 0.0
    %4490 = vmatpush1.msra.mxu0 0.0
    %4491 = vmatprep.subr.mxu0 0.0
    %4492 = vmatpush1.msra.mxu0 0.0
    %4493 = vmatprep.subr.mxu0 0.0
    %4494 = vmatpush1.msra.mxu0 0.0
    %4495 = vmatprep.subr.mxu0 0.0
    %4496 = vmatpush1.msra.mxu0 0.0
    %4497 = vmatprep.subr.mxu0 0.0
    %4498 = vmatpush1.msra.mxu0 0.0
    %4499 = vmatprep.subr.mxu0 0.0
    %4500 = vmatpush1.msra.mxu0 0.0
    %4501 = vmatprep.subr.mxu0 0.0
    %4502 = vmatpush1.msra.mxu0 0.0
    %4503 = vmatprep.subr.mxu0 0.0
    %4504 = vmatpush1.msra.mxu0 0.0
    %4505 = vmatprep.subr.mxu0 0.0
    %4506 = vmatpush1.msra.mxu0 0.0
    %4507 = vmatprep.subr.mxu0 0.0
    %4508 = vmatpush1.msra.mxu0 0.0
    %4509 = vmatprep.subr.mxu0 0.0
    %4510 = vmatpush1.msra.mxu0 0.0
    %4511 = vmatprep.subr.mxu0 0.0
    %4512 = vmatpush1.msra.mxu0 0.0
    %4513 = vmatprep.subr.mxu0 0.0
    %4514 = vmatpush1.msra.mxu0 0.0
    %4515 = vmatprep.subr.mxu0 0.0
    %4516 = vmatpush1.msra.mxu0 0.0
    %4517 = vmatprep.subr.mxu0 0.0
    %4518 = vmatpush1.msra.mxu0 0.0
    %4519 = vmatprep.mubr.f32.mxu0 0.0
    %4520 = vmatmul.mubr.f32.gmra.mrb[0].mxu0 %v2920
    %v4521 = vpop.f32.mrb[0].mxu0
    %v4522 = vadd.f32 %v4453, %v4521
    %v4523 = vpop.f32.mrb[0].mxu0
    %4524 = vmatprep.mubr.f32.mxu0 0.0
    %4525 = vmatmul.mubr.f32.gmra.mrb[0].mxu0 %v2922
    %v4526 = vpop.f32.mrb[0].mxu0
    %v4527 = vadd.f32 %v4453, %v4526
    %v4528 = vpop.f32.mrb[0].mxu0
    %4529 = vdwg.mxu0
    %v4531 = vsel %vm3171, %v4346, 0
    %v4534 = vsel %vm3171, %v4434, 0
    %4536 = vmatprep.subr.mxu0 0.0
    %4537 = vmatpush1.xpose.msra.mxu0 %v4534
    %4538 = vmatprep.subr.mxu0 0.0
    %4539 = vmatpush1.xpose.msra.mxu0 0.0
    %4540 = vmatprep.subr.mxu0 0.0
    %4541 = vmatpush1.xpose.msra.mxu0 0.0
    %4542 = vmatprep.subr.mxu0 0.0
    %4543 = vmatpush1.xpose.msra.mxu0 0.0
    %4544 = vmatprep.subr.mxu0 0.0
    %4545 = vmatpush1.xpose.msra.mxu0 0.0
    %4546 = vmatprep.subr.mxu0 0.0
    %4547 = vmatpush1.xpose.msra.mxu0 0.0
    %4548 = vmatprep.subr.mxu0 0.0
    %4549 = vmatpush1.xpose.msra.mxu0 0.0
    %4550 = vmatprep.subr.mxu0 0.0
    %4551 = vmatpush1.xpose.msra.mxu0 0.0
    %4552 = vmatprep.subr.mxu0 0.0
    %4553 = vmatpush1.xpose.msra.mxu0 0.0
    %4554 = vmatprep.subr.mxu0 0.0
    %4555 = vmatpush1.xpose.msra.mxu0 0.0
    %4556 = vmatprep.subr.mxu0 0.0
    %4557 = vmatpush1.xpose.msra.mxu0 0.0
    %4558 = vmatprep.subr.mxu0 0.0
    %4559 = vmatpush1.xpose.msra.mxu0 0.0
    %4560 = vmatprep.subr.mxu0 0.0
    %4561 = vmatpush1.xpose.msra.mxu0 0.0
    %4562 = vmatprep.subr.mxu0 0.0
    %4563 = vmatpush1.xpose.msra.mxu0 0.0
    %4564 = vmatprep.subr.mxu0 0.0
    %4565 = vmatpush1.xpose.msra.mxu0 0.0
    %4566 = vmatprep.subr.mxu0 0.0
    %4567 = vmatpush1.xpose.msra.mxu0 0.0
    %4568 = vmatprep.subr.mxu0 0.0
    %4569 = vmatpush1.xpose.msra.mxu0 0.0
    %4570 = vmatprep.subr.mxu0 0.0
    %4571 = vmatpush1.xpose.msra.mxu0 0.0
    %4572 = vmatprep.subr.mxu0 0.0
    %4573 = vmatpush1.xpose.msra.mxu0 0.0
    %4574 = vmatprep.subr.mxu0 0.0
    %4575 = vmatpush1.xpose.msra.mxu0 0.0
    %4576 = vmatprep.subr.mxu0 0.0
    %4577 = vmatpush1.xpose.msra.mxu0 0.0
    %4578 = vmatprep.subr.mxu0 0.0
    %4579 = vmatpush1.xpose.msra.mxu0 0.0
    %4580 = vmatprep.subr.mxu0 0.0
    %4581 = vmatpush1.xpose.msra.mxu0 0.0
    %4582 = vmatprep.subr.mxu0 0.0
    %4583 = vmatpush1.xpose.msra.mxu0 0.0
    %4584 = vmatprep.subr.mxu0 0.0
    %4585 = vmatpush1.xpose.msra.mxu0 0.0
    %4586 = vmatprep.subr.mxu0 0.0
    %4587 = vmatpush1.xpose.msra.mxu0 0.0
    %4588 = vmatprep.subr.mxu0 0.0
    %4589 = vmatpush1.xpose.msra.mxu0 0.0
    %4590 = vmatprep.subr.mxu0 0.0
    %4591 = vmatpush1.xpose.msra.mxu0 0.0
    %4592 = vmatprep.subr.mxu0 0.0
    %4593 = vmatpush1.xpose.msra.mxu0 0.0
    %4594 = vmatprep.subr.mxu0 0.0
    %4595 = vmatpush1.xpose.msra.mxu0 0.0
    %4596 = vmatprep.subr.mxu0 0.0
    %4597 = vmatpush1.xpose.msra.mxu0 0.0
    %4598 = vmatprep.subr.mxu0 0.0
    %4599 = vmatpush1.xpose.msra.mxu0 0.0
    %4600 = vmatprep.mubr.f32.mxu0 0.0
    %4601 = vmatmul.mubr.f32.gmra.mrb[0].mxu0 %v4531
    %v4602 = vpop.f32.mrb[0].mxu0
    %v4603 = vadd.f32 0.0, %v4602
    %v4604 = vpop.f32.mrb[0].mxu0
    %4605 = vdwg.mxu0
    %v4607 = vsel %vm3171, %v4351, 0
    %v4610 = vsel %vm3171, %v4439, 0
    %4612 = vmatprep.subr.mxu0 0.0
    %4613 = vmatpush1.xpose.msra.mxu0 %v4610
    %4614 = vmatprep.subr.mxu0 0.0
    %4615 = vmatpush1.xpose.msra.mxu0 0.0
    %4616 = vmatprep.subr.mxu0 0.0
    %4617 = vmatpush1.xpose.msra.mxu0 0.0
    %4618 = vmatprep.subr.mxu0 0.0
    %4619 = vmatpush1.xpose.msra.mxu0 0.0
    %4620 = vmatprep.subr.mxu0 0.0
    %4621 = vmatpush1.xpose.msra.mxu0 0.0
    %4622 = vmatprep.subr.mxu0 0.0
    %4623 = vmatpush1.xpose.msra.mxu0 0.0
    %4624 = vmatprep.subr.mxu0 0.0
    %4625 = vmatpush1.xpose.msra.mxu0 0.0
    %4626 = vmatprep.subr.mxu0 0.0
    %4627 = vmatpush1.xpose.msra.mxu0 0.0
    %4628 = vmatprep.subr.mxu0 0.0
    %4629 = vmatpush1.xpose.msra.mxu0 0.0
    %4630 = vmatprep.subr.mxu0 0.0
    %4631 = vmatpush1.xpose.msra.mxu0 0.0
    %4632 = vmatprep.subr.mxu0 0.0
    %4633 = vmatpush1.xpose.msra.mxu0 0.0
    %4634 = vmatprep.subr.mxu0 0.0
    %4635 = vmatpush1.xpose.msra.mxu0 0.0
    %4636 = vmatprep.subr.mxu0 0.0
    %4637 = vmatpush1.xpose.msra.mxu0 0.0
    %4638 = vmatprep.subr.mxu0 0.0
    %4639 = vmatpush1.xpose.msra.mxu0 0.0
    %4640 = vmatprep.subr.mxu0 0.0
    %4641 = vmatpush1.xpose.msra.mxu0 0.0
    %4642 = vmatprep.subr.mxu0 0.0
    %4643 = vmatpush1.xpose.msra.mxu0 0.0
    %4644 = vmatprep.subr.mxu0 0.0
    %4645 = vmatpush1.xpose.msra.mxu0 0.0
    %4646 = vmatprep.subr.mxu0 0.0
    %4647 = vmatpush1.xpose.msra.mxu0 0.0
    %4648 = vmatprep.subr.mxu0 0.0
    %4649 = vmatpush1.xpose.msra.mxu0 0.0
    %4650 = vmatprep.subr.mxu0 0.0
    %4651 = vmatpush1.xpose.msra.mxu0 0.0
    %4652 = vmatprep.subr.mxu0 0.0
    %4653 = vmatpush1.xpose.msra.mxu0 0.0
    %4654 = vmatprep.subr.mxu0 0.0
    %4655 = vmatpush1.xpose.msra.mxu0 0.0
    %4656 = vmatprep.subr.mxu0 0.0
    %4657 = vmatpush1.xpose.msra.mxu0 0.0
    %4658 = vmatprep.subr.mxu0 0.0
    %4659 = vmatpush1.xpose.msra.mxu0 0.0
    %4660 = vmatprep.subr.mxu0 0.0
    %4661 = vmatpush1.xpose.msra.mxu0 0.0
    %4662 = vmatprep.subr.mxu0 0.0
    %4663 = vmatpush1.xpose.msra.mxu0 0.0
    %4664 = vmatprep.subr.mxu0 0.0
    %4665 = vmatpush1.xpose.msra.mxu0 0.0
    %4666 = vmatprep.subr.mxu0 0.0
    %4667 = vmatpush1.xpose.msra.mxu0 0.0
    %4668 = vmatprep.subr.mxu0 0.0
    %4669 = vmatpush1.xpose.msra.mxu0 0.0
    %4670 = vmatprep.subr.mxu0 0.0
    %4671 = vmatpush1.xpose.msra.mxu0 0.0
    %4672 = vmatprep.subr.mxu0 0.0
    %4673 = vmatpush1.xpose.msra.mxu0 0.0
    %4674 = vmatprep.subr.mxu0 0.0
    %4675 = vmatpush1.xpose.msra.mxu0 0.0
    %4676 = vmatprep.mubr.f32.mxu0 0.0
    %4677 = vmatmul.mubr.f32.gmra.mrb[0].mxu0 %v4607
    %v4678 = vpop.f32.mrb[0].mxu0
    %v4679 = vadd.f32 0.0, %v4678
    %v4680 = vpop.f32.mrb[0].mxu0
    %4681 = vdwg.mxu0
    %v4682 = vmul.f32 %v4603, 0.35355338
    %v4683 = vmul.f32 %v4679, 0.35355338
    %v4684 = vsel %vm3171, %v4682, -inf
    %4685 = vmax.xlane.f32.xlu0 %v4684
    %v4686 = vpop.xlane.xlu0 %4685
    %v4687 = vsel %vm3171, %v4683, -inf
    %4688 = vmax.xlane.f32.xlu0 %v4687
    %v4689 = vpop.xlane.xlu0 %4688
    %v4690 = vsub.f32 %v4682, %v4686
    %v4691 = vsub.f32 %v4683, %v4689
    %v4692 = vmul.f32 %v4690, 1.442695
    %v4693 = vpow.pop %v4692
    %v4694 = vmul.f32 %v4691, 1.442695
    %v4695 = vpow.pop %v4694
    %v4696 = vsel %vm3171, %v4693, 0.0
    %4697 = vadd.xlane.f32.xlu0 %v4696
    %v4698 = vpop.xlane.xlu0 %4697
    %v4699 = vsel %vm3171, %v4695, 0.0
    %4700 = vadd.xlane.f32.xlu0 %v4699
    %v4701 = vpop.xlane.xlu0 %4700
    %v4702 = vrcp.pop %v4698
    %v4703 = vmul.f32 %v4693, %v4702
    %v4704 = vrcp.pop %v4701
    %v4705 = vmul.f32 %v4695, %v4704
    %v4707 = vsel %vm3171, %v4703, 0
    %4709 = vmatprep.subr.mxu0 0.0
    %4710 = vmatpush1.msra.mxu0 %v4522
    %4711 = vmatprep.subr.mxu0 0.0
    %4712 = vmatpush1.msra.mxu0 0.0
    %4713 = vmatprep.subr.mxu0 0.0
    %4714 = vmatpush1.msra.mxu0 0.0
    %4715 = vmatprep.subr.mxu0 0.0
    %4716 = vmatpush1.msra.mxu0 0.0
    %4717 = vmatprep.subr.mxu0 0.0
    %4718 = vmatpush1.msra.mxu0 0.0
    %4719 = vmatprep.subr.mxu0 0.0
    %4720 = vmatpush1.msra.mxu0 0.0
    %4721 = vmatprep.subr.mxu0 0.0
    %4722 = vmatpush1.msra.mxu0 0.0
    %4723 = vmatprep.subr.mxu0 0.0
    %4724 = vmatpush1.msra.mxu0 0.0
    %4725 = vmatprep.subr.mxu0 0.0
    %4726 = vmatpush1.msra.mxu0 0.0
    %4727 = vmatprep.subr.mxu0 0.0
    %4728 = vmatpush1.msra.mxu0 0.0
    %4729 = vmatprep.subr.mxu0 0.0
    %4730 = vmatpush1.msra.mxu0 0.0
    %4731 = vmatprep.subr.mxu0 0.0
    %4732 = vmatpush1.msra.mxu0 0.0
    %4733 = vmatprep.subr.mxu0 0.0
    %4734 = vmatpush1.msra.mxu0 0.0
    %4735 = vmatprep.subr.mxu0 0.0
    %4736 = vmatpush1.msra.mxu0 0.0
    %4737 = vmatprep.subr.mxu0 0.0
    %4738 = vmatpush1.msra.mxu0 0.0
    %4739 = vmatprep.subr.mxu0 0.0
    %4740 = vmatpush1.msra.mxu0 0.0
    %4741 = vmatprep.subr.mxu0 0.0
    %4742 = vmatpush1.msra.mxu0 0.0
    %4743 = vmatprep.subr.mxu0 0.0
    %4744 = vmatpush1.msra.mxu0 0.0
    %4745 = vmatprep.subr.mxu0 0.0
    %4746 = vmatpush1.msra.mxu0 0.0
    %4747 = vmatprep.subr.mxu0 0.0
    %4748 = vmatpush1.msra.mxu0 0.0
    %4749 = vmatprep.subr.mxu0 0.0
    %4750 = vmatpush1.msra.mxu0 0.0
    %4751 = vmatprep.subr.mxu0 0.0
    %4752 = vmatpush1.msra.mxu0 0.0
    %4753 = vmatprep.subr.mxu0 0.0
    %4754 = vmatpush1.msra.mxu0 0.0
    %4755 = vmatprep.subr.mxu0 0.0
    %4756 = vmatpush1.msra.mxu0 0.0
    %4757 = vmatprep.subr.mxu0 0.0
    %4758 = vmatpush1.msra.mxu0 0.0
    %4759 = vmatprep.subr.mxu0 0.0
    %4760 = vmatpush1.msra.mxu0 0.0
    %4761 = vmatprep.subr.mxu0 0.0
    %4762 = vmatpush1.msra.mxu0 0.0
    %4763 = vmatprep.subr.mxu0 0.0
    %4764 = vmatpush1.msra.mxu0 0.0
    %4765 = vmatprep.subr.mxu0 0.0
    %4766 = vmatpush1.msra.mxu0 0.0
    %4767 = vmatprep.subr.mxu0 0.0
    %4768 = vmatpush1.msra.mxu0 0.0
    %4769 = vmatprep.subr.mxu0 0.0
    %4770 = vmatpush1.msra.mxu0 0.0
    %4771 = vmatprep.subr.mxu0 0.0
    %4772 = vmatpush1.msra.mxu0 0.0
    %4773 = vmatprep.mubr.f32.mxu0 0.0
    %4774 = vmatmul.mubr.f32.gmra.mrb[0].mxu0 %v4707
    %v4775 = vpop.f32.mrb[0].mxu0
    %v4776 = vadd.f32 0.0, %v4775
    %v4777 = vpop.f32.mrb[0].mxu0
    %4778 = vdwg.mxu0
    %v4780 = vsel %vm3171, %v4705, 0
    %4782 = vmatprep.subr.mxu0 0.0
    %4783 = vmatpush1.msra.mxu0 %v4527
    %4784 = vmatprep.subr.mxu0 0.0
    %4785 = vmatpush1.msra.mxu0 0.0
    %4786 = vmatprep.subr.mxu0 0.0
    %4787 = vmatpush1.msra.mxu0 0.0
    %4788 = vmatprep.subr.mxu0 0.0
    %4789 = vmatpush1.msra.mxu0 0.0
    %4790 = vmatprep.subr.mxu0 0.0
    %4791 = vmatpush1.msra.mxu0 0.0
    %4792 = vmatprep.subr.mxu0 0.0
    %4793 = vmatpush1.msra.mxu0 0.0
    %4794 = vmatprep.subr.mxu0 0.0
    %4795 = vmatpush1.msra.mxu0 0.0
    %4796 = vmatprep.subr.mxu0 0.0
    %4797 = vmatpush1.msra.mxu0 0.0
    %4798 = vmatprep.subr.mxu0 0.0
    %4799 = vmatpush1.msra.mxu0 0.0
    %4800 = vmatprep.subr.mxu0 0.0
    %4801 = vmatpush1.msra.mxu0 0.0
    %4802 = vmatprep.subr.mxu0 0.0
    %4803 = vmatpush1.msra.mxu0 0.0
    %4804 = vmatprep.subr.mxu0 0.0
    %4805 = vmatpush1.msra.mxu0 0.0
    %4806 = vmatprep.subr.mxu0 0.0
    %4807 = vmatpush1.msra.mxu0 0.0
    %4808 = vmatprep.subr.mxu0 0.0
    %4809 = vmatpush1.msra.mxu0 0.0
    %4810 = vmatprep.subr.mxu0 0.0
    %4811 = vmatpush1.msra.mxu0 0.0
    %4812 = vmatprep.subr.mxu0 0.0
    %4813 = vmatpush1.msra.mxu0 0.0
    %4814 = vmatprep.subr.mxu0 0.0
    %4815 = vmatpush1.msra.mxu0 0.0
    %4816 = vmatprep.subr.mxu0 0.0
    %4817 = vmatpush1.msra.mxu0 0.0
    %4818 = vmatprep.subr.mxu0 0.0
    %4819 = vmatpush1.msra.mxu0 0.0
    %4820 = vmatprep.subr.mxu0 0.0
    %4821 = vmatpush1.msra.mxu0 0.0
    %4822 = vmatprep.subr.mxu0 0.0
    %4823 = vmatpush1.msra.mxu0 0.0
    %4824 = vmatprep.subr.mxu0 0.0
    %4825 = vmatpush1.msra.mxu0 0.0
    %4826 = vmatprep.subr.mxu0 0.0
    %4827 = vmatpush1.msra.mxu0 0.0
    %4828 = vmatprep.subr.mxu0 0.0
    %4829 = vmatpush1.msra.mxu0 0.0
    %4830 = vmatprep.subr.mxu0 0.0
    %4831 = vmatpush1.msra.mxu0 0.0
    %4832 = vmatprep.subr.mxu0 0.0
    %4833 = vmatpush1.msra.mxu0 0.0
    %4834 = vmatprep.subr.mxu0 0.0
    %4835 = vmatpush1.msra.mxu0 0.0
    %4836 = vmatprep.subr.mxu0 0.0
    %4837 = vmatpush1.msra.mxu0 0.0
    %4838 = vmatprep.subr.mxu0 0.0
    %4839 = vmatpush1.msra.mxu0 0.0
    %4840 = vmatprep.subr.mxu0 0.0
    %4841 = vmatpush1.msra.mxu0 0.0
    %4842 = vmatprep.subr.mxu0 0.0
    %4843 = vmatpush1.msra.mxu0 0.0
    %4844 = vmatprep.subr.mxu0 0.0
    %4845 = vmatpush1.msra.mxu0 0.0
    %4846 = vmatprep.mubr.f32.mxu0 0.0
    %4847 = vmatmul.mubr.f32.gmra.mrb[0].mxu0 %v4780
    %v4848 = vpop.f32.mrb[0].mxu0
    %v4849 = vadd.f32 0.0, %v4848
    %v4850 = vpop.f32.mrb[0].mxu0
    %4851 = vdwg.mxu0
    %v4852 = vsel %vm3171, %v4776, 0.0
    %v4853 = vrot.slane %v4852, 4
    %v4854 = vadd.f32 %v4852, %v4853
    %v4855 = vrot.slane %v4854, 2
    %v4856 = vadd.f32 %v4854, %v4855
    %v4857 = vrot.slane %v4856, 1
    %v4858 = vadd.f32 %v4856, %v4857
    %v4859 = vsel %vm3171, %v4849, 0.0
    %v4860 = vrot.slane %v4859, 4
    %v4861 = vadd.f32 %v4859, %v4860
    %v4862 = vrot.slane %v4861, 2
    %v4863 = vadd.f32 %v4861, %v4862
    %v4864 = vrot.slane %v4863, 1
    %v4865 = vadd.f32 %v4863, %v4864
    %v4866 = vmul.f32 %v4858, %v3508
    %v4867 = vmul.f32 %v4865, %v3508
    %s4868 = scalar_lea.vmem %s13, 16
    %v4869 = vld [vmem:[%s4868] sm:$0xff]
    %v4872 = vsel %vm364, %v4867, %v4866
    %v4873 = vsel %vm3171, %v4872, 0
    %4875 = vmatprep.subr.mxu0 0.0
    %4876 = vmatpush1.msra.mxu0 %v4869
    %4877 = vmatprep.subr.mxu0 0.0
    %4878 = vmatpush1.msra.mxu0 0.0
    %4879 = vmatprep.subr.mxu0 0.0
    %4880 = vmatpush1.msra.mxu0 0.0
    %4881 = vmatprep.subr.mxu0 0.0
    %4882 = vmatpush1.msra.mxu0 0.0
    %4883 = vmatprep.subr.mxu0 0.0
    %4884 = vmatpush1.msra.mxu0 0.0
    %4885 = vmatprep.subr.mxu0 0.0
    %4886 = vmatpush1.msra.mxu0 0.0
    %4887 = vmatprep.subr.mxu0 0.0
    %4888 = vmatpush1.msra.mxu0 0.0
    %4889 = vmatprep.subr.mxu0 0.0
    %4890 = vmatpush1.msra.mxu0 0.0
    %4891 = vmatprep.subr.mxu0 0.0
    %4892 = vmatpush1.msra.mxu0 0.0
    %4893 = vmatprep.subr.mxu0 0.0
    %4894 = vmatpush1.msra.mxu0 0.0
    %4895 = vmatprep.subr.mxu0 0.0
    %4896 = vmatpush1.msra.mxu0 0.0
    %4897 = vmatprep.subr.mxu0 0.0
    %4898 = vmatpush1.msra.mxu0 0.0
    %4899 = vmatprep.subr.mxu0 0.0
    %4900 = vmatpush1.msra.mxu0 0.0
    %4901 = vmatprep.subr.mxu0 0.0
    %4902 = vmatpush1.msra.mxu0 0.0
    %4903 = vmatprep.subr.mxu0 0.0
    %4904 = vmatpush1.msra.mxu0 0.0
    %4905 = vmatprep.subr.mxu0 0.0
    %4906 = vmatpush1.msra.mxu0 0.0
    %4907 = vmatprep.subr.mxu0 0.0
    %4908 = vmatpush1.msra.mxu0 0.0
    %4909 = vmatprep.subr.mxu0 0.0
    %4910 = vmatpush1.msra.mxu0 0.0
    %4911 = vmatprep.subr.mxu0 0.0
    %4912 = vmatpush1.msra.mxu0 0.0
    %4913 = vmatprep.subr.mxu0 0.0
    %4914 = vmatpush1.msra.mxu0 0.0
    %4915 = vmatprep.subr.mxu0 0.0
    %4916 = vmatpush1.msra.mxu0 0.0
    %4917 = vmatprep.subr.mxu0 0.0
    %4918 = vmatpush1.msra.mxu0 0.0
    %4919 = vmatprep.subr.mxu0 0.0
    %4920 = vmatpush1.msra.mxu0 0.0
    %4921 = vmatprep.subr.mxu0 0.0
    %4922 = vmatpush1.msra.mxu0 0.0
    %4923 = vmatprep.subr.mxu0 0.0
    %4924 = vmatpush1.msra.mxu0 0.0
    %4925 = vmatprep.subr.mxu0 0.0
    %4926 = vmatpush1.msra.mxu0 0.0
    %4927 = vmatprep.subr.mxu0 0.0
    %4928 = vmatpush1.msra.mxu0 0.0
    %4929 = vmatprep.subr.mxu0 0.0
    %4930 = vmatpush1.msra.mxu0 0.0
    %4931 = vmatprep.subr.mxu0 0.0
    %4932 = vmatpush1.msra.mxu0 0.0
    %4933 = vmatprep.subr.mxu0 0.0
    %4934 = vmatpush1.msra.mxu0 0.0
    %4935 = vmatprep.subr.mxu0 0.0
    %4936 = vmatpush1.msra.mxu0 0.0
    %4937 = vmatprep.subr.mxu0 0.0
    %4938 = vmatpush1.msra.mxu0 0.0
    %4939 = vmatprep.mubr.f32.mxu0 0.0
    %4940 = vmatmul.mubr.f32.gmra.mrb[0].mxu0 %v4873
    %v4941 = vpop.f32.mrb[0].mxu0
    %v4942 = vadd.f32 0.0, %v4941
    %v4943 = vpop.f32.mrb[0].mxu0
    %4944 = vdwg.mxu0
    %v4945 = vadd.f32 %v4263, %v4942
    %s4946 = scalar_lea.vmem %s7, 96
    %v4947 = vld [vmem:[%s4946] sm:$0xff]
    %v4948 = vld [vmem:[%s4946 + $0x8] sm:$0xff]
    %v4949 = vld [vmem:[%s4946 + $0x10] sm:$0xff]
    %v4950 = vld [vmem:[%s4946 + $0x18] sm:$0xff]
    %s4951 = scalar_lea.vmem %s10, 3
    %v4952 = vld [vmem:[%s4951] sm:$0x1]
    %v4954 = vlaneseq
    %v4955 = vshrl.u32 %v4954, 7
    %v4956 = vsub.s32 0, %v4955
    %v4957 = vrot.slane %v4952, %v4956
    %4959 = vmatprep.subr.mxu0 0.0
    %4960 = vmatpush1.msra.mxu0 %v4947
    %4961 = vmatprep.subr.mxu0 0.0
    %4962 = vmatpush1.msra.mxu0 %v4948
    %4963 = vmatprep.subr.mxu0 0.0
    %4964 = vmatpush1.msra.mxu0 %v4949
    %4965 = vmatprep.subr.mxu0 0.0
    %4966 = vmatpush1.msra.mxu0 %v4950
    %4967 = vmatprep.subr.mxu0 0.0
    %4968 = vmatpush1.msra.mxu0 0.0
    %4969 = vmatprep.subr.mxu0 0.0
    %4970 = vmatpush1.msra.mxu0 0.0
    %4971 = vmatprep.subr.mxu0 0.0
    %4972 = vmatpush1.msra.mxu0 0.0
    %4973 = vmatprep.subr.mxu0 0.0
    %4974 = vmatpush1.msra.mxu0 0.0
    %4975 = vmatprep.subr.mxu0 0.0
    %4976 = vmatpush1.msra.mxu0 0.0
    %4977 = vmatprep.subr.mxu0 0.0
    %4978 = vmatpush1.msra.mxu0 0.0
    %4979 = vmatprep.subr.mxu0 0.0
    %4980 = vmatpush1.msra.mxu0 0.0
    %4981 = vmatprep.subr.mxu0 0.0
    %4982 = vmatpush1.msra.mxu0 0.0
    %4983 = vmatprep.subr.mxu0 0.0
    %4984 = vmatpush1.msra.mxu0 0.0
    %4985 = vmatprep.subr.mxu0 0.0
    %4986 = vmatpush1.msra.mxu0 0.0
    %4987 = vmatprep.subr.mxu0 0.0
    %4988 = vmatpush1.msra.mxu0 0.0
    %4989 = vmatprep.subr.mxu0 0.0
    %4990 = vmatpush1.msra.mxu0 0.0
    %4991 = vmatprep.subr.mxu0 0.0
    %4992 = vmatpush1.msra.mxu0 0.0
    %4993 = vmatprep.subr.mxu0 0.0
    %4994 = vmatpush1.msra.mxu0 0.0
    %4995 = vmatprep.subr.mxu0 0.0
    %4996 = vmatpush1.msra.mxu0 0.0
    %4997 = vmatprep.subr.mxu0 0.0
    %4998 = vmatpush1.msra.mxu0 0.0
    %4999 = vmatprep.subr.mxu0 0.0
    %5000 = vmatpush1.msra.mxu0 0.0
    %5001 = vmatprep.subr.mxu0 0.0
    %5002 = vmatpush1.msra.mxu0 0.0
    %5003 = vmatprep.subr.mxu0 0.0
    %5004 = vmatpush1.msra.mxu0 0.0
    %5005 = vmatprep.subr.mxu0 0.0
    %5006 = vmatpush1.msra.mxu0 0.0
    %5007 = vmatprep.subr.mxu0 0.0
    %5008 = vmatpush1.msra.mxu0 0.0
    %5009 = vmatprep.subr.mxu0 0.0
    %5010 = vmatpush1.msra.mxu0 0.0
    %5011 = vmatprep.subr.mxu0 0.0
    %5012 = vmatpush1.msra.mxu0 0.0
    %5013 = vmatprep.subr.mxu0 0.0
    %5014 = vmatpush1.msra.mxu0 0.0
    %5015 = vmatprep.subr.mxu0 0.0
    %5016 = vmatpush1.msra.mxu0 0.0
    %5017 = vmatprep.subr.mxu0 0.0
    %5018 = vmatpush1.msra.mxu0 0.0
    %5019 = vmatprep.subr.mxu0 0.0
    %5020 = vmatpush1.msra.mxu0 0.0
    %5021 = vmatprep.subr.mxu0 0.0
    %5022 = vmatpush1.msra.mxu0 0.0
    %5023 = vmatprep.mubr.f32.mxu0 0.0
    %5024 = vmatmul.mubr.f32.gmra.mrb[0].mxu0 %v2920
    %v5025 = vpop.f32.mrb[0].mxu0
    %v5026 = vadd.f32 %v4957, %v5025
    %v5027 = vpop.f32.mrb[0].mxu0
    %5028 = vmatprep.mubr.f32.mxu0 0.0
    %5029 = vmatmul.mubr.f32.gmra.mrb[0].mxu0 %v2922
    %v5030 = vpop.f32.mrb[0].mxu0
    %v5031 = vadd.f32 %v4957, %v5030
    %v5032 = vpop.f32.mrb[0].mxu0
    %5033 = vdwg.mxu0
    %s5034 = scalar_lea.vmem %s8, 96
    %v5035 = vld [vmem:[%s5034] sm:$0xff]
    %v5036 = vld [vmem:[%s5034 + $0x8] sm:$0xff]
    %v5037 = vld [vmem:[%s5034 + $0x10] sm:$0xff]
    %v5038 = vld [vmem:[%s5034 + $0x18] sm:$0xff]
    %s5039 = scalar_lea.vmem %s11, 3
    %v5040 = vld [vmem:[%s5039] sm:$0x1]
    %v5042 = vlaneseq
    %v5043 = vshrl.u32 %v5042, 7
    %v5044 = vsub.s32 0, %v5043
    %v5045 = vrot.slane %v5040, %v5044
    %5047 = vmatprep.subr.mxu0 0.0
    %5048 = vmatpush1.msra.mxu0 %v5035
    %5049 = vmatprep.subr.mxu0 0.0
    %5050 = vmatpush1.msra.mxu0 %v5036
    %5051 = vmatprep.subr.mxu0 0.0
    %5052 = vmatpush1.msra.mxu0 %v5037
    %5053 = vmatprep.subr.mxu0 0.0
    %5054 = vmatpush1.msra.mxu0 %v5038
    %5055 = vmatprep.subr.mxu0 0.0
    %5056 = vmatpush1.msra.mxu0 0.0
    %5057 = vmatprep.subr.mxu0 0.0
    %5058 = vmatpush1.msra.mxu0 0.0
    %5059 = vmatprep.subr.mxu0 0.0
    %5060 = vmatpush1.msra.mxu0 0.0
    %5061 = vmatprep.subr.mxu0 0.0
    %5062 = vmatpush1.msra.mxu0 0.0
    %5063 = vmatprep.subr.mxu0 0.0
    %5064 = vmatpush1.msra.mxu0 0.0
    %5065 = vmatprep.subr.mxu0 0.0
    %5066 = vmatpush1.msra.mxu0 0.0
    %5067 = vmatprep.subr.mxu0 0.0
    %5068 = vmatpush1.msra.mxu0 0.0
    %5069 = vmatprep.subr.mxu0 0.0
    %5070 = vmatpush1.msra.mxu0 0.0
    %5071 = vmatprep.subr.mxu0 0.0
    %5072 = vmatpush1.msra.mxu0 0.0
    %5073 = vmatprep.subr.mxu0 0.0
    %5074 = vmatpush1.msra.mxu0 0.0
    %5075 = vmatprep.subr.mxu0 0.0
    %5076 = vmatpush1.msra.mxu0 0.0
    %5077 = vmatprep.subr.mxu0 0.0
    %5078 = vmatpush1.msra.mxu0 0.0
    %5079 = vmatprep.subr.mxu0 0.0
    %5080 = vmatpush1.msra.mxu0 0.0
    %5081 = vmatprep.subr.mxu0 0.0
    %5082 = vmatpush1.msra.mxu0 0.0
    %5083 = vmatprep.subr.mxu0 0.0
    %5084 = vmatpush1.msra.mxu0 0.0
    %5085 = vmatprep.subr.mxu0 0.0
    %5086 = vmatpush1.msra.mxu0 0.0
    %5087 = vmatprep.subr.mxu0 0.0
    %5088 = vmatpush1.msra.mxu0 0.0
    %5089 = vmatprep.subr.mxu0 0.0
    %5090 = vmatpush1.msra.mxu0 0.0
    %5091 = vmatprep.subr.mxu0 0.0
    %5092 = vmatpush1.msra.mxu0 0.0
    %5093 = vmatprep.subr.mxu0 0.0
    %5094 = vmatpush1.msra.mxu0 0.0
    %5095 = vmatprep.subr.mxu0 0.0
    %5096 = vmatpush1.msra.mxu0 0.0
    %5097 = vmatprep.subr.mxu0 0.0
    %5098 = vmatpush1.msra.mxu0 0.0
    %5099 = vmatprep.subr.mxu0 0.0
    %5100 = vmatpush1.msra.mxu0 0.0
    %5101 = vmatprep.subr.mxu0 0.0
    %5102 = vmatpush1.msra.mxu0 0.0
    %5103 = vmatprep.subr.mxu0 0.0
    %5104 = vmatpush1.msra.mxu0 0.0
    %5105 = vmatprep.subr.mxu0 0.0
    %5106 = vmatpush1.msra.mxu0 0.0
    %5107 = vmatprep.subr.mxu0 0.0
    %5108 = vmatpush1.msra.mxu0 0.0
    %5109 = vmatprep.subr.mxu0 0.0
    %5110 = vmatpush1.msra.mxu0 0.0
    %5111 = vmatprep.mubr.f32.mxu0 0.0
    %5112 = vmatmul.mubr.f32.gmra.mrb[0].mxu0 %v2920
    %v5113 = vpop.f32.mrb[0].mxu0
    %v5114 = vadd.f32 %v5045, %v5113
    %v5115 = vpop.f32.mrb[0].mxu0
    %5116 = vmatprep.mubr.f32.mxu0 0.0
    %5117 = vmatmul.mubr.f32.gmra.mrb[0].mxu0 %v2922
    %v5118 = vpop.f32.mrb[0].mxu0
    %v5119 = vadd.f32 %v5045, %v5118
    %v5120 = vpop.f32.mrb[0].mxu0
    %5121 = vdwg.mxu0
    %s5122 = scalar_lea.vmem %s9, 96
    %v5123 = vld [vmem:[%s5122] sm:$0xff]
    %v5124 = vld [vmem:[%s5122 + $0x8] sm:$0xff]
    %v5125 = vld [vmem:[%s5122 + $0x10] sm:$0xff]
    %v5126 = vld [vmem:[%s5122 + $0x18] sm:$0xff]
    %s5127 = scalar_lea.vmem %s12, 3
    %v5128 = vld [vmem:[%s5127] sm:$0x1]
    %v5130 = vlaneseq
    %v5131 = vshrl.u32 %v5130, 7
    %v5132 = vsub.s32 0, %v5131
    %v5133 = vrot.slane %v5128, %v5132
    %5135 = vmatprep.subr.mxu0 0.0
    %5136 = vmatpush1.msra.mxu0 %v5123
    %5137 = vmatprep.subr.mxu0 0.0
    %5138 = vmatpush1.msra.mxu0 %v5124
    %5139 = vmatprep.subr.mxu0 0.0
    %5140 = vmatpush1.msra.mxu0 %v5125
    %5141 = vmatprep.subr.mxu0 0.0
    %5142 = vmatpush1.msra.mxu0 %v5126
    %5143 = vmatprep.subr.mxu0 0.0
    %5144 = vmatpush1.msra.mxu0 0.0
    %5145 = vmatprep.subr.mxu0 0.0
    %5146 = vmatpush1.msra.mxu0 0.0
    %5147 = vmatprep.subr.mxu0 0.0
    %5148 = vmatpush1.msra.mxu0 0.0
    %5149 = vmatprep.subr.mxu0 0.0
    %5150 = vmatpush1.msra.mxu0 0.0
    %5151 = vmatprep.subr.mxu0 0.0
    %5152 = vmatpush1.msra.mxu0 0.0
    %5153 = vmatprep.subr.mxu0 0.0
    %5154 = vmatpush1.msra.mxu0 0.0
    %5155 = vmatprep.subr.mxu0 0.0
    %5156 = vmatpush1.msra.mxu0 0.0
    %5157 = vmatprep.subr.mxu0 0.0
    %5158 = vmatpush1.msra.mxu0 0.0
    %5159 = vmatprep.subr.mxu0 0.0
    %5160 = vmatpush1.msra.mxu0 0.0
    %5161 = vmatprep.subr.mxu0 0.0
    %5162 = vmatpush1.msra.mxu0 0.0
    %5163 = vmatprep.subr.mxu0 0.0
    %5164 = vmatpush1.msra.mxu0 0.0
    %5165 = vmatprep.subr.mxu0 0.0
    %5166 = vmatpush1.msra.mxu0 0.0
    %5167 = vmatprep.subr.mxu0 0.0
    %5168 = vmatpush1.msra.mxu0 0.0
    %5169 = vmatprep.subr.mxu0 0.0
    %5170 = vmatpush1.msra.mxu0 0.0
    %5171 = vmatprep.subr.mxu0 0.0
    %5172 = vmatpush1.msra.mxu0 0.0
    %5173 = vmatprep.subr.mxu0 0.0
    %5174 = vmatpush1.msra.mxu0 0.0
    %5175 = vmatprep.subr.mxu0 0.0
    %5176 = vmatpush1.msra.mxu0 0.0
    %5177 = vmatprep.subr.mxu0 0.0
    %5178 = vmatpush1.msra.mxu0 0.0
    %5179 = vmatprep.subr.mxu0 0.0
    %5180 = vmatpush1.msra.mxu0 0.0
    %5181 = vmatprep.subr.mxu0 0.0
    %5182 = vmatpush1.msra.mxu0 0.0
    %5183 = vmatprep.subr.mxu0 0.0
    %5184 = vmatpush1.msra.mxu0 0.0
    %5185 = vmatprep.subr.mxu0 0.0
    %5186 = vmatpush1.msra.mxu0 0.0
    %5187 = vmatprep.subr.mxu0 0.0
    %5188 = vmatpush1.msra.mxu0 0.0
    %5189 = vmatprep.subr.mxu0 0.0
    %5190 = vmatpush1.msra.mxu0 0.0
    %5191 = vmatprep.subr.mxu0 0.0
    %5192 = vmatpush1.msra.mxu0 0.0
    %5193 = vmatprep.subr.mxu0 0.0
    %5194 = vmatpush1.msra.mxu0 0.0
    %5195 = vmatprep.subr.mxu0 0.0
    %5196 = vmatpush1.msra.mxu0 0.0
    %5197 = vmatprep.subr.mxu0 0.0
    %5198 = vmatpush1.msra.mxu0 0.0
    %5199 = vmatprep.mubr.f32.mxu0 0.0
    %5200 = vmatmul.mubr.f32.gmra.mrb[0].mxu0 %v2920
    %v5201 = vpop.f32.mrb[0].mxu0
    %v5202 = vadd.f32 %v5133, %v5201
    %v5203 = vpop.f32.mrb[0].mxu0
    %5204 = vmatprep.mubr.f32.mxu0 0.0
    %5205 = vmatmul.mubr.f32.gmra.mrb[0].mxu0 %v2922
    %v5206 = vpop.f32.mrb[0].mxu0
    %v5207 = vadd.f32 %v5133, %v5206
    %v5208 = vpop.f32.mrb[0].mxu0
    %5209 = vdwg.mxu0
    %v5211 = vsel %vm3171, %v5026, 0
    %v5214 = vsel %vm3171, %v5114, 0
    %5216 = vmatprep.subr.mxu0 0.0
    %5217 = vmatpush1.xpose.msra.mxu0 %v5214
    %5218 = vmatprep.subr.mxu0 0.0
    %5219 = vmatpush1.xpose.msra.mxu0 0.0
    %5220 = vmatprep.subr.mxu0 0.0
    %5221 = vmatpush1.xpose.msra.mxu0 0.0
    %5222 = vmatprep.subr.mxu0 0.0
    %5223 = vmatpush1.xpose.msra.mxu0 0.0
    %5224 = vmatprep.subr.mxu0 0.0
    %5225 = vmatpush1.xpose.msra.mxu0 0.0
    %5226 = vmatprep.subr.mxu0 0.0
    %5227 = vmatpush1.xpose.msra.mxu0 0.0
    %5228 = vmatprep.subr.mxu0 0.0
    %5229 = vmatpush1.xpose.msra.mxu0 0.0
    %5230 = vmatprep.subr.mxu0 0.0
    %5231 = vmatpush1.xpose.msra.mxu0 0.0
    %5232 = vmatprep.subr.mxu0 0.0
    %5233 = vmatpush1.xpose.msra.mxu0 0.0
    %5234 = vmatprep.subr.mxu0 0.0
    %5235 = vmatpush1.xpose.msra.mxu0 0.0
    %5236 = vmatprep.subr.mxu0 0.0
    %5237 = vmatpush1.xpose.msra.mxu0 0.0
    %5238 = vmatprep.subr.mxu0 0.0
    %5239 = vmatpush1.xpose.msra.mxu0 0.0
    %5240 = vmatprep.subr.mxu0 0.0
    %5241 = vmatpush1.xpose.msra.mxu0 0.0
    %5242 = vmatprep.subr.mxu0 0.0
    %5243 = vmatpush1.xpose.msra.mxu0 0.0
    %5244 = vmatprep.subr.mxu0 0.0
    %5245 = vmatpush1.xpose.msra.mxu0 0.0
    %5246 = vmatprep.subr.mxu0 0.0
    %5247 = vmatpush1.xpose.msra.mxu0 0.0
    %5248 = vmatprep.subr.mxu0 0.0
    %5249 = vmatpush1.xpose.msra.mxu0 0.0
    %5250 = vmatprep.subr.mxu0 0.0
    %5251 = vmatpush1.xpose.msra.mxu0 0.0
    %5252 = vmatprep.subr.mxu0 0.0
    %5253 = vmatpush1.xpose.msra.mxu0 0.0
    %5254 = vmatprep.subr.mxu0 0.0
    %5255 = vmatpush1.xpose.msra.mxu0 0.0
    %5256 = vmatprep.subr.mxu0 0.0
    %5257 = vmatpush1.xpose.msra.mxu0 0.0
    %5258 = vmatprep.subr.mxu0 0.0
    %5259 = vmatpush1.xpose.msra.mxu0 0.0
    %5260 = vmatprep.subr.mxu0 0.0
    %5261 = vmatpush1.xpose.msra.mxu0 0.0
    %5262 = vmatprep.subr.mxu0 0.0
    %5263 = vmatpush1.xpose.msra.mxu0 0.0
    %5264 = vmatprep.subr.mxu0 0.0
    %5265 = vmatpush1.xpose.msra.mxu0 0.0
    %5266 = vmatprep.subr.mxu0 0.0
    %5267 = vmatpush1.xpose.msra.mxu0 0.0
    %5268 = vmatprep.subr.mxu0 0.0
    %5269 = vmatpush1.xpose.msra.mxu0 0.0
    %5270 = vmatprep.subr.mxu0 0.0
    %5271 = vmatpush1.xpose.msra.mxu0 0.0
    %5272 = vmatprep.subr.mxu0 0.0
    %5273 = vmatpush1.xpose.msra.mxu0 0.0
    %5274 = vmatprep.subr.mxu0 0.0
    %5275 = vmatpush1.xpose.msra.mxu0 0.0
    %5276 = vmatprep.subr.mxu0 0.0
    %5277 = vmatpush1.xpose.msra.mxu0 0.0
    %5278 = vmatprep.subr.mxu0 0.0
    %5279 = vmatpush1.xpose.msra.mxu0 0.0
    %5280 = vmatprep.mubr.f32.mxu0 0.0
    %5281 = vmatmul.mubr.f32.gmra.mrb[0].mxu0 %v5211
    %v5282 = vpop.f32.mrb[0].mxu0
    %v5283 = vadd.f32 0.0, %v5282
    %v5284 = vpop.f32.mrb[0].mxu0
    %5285 = vdwg.mxu0
    %v5287 = vsel %vm3171, %v5031, 0
    %v5290 = vsel %vm3171, %v5119, 0
    %5292 = vmatprep.subr.mxu0 0.0
    %5293 = vmatpush1.xpose.msra.mxu0 %v5290
    %5294 = vmatprep.subr.mxu0 0.0
    %5295 = vmatpush1.xpose.msra.mxu0 0.0
    %5296 = vmatprep.subr.mxu0 0.0
    %5297 = vmatpush1.xpose.msra.mxu0 0.0
    %5298 = vmatprep.subr.mxu0 0.0
    %5299 = vmatpush1.xpose.msra.mxu0 0.0
    %5300 = vmatprep.subr.mxu0 0.0
    %5301 = vmatpush1.xpose.msra.mxu0 0.0
    %5302 = vmatprep.subr.mxu0 0.0
    %5303 = vmatpush1.xpose.msra.mxu0 0.0
    %5304 = vmatprep.subr.mxu0 0.0
    %5305 = vmatpush1.xpose.msra.mxu0 0.0
    %5306 = vmatprep.subr.mxu0 0.0
    %5307 = vmatpush1.xpose.msra.mxu0 0.0
    %5308 = vmatprep.subr.mxu0 0.0
    %5309 = vmatpush1.xpose.msra.mxu0 0.0
    %5310 = vmatprep.subr.mxu0 0.0
    %5311 = vmatpush1.xpose.msra.mxu0 0.0
    %5312 = vmatprep.subr.mxu0 0.0
    %5313 = vmatpush1.xpose.msra.mxu0 0.0
    %5314 = vmatprep.subr.mxu0 0.0
    %5315 = vmatpush1.xpose.msra.mxu0 0.0
    %5316 = vmatprep.subr.mxu0 0.0
    %5317 = vmatpush1.xpose.msra.mxu0 0.0
    %5318 = vmatprep.subr.mxu0 0.0
    %5319 = vmatpush1.xpose.msra.mxu0 0.0
    %5320 = vmatprep.subr.mxu0 0.0
    %5321 = vmatpush1.xpose.msra.mxu0 0.0
    %5322 = vmatprep.subr.mxu0 0.0
    %5323 = vmatpush1.xpose.msra.mxu0 0.0
    %5324 = vmatprep.subr.mxu0 0.0
    %5325 = vmatpush1.xpose.msra.mxu0 0.0
    %5326 = vmatprep.subr.mxu0 0.0
    %5327 = vmatpush1.xpose.msra.mxu0 0.0
    %5328 = vmatprep.subr.mxu0 0.0
    %5329 = vmatpush1.xpose.msra.mxu0 0.0
    %5330 = vmatprep.subr.mxu0 0.0
    %5331 = vmatpush1.xpose.msra.mxu0 0.0
    %5332 = vmatprep.subr.mxu0 0.0
    %5333 = vmatpush1.xpose.msra.mxu0 0.0
    %5334 = vmatprep.subr.mxu0 0.0
    %5335 = vmatpush1.xpose.msra.mxu0 0.0
    %5336 = vmatprep.subr.mxu0 0.0
    %5337 = vmatpush1.xpose.msra.mxu0 0.0
    %5338 = vmatprep.subr.mxu0 0.0
    %5339 = vmatpush1.xpose.msra.mxu0 0.0
    %5340 = vmatprep.subr.mxu0 0.0
    %5341 = vmatpush1.xpose.msra.mxu0 0.0
    %5342 = vmatprep.subr.mxu0 0.0
    %5343 = vmatpush1.xpose.msra.mxu0 0.0
    %5344 = vmatprep.subr.mxu0 0.0
    %5345 = vmatpush1.xpose.msra.mxu0 0.0
    %5346 = vmatprep.subr.mxu0 0.0
    %5347 = vmatpush1.xpose.msra.mxu0 0.0
    %5348 = vmatprep.subr.mxu0 0.0
    %5349 = vmatpush1.xpose.msra.mxu0 0.0
    %5350 = vmatprep.subr.mxu0 0.0
    %5351 = vmatpush1.xpose.msra.mxu0 0.0
    %5352 = vmatprep.subr.mxu0 0.0
    %5353 = vmatpush1.xpose.msra.mxu0 0.0
    %5354 = vmatprep.subr.mxu0 0.0
    %5355 = vmatpush1.xpose.msra.mxu0 0.0
    %5356 = vmatprep.mubr.f32.mxu0 0.0
    %5357 = vmatmul.mubr.f32.gmra.mrb[0].mxu0 %v5287
    %v5358 = vpop.f32.mrb[0].mxu0
    %v5359 = vadd.f32 0.0, %v5358
    %v5360 = vpop.f32.mrb[0].mxu0
    %5361 = vdwg.mxu0
    %v5362 = vmul.f32 %v5283, 0.35355338
    %v5363 = vmul.f32 %v5359, 0.35355338
    %v5364 = vsel %vm3171, %v5362, -inf
    %5365 = vmax.xlane.f32.xlu0 %v5364
    %v5366 = vpop.xlane.xlu0 %5365
    %v5367 = vsel %vm3171, %v5363, -inf
    %5368 = vmax.xlane.f32.xlu0 %v5367
    %v5369 = vpop.xlane.xlu0 %5368
    %v5370 = vsub.f32 %v5362, %v5366
    %v5371 = vsub.f32 %v5363, %v5369
    %v5372 = vmul.f32 %v5370, 1.442695
    %v5373 = vpow.pop %v5372
    %v5374 = vmul.f32 %v5371, 1.442695
    %v5375 = vpow.pop %v5374
    %v5376 = vsel %vm3171, %v5373, 0.0
    %5377 = vadd.xlane.f32.xlu0 %v5376
    %v5378 = vpop.xlane.xlu0 %5377
    %v5379 = vsel %vm3171, %v5375, 0.0
    %5380 = vadd.xlane.f32.xlu0 %v5379
    %v5381 = vpop.xlane.xlu0 %5380
    %v5382 = vrcp.pop %v5378
    %v5383 = vmul.f32 %v5373, %v5382
    %v5384 = vrcp.pop %v5381
    %v5385 = vmul.f32 %v5375, %v5384
    %v5387 = vsel %vm3171, %v5383, 0
    %5389 = vmatprep.subr.mxu0 0.0
    %5390 = vmatpush1.msra.mxu0 %v5202
    %5391 = vmatprep.subr.mxu0 0.0
    %5392 = vmatpush1.msra.mxu0 0.0
    %5393 = vmatprep.subr.mxu0 0.0
    %5394 = vmatpush1.msra.mxu0 0.0
    %5395 = vmatprep.subr.mxu0 0.0
    %5396 = vmatpush1.msra.mxu0 0.0
    %5397 = vmatprep.subr.mxu0 0.0
    %5398 = vmatpush1.msra.mxu0 0.0
    %5399 = vmatprep.subr.mxu0 0.0
    %5400 = vmatpush1.msra.mxu0 0.0
    %5401 = vmatprep.subr.mxu0 0.0
    %5402 = vmatpush1.msra.mxu0 0.0
    %5403 = vmatprep.subr.mxu0 0.0
    %5404 = vmatpush1.msra.mxu0 0.0
    %5405 = vmatprep.subr.mxu0 0.0
    %5406 = vmatpush1.msra.mxu0 0.0
    %5407 = vmatprep.subr.mxu0 0.0
    %5408 = vmatpush1.msra.mxu0 0.0
    %5409 = vmatprep.subr.mxu0 0.0
    %5410 = vmatpush1.msra.mxu0 0.0
    %5411 = vmatprep.subr.mxu0 0.0
    %5412 = vmatpush1.msra.mxu0 0.0
    %5413 = vmatprep.subr.mxu0 0.0
    %5414 = vmatpush1.msra.mxu0 0.0
    %5415 = vmatprep.subr.mxu0 0.0
    %5416 = vmatpush1.msra.mxu0 0.0
    %5417 = vmatprep.subr.mxu0 0.0
    %5418 = vmatpush1.msra.mxu0 0.0
    %5419 = vmatprep.subr.mxu0 0.0
    %5420 = vmatpush1.msra.mxu0 0.0
    %5421 = vmatprep.subr.mxu0 0.0
    %5422 = vmatpush1.msra.mxu0 0.0
    %5423 = vmatprep.subr.mxu0 0.0
    %5424 = vmatpush1.msra.mxu0 0.0
    %5425 = vmatprep.subr.mxu0 0.0
    %5426 = vmatpush1.msra.mxu0 0.0
    %5427 = vmatprep.subr.mxu0 0.0
    %5428 = vmatpush1.msra.mxu0 0.0
    %5429 = vmatprep.subr.mxu0 0.0
    %5430 = vmatpush1.msra.mxu0 0.0
    %5431 = vmatprep.subr.mxu0 0.0
    %5432 = vmatpush1.msra.mxu0 0.0
    %5433 = vmatprep.subr.mxu0 0.0
    %5434 = vmatpush1.msra.mxu0 0.0
    %5435 = vmatprep.subr.mxu0 0.0
    %5436 = vmatpush1.msra.mxu0 0.0
    %5437 = vmatprep.subr.mxu0 0.0
    %5438 = vmatpush1.msra.mxu0 0.0
    %5439 = vmatprep.subr.mxu0 0.0
    %5440 = vmatpush1.msra.mxu0 0.0
    %5441 = vmatprep.subr.mxu0 0.0
    %5442 = vmatpush1.msra.mxu0 0.0
    %5443 = vmatprep.subr.mxu0 0.0
    %5444 = vmatpush1.msra.mxu0 0.0
    %5445 = vmatprep.subr.mxu0 0.0
    %5446 = vmatpush1.msra.mxu0 0.0
    %5447 = vmatprep.subr.mxu0 0.0
    %5448 = vmatpush1.msra.mxu0 0.0
    %5449 = vmatprep.subr.mxu0 0.0
    %5450 = vmatpush1.msra.mxu0 0.0
    %5451 = vmatprep.subr.mxu0 0.0
    %5452 = vmatpush1.msra.mxu0 0.0
    %5453 = vmatprep.mubr.f32.mxu0 0.0
    %5454 = vmatmul.mubr.f32.gmra.mrb[0].mxu0 %v5387
    %v5455 = vpop.f32.mrb[0].mxu0
    %v5456 = vadd.f32 0.0, %v5455
    %v5457 = vpop.f32.mrb[0].mxu0
    %5458 = vdwg.mxu0
    %v5460 = vsel %vm3171, %v5385, 0
    %5462 = vmatprep.subr.mxu0 0.0
    %5463 = vmatpush1.msra.mxu0 %v5207
    %5464 = vmatprep.subr.mxu0 0.0
    %5465 = vmatpush1.msra.mxu0 0.0
    %5466 = vmatprep.subr.mxu0 0.0
    %5467 = vmatpush1.msra.mxu0 0.0
    %5468 = vmatprep.subr.mxu0 0.0
    %5469 = vmatpush1.msra.mxu0 0.0
    %5470 = vmatprep.subr.mxu0 0.0
    %5471 = vmatpush1.msra.mxu0 0.0
    %5472 = vmatprep.subr.mxu0 0.0
    %5473 = vmatpush1.msra.mxu0 0.0
    %5474 = vmatprep.subr.mxu0 0.0
    %5475 = vmatpush1.msra.mxu0 0.0
    %5476 = vmatprep.subr.mxu0 0.0
    %5477 = vmatpush1.msra.mxu0 0.0
    %5478 = vmatprep.subr.mxu0 0.0
    %5479 = vmatpush1.msra.mxu0 0.0
    %5480 = vmatprep.subr.mxu0 0.0
    %5481 = vmatpush1.msra.mxu0 0.0
    %5482 = vmatprep.subr.mxu0 0.0
    %5483 = vmatpush1.msra.mxu0 0.0
    %5484 = vmatprep.subr.mxu0 0.0
    %5485 = vmatpush1.msra.mxu0 0.0
    %5486 = vmatprep.subr.mxu0 0.0
    %5487 = vmatpush1.msra.mxu0 0.0
    %5488 = vmatprep.subr.mxu0 0.0
    %5489 = vmatpush1.msra.mxu0 0.0
    %5490 = vmatprep.subr.mxu0 0.0
    %5491 = vmatpush1.msra.mxu0 0.0
    %5492 = vmatprep.subr.mxu0 0.0
    %5493 = vmatpush1.msra.mxu0 0.0
    %5494 = vmatprep.subr.mxu0 0.0
    %5495 = vmatpush1.msra.mxu0 0.0
    %5496 = vmatprep.subr.mxu0 0.0
    %5497 = vmatpush1.msra.mxu0 0.0
    %5498 = vmatprep.subr.mxu0 0.0
    %5499 = vmatpush1.msra.mxu0 0.0
    %5500 = vmatprep.subr.mxu0 0.0
    %5501 = vmatpush1.msra.mxu0 0.0
    %5502 = vmatprep.subr.mxu0 0.0
    %5503 = vmatpush1.msra.mxu0 0.0
    %5504 = vmatprep.subr.mxu0 0.0
    %5505 = vmatpush1.msra.mxu0 0.0
    %5506 = vmatprep.subr.mxu0 0.0
    %5507 = vmatpush1.msra.mxu0 0.0
    %5508 = vmatprep.subr.mxu0 0.0
    %5509 = vmatpush1.msra.mxu0 0.0
    %5510 = vmatprep.subr.mxu0 0.0
    %5511 = vmatpush1.msra.mxu0 0.0
    %5512 = vmatprep.subr.mxu0 0.0
    %5513 = vmatpush1.msra.mxu0 0.0
    %5514 = vmatprep.subr.mxu0 0.0
    %5515 = vmatpush1.msra.mxu0 0.0
    %5516 = vmatprep.subr.mxu0 0.0
    %5517 = vmatpush1.msra.mxu0 0.0
    %5518 = vmatprep.subr.mxu0 0.0
    %5519 = vmatpush1.msra.mxu0 0.0
    %5520 = vmatprep.subr.mxu0 0.0
    %5521 = vmatpush1.msra.mxu0 0.0
    %5522 = vmatprep.subr.mxu0 0.0
    %5523 = vmatpush1.msra.mxu0 0.0
    %5524 = vmatprep.subr.mxu0 0.0
    %5525 = vmatpush1.msra.mxu0 0.0
    %5526 = vmatprep.mubr.f32.mxu0 0.0
    %5527 = vmatmul.mubr.f32.gmra.mrb[0].mxu0 %v5460
    %v5528 = vpop.f32.mrb[0].mxu0
    %v5529 = vadd.f32 0.0, %v5528
    %v5530 = vpop.f32.mrb[0].mxu0
    %5531 = vdwg.mxu0
    %v5532 = vsel %vm3171, %v5456, 0.0
    %v5533 = vrot.slane %v5532, 4
    %v5534 = vadd.f32 %v5532, %v5533
    %v5535 = vrot.slane %v5534, 2
    %v5536 = vadd.f32 %v5534, %v5535
    %v5537 = vrot.slane %v5536, 1
    %v5538 = vadd.f32 %v5536, %v5537
    %v5539 = vsel %vm3171, %v5529, 0.0
    %v5540 = vrot.slane %v5539, 4
    %v5541 = vadd.f32 %v5539, %v5540
    %v5542 = vrot.slane %v5541, 2
    %v5543 = vadd.f32 %v5541, %v5542
    %v5544 = vrot.slane %v5543, 1
    %v5545 = vadd.f32 %v5543, %v5544
    %v5546 = vmul.f32 %v5538, %v3508
    %v5547 = vmul.f32 %v5545, %v3508
    %s5548 = scalar_lea.vmem %s13, 24
    %v5549 = vld [vmem:[%s5548] sm:$0xff]
    %v5552 = vsel %vm364, %v5547, %v5546
    %v5553 = vsel %vm3171, %v5552, 0
    %5555 = vmatprep.subr.mxu0 0.0
    %5556 = vmatpush1.msra.mxu0 %v5549
    %5557 = vmatprep.subr.mxu0 0.0
    %5558 = vmatpush1.msra.mxu0 0.0
    %5559 = vmatprep.subr.mxu0 0.0
    %5560 = vmatpush1.msra.mxu0 0.0
    %5561 = vmatprep.subr.mxu0 0.0
    %5562 = vmatpush1.msra.mxu0 0.0
    %5563 = vmatprep.subr.mxu0 0.0
    %5564 = vmatpush1.msra.mxu0 0.0
    %5565 = vmatprep.subr.mxu0 0.0
    %5566 = vmatpush1.msra.mxu0 0.0
    %5567 = vmatprep.subr.mxu0 0.0
    %5568 = vmatpush1.msra.mxu0 0.0
    %5569 = vmatprep.subr.mxu0 0.0
    %5570 = vmatpush1.msra.mxu0 0.0
    %5571 = vmatprep.subr.mxu0 0.0
    %5572 = vmatpush1.msra.mxu0 0.0
    %5573 = vmatprep.subr.mxu0 0.0
    %5574 = vmatpush1.msra.mxu0 0.0
    %5575 = vmatprep.subr.mxu0 0.0
    %5576 = vmatpush1.msra.mxu0 0.0
    %5577 = vmatprep.subr.mxu0 0.0
    %5578 = vmatpush1.msra.mxu0 0.0
    %5579 = vmatprep.subr.mxu0 0.0
    %5580 = vmatpush1.msra.mxu0 0.0
    %5581 = vmatprep.subr.mxu0 0.0
    %5582 = vmatpush1.msra.mxu0 0.0
    %5583 = vmatprep.subr.mxu0 0.0
    %5584 = vmatpush1.msra.mxu0 0.0
    %5585 = vmatprep.subr.mxu0 0.0
    %5586 = vmatpush1.msra.mxu0 0.0
    %5587 = vmatprep.subr.mxu0 0.0
    %5588 = vmatpush1.msra.mxu0 0.0
    %5589 = vmatprep.subr.mxu0 0.0
    %5590 = vmatpush1.msra.mxu0 0.0
    %5591 = vmatprep.subr.mxu0 0.0
    %5592 = vmatpush1.msra.mxu0 0.0
    %5593 = vmatprep.subr.mxu0 0.0
    %5594 = vmatpush1.msra.mxu0 0.0
    %5595 = vmatprep.subr.mxu0 0.0
    %5596 = vmatpush1.msra.mxu0 0.0
    %5597 = vmatprep.subr.mxu0 0.0
    %5598 = vmatpush1.msra.mxu0 0.0
    %5599 = vmatprep.subr.mxu0 0.0
    %5600 = vmatpush1.msra.mxu0 0.0
    %5601 = vmatprep.subr.mxu0 0.0
    %5602 = vmatpush1.msra.mxu0 0.0
    %5603 = vmatprep.subr.mxu0 0.0
    %5604 = vmatpush1.msra.mxu0 0.0
    %5605 = vmatprep.subr.mxu0 0.0
    %5606 = vmatpush1.msra.mxu0 0.0
    %5607 = vmatprep.subr.mxu0 0.0
    %5608 = vmatpush1.msra.mxu0 0.0
    %5609 = vmatprep.subr.mxu0 0.0
    %5610 = vmatpush1.msra.mxu0 0.0
    %5611 = vmatprep.subr.mxu0 0.0
    %5612 = vmatpush1.msra.mxu0 0.0
    %5613 = vmatprep.subr.mxu0 0.0
    %5614 = vmatpush1.msra.mxu0 0.0
    %5615 = vmatprep.subr.mxu0 0.0
    %5616 = vmatpush1.msra.mxu0 0.0
    %5617 = vmatprep.subr.mxu0 0.0
    %5618 = vmatpush1.msra.mxu0 0.0
    %5619 = vmatprep.mubr.f32.mxu0 0.0
    %5620 = vmatmul.mubr.f32.gmra.mrb[0].mxu0 %v5553
    %v5621 = vpop.f32.mrb[0].mxu0
    %v5622 = vadd.f32 0.0, %v5621
    %v5623 = vpop.f32.mrb[0].mxu0
    %5624 = vdwg.mxu0
    %v5625 = vadd.f32 %v4945, %v5622
    %v5626 = vld [vmem:[%s14] sm:$0x1]
    %v5628 = vlaneseq
    %v5629 = vshrl.u32 %v5628, 7
    %v5630 = vsub.s32 0, %v5629
    %v5631 = vrot.slane %v5626, %v5630
    %v5633 = vadd.f32 %v5625, %v5631
    %vm5634 = vcmask 254976
    %5635 = vst.msk [vmem:[#allocation2] sm:$0x3] %vm5634, %v5633
    // Predicated region
    $region62: #{tpu_custom_call.1} parent=1 // pred_check
      _
    $region63: #{tpu_custom_call.1} parent=1 // pred_check_branch
      %5637 = sbr.rel (0) target = $region65
    $region64: #{tpu_custom_call.1} parent=1 // pred_region
      %s5639 = ssub.s32 32, 32
      %5640 = vsyncadd [#allocation3], %s5639
      %s5642 = sshll.u32 [#allocation2], 4
      %s5643 = int_to_ptr.vmem [resolvable:$true] %s5642
      %5645 = dma.vmem_to_hbm [thread:$0]  %s5643, 32, %s15, [#allocation3]
    $region65: #{tpu_custom_call.1} parent=1 // pred_fallthru
      _
    // Predicated region
    $region66: #{tpu_custom_call.1} parent=1 // pred_check
      _
    $region67: #{tpu_custom_call.1} parent=1 // pred_check_branch
      %5647 = sbr.rel (0) target = $region69
    $region68: #{tpu_custom_call.1} parent=1 // pred_region
      %5648 = dma.done [#allocation3], 32
    $region69: #{tpu_custom_call.1} parent=1 // pred_fallthru
      _
    %5649 = vsyncpa [#allocation3], 1

</llo_original>
